<compile_context>
chip_gen: v7x
topology: tpu7x:2x2x1
jax: 0.10.0
libtpu: 0.0.40
codegen_flags: <defaults>
</compile_context>

<pallas_src>
import functools

import jax
import jax.numpy as jnp
from jax.experimental import pallas as pl
from jax.experimental.pallas import tpu as pltpu


# ------------------------------- fused Pallas kernel ---------------------------

def make_fused_kernel(*, H, W, C_in, C_hid, C_out, n_branch, pad_max,
                      eps=1e-5, neg_slope=0.2):
    S = H * W                                   # spatial, lane (minor) axis
    KS = 2 * pad_max + 1                        # shared offset grid (largest k)
    CHUNK = KS * C_hid                          # contraction depth per row-chunk
    BC = n_branch * C_out                       # all branch outputs on sublanes
    LB = (H + 2 * pad_max) * W + 2 * pad_max    # H-padded flat buffer length
    LPAD = pad_max + pad_max * W                # where h row 0 lands in hbuf

    def kernel(x_ref, w1_ref, b1_ref, wall_ref, ball_ref, gamma_ref, beta_ref,
               m_ref, o_ref, hbuf_ref, stack_ref):
        # ---- 1x1 conv: h = W1 @ x + b1, lane-dense (C_hid, S) ----
        x = x_ref[0]                                          # (C_in, S)
        h = jnp.dot(w1_ref[...], x,
                    preferred_element_type=jnp.float32) + b1_ref[...]

        # ---- zero-padded (in H) flat buffer; W padding handled by masks ----
        hbuf_ref[...] = jnp.zeros_like(hbuf_ref)
        hbuf_ref[:, LPAD:LPAD + S] = h

        # ---- im2col: stack all KS*KS shifted windows along contraction ----
        col = jax.lax.broadcasted_iota(jnp.int32, (1, S), 1) % W
        for dx in range(KS):
            dxr = dx - pad_max
            if dx != pad_max:
                maskf = jnp.logical_and(col >= -dxr,
                                        col < W - dxr).astype(jnp.float32)
            for dy in range(KS):
                a = dy * W + dx                               # static slice start
                win = hbuf_ref[:, a:a + S]                    # (C_hid, S)
                if dx != pad_max:                             # center dx: all valid
                    win = win * maskf
                stack_ref[dy, dx * C_hid:(dx + 1) * C_hid, :] = win

        # ---- all 4 grouped convs as KS fat matmuls on the MXU ----
        acc = jnp.zeros((BC, S), jnp.float32)
        for r in range(KS):
            acc = acc + jnp.dot(wall_ref[r], stack_ref[r],
                                preferred_element_type=jnp.float32)
        acc = acc + ball_ref[...]

        # ---- GroupNorm (two-pass variance) for all branches at once ----
        # m_ref is the (branch,group) membership matrix with 1/(H*W*Cg) folded in.
        gsum = jnp.dot(m_ref[...], acc, preferred_element_type=jnp.float32)
        mean = jnp.sum(gsum, axis=1, keepdims=True)           # (BC, 1)
        d = acc - mean
        gsq = jnp.dot(m_ref[...], d * d, preferred_element_type=jnp.float32)
        var = jnp.sum(gsq, axis=1, keepdims=True)             # (BC, 1)
        inv_std = jax.lax.rsqrt(var + eps)
        y = d * inv_std * gamma_ref[...] + beta_ref[...]
        y = jnp.where(y >= 0, y, neg_slope * y)               # LeakyReLU(0.2)

        # ---- sum the branches; lane-dense (C_out, S) output (unmasked vst) ----
        out = y[0:C_out, :]
        for b in range(1, n_branch):
            out = out + y[b * C_out:(b + 1) * C_out, :]
        o_ref[...] = out[None, :, :]

    scratch_shapes = [
        pltpu.VMEM((C_hid, LB), jnp.float32),       # H-padded flat hidden buffer
        pltpu.VMEM((KS, CHUNK, S), jnp.float32),    # shared im2col stack (~2 MB)
    ]
    return kernel, scratch_shapes


# ------------------------------ parameter packing -------------------------------

def pack_inception_params(params, *, incep_ker, groups, H, W):
    """Pack per-branch grouped weights into the fused-kernel layout."""
    w1 = params['w1'].astype(jnp.float32)                     # (C_hid, C_in)
    C_hid = w1.shape[0]
    C_out = params['branches'][0]['bias'].shape[0]
    n_branch = len(incep_ker)
    pad_max = max(incep_ker) // 2
    KS = 2 * pad_max + 1
    Cg_in, Cg_out = C_hid // groups, C_out // groups
    BC = n_branch * C_out

    # w_all[dy, b*C_out + o, dx*C_hid + c] = weight of branch b at shared
    # offset (dy, dx) for (input channel c, output channel o); zero off-group
    # and outside the branch's own kxk window.
    w_all = jnp.zeros((KS, BC, KS * C_hid), jnp.float32)
    biases, gammas, betas = [], [], []
    for b, (k, bp) in enumerate(zip(incep_ker, params['branches'])):
        off = pad_max - k // 2
        wg = bp['w_group'].astype(jnp.float32)                # (G, k, k, Cgi, Cgo)
        dense = jnp.zeros((k, k, C_hid, C_out), jnp.float32)
        for g in range(groups):
            dense = dense.at[:, :, g * Cg_in:(g + 1) * Cg_in,
                             g * Cg_out:(g + 1) * Cg_out].set(wg[g])
        blk = jnp.transpose(dense, (0, 3, 1, 2)).reshape(k, C_out, k * C_hid)
        w_all = w_all.at[off:off + k, b * C_out:(b + 1) * C_out,
                         off * C_hid:(off + k) * C_hid].set(blk)
        biases.append(bp['bias'])
        gammas.append(bp['gamma'])
        betas.append(bp['beta'])

    bias_all = jnp.concatenate(biases).reshape(BC, 1).astype(jnp.float32)
    gamma_all = jnp.concatenate(gammas).reshape(BC, 1).astype(jnp.float32)
    beta_all = jnp.concatenate(betas).reshape(BC, 1).astype(jnp.float32)

    # (branch, group) membership matrix, scaled by 1/(H*W*Cg)
    idx = jnp.arange(BC)
    gid = (idx // C_out) * groups + (idx % C_out) // Cg_out
    m_scaled = (gid[:, None] == gid[None, :]).astype(jnp.float32) \
               * (1.0 / float(H * W * Cg_out))

    b1 = params['b1'].reshape(C_hid, 1).astype(jnp.float32)
    return w1, b1, w_all, bias_all, gamma_all, beta_all, m_scaled


# ----------------------------------- wrapper ------------------------------------

def ginception_st_forward(x_nchw, params, *, incep_ker, groups):
    N, C_in, H, W = x_nchw.shape
    S = H * W
    C_hid = params['w1'].shape[0]
    C_out = params['branches'][0]['bias'].shape[0]
    n_branch = len(incep_ker)
    pad_max = max(incep_ker) // 2
    KS = 2 * pad_max + 1
    CHUNK = KS * C_hid
    BC = n_branch * C_out

    # NCHW -> (N, C, H*W): channels on sublanes, H*W (=256) on lanes. No transpose.
    x = x_nchw.reshape(N, C_in, S).astype(jnp.float32)
    (w1, b1, w_all, bias_all, gamma_all, beta_all,
     m_scaled) = pack_inception_params(params, incep_ker=incep_ker,
                                       groups=groups, H=H, W=W)

    kernel, scratch_shapes = make_fused_kernel(
        H=H, W=W, C_in=C_in, C_hid=C_hid, C_out=C_out,
        n_branch=n_branch, pad_max=pad_max)

    y = pl.pallas_call(
        kernel,
        out_shape=jax.ShapeDtypeStruct((N, C_out, S), jnp.float32),
        grid=(N,),
        in_specs=[
            pl.BlockSpec((1, C_in, S), lambda n: (n, 0, 0)),        # x
            pl.BlockSpec((C_hid, C_in), lambda n: (0, 0)),          # w1
            pl.BlockSpec((C_hid, 1), lambda n: (0, 0)),             # b1
            pl.BlockSpec((KS, BC, CHUNK), lambda n: (0, 0, 0)),     # stacked weights
            pl.BlockSpec((BC, 1), lambda n: (0, 0)),                # biases
            pl.BlockSpec((BC, 1), lambda n: (0, 0)),                # gamma
            pl.BlockSpec((BC, 1), lambda n: (0, 0)),                # beta
            pl.BlockSpec((BC, BC), lambda n: (0, 0)),               # group membership
        ],
        out_specs=pl.BlockSpec((1, C_out, S), lambda n: (n, 0, 0)),
        scratch_shapes=scratch_shapes,
        compiler_params=pltpu.CompilerParams(
            dimension_semantics=("parallel",)),   # batch-parallel (megacore on v7x)
    )(x, w1, b1, w_all, bias_all, gamma_all, beta_all, m_scaled)

    return y.reshape(N, C_out, H, W)


# ------------------------- deterministic parameter init --------------------------

def init_params(key, C_in, C_hid, C_out, incep_ker, groups):
    keys = jax.random.split(key, 2 + 4 * len(incep_ker))
    params = {
        'w1': jax.random.normal(keys[0], (C_hid, C_in), jnp.float32)
              * (1.0 / jnp.sqrt(C_in)),
        'b1': jax.random.normal(keys[1], (C_hid,), jnp.float32) * 0.05,
    }
    Cg_in, Cg_out = C_hid // groups, C_out // groups
    branches = []
    for i, k in enumerate(incep_ker):
        kw, kb, kg, kbe = keys[2 + 4 * i: 6 + 4 * i]
        wg = jax.random.normal(kw, (groups, k, k, Cg_in, Cg_out), jnp.float32) \
             * (1.0 / (k * float(jnp.sqrt(Cg_in))))
        # HWIO layout of the same grouped weights (reference path only)
        w_hwio = jnp.transpose(wg, (1, 2, 3, 0, 4)).reshape(k, k, Cg_in, C_out)
        branches.append({
            'w_group': wg,
            'w_hwio': w_hwio,
            'bias': jax.random.normal(kb, (C_out,), jnp.float32) * 0.05,
            'gamma': 1.0 + 0.1 * jax.random.normal(kg, (C_out,), jnp.float32),
            'beta': 0.1 * jax.random.normal(kbe, (C_out,), jnp.float32),
        })
    params['branches'] = branches
    return params


# ------------------------------ pure-JAX reference --------------------------------

def reference_forward(x_nchw, params, *, incep_ker, groups, eps=1e-5):
    x = jnp.transpose(x_nchw, (0, 2, 3, 1)).astype(jnp.float32)   # NHWC
    h = jnp.einsum('nhwc,dc->nhwd', x, params['w1'],
                   precision=jax.lax.Precision.HIGHEST) + params['b1']
    N, H, W, _ = h.shape
    C_out = params['branches'][0]['bias'].shape[0]
    y = jnp.zeros((N, H, W, C_out), jnp.float32)
    for k, bp in zip(incep_ker, params['branches']):
        conv = jax.lax.conv_general_dilated(
            h, bp['w_hwio'], window_strides=(1, 1), padding='SAME',
            dimension_numbers=('NHWC', 'HWIO', 'NHWC'),
            feature_group_count=groups,
            precision=jax.lax.Precision.HIGHEST) + bp['bias']
        Cg = C_out // groups
        cg = conv.reshape(N, H, W, groups, Cg)
        mean = cg.mean(axis=(1, 2, 4), keepdims=True)
        var = ((cg - mean) ** 2).mean(axis=(1, 2, 4), keepdims=True)
        norm = ((cg - mean) / jnp.sqrt(var + eps)).reshape(N, H, W, C_out)
        yb = norm * bp['gamma'] + bp['beta']
        yb = jnp.where(yb >= 0, yb, 0.2 * yb)
        y = y + yb
    return jnp.transpose(y, (0, 3, 1, 2))


# -------------------------------------- main ---------------------------------------

if __name__ == "__main__":
    C_in, C_hid, C_out = 8, 16, 16
    incep_ker = [3, 5, 7, 11]
    groups = 8
    N, H, W = 2, 16, 16

    key = jax.random.PRNGKey(0)
    kx, kp = jax.random.split(key)
    x = jax.random.normal(kx, (N, C_in, H, W), jnp.float32)   # NCHW like PyTorch
    params = init_params(kp, C_in, C_hid, C_out, incep_ker, groups)

    fwd = jax.jit(functools.partial(ginception_st_forward,
                                    incep_ker=tuple(incep_ker), groups=groups))
    out = jax.block_until_ready(fwd(x, params))

    ref = jax.block_until_ready(
        reference_forward(x, params, incep_ker=incep_ker, groups=groups))

    assert out.shape == (N, C_out, H, W), out.shape
    err = float(jnp.max(jnp.abs(out - ref)))
    assert err < 2e-2, f"max abs err {err}"
    print("KERNEL_OK")
</pallas_src>

<mosaic_0001>
module attributes {stable_mosaic.version = 11 : i64} {
  func.func @kernel(%arg0: i32, %arg1: memref<1x8x256xf32, #tpu.memory_space<vmem>>, %arg2: memref<16x8xf32, #tpu.memory_space<vmem>>, %arg3: memref<16x1xf32, #tpu.memory_space<vmem>>, %arg4: memref<11x64x176xf32, #tpu.memory_space<vmem>>, %arg5: memref<64x1xf32, #tpu.memory_space<vmem>>, %arg6: memref<64x1xf32, #tpu.memory_space<vmem>>, %arg7: memref<64x1xf32, #tpu.memory_space<vmem>>, %arg8: memref<64x64xf32, #tpu.memory_space<vmem>>, %arg9: memref<1x16x256xf32, #tpu.memory_space<vmem>>, %arg10: memref<16x426xf32, #tpu.memory_space<vmem>>, %arg11: memref<11x176x256xf32, #tpu.memory_space<vmem>>) attributes {dimension_semantics = [#tpu.dimension_semantics<parallel>], iteration_bounds = array<i64: 2>, scalar_prefetch = 0 : i64, scratch_operands = 2 : i64, tpu.core_type = #tpu.core_type<tc>, window_params = [{transform_indices = @transform_0, window_bounds = array<i64: 1, 8, 256>}, {pipeline_mode = #tpu.pipeline_mode<synchronous>, transform_indices = @transform_1, window_bounds = array<i64: 16, 8>}, {pipeline_mode = #tpu.pipeline_mode<synchronous>, transform_indices = @transform_2, window_bounds = array<i64: 16, 1>}, {pipeline_mode = #tpu.pipeline_mode<synchronous>, transform_indices = @transform_3, window_bounds = array<i64: 11, 64, 176>}, {pipeline_mode = #tpu.pipeline_mode<synchronous>, transform_indices = @transform_4, window_bounds = array<i64: 64, 1>}, {pipeline_mode = #tpu.pipeline_mode<synchronous>, transform_indices = @transform_5, window_bounds = array<i64: 64, 1>}, {pipeline_mode = #tpu.pipeline_mode<synchronous>, transform_indices = @transform_6, window_bounds = array<i64: 64, 1>}, {pipeline_mode = #tpu.pipeline_mode<synchronous>, transform_indices = @transform_7, window_bounds = array<i64: 64, 64>}, {transform_indices = @transform_8, window_bounds = array<i64: 1, 16, 256>}]} {
    %c0 = arith.constant 0 : index
    %c0_0 = arith.constant 0 : index
    %c0_1 = arith.constant 0 : index
    %0 = vector.load %arg1[%c0, %c0_0, %c0_1] : memref<1x8x256xf32, #tpu.memory_space<vmem>>, vector<1x8x256xf32>
    %1 = vector.shape_cast %0 : vector<1x8x256xf32> to vector<8x256xf32>
    %c0_2 = arith.constant 0 : index
    %c0_3 = arith.constant 0 : index
    %2 = vector.load %arg2[%c0_2, %c0_3] : memref<16x8xf32, #tpu.memory_space<vmem>>, vector<16x8xf32>
    %cst = arith.constant dense<0.000000e+00> : vector<16x256xf32>
    %3 = tpu.matmul %2, %1, %cst {dimension_numbers = #tpu.dot_dimension_numbers<[1], [0], [0], [1], [0, 0, 1, 1], [], []>} : vector<16x8xf32>, vector<8x256xf32>, vector<16x256xf32> -> vector<16x256xf32>
    %c0_4 = arith.constant 0 : index
    %c0_5 = arith.constant 0 : index
    %4 = vector.load %arg3[%c0_4, %c0_5] : memref<16x1xf32, #tpu.memory_space<vmem>>, vector<16x1xf32>
    %5 = vector.broadcast %4 : vector<16x1xf32> to vector<16x256xf32>
    %6 = arith.addf %3, %5 : vector<16x256xf32>
    %cst_6 = arith.constant 0.000000e+00 : f32
    %7 = vector.broadcast %cst_6 : f32 to vector<16x426xf32>
    %c0_7 = arith.constant 0 : index
    %c0_8 = arith.constant 0 : index
    %8 = vector.load %arg10[%c0_7, %c0_8] : memref<16x426xf32, #tpu.memory_space<vmem>>, vector<16x426xf32>
    tpu.vector_store %arg10[%c0_7, %c0_8], %7 {strides = array<i32>} : memref<16x426xf32, #tpu.memory_space<vmem>>, vector<16x426xf32>,
    %c0_9 = arith.constant 0 : index
    %c85 = arith.constant 85 : index
    %9 = vector.load %arg10[%c0_9, %c85] : memref<16x426xf32, #tpu.memory_space<vmem>>, vector<16x256xf32>
    tpu.vector_store %arg10[%c0_9, %c85], %6 {strides = array<i32>} : memref<16x426xf32, #tpu.memory_space<vmem>>, vector<16x256xf32>,
    %10 = tpu.iota {dimensions = array<i32: 1>} : vector<1x256xi32>
    %c16_i32 = arith.constant 16 : i32
    %c0_i32 = arith.constant 0 : i32
    %11 = arith.cmpi eq, %c16_i32, %c0_i32 : i32
    %c1_i32 = arith.constant 1 : i32
    %12 = arith.select %11, %c1_i32, %c16_i32 : i32
    %13 = vector.broadcast %12 : i32 to vector<1x256xi32>
    %14 = arith.remsi %10, %13 : vector<1x256xi32>
    %c0_i32_10 = arith.constant 0 : i32
    %15 = vector.broadcast %c0_i32_10 : i32 to vector<1x256xi32>
    %16 = arith.cmpi ne, %14, %15 : vector<1x256xi32>
    %c0_i32_11 = arith.constant 0 : i32
    %17 = vector.broadcast %c0_i32_11 : i32 to vector<1x256xi32>
    %18 = arith.cmpi slt, %14, %17 : vector<1x256xi32>
    %c0_i32_12 = arith.constant 0 : i32
    %19 = arith.cmpi slt, %12, %c0_i32_12 : i32
    %20 = vector.broadcast %19 : i1 to vector<1x256xi1>
    %21 = vector.broadcast %20 : vector<1x256xi1> to vector<1x256xi1>
    %22 = arith.xori %18, %21 : vector<1x256xi1>
    %23 = arith.andi %22, %16 : vector<1x256xi1>
    %24 = vector.broadcast %12 : i32 to vector<1x256xi32>
    %25 = arith.addi %14, %24 : vector<1x256xi32>
    %26 = arith.select %23, %25, %14 : vector<1x256xi1>, vector<1x256xi32>
    %c5_i32 = arith.constant 5 : i32
    %27 = vector.broadcast %c5_i32 : i32 to vector<1x256xi32>
    %28 = arith.cmpi sge, %26, %27 : vector<1x256xi32>
    %c21_i32 = arith.constant 21 : i32
    %29 = vector.broadcast %c21_i32 : i32 to vector<1x256xi32>
    %30 = arith.cmpi slt, %26, %29 : vector<1x256xi32>
    %31 = arith.andi %28, %30 : vector<1x256xi1>
    %32 = arith.extui %31 : vector<1x256xi1> to vector<1x256xi32>
    %33 = arith.sitofp %32 : vector<1x256xi32> to vector<1x256xf32>
    %c0_13 = arith.constant 0 : index
    %c0_14 = arith.constant 0 : index
    %34 = vector.load %arg10[%c0_13, %c0_14] : memref<16x426xf32, #tpu.memory_space<vmem>>, vector<16x256xf32>
    %35 = vector.broadcast %33 : vector<1x256xf32> to vector<16x256xf32>
    %36 = arith.mulf %34, %35 : vector<16x256xf32>
    %c0_15 = arith.constant 0 : index
    %c0_16 = arith.constant 0 : index
    %c0_17 = arith.constant 0 : index
    %37 = vector.load %arg11[%c0_15, %c0_16, %c0_17] : memref<11x176x256xf32, #tpu.memory_space<vmem>>, vector<1x16x256xf32>
    %38 = vector.shape_cast %37 : vector<1x16x256xf32> to vector<16x256xf32>
    %39 = vector.shape_cast %36 : vector<16x256xf32> to vector<1x16x256xf32>
    tpu.vector_store %arg11[%c0_15, %c0_16, %c0_17], %39 {strides = array<i32>} : memref<11x176x256xf32, #tpu.memory_space<vmem>>, vector<1x16x256xf32>,
    %c0_18 = arith.constant 0 : index
    %c16 = arith.constant 16 : index
    %40 = vector.load %arg10[%c0_18, %c16] : memref<16x426xf32, #tpu.memory_space<vmem>>, vector<16x256xf32>
    %41 = vector.broadcast %33 : vector<1x256xf32> to vector<16x256xf32>
    %42 = arith.mulf %40, %41 : vector<16x256xf32>
    %c1 = arith.constant 1 : index
    %c0_19 = arith.constant 0 : index
    %c0_20 = arith.constant 0 : index
    %43 = vector.load %arg11[%c1, %c0_19, %c0_20] : memref<11x176x256xf32, #tpu.memory_space<vmem>>, vector<1x16x256xf32>
    %44 = vector.shape_cast %43 : vector<1x16x256xf32> to vector<16x256xf32>
    %45 = vector.shape_cast %42 : vector<16x256xf32> to vector<1x16x256xf32>
    tpu.vector_store %arg11[%c1, %c0_19, %c0_20], %45 {strides = array<i32>} : memref<11x176x256xf32, #tpu.memory_space<vmem>>, vector<1x16x256xf32>,
    %c0_21 = arith.constant 0 : index
    %c32 = arith.constant 32 : index
    %46 = vector.load %arg10[%c0_21, %c32] : memref<16x426xf32, #tpu.memory_space<vmem>>, vector<16x256xf32>
    %47 = vector.broadcast %33 : vector<1x256xf32> to vector<16x256xf32>
    %48 = arith.mulf %46, %47 : vector<16x256xf32>
    %c2 = arith.constant 2 : index
    %c0_22 = arith.constant 0 : index
    %c0_23 = arith.constant 0 : index
    %49 = vector.load %arg11[%c2, %c0_22, %c0_23] : memref<11x176x256xf32, #tpu.memory_space<vmem>>, vector<1x16x256xf32>
    %50 = vector.shape_cast %49 : vector<1x16x256xf32> to vector<16x256xf32>
    %51 = vector.shape_cast %48 : vector<16x256xf32> to vector<1x16x256xf32>
    tpu.vector_store %arg11[%c2, %c0_22, %c0_23], %51 {strides = array<i32>} : memref<11x176x256xf32, #tpu.memory_space<vmem>>, vector<1x16x256xf32>,
    %c0_24 = arith.constant 0 : index
    %c48 = arith.constant 48 : index
    %52 = vector.load %arg10[%c0_24, %c48] : memref<16x426xf32, #tpu.memory_space<vmem>>, vector<16x256xf32>
    %53 = vector.broadcast %33 : vector<1x256xf32> to vector<16x256xf32>
    %54 = arith.mulf %52, %53 : vector<16x256xf32>
    %c3 = arith.constant 3 : index
    %c0_25 = arith.constant 0 : index
    %c0_26 = arith.constant 0 : index
    %55 = vector.load %arg11[%c3, %c0_25, %c0_26] : memref<11x176x256xf32, #tpu.memory_space<vmem>>, vector<1x16x256xf32>
    %56 = vector.shape_cast %55 : vector<1x16x256xf32> to vector<16x256xf32>
    %57 = vector.shape_cast %54 : vector<16x256xf32> to vector<1x16x256xf32>
    tpu.vector_store %arg11[%c3, %c0_25, %c0_26], %57 {strides = array<i32>} : memref<11x176x256xf32, #tpu.memory_space<vmem>>, vector<1x16x256xf32>,
    %c0_27 = arith.constant 0 : index
    %c64 = arith.constant 64 : index
    %58 = vector.load %arg10[%c0_27, %c64] : memref<16x426xf32, #tpu.memory_space<vmem>>, vector<16x256xf32>
    %59 = vector.broadcast %33 : vector<1x256xf32> to vector<16x256xf32>
    %60 = arith.mulf %58, %59 : vector<16x256xf32>
    %c4 = arith.constant 4 : index
    %c0_28 = arith.constant 0 : index
    %c0_29 = arith.constant 0 : index
    %61 = vector.load %arg11[%c4, %c0_28, %c0_29] : memref<11x176x256xf32, #tpu.memory_space<vmem>>, vector<1x16x256xf32>
    %62 = vector.shape_cast %61 : vector<1x16x256xf32> to vector<16x256xf32>
    %63 = vector.shape_cast %60 : vector<16x256xf32> to vector<1x16x256xf32>
    tpu.vector_store %arg11[%c4, %c0_28, %c0_29], %63 {strides = array<i32>} : memref<11x176x256xf32, #tpu.memory_space<vmem>>, vector<1x16x256xf32>,
    %c0_30 = arith.constant 0 : index
    %c80 = arith.constant 80 : index
    %64 = vector.load %arg10[%c0_30, %c80] : memref<16x426xf32, #tpu.memory_space<vmem>>, vector<16x256xf32>
    %65 = vector.broadcast %33 : vector<1x256xf32> to vector<16x256xf32>
    %66 = arith.mulf %64, %65 : vector<16x256xf32>
    %c5 = arith.constant 5 : index
    %c0_31 = arith.constant 0 : index
    %c0_32 = arith.constant 0 : index
    %67 = vector.load %arg11[%c5, %c0_31, %c0_32] : memref<11x176x256xf32, #tpu.memory_space<vmem>>, vector<1x16x256xf32>
    %68 = vector.shape_cast %67 : vector<1x16x256xf32> to vector<16x256xf32>
    %69 = vector.shape_cast %66 : vector<16x256xf32> to vector<1x16x256xf32>
    tpu.vector_store %arg11[%c5, %c0_31, %c0_32], %69 {strides = array<i32>} : memref<11x176x256xf32, #tpu.memory_space<vmem>>, vector<1x16x256xf32>,
    %c0_33 = arith.constant 0 : index
    %c96 = arith.constant 96 : index
    %70 = vector.load %arg10[%c0_33, %c96] : memref<16x426xf32, #tpu.memory_space<vmem>>, vector<16x256xf32>
    %71 = vector.broadcast %33 : vector<1x256xf32> to vector<16x256xf32>
    %72 = arith.mulf %70, %71 : vector<16x256xf32>
    %c6 = arith.constant 6 : index
    %c0_34 = arith.constant 0 : index
    %c0_35 = arith.constant 0 : index
    %73 = vector.load %arg11[%c6, %c0_34, %c0_35] : memref<11x176x256xf32, #tpu.memory_space<vmem>>, vector<1x16x256xf32>
    %74 = vector.shape_cast %73 : vector<1x16x256xf32> to vector<16x256xf32>
    %75 = vector.shape_cast %72 : vector<16x256xf32> to vector<1x16x256xf32>
    tpu.vector_store %arg11[%c6, %c0_34, %c0_35], %75 {strides = array<i32>} : memref<11x176x256xf32, #tpu.memory_space<vmem>>, vector<1x16x256xf32>,
    %c0_36 = arith.constant 0 : index
    %c112 = arith.constant 112 : index
    %76 = vector.load %arg10[%c0_36, %c112] : memref<16x426xf32, #tpu.memory_space<vmem>>, vector<16x256xf32>
    %77 = vector.broadcast %33 : vector<1x256xf32> to vector<16x256xf32>
    %78 = arith.mulf %76, %77 : vector<16x256xf32>
    %c7 = arith.constant 7 : index
    %c0_37 = arith.constant 0 : index
    %c0_38 = arith.constant 0 : index
    %79 = vector.load %arg11[%c7, %c0_37, %c0_38] : memref<11x176x256xf32, #tpu.memory_space<vmem>>, vector<1x16x256xf32>
    %80 = vector.shape_cast %79 : vector<1x16x256xf32> to vector<16x256xf32>
    %81 = vector.shape_cast %78 : vector<16x256xf32> to vector<1x16x256xf32>
    tpu.vector_store %arg11[%c7, %c0_37, %c0_38], %81 {strides = array<i32>} : memref<11x176x256xf32, #tpu.memory_space<vmem>>, vector<1x16x256xf32>,
    %c0_39 = arith.constant 0 : index
    %c128 = arith.constant 128 : index
    %82 = vector.load %arg10[%c0_39, %c128] : memref<16x426xf32, #tpu.memory_space<vmem>>, vector<16x256xf32>
    %83 = vector.broadcast %33 : vector<1x256xf32> to vector<16x256xf32>
    %84 = arith.mulf %82, %83 : vector<16x256xf32>
    %c8 = arith.constant 8 : index
    %c0_40 = arith.constant 0 : index
    %c0_41 = arith.constant 0 : index
    %85 = vector.load %arg11[%c8, %c0_40, %c0_41] : memref<11x176x256xf32, #tpu.memory_space<vmem>>, vector<1x16x256xf32>
    %86 = vector.shape_cast %85 : vector<1x16x256xf32> to vector<16x256xf32>
    %87 = vector.shape_cast %84 : vector<16x256xf32> to vector<1x16x256xf32>
    tpu.vector_store %arg11[%c8, %c0_40, %c0_41], %87 {strides = array<i32>} : memref<11x176x256xf32, #tpu.memory_space<vmem>>, vector<1x16x256xf32>,
    %c0_42 = arith.constant 0 : index
    %c144 = arith.constant 144 : index
    %88 = vector.load %arg10[%c0_42, %c144] : memref<16x426xf32, #tpu.memory_space<vmem>>, vector<16x256xf32>
    %89 = vector.broadcast %33 : vector<1x256xf32> to vector<16x256xf32>
    %90 = arith.mulf %88, %89 : vector<16x256xf32>
    %c9 = arith.constant 9 : index
    %c0_43 = arith.constant 0 : index
    %c0_44 = arith.constant 0 : index
    %91 = vector.load %arg11[%c9, %c0_43, %c0_44] : memref<11x176x256xf32, #tpu.memory_space<vmem>>, vector<1x16x256xf32>
    %92 = vector.shape_cast %91 : vector<1x16x256xf32> to vector<16x256xf32>
    %93 = vector.shape_cast %90 : vector<16x256xf32> to vector<1x16x256xf32>
    tpu.vector_store %arg11[%c9, %c0_43, %c0_44], %93 {strides = array<i32>} : memref<11x176x256xf32, #tpu.memory_space<vmem>>, vector<1x16x256xf32>,
    %c0_45 = arith.constant 0 : index
    %c160 = arith.constant 160 : index
    %94 = vector.load %arg10[%c0_45, %c160] : memref<16x426xf32, #tpu.memory_space<vmem>>, vector<16x256xf32>
    %95 = vector.broadcast %33 : vector<1x256xf32> to vector<16x256xf32>
    %96 = arith.mulf %94, %95 : vector<16x256xf32>
    %c10 = arith.constant 10 : index
    %c0_46 = arith.constant 0 : index
    %c0_47 = arith.constant 0 : index
    %97 = vector.load %arg11[%c10, %c0_46, %c0_47] : memref<11x176x256xf32, #tpu.memory_space<vmem>>, vector<1x16x256xf32>
    %98 = vector.shape_cast %97 : vector<1x16x256xf32> to vector<16x256xf32>
    %99 = vector.shape_cast %96 : vector<16x256xf32> to vector<1x16x256xf32>
    tpu.vector_store %arg11[%c10, %c0_46, %c0_47], %99 {strides = array<i32>} : memref<11x176x256xf32, #tpu.memory_space<vmem>>, vector<1x16x256xf32>,
    %c4_i32 = arith.constant 4 : i32
    %100 = vector.broadcast %c4_i32 : i32 to vector<1x256xi32>
    %101 = arith.cmpi sge, %26, %100 : vector<1x256xi32>
    %c20_i32 = arith.constant 20 : i32
    %102 = vector.broadcast %c20_i32 : i32 to vector<1x256xi32>
    %103 = arith.cmpi slt, %26, %102 : vector<1x256xi32>
    %104 = arith.andi %101, %103 : vector<1x256xi1>
    %105 = arith.extui %104 : vector<1x256xi1> to vector<1x256xi32>
    %106 = arith.sitofp %105 : vector<1x256xi32> to vector<1x256xf32>
    %c0_48 = arith.constant 0 : index
    %c1_49 = arith.constant 1 : index
    %107 = vector.load %arg10[%c0_48, %c1_49] : memref<16x426xf32, #tpu.memory_space<vmem>>, vector<16x256xf32>
    %108 = vector.broadcast %106 : vector<1x256xf32> to vector<16x256xf32>
    %109 = arith.mulf %107, %108 : vector<16x256xf32>
    %c0_50 = arith.constant 0 : index
    %c16_51 = arith.constant 16 : index
    %c0_52 = arith.constant 0 : index
    %110 = vector.load %arg11[%c0_50, %c16_51, %c0_52] : memref<11x176x256xf32, #tpu.memory_space<vmem>>, vector<1x16x256xf32>
    %111 = vector.shape_cast %110 : vector<1x16x256xf32> to vector<16x256xf32>
    %112 = vector.shape_cast %109 : vector<16x256xf32> to vector<1x16x256xf32>
    tpu.vector_store %arg11[%c0_50, %c16_51, %c0_52], %112 {strides = array<i32>} : memref<11x176x256xf32, #tpu.memory_space<vmem>>, vector<1x16x256xf32>,
    %c0_53 = arith.constant 0 : index
    %c17 = arith.constant 17 : index
    %113 = vector.load %arg10[%c0_53, %c17] : memref<16x426xf32, #tpu.memory_space<vmem>>, vector<16x256xf32>
    %114 = vector.broadcast %106 : vector<1x256xf32> to vector<16x256xf32>
    %115 = arith.mulf %113, %114 : vector<16x256xf32>
    %c1_54 = arith.constant 1 : index
    %c16_55 = arith.constant 16 : index
    %c0_56 = arith.constant 0 : index
    %116 = vector.load %arg11[%c1_54, %c16_55, %c0_56] : memref<11x176x256xf32, #tpu.memory_space<vmem>>, vector<1x16x256xf32>
    %117 = vector.shape_cast %116 : vector<1x16x256xf32> to vector<16x256xf32>
    %118 = vector.shape_cast %115 : vector<16x256xf32> to vector<1x16x256xf32>
    tpu.vector_store %arg11[%c1_54, %c16_55, %c0_56], %118 {strides = array<i32>} : memref<11x176x256xf32, #tpu.memory_space<vmem>>, vector<1x16x256xf32>,
    %c0_57 = arith.constant 0 : index
    %c33 = arith.constant 33 : index
    %119 = vector.load %arg10[%c0_57, %c33] : memref<16x426xf32, #tpu.memory_space<vmem>>, vector<16x256xf32>
    %120 = vector.broadcast %106 : vector<1x256xf32> to vector<16x256xf32>
    %121 = arith.mulf %119, %120 : vector<16x256xf32>
    %c2_58 = arith.constant 2 : index
    %c16_59 = arith.constant 16 : index
    %c0_60 = arith.constant 0 : index
    %122 = vector.load %arg11[%c2_58, %c16_59, %c0_60] : memref<11x176x256xf32, #tpu.memory_space<vmem>>, vector<1x16x256xf32>
    %123 = vector.shape_cast %122 : vector<1x16x256xf32> to vector<16x256xf32>
    %124 = vector.shape_cast %121 : vector<16x256xf32> to vector<1x16x256xf32>
    tpu.vector_store %arg11[%c2_58, %c16_59, %c0_60], %124 {strides = array<i32>} : memref<11x176x256xf32, #tpu.memory_space<vmem>>, vector<1x16x256xf32>,
    %c0_61 = arith.constant 0 : index
    %c49 = arith.constant 49 : index
    %125 = vector.load %arg10[%c0_61, %c49] : memref<16x426xf32, #tpu.memory_space<vmem>>, vector<16x256xf32>
    %126 = vector.broadcast %106 : vector<1x256xf32> to vector<16x256xf32>
    %127 = arith.mulf %125, %126 : vector<16x256xf32>
    %c3_62 = arith.constant 3 : index
    %c16_63 = arith.constant 16 : index
    %c0_64 = arith.constant 0 : index
    %128 = vector.load %arg11[%c3_62, %c16_63, %c0_64] : memref<11x176x256xf32, #tpu.memory_space<vmem>>, vector<1x16x256xf32>
    %129 = vector.shape_cast %128 : vector<1x16x256xf32> to vector<16x256xf32>
    %130 = vector.shape_cast %127 : vector<16x256xf32> to vector<1x16x256xf32>
    tpu.vector_store %arg11[%c3_62, %c16_63, %c0_64], %130 {strides = array<i32>} : memref<11x176x256xf32, #tpu.memory_space<vmem>>, vector<1x16x256xf32>,
    %c0_65 = arith.constant 0 : index
    %c65 = arith.constant 65 : index
    %131 = vector.load %arg10[%c0_65, %c65] : memref<16x426xf32, #tpu.memory_space<vmem>>, vector<16x256xf32>
    %132 = vector.broadcast %106 : vector<1x256xf32> to vector<16x256xf32>
    %133 = arith.mulf %131, %132 : vector<16x256xf32>
    %c4_66 = arith.constant 4 : index
    %c16_67 = arith.constant 16 : index
    %c0_68 = arith.constant 0 : index
    %134 = vector.load %arg11[%c4_66, %c16_67, %c0_68] : memref<11x176x256xf32, #tpu.memory_space<vmem>>, vector<1x16x256xf32>
    %135 = vector.shape_cast %134 : vector<1x16x256xf32> to vector<16x256xf32>
    %136 = vector.shape_cast %133 : vector<16x256xf32> to vector<1x16x256xf32>
    tpu.vector_store %arg11[%c4_66, %c16_67, %c0_68], %136 {strides = array<i32>} : memref<11x176x256xf32, #tpu.memory_space<vmem>>, vector<1x16x256xf32>,
    %c0_69 = arith.constant 0 : index
    %c81 = arith.constant 81 : index
    %137 = vector.load %arg10[%c0_69, %c81] : memref<16x426xf32, #tpu.memory_space<vmem>>, vector<16x256xf32>
    %138 = vector.broadcast %106 : vector<1x256xf32> to vector<16x256xf32>
    %139 = arith.mulf %137, %138 : vector<16x256xf32>
    %c5_70 = arith.constant 5 : index
    %c16_71 = arith.constant 16 : index
    %c0_72 = arith.constant 0 : index
    %140 = vector.load %arg11[%c5_70, %c16_71, %c0_72] : memref<11x176x256xf32, #tpu.memory_space<vmem>>, vector<1x16x256xf32>
    %141 = vector.shape_cast %140 : vector<1x16x256xf32> to vector<16x256xf32>
    %142 = vector.shape_cast %139 : vector<16x256xf32> to vector<1x16x256xf32>
    tpu.vector_store %arg11[%c5_70, %c16_71, %c0_72], %142 {strides = array<i32>} : memref<11x176x256xf32, #tpu.memory_space<vmem>>, vector<1x16x256xf32>,
    %c0_73 = arith.constant 0 : index
    %c97 = arith.constant 97 : index
    %143 = vector.load %arg10[%c0_73, %c97] : memref<16x426xf32, #tpu.memory_space<vmem>>, vector<16x256xf32>
    %144 = vector.broadcast %106 : vector<1x256xf32> to vector<16x256xf32>
    %145 = arith.mulf %143, %144 : vector<16x256xf32>
    %c6_74 = arith.constant 6 : index
    %c16_75 = arith.constant 16 : index
    %c0_76 = arith.constant 0 : index
    %146 = vector.load %arg11[%c6_74, %c16_75, %c0_76] : memref<11x176x256xf32, #tpu.memory_space<vmem>>, vector<1x16x256xf32>
    %147 = vector.shape_cast %146 : vector<1x16x256xf32> to vector<16x256xf32>
    %148 = vector.shape_cast %145 : vector<16x256xf32> to vector<1x16x256xf32>
    tpu.vector_store %arg11[%c6_74, %c16_75, %c0_76], %148 {strides = array<i32>} : memref<11x176x256xf32, #tpu.memory_space<vmem>>, vector<1x16x256xf32>,
    %c0_77 = arith.constant 0 : index
    %c113 = arith.constant 113 : index
    %149 = vector.load %arg10[%c0_77, %c113] : memref<16x426xf32, #tpu.memory_space<vmem>>, vector<16x256xf32>
    %150 = vector.broadcast %106 : vector<1x256xf32> to vector<16x256xf32>
    %151 = arith.mulf %149, %150 : vector<16x256xf32>
    %c7_78 = arith.constant 7 : index
    %c16_79 = arith.constant 16 : index
    %c0_80 = arith.constant 0 : index
    %152 = vector.load %arg11[%c7_78, %c16_79, %c0_80] : memref<11x176x256xf32, #tpu.memory_space<vmem>>, vector<1x16x256xf32>
    %153 = vector.shape_cast %152 : vector<1x16x256xf32> to vector<16x256xf32>
    %154 = vector.shape_cast %151 : vector<16x256xf32> to vector<1x16x256xf32>
    tpu.vector_store %arg11[%c7_78, %c16_79, %c0_80], %154 {strides = array<i32>} : memref<11x176x256xf32, #tpu.memory_space<vmem>>, vector<1x16x256xf32>,
    %c0_81 = arith.constant 0 : index
    %c129 = arith.constant 129 : index
    %155 = vector.load %arg10[%c0_81, %c129] : memref<16x426xf32, #tpu.memory_space<vmem>>, vector<16x256xf32>
    %156 = vector.broadcast %106 : vector<1x256xf32> to vector<16x256xf32>
    %157 = arith.mulf %155, %156 : vector<16x256xf32>
    %c8_82 = arith.constant 8 : index
    %c16_83 = arith.constant 16 : index
    %c0_84 = arith.constant 0 : index
    %158 = vector.load %arg11[%c8_82, %c16_83, %c0_84] : memref<11x176x256xf32, #tpu.memory_space<vmem>>, vector<1x16x256xf32>
    %159 = vector.shape_cast %158 : vector<1x16x256xf32> to vector<16x256xf32>
    %160 = vector.shape_cast %157 : vector<16x256xf32> to vector<1x16x256xf32>
    tpu.vector_store %arg11[%c8_82, %c16_83, %c0_84], %160 {strides = array<i32>} : memref<11x176x256xf32, #tpu.memory_space<vmem>>, vector<1x16x256xf32>,
    %c0_85 = arith.constant 0 : index
    %c145 = arith.constant 145 : index
    %161 = vector.load %arg10[%c0_85, %c145] : memref<16x426xf32, #tpu.memory_space<vmem>>, vector<16x256xf32>
    %162 = vector.broadcast %106 : vector<1x256xf32> to vector<16x256xf32>
    %163 = arith.mulf %161, %162 : vector<16x256xf32>
    %c9_86 = arith.constant 9 : index
    %c16_87 = arith.constant 16 : index
    %c0_88 = arith.constant 0 : index
    %164 = vector.load %arg11[%c9_86, %c16_87, %c0_88] : memref<11x176x256xf32, #tpu.memory_space<vmem>>, vector<1x16x256xf32>
    %165 = vector.shape_cast %164 : vector<1x16x256xf32> to vector<16x256xf32>
    %166 = vector.shape_cast %163 : vector<16x256xf32> to vector<1x16x256xf32>
    tpu.vector_store %arg11[%c9_86, %c16_87, %c0_88], %166 {strides = array<i32>} : memref<11x176x256xf32, #tpu.memory_space<vmem>>, vector<1x16x256xf32>,
    %c0_89 = arith.constant 0 : index
    %c161 = arith.constant 161 : index
    %167 = vector.load %arg10[%c0_89, %c161] : memref<16x426xf32, #tpu.memory_space<vmem>>, vector<16x256xf32>
    %168 = vector.broadcast %106 : vector<1x256xf32> to vector<16x256xf32>
    %169 = arith.mulf %167, %168 : vector<16x256xf32>
    %c10_90 = arith.constant 10 : index
    %c16_91 = arith.constant 16 : index
    %c0_92 = arith.constant 0 : index
    %170 = vector.load %arg11[%c10_90, %c16_91, %c0_92] : memref<11x176x256xf32, #tpu.memory_space<vmem>>, vector<1x16x256xf32>
    %171 = vector.shape_cast %170 : vector<1x16x256xf32> to vector<16x256xf32>
    %172 = vector.shape_cast %169 : vector<16x256xf32> to vector<1x16x256xf32>
    tpu.vector_store %arg11[%c10_90, %c16_91, %c0_92], %172 {strides = array<i32>} : memref<11x176x256xf32, #tpu.memory_space<vmem>>, vector<1x16x256xf32>,
    %c3_i32 = arith.constant 3 : i32
    %173 = vector.broadcast %c3_i32 : i32 to vector<1x256xi32>
    %174 = arith.cmpi sge, %26, %173 : vector<1x256xi32>
    %c19_i32 = arith.constant 19 : i32
    %175 = vector.broadcast %c19_i32 : i32 to vector<1x256xi32>
    %176 = arith.cmpi slt, %26, %175 : vector<1x256xi32>
    %177 = arith.andi %174, %176 : vector<1x256xi1>
    %178 = arith.extui %177 : vector<1x256xi1> to vector<1x256xi32>
    %179 = arith.sitofp %178 : vector<1x256xi32> to vector<1x256xf32>
    %c0_93 = arith.constant 0 : index
    %c2_94 = arith.constant 2 : index
    %180 = vector.load %arg10[%c0_93, %c2_94] : memref<16x426xf32, #tpu.memory_space<vmem>>, vector<16x256xf32>
    %181 = vector.broadcast %179 : vector<1x256xf32> to vector<16x256xf32>
    %182 = arith.mulf %180, %181 : vector<16x256xf32>
    %c0_95 = arith.constant 0 : index
    %c32_96 = arith.constant 32 : index
    %c0_97 = arith.constant 0 : index
    %183 = vector.load %arg11[%c0_95, %c32_96, %c0_97] : memref<11x176x256xf32, #tpu.memory_space<vmem>>, vector<1x16x256xf32>
    %184 = vector.shape_cast %183 : vector<1x16x256xf32> to vector<16x256xf32>
    %185 = vector.shape_cast %182 : vector<16x256xf32> to vector<1x16x256xf32>
    tpu.vector_store %arg11[%c0_95, %c32_96, %c0_97], %185 {strides = array<i32>} : memref<11x176x256xf32, #tpu.memory_space<vmem>>, vector<1x16x256xf32>,
    %c0_98 = arith.constant 0 : index
    %c18 = arith.constant 18 : index
    %186 = vector.load %arg10[%c0_98, %c18] : memref<16x426xf32, #tpu.memory_space<vmem>>, vector<16x256xf32>
    %187 = vector.broadcast %179 : vector<1x256xf32> to vector<16x256xf32>
    %188 = arith.mulf %186, %187 : vector<16x256xf32>
    %c1_99 = arith.constant 1 : index
    %c32_100 = arith.constant 32 : index
    %c0_101 = arith.constant 0 : index
    %189 = vector.load %arg11[%c1_99, %c32_100, %c0_101] : memref<11x176x256xf32, #tpu.memory_space<vmem>>, vector<1x16x256xf32>
    %190 = vector.shape_cast %189 : vector<1x16x256xf32> to vector<16x256xf32>
    %191 = vector.shape_cast %188 : vector<16x256xf32> to vector<1x16x256xf32>
    tpu.vector_store %arg11[%c1_99, %c32_100, %c0_101], %191 {strides = array<i32>} : memref<11x176x256xf32, #tpu.memory_space<vmem>>, vector<1x16x256xf32>,
    %c0_102 = arith.constant 0 : index
    %c34 = arith.constant 34 : index
    %192 = vector.load %arg10[%c0_102, %c34] : memref<16x426xf32, #tpu.memory_space<vmem>>, vector<16x256xf32>
    %193 = vector.broadcast %179 : vector<1x256xf32> to vector<16x256xf32>
    %194 = arith.mulf %192, %193 : vector<16x256xf32>
    %c2_103 = arith.constant 2 : index
    %c32_104 = arith.constant 32 : index
    %c0_105 = arith.constant 0 : index
    %195 = vector.load %arg11[%c2_103, %c32_104, %c0_105] : memref<11x176x256xf32, #tpu.memory_space<vmem>>, vector<1x16x256xf32>
    %196 = vector.shape_cast %195 : vector<1x16x256xf32> to vector<16x256xf32>
    %197 = vector.shape_cast %194 : vector<16x256xf32> to vector<1x16x256xf32>
    tpu.vector_store %arg11[%c2_103, %c32_104, %c0_105], %197 {strides = array<i32>} : memref<11x176x256xf32, #tpu.memory_space<vmem>>, vector<1x16x256xf32>,
    %c0_106 = arith.constant 0 : index
    %c50 = arith.constant 50 : index
    %198 = vector.load %arg10[%c0_106, %c50] : memref<16x426xf32, #tpu.memory_space<vmem>>, vector<16x256xf32>
    %199 = vector.broadcast %179 : vector<1x256xf32> to vector<16x256xf32>
    %200 = arith.mulf %198, %199 : vector<16x256xf32>
    %c3_107 = arith.constant 3 : index
    %c32_108 = arith.constant 32 : index
    %c0_109 = arith.constant 0 : index
    %201 = vector.load %arg11[%c3_107, %c32_108, %c0_109] : memref<11x176x256xf32, #tpu.memory_space<vmem>>, vector<1x16x256xf32>
    %202 = vector.shape_cast %201 : vector<1x16x256xf32> to vector<16x256xf32>
    %203 = vector.shape_cast %200 : vector<16x256xf32> to vector<1x16x256xf32>
    tpu.vector_store %arg11[%c3_107, %c32_108, %c0_109], %203 {strides = array<i32>} : memref<11x176x256xf32, #tpu.memory_space<vmem>>, vector<1x16x256xf32>,
    %c0_110 = arith.constant 0 : index
    %c66 = arith.constant 66 : index
    %204 = vector.load %arg10[%c0_110, %c66] : memref<16x426xf32, #tpu.memory_space<vmem>>, vector<16x256xf32>
    %205 = vector.broadcast %179 : vector<1x256xf32> to vector<16x256xf32>
    %206 = arith.mulf %204, %205 : vector<16x256xf32>
    %c4_111 = arith.constant 4 : index
    %c32_112 = arith.constant 32 : index
    %c0_113 = arith.constant 0 : index
    %207 = vector.load %arg11[%c4_111, %c32_112, %c0_113] : memref<11x176x256xf32, #tpu.memory_space<vmem>>, vector<1x16x256xf32>
    %208 = vector.shape_cast %207 : vector<1x16x256xf32> to vector<16x256xf32>
    %209 = vector.shape_cast %206 : vector<16x256xf32> to vector<1x16x256xf32>
    tpu.vector_store %arg11[%c4_111, %c32_112, %c0_113], %209 {strides = array<i32>} : memref<11x176x256xf32, #tpu.memory_space<vmem>>, vector<1x16x256xf32>,
    %c0_114 = arith.constant 0 : index
    %c82 = arith.constant 82 : index
    %210 = vector.load %arg10[%c0_114, %c82] : memref<16x426xf32, #tpu.memory_space<vmem>>, vector<16x256xf32>
    %211 = vector.broadcast %179 : vector<1x256xf32> to vector<16x256xf32>
    %212 = arith.mulf %210, %211 : vector<16x256xf32>
    %c5_115 = arith.constant 5 : index
    %c32_116 = arith.constant 32 : index
    %c0_117 = arith.constant 0 : index
    %213 = vector.load %arg11[%c5_115, %c32_116, %c0_117] : memref<11x176x256xf32, #tpu.memory_space<vmem>>, vector<1x16x256xf32>
    %214 = vector.shape_cast %213 : vector<1x16x256xf32> to vector<16x256xf32>
    %215 = vector.shape_cast %212 : vector<16x256xf32> to vector<1x16x256xf32>
    tpu.vector_store %arg11[%c5_115, %c32_116, %c0_117], %215 {strides = array<i32>} : memref<11x176x256xf32, #tpu.memory_space<vmem>>, vector<1x16x256xf32>,
    %c0_118 = arith.constant 0 : index
    %c98 = arith.constant 98 : index
    %216 = vector.load %arg10[%c0_118, %c98] : memref<16x426xf32, #tpu.memory_space<vmem>>, vector<16x256xf32>
    %217 = vector.broadcast %179 : vector<1x256xf32> to vector<16x256xf32>
    %218 = arith.mulf %216, %217 : vector<16x256xf32>
    %c6_119 = arith.constant 6 : index
    %c32_120 = arith.constant 32 : index
    %c0_121 = arith.constant 0 : index
    %219 = vector.load %arg11[%c6_119, %c32_120, %c0_121] : memref<11x176x256xf32, #tpu.memory_space<vmem>>, vector<1x16x256xf32>
    %220 = vector.shape_cast %219 : vector<1x16x256xf32> to vector<16x256xf32>
    %221 = vector.shape_cast %218 : vector<16x256xf32> to vector<1x16x256xf32>
    tpu.vector_store %arg11[%c6_119, %c32_120, %c0_121], %221 {strides = array<i32>} : memref<11x176x256xf32, #tpu.memory_space<vmem>>, vector<1x16x256xf32>,
    %c0_122 = arith.constant 0 : index
    %c114 = arith.constant 114 : index
    %222 = vector.load %arg10[%c0_122, %c114] : memref<16x426xf32, #tpu.memory_space<vmem>>, vector<16x256xf32>
    %223 = vector.broadcast %179 : vector<1x256xf32> to vector<16x256xf32>
    %224 = arith.mulf %222, %223 : vector<16x256xf32>
    %c7_123 = arith.constant 7 : index
    %c32_124 = arith.constant 32 : index
    %c0_125 = arith.constant 0 : index
    %225 = vector.load %arg11[%c7_123, %c32_124, %c0_125] : memref<11x176x256xf32, #tpu.memory_space<vmem>>, vector<1x16x256xf32>
    %226 = vector.shape_cast %225 : vector<1x16x256xf32> to vector<16x256xf32>
    %227 = vector.shape_cast %224 : vector<16x256xf32> to vector<1x16x256xf32>
    tpu.vector_store %arg11[%c7_123, %c32_124, %c0_125], %227 {strides = array<i32>} : memref<11x176x256xf32, #tpu.memory_space<vmem>>, vector<1x16x256xf32>,
    %c0_126 = arith.constant 0 : index
    %c130 = arith.constant 130 : index
    %228 = vector.load %arg10[%c0_126, %c130] : memref<16x426xf32, #tpu.memory_space<vmem>>, vector<16x256xf32>
    %229 = vector.broadcast %179 : vector<1x256xf32> to vector<16x256xf32>
    %230 = arith.mulf %228, %229 : vector<16x256xf32>
    %c8_127 = arith.constant 8 : index
    %c32_128 = arith.constant 32 : index
    %c0_129 = arith.constant 0 : index
    %231 = vector.load %arg11[%c8_127, %c32_128, %c0_129] : memref<11x176x256xf32, #tpu.memory_space<vmem>>, vector<1x16x256xf32>
    %232 = vector.shape_cast %231 : vector<1x16x256xf32> to vector<16x256xf32>
    %233 = vector.shape_cast %230 : vector<16x256xf32> to vector<1x16x256xf32>
    tpu.vector_store %arg11[%c8_127, %c32_128, %c0_129], %233 {strides = array<i32>} : memref<11x176x256xf32, #tpu.memory_space<vmem>>, vector<1x16x256xf32>,
    %c0_130 = arith.constant 0 : index
    %c146 = arith.constant 146 : index
    %234 = vector.load %arg10[%c0_130, %c146] : memref<16x426xf32, #tpu.memory_space<vmem>>, vector<16x256xf32>
    %235 = vector.broadcast %179 : vector<1x256xf32> to vector<16x256xf32>
    %236 = arith.mulf %234, %235 : vector<16x256xf32>
    %c9_131 = arith.constant 9 : index
    %c32_132 = arith.constant 32 : index
    %c0_133 = arith.constant 0 : index
    %237 = vector.load %arg11[%c9_131, %c32_132, %c0_133] : memref<11x176x256xf32, #tpu.memory_space<vmem>>, vector<1x16x256xf32>
    %238 = vector.shape_cast %237 : vector<1x16x256xf32> to vector<16x256xf32>
    %239 = vector.shape_cast %236 : vector<16x256xf32> to vector<1x16x256xf32>
    tpu.vector_store %arg11[%c9_131, %c32_132, %c0_133], %239 {strides = array<i32>} : memref<11x176x256xf32, #tpu.memory_space<vmem>>, vector<1x16x256xf32>,
    %c0_134 = arith.constant 0 : index
    %c162 = arith.constant 162 : index
    %240 = vector.load %arg10[%c0_134, %c162] : memref<16x426xf32, #tpu.memory_space<vmem>>, vector<16x256xf32>
    %241 = vector.broadcast %179 : vector<1x256xf32> to vector<16x256xf32>
    %242 = arith.mulf %240, %241 : vector<16x256xf32>
    %c10_135 = arith.constant 10 : index
    %c32_136 = arith.constant 32 : index
    %c0_137 = arith.constant 0 : index
    %243 = vector.load %arg11[%c10_135, %c32_136, %c0_137] : memref<11x176x256xf32, #tpu.memory_space<vmem>>, vector<1x16x256xf32>
    %244 = vector.shape_cast %243 : vector<1x16x256xf32> to vector<16x256xf32>
    %245 = vector.shape_cast %242 : vector<16x256xf32> to vector<1x16x256xf32>
    tpu.vector_store %arg11[%c10_135, %c32_136, %c0_137], %245 {strides = array<i32>} : memref<11x176x256xf32, #tpu.memory_space<vmem>>, vector<1x16x256xf32>,
    %c2_i32 = arith.constant 2 : i32
    %246 = vector.broadcast %c2_i32 : i32 to vector<1x256xi32>
    %247 = arith.cmpi sge, %26, %246 : vector<1x256xi32>
    %c18_i32 = arith.constant 18 : i32
    %248 = vector.broadcast %c18_i32 : i32 to vector<1x256xi32>
    %249 = arith.cmpi slt, %26, %248 : vector<1x256xi32>
    %250 = arith.andi %247, %249 : vector<1x256xi1>
    %251 = arith.extui %250 : vector<1x256xi1> to vector<1x256xi32>
    %252 = arith.sitofp %251 : vector<1x256xi32> to vector<1x256xf32>
    %c0_138 = arith.constant 0 : index
    %c3_139 = arith.constant 3 : index
    %253 = vector.load %arg10[%c0_138, %c3_139] : memref<16x426xf32, #tpu.memory_space<vmem>>, vector<16x256xf32>
    %254 = vector.broadcast %252 : vector<1x256xf32> to vector<16x256xf32>
    %255 = arith.mulf %253, %254 : vector<16x256xf32>
    %c0_140 = arith.constant 0 : index
    %c48_141 = arith.constant 48 : index
    %c0_142 = arith.constant 0 : index
    %256 = vector.load %arg11[%c0_140, %c48_141, %c0_142] : memref<11x176x256xf32, #tpu.memory_space<vmem>>, vector<1x16x256xf32>
    %257 = vector.shape_cast %256 : vector<1x16x256xf32> to vector<16x256xf32>
    %258 = vector.shape_cast %255 : vector<16x256xf32> to vector<1x16x256xf32>
    tpu.vector_store %arg11[%c0_140, %c48_141, %c0_142], %258 {strides = array<i32>} : memref<11x176x256xf32, #tpu.memory_space<vmem>>, vector<1x16x256xf32>,
    %c0_143 = arith.constant 0 : index
    %c19 = arith.constant 19 : index
    %259 = vector.load %arg10[%c0_143, %c19] : memref<16x426xf32, #tpu.memory_space<vmem>>, vector<16x256xf32>
    %260 = vector.broadcast %252 : vector<1x256xf32> to vector<16x256xf32>
    %261 = arith.mulf %259, %260 : vector<16x256xf32>
    %c1_144 = arith.constant 1 : index
    %c48_145 = arith.constant 48 : index
    %c0_146 = arith.constant 0 : index
    %262 = vector.load %arg11[%c1_144, %c48_145, %c0_146] : memref<11x176x256xf32, #tpu.memory_space<vmem>>, vector<1x16x256xf32>
    %263 = vector.shape_cast %262 : vector<1x16x256xf32> to vector<16x256xf32>
    %264 = vector.shape_cast %261 : vector<16x256xf32> to vector<1x16x256xf32>
    tpu.vector_store %arg11[%c1_144, %c48_145, %c0_146], %264 {strides = array<i32>} : memref<11x176x256xf32, #tpu.memory_space<vmem>>, vector<1x16x256xf32>,
    %c0_147 = arith.constant 0 : index
    %c35 = arith.constant 35 : index
    %265 = vector.load %arg10[%c0_147, %c35] : memref<16x426xf32, #tpu.memory_space<vmem>>, vector<16x256xf32>
    %266 = vector.broadcast %252 : vector<1x256xf32> to vector<16x256xf32>
    %267 = arith.mulf %265, %266 : vector<16x256xf32>
    %c2_148 = arith.constant 2 : index
    %c48_149 = arith.constant 48 : index
    %c0_150 = arith.constant 0 : index
    %268 = vector.load %arg11[%c2_148, %c48_149, %c0_150] : memref<11x176x256xf32, #tpu.memory_space<vmem>>, vector<1x16x256xf32>
    %269 = vector.shape_cast %268 : vector<1x16x256xf32> to vector<16x256xf32>
    %270 = vector.shape_cast %267 : vector<16x256xf32> to vector<1x16x256xf32>
    tpu.vector_store %arg11[%c2_148, %c48_149, %c0_150], %270 {strides = array<i32>} : memref<11x176x256xf32, #tpu.memory_space<vmem>>, vector<1x16x256xf32>,
    %c0_151 = arith.constant 0 : index
    %c51 = arith.constant 51 : index
    %271 = vector.load %arg10[%c0_151, %c51] : memref<16x426xf32, #tpu.memory_space<vmem>>, vector<16x256xf32>
    %272 = vector.broadcast %252 : vector<1x256xf32> to vector<16x256xf32>
    %273 = arith.mulf %271, %272 : vector<16x256xf32>
    %c3_152 = arith.constant 3 : index
    %c48_153 = arith.constant 48 : index
    %c0_154 = arith.constant 0 : index
    %274 = vector.load %arg11[%c3_152, %c48_153, %c0_154] : memref<11x176x256xf32, #tpu.memory_space<vmem>>, vector<1x16x256xf32>
    %275 = vector.shape_cast %274 : vector<1x16x256xf32> to vector<16x256xf32>
    %276 = vector.shape_cast %273 : vector<16x256xf32> to vector<1x16x256xf32>
    tpu.vector_store %arg11[%c3_152, %c48_153, %c0_154], %276 {strides = array<i32>} : memref<11x176x256xf32, #tpu.memory_space<vmem>>, vector<1x16x256xf32>,
    %c0_155 = arith.constant 0 : index
    %c67 = arith.constant 67 : index
    %277 = vector.load %arg10[%c0_155, %c67] : memref<16x426xf32, #tpu.memory_space<vmem>>, vector<16x256xf32>
    %278 = vector.broadcast %252 : vector<1x256xf32> to vector<16x256xf32>
    %279 = arith.mulf %277, %278 : vector<16x256xf32>
    %c4_156 = arith.constant 4 : index
    %c48_157 = arith.constant 48 : index
    %c0_158 = arith.constant 0 : index
    %280 = vector.load %arg11[%c4_156, %c48_157, %c0_158] : memref<11x176x256xf32, #tpu.memory_space<vmem>>, vector<1x16x256xf32>
    %281 = vector.shape_cast %280 : vector<1x16x256xf32> to vector<16x256xf32>
    %282 = vector.shape_cast %279 : vector<16x256xf32> to vector<1x16x256xf32>
    tpu.vector_store %arg11[%c4_156, %c48_157, %c0_158], %282 {strides = array<i32>} : memref<11x176x256xf32, #tpu.memory_space<vmem>>, vector<1x16x256xf32>,
    %c0_159 = arith.constant 0 : index
    %c83 = arith.constant 83 : index
    %283 = vector.load %arg10[%c0_159, %c83] : memref<16x426xf32, #tpu.memory_space<vmem>>, vector<16x256xf32>
    %284 = vector.broadcast %252 : vector<1x256xf32> to vector<16x256xf32>
    %285 = arith.mulf %283, %284 : vector<16x256xf32>
    %c5_160 = arith.constant 5 : index
    %c48_161 = arith.constant 48 : index
    %c0_162 = arith.constant 0 : index
    %286 = vector.load %arg11[%c5_160, %c48_161, %c0_162] : memref<11x176x256xf32, #tpu.memory_space<vmem>>, vector<1x16x256xf32>
    %287 = vector.shape_cast %286 : vector<1x16x256xf32> to vector<16x256xf32>
    %288 = vector.shape_cast %285 : vector<16x256xf32> to vector<1x16x256xf32>
    tpu.vector_store %arg11[%c5_160, %c48_161, %c0_162], %288 {strides = array<i32>} : memref<11x176x256xf32, #tpu.memory_space<vmem>>, vector<1x16x256xf32>,
    %c0_163 = arith.constant 0 : index
    %c99 = arith.constant 99 : index
    %289 = vector.load %arg10[%c0_163, %c99] : memref<16x426xf32, #tpu.memory_space<vmem>>, vector<16x256xf32>
    %290 = vector.broadcast %252 : vector<1x256xf32> to vector<16x256xf32>
    %291 = arith.mulf %289, %290 : vector<16x256xf32>
    %c6_164 = arith.constant 6 : index
    %c48_165 = arith.constant 48 : index
    %c0_166 = arith.constant 0 : index
    %292 = vector.load %arg11[%c6_164, %c48_165, %c0_166] : memref<11x176x256xf32, #tpu.memory_space<vmem>>, vector<1x16x256xf32>
    %293 = vector.shape_cast %292 : vector<1x16x256xf32> to vector<16x256xf32>
    %294 = vector.shape_cast %291 : vector<16x256xf32> to vector<1x16x256xf32>
    tpu.vector_store %arg11[%c6_164, %c48_165, %c0_166], %294 {strides = array<i32>} : memref<11x176x256xf32, #tpu.memory_space<vmem>>, vector<1x16x256xf32>,
    %c0_167 = arith.constant 0 : index
    %c115 = arith.constant 115 : index
    %295 = vector.load %arg10[%c0_167, %c115] : memref<16x426xf32, #tpu.memory_space<vmem>>, vector<16x256xf32>
    %296 = vector.broadcast %252 : vector<1x256xf32> to vector<16x256xf32>
    %297 = arith.mulf %295, %296 : vector<16x256xf32>
    %c7_168 = arith.constant 7 : index
    %c48_169 = arith.constant 48 : index
    %c0_170 = arith.constant 0 : index
    %298 = vector.load %arg11[%c7_168, %c48_169, %c0_170] : memref<11x176x256xf32, #tpu.memory_space<vmem>>, vector<1x16x256xf32>
    %299 = vector.shape_cast %298 : vector<1x16x256xf32> to vector<16x256xf32>
    %300 = vector.shape_cast %297 : vector<16x256xf32> to vector<1x16x256xf32>
    tpu.vector_store %arg11[%c7_168, %c48_169, %c0_170], %300 {strides = array<i32>} : memref<11x176x256xf32, #tpu.memory_space<vmem>>, vector<1x16x256xf32>,
    %c0_171 = arith.constant 0 : index
    %c131 = arith.constant 131 : index
    %301 = vector.load %arg10[%c0_171, %c131] : memref<16x426xf32, #tpu.memory_space<vmem>>, vector<16x256xf32>
    %302 = vector.broadcast %252 : vector<1x256xf32> to vector<16x256xf32>
    %303 = arith.mulf %301, %302 : vector<16x256xf32>
    %c8_172 = arith.constant 8 : index
    %c48_173 = arith.constant 48 : index
    %c0_174 = arith.constant 0 : index
    %304 = vector.load %arg11[%c8_172, %c48_173, %c0_174] : memref<11x176x256xf32, #tpu.memory_space<vmem>>, vector<1x16x256xf32>
    %305 = vector.shape_cast %304 : vector<1x16x256xf32> to vector<16x256xf32>
    %306 = vector.shape_cast %303 : vector<16x256xf32> to vector<1x16x256xf32>
    tpu.vector_store %arg11[%c8_172, %c48_173, %c0_174], %306 {strides = array<i32>} : memref<11x176x256xf32, #tpu.memory_space<vmem>>, vector<1x16x256xf32>,
    %c0_175 = arith.constant 0 : index
    %c147 = arith.constant 147 : index
    %307 = vector.load %arg10[%c0_175, %c147] : memref<16x426xf32, #tpu.memory_space<vmem>>, vector<16x256xf32>
    %308 = vector.broadcast %252 : vector<1x256xf32> to vector<16x256xf32>
    %309 = arith.mulf %307, %308 : vector<16x256xf32>
    %c9_176 = arith.constant 9 : index
    %c48_177 = arith.constant 48 : index
    %c0_178 = arith.constant 0 : index
    %310 = vector.load %arg11[%c9_176, %c48_177, %c0_178] : memref<11x176x256xf32, #tpu.memory_space<vmem>>, vector<1x16x256xf32>
    %311 = vector.shape_cast %310 : vector<1x16x256xf32> to vector<16x256xf32>
    %312 = vector.shape_cast %309 : vector<16x256xf32> to vector<1x16x256xf32>
    tpu.vector_store %arg11[%c9_176, %c48_177, %c0_178], %312 {strides = array<i32>} : memref<11x176x256xf32, #tpu.memory_space<vmem>>, vector<1x16x256xf32>,
    %c0_179 = arith.constant 0 : index
    %c163 = arith.constant 163 : index
    %313 = vector.load %arg10[%c0_179, %c163] : memref<16x426xf32, #tpu.memory_space<vmem>>, vector<16x256xf32>
    %314 = vector.broadcast %252 : vector<1x256xf32> to vector<16x256xf32>
    %315 = arith.mulf %313, %314 : vector<16x256xf32>
    %c10_180 = arith.constant 10 : index
    %c48_181 = arith.constant 48 : index
    %c0_182 = arith.constant 0 : index
    %316 = vector.load %arg11[%c10_180, %c48_181, %c0_182] : memref<11x176x256xf32, #tpu.memory_space<vmem>>, vector<1x16x256xf32>
    %317 = vector.shape_cast %316 : vector<1x16x256xf32> to vector<16x256xf32>
    %318 = vector.shape_cast %315 : vector<16x256xf32> to vector<1x16x256xf32>
    tpu.vector_store %arg11[%c10_180, %c48_181, %c0_182], %318 {strides = array<i32>} : memref<11x176x256xf32, #tpu.memory_space<vmem>>, vector<1x16x256xf32>,
    %c1_i32_183 = arith.constant 1 : i32
    %319 = vector.broadcast %c1_i32_183 : i32 to vector<1x256xi32>
    %320 = arith.cmpi sge, %26, %319 : vector<1x256xi32>
    %c17_i32 = arith.constant 17 : i32
    %321 = vector.broadcast %c17_i32 : i32 to vector<1x256xi32>
    %322 = arith.cmpi slt, %26, %321 : vector<1x256xi32>
    %323 = arith.andi %320, %322 : vector<1x256xi1>
    %324 = arith.extui %323 : vector<1x256xi1> to vector<1x256xi32>
    %325 = arith.sitofp %324 : vector<1x256xi32> to vector<1x256xf32>
    %c0_184 = arith.constant 0 : index
    %c4_185 = arith.constant 4 : index
    %326 = vector.load %arg10[%c0_184, %c4_185] : memref<16x426xf32, #tpu.memory_space<vmem>>, vector<16x256xf32>
    %327 = vector.broadcast %325 : vector<1x256xf32> to vector<16x256xf32>
    %328 = arith.mulf %326, %327 : vector<16x256xf32>
    %c0_186 = arith.constant 0 : index
    %c64_187 = arith.constant 64 : index
    %c0_188 = arith.constant 0 : index
    %329 = vector.load %arg11[%c0_186, %c64_187, %c0_188] : memref<11x176x256xf32, #tpu.memory_space<vmem>>, vector<1x16x256xf32>
    %330 = vector.shape_cast %329 : vector<1x16x256xf32> to vector<16x256xf32>
    %331 = vector.shape_cast %328 : vector<16x256xf32> to vector<1x16x256xf32>
    tpu.vector_store %arg11[%c0_186, %c64_187, %c0_188], %331 {strides = array<i32>} : memref<11x176x256xf32, #tpu.memory_space<vmem>>, vector<1x16x256xf32>,
    %c0_189 = arith.constant 0 : index
    %c20 = arith.constant 20 : index
    %332 = vector.load %arg10[%c0_189, %c20] : memref<16x426xf32, #tpu.memory_space<vmem>>, vector<16x256xf32>
    %333 = vector.broadcast %325 : vector<1x256xf32> to vector<16x256xf32>
    %334 = arith.mulf %332, %333 : vector<16x256xf32>
    %c1_190 = arith.constant 1 : index
    %c64_191 = arith.constant 64 : index
    %c0_192 = arith.constant 0 : index
    %335 = vector.load %arg11[%c1_190, %c64_191, %c0_192] : memref<11x176x256xf32, #tpu.memory_space<vmem>>, vector<1x16x256xf32>
    %336 = vector.shape_cast %335 : vector<1x16x256xf32> to vector<16x256xf32>
    %337 = vector.shape_cast %334 : vector<16x256xf32> to vector<1x16x256xf32>
    tpu.vector_store %arg11[%c1_190, %c64_191, %c0_192], %337 {strides = array<i32>} : memref<11x176x256xf32, #tpu.memory_space<vmem>>, vector<1x16x256xf32>,
    %c0_193 = arith.constant 0 : index
    %c36 = arith.constant 36 : index
    %338 = vector.load %arg10[%c0_193, %c36] : memref<16x426xf32, #tpu.memory_space<vmem>>, vector<16x256xf32>
    %339 = vector.broadcast %325 : vector<1x256xf32> to vector<16x256xf32>
    %340 = arith.mulf %338, %339 : vector<16x256xf32>
    %c2_194 = arith.constant 2 : index
    %c64_195 = arith.constant 64 : index
    %c0_196 = arith.constant 0 : index
    %341 = vector.load %arg11[%c2_194, %c64_195, %c0_196] : memref<11x176x256xf32, #tpu.memory_space<vmem>>, vector<1x16x256xf32>
    %342 = vector.shape_cast %341 : vector<1x16x256xf32> to vector<16x256xf32>
    %343 = vector.shape_cast %340 : vector<16x256xf32> to vector<1x16x256xf32>
    tpu.vector_store %arg11[%c2_194, %c64_195, %c0_196], %343 {strides = array<i32>} : memref<11x176x256xf32, #tpu.memory_space<vmem>>, vector<1x16x256xf32>,
    %c0_197 = arith.constant 0 : index
    %c52 = arith.constant 52 : index
    %344 = vector.load %arg10[%c0_197, %c52] : memref<16x426xf32, #tpu.memory_space<vmem>>, vector<16x256xf32>
    %345 = vector.broadcast %325 : vector<1x256xf32> to vector<16x256xf32>
    %346 = arith.mulf %344, %345 : vector<16x256xf32>
    %c3_198 = arith.constant 3 : index
    %c64_199 = arith.constant 64 : index
    %c0_200 = arith.constant 0 : index
    %347 = vector.load %arg11[%c3_198, %c64_199, %c0_200] : memref<11x176x256xf32, #tpu.memory_space<vmem>>, vector<1x16x256xf32>
    %348 = vector.shape_cast %347 : vector<1x16x256xf32> to vector<16x256xf32>
    %349 = vector.shape_cast %346 : vector<16x256xf32> to vector<1x16x256xf32>
    tpu.vector_store %arg11[%c3_198, %c64_199, %c0_200], %349 {strides = array<i32>} : memref<11x176x256xf32, #tpu.memory_space<vmem>>, vector<1x16x256xf32>,
    %c0_201 = arith.constant 0 : index
    %c68 = arith.constant 68 : index
    %350 = vector.load %arg10[%c0_201, %c68] : memref<16x426xf32, #tpu.memory_space<vmem>>, vector<16x256xf32>
    %351 = vector.broadcast %325 : vector<1x256xf32> to vector<16x256xf32>
    %352 = arith.mulf %350, %351 : vector<16x256xf32>
    %c4_202 = arith.constant 4 : index
    %c64_203 = arith.constant 64 : index
    %c0_204 = arith.constant 0 : index
    %353 = vector.load %arg11[%c4_202, %c64_203, %c0_204] : memref<11x176x256xf32, #tpu.memory_space<vmem>>, vector<1x16x256xf32>
    %354 = vector.shape_cast %353 : vector<1x16x256xf32> to vector<16x256xf32>
    %355 = vector.shape_cast %352 : vector<16x256xf32> to vector<1x16x256xf32>
    tpu.vector_store %arg11[%c4_202, %c64_203, %c0_204], %355 {strides = array<i32>} : memref<11x176x256xf32, #tpu.memory_space<vmem>>, vector<1x16x256xf32>,
    %c0_205 = arith.constant 0 : index
    %c84 = arith.constant 84 : index
    %356 = vector.load %arg10[%c0_205, %c84] : memref<16x426xf32, #tpu.memory_space<vmem>>, vector<16x256xf32>
    %357 = vector.broadcast %325 : vector<1x256xf32> to vector<16x256xf32>
    %358 = arith.mulf %356, %357 : vector<16x256xf32>
    %c5_206 = arith.constant 5 : index
    %c64_207 = arith.constant 64 : index
    %c0_208 = arith.constant 0 : index
    %359 = vector.load %arg11[%c5_206, %c64_207, %c0_208] : memref<11x176x256xf32, #tpu.memory_space<vmem>>, vector<1x16x256xf32>
    %360 = vector.shape_cast %359 : vector<1x16x256xf32> to vector<16x256xf32>
    %361 = vector.shape_cast %358 : vector<16x256xf32> to vector<1x16x256xf32>
    tpu.vector_store %arg11[%c5_206, %c64_207, %c0_208], %361 {strides = array<i32>} : memref<11x176x256xf32, #tpu.memory_space<vmem>>, vector<1x16x256xf32>,
    %c0_209 = arith.constant 0 : index
    %c100 = arith.constant 100 : index
    %362 = vector.load %arg10[%c0_209, %c100] : memref<16x426xf32, #tpu.memory_space<vmem>>, vector<16x256xf32>
    %363 = vector.broadcast %325 : vector<1x256xf32> to vector<16x256xf32>
    %364 = arith.mulf %362, %363 : vector<16x256xf32>
    %c6_210 = arith.constant 6 : index
    %c64_211 = arith.constant 64 : index
    %c0_212 = arith.constant 0 : index
    %365 = vector.load %arg11[%c6_210, %c64_211, %c0_212] : memref<11x176x256xf32, #tpu.memory_space<vmem>>, vector<1x16x256xf32>
    %366 = vector.shape_cast %365 : vector<1x16x256xf32> to vector<16x256xf32>
    %367 = vector.shape_cast %364 : vector<16x256xf32> to vector<1x16x256xf32>
    tpu.vector_store %arg11[%c6_210, %c64_211, %c0_212], %367 {strides = array<i32>} : memref<11x176x256xf32, #tpu.memory_space<vmem>>, vector<1x16x256xf32>,
    %c0_213 = arith.constant 0 : index
    %c116 = arith.constant 116 : index
    %368 = vector.load %arg10[%c0_213, %c116] : memref<16x426xf32, #tpu.memory_space<vmem>>, vector<16x256xf32>
    %369 = vector.broadcast %325 : vector<1x256xf32> to vector<16x256xf32>
    %370 = arith.mulf %368, %369 : vector<16x256xf32>
    %c7_214 = arith.constant 7 : index
    %c64_215 = arith.constant 64 : index
    %c0_216 = arith.constant 0 : index
    %371 = vector.load %arg11[%c7_214, %c64_215, %c0_216] : memref<11x176x256xf32, #tpu.memory_space<vmem>>, vector<1x16x256xf32>
    %372 = vector.shape_cast %371 : vector<1x16x256xf32> to vector<16x256xf32>
    %373 = vector.shape_cast %370 : vector<16x256xf32> to vector<1x16x256xf32>
    tpu.vector_store %arg11[%c7_214, %c64_215, %c0_216], %373 {strides = array<i32>} : memref<11x176x256xf32, #tpu.memory_space<vmem>>, vector<1x16x256xf32>,
    %c0_217 = arith.constant 0 : index
    %c132 = arith.constant 132 : index
    %374 = vector.load %arg10[%c0_217, %c132] : memref<16x426xf32, #tpu.memory_space<vmem>>, vector<16x256xf32>
    %375 = vector.broadcast %325 : vector<1x256xf32> to vector<16x256xf32>
    %376 = arith.mulf %374, %375 : vector<16x256xf32>
    %c8_218 = arith.constant 8 : index
    %c64_219 = arith.constant 64 : index
    %c0_220 = arith.constant 0 : index
    %377 = vector.load %arg11[%c8_218, %c64_219, %c0_220] : memref<11x176x256xf32, #tpu.memory_space<vmem>>, vector<1x16x256xf32>
    %378 = vector.shape_cast %377 : vector<1x16x256xf32> to vector<16x256xf32>
    %379 = vector.shape_cast %376 : vector<16x256xf32> to vector<1x16x256xf32>
    tpu.vector_store %arg11[%c8_218, %c64_219, %c0_220], %379 {strides = array<i32>} : memref<11x176x256xf32, #tpu.memory_space<vmem>>, vector<1x16x256xf32>,
    %c0_221 = arith.constant 0 : index
    %c148 = arith.constant 148 : index
    %380 = vector.load %arg10[%c0_221, %c148] : memref<16x426xf32, #tpu.memory_space<vmem>>, vector<16x256xf32>
    %381 = vector.broadcast %325 : vector<1x256xf32> to vector<16x256xf32>
    %382 = arith.mulf %380, %381 : vector<16x256xf32>
    %c9_222 = arith.constant 9 : index
    %c64_223 = arith.constant 64 : index
    %c0_224 = arith.constant 0 : index
    %383 = vector.load %arg11[%c9_222, %c64_223, %c0_224] : memref<11x176x256xf32, #tpu.memory_space<vmem>>, vector<1x16x256xf32>
    %384 = vector.shape_cast %383 : vector<1x16x256xf32> to vector<16x256xf32>
    %385 = vector.shape_cast %382 : vector<16x256xf32> to vector<1x16x256xf32>
    tpu.vector_store %arg11[%c9_222, %c64_223, %c0_224], %385 {strides = array<i32>} : memref<11x176x256xf32, #tpu.memory_space<vmem>>, vector<1x16x256xf32>,
    %c0_225 = arith.constant 0 : index
    %c164 = arith.constant 164 : index
    %386 = vector.load %arg10[%c0_225, %c164] : memref<16x426xf32, #tpu.memory_space<vmem>>, vector<16x256xf32>
    %387 = vector.broadcast %325 : vector<1x256xf32> to vector<16x256xf32>
    %388 = arith.mulf %386, %387 : vector<16x256xf32>
    %c10_226 = arith.constant 10 : index
    %c64_227 = arith.constant 64 : index
    %c0_228 = arith.constant 0 : index
    %389 = vector.load %arg11[%c10_226, %c64_227, %c0_228] : memref<11x176x256xf32, #tpu.memory_space<vmem>>, vector<1x16x256xf32>
    %390 = vector.shape_cast %389 : vector<1x16x256xf32> to vector<16x256xf32>
    %391 = vector.shape_cast %388 : vector<16x256xf32> to vector<1x16x256xf32>
    tpu.vector_store %arg11[%c10_226, %c64_227, %c0_228], %391 {strides = array<i32>} : memref<11x176x256xf32, #tpu.memory_space<vmem>>, vector<1x16x256xf32>,
    %c0_229 = arith.constant 0 : index
    %c5_230 = arith.constant 5 : index
    %392 = vector.load %arg10[%c0_229, %c5_230] : memref<16x426xf32, #tpu.memory_space<vmem>>, vector<16x256xf32>
    %c0_231 = arith.constant 0 : index
    %c80_232 = arith.constant 80 : index
    %c0_233 = arith.constant 0 : index
    %393 = vector.load %arg11[%c0_231, %c80_232, %c0_233] : memref<11x176x256xf32, #tpu.memory_space<vmem>>, vector<1x16x256xf32>
    %394 = vector.shape_cast %393 : vector<1x16x256xf32> to vector<16x256xf32>
    %395 = vector.shape_cast %392 : vector<16x256xf32> to vector<1x16x256xf32>
    tpu.vector_store %arg11[%c0_231, %c80_232, %c0_233], %395 {strides = array<i32>} : memref<11x176x256xf32, #tpu.memory_space<vmem>>, vector<1x16x256xf32>,
    %c0_234 = arith.constant 0 : index
    %c21 = arith.constant 21 : index
    %396 = vector.load %arg10[%c0_234, %c21] : memref<16x426xf32, #tpu.memory_space<vmem>>, vector<16x256xf32>
    %c1_235 = arith.constant 1 : index
    %c80_236 = arith.constant 80 : index
    %c0_237 = arith.constant 0 : index
    %397 = vector.load %arg11[%c1_235, %c80_236, %c0_237] : memref<11x176x256xf32, #tpu.memory_space<vmem>>, vector<1x16x256xf32>
    %398 = vector.shape_cast %397 : vector<1x16x256xf32> to vector<16x256xf32>
    %399 = vector.shape_cast %396 : vector<16x256xf32> to vector<1x16x256xf32>
    tpu.vector_store %arg11[%c1_235, %c80_236, %c0_237], %399 {strides = array<i32>} : memref<11x176x256xf32, #tpu.memory_space<vmem>>, vector<1x16x256xf32>,
    %c0_238 = arith.constant 0 : index
    %c37 = arith.constant 37 : index
    %400 = vector.load %arg10[%c0_238, %c37] : memref<16x426xf32, #tpu.memory_space<vmem>>, vector<16x256xf32>
    %c2_239 = arith.constant 2 : index
    %c80_240 = arith.constant 80 : index
    %c0_241 = arith.constant 0 : index
    %401 = vector.load %arg11[%c2_239, %c80_240, %c0_241] : memref<11x176x256xf32, #tpu.memory_space<vmem>>, vector<1x16x256xf32>
    %402 = vector.shape_cast %401 : vector<1x16x256xf32> to vector<16x256xf32>
    %403 = vector.shape_cast %400 : vector<16x256xf32> to vector<1x16x256xf32>
    tpu.vector_store %arg11[%c2_239, %c80_240, %c0_241], %403 {strides = array<i32>} : memref<11x176x256xf32, #tpu.memory_space<vmem>>, vector<1x16x256xf32>,
    %c0_242 = arith.constant 0 : index
    %c53 = arith.constant 53 : index
    %404 = vector.load %arg10[%c0_242, %c53] : memref<16x426xf32, #tpu.memory_space<vmem>>, vector<16x256xf32>
    %c3_243 = arith.constant 3 : index
    %c80_244 = arith.constant 80 : index
    %c0_245 = arith.constant 0 : index
    %405 = vector.load %arg11[%c3_243, %c80_244, %c0_245] : memref<11x176x256xf32, #tpu.memory_space<vmem>>, vector<1x16x256xf32>
    %406 = vector.shape_cast %405 : vector<1x16x256xf32> to vector<16x256xf32>
    %407 = vector.shape_cast %404 : vector<16x256xf32> to vector<1x16x256xf32>
    tpu.vector_store %arg11[%c3_243, %c80_244, %c0_245], %407 {strides = array<i32>} : memref<11x176x256xf32, #tpu.memory_space<vmem>>, vector<1x16x256xf32>,
    %c0_246 = arith.constant 0 : index
    %c69 = arith.constant 69 : index
    %408 = vector.load %arg10[%c0_246, %c69] : memref<16x426xf32, #tpu.memory_space<vmem>>, vector<16x256xf32>
    %c4_247 = arith.constant 4 : index
    %c80_248 = arith.constant 80 : index
    %c0_249 = arith.constant 0 : index
    %409 = vector.load %arg11[%c4_247, %c80_248, %c0_249] : memref<11x176x256xf32, #tpu.memory_space<vmem>>, vector<1x16x256xf32>
    %410 = vector.shape_cast %409 : vector<1x16x256xf32> to vector<16x256xf32>
    %411 = vector.shape_cast %408 : vector<16x256xf32> to vector<1x16x256xf32>
    tpu.vector_store %arg11[%c4_247, %c80_248, %c0_249], %411 {strides = array<i32>} : memref<11x176x256xf32, #tpu.memory_space<vmem>>, vector<1x16x256xf32>,
    %c0_250 = arith.constant 0 : index
    %c85_251 = arith.constant 85 : index
    %412 = vector.load %arg10[%c0_250, %c85_251] : memref<16x426xf32, #tpu.memory_space<vmem>>, vector<16x256xf32>
    %c5_252 = arith.constant 5 : index
    %c80_253 = arith.constant 80 : index
    %c0_254 = arith.constant 0 : index
    %413 = vector.load %arg11[%c5_252, %c80_253, %c0_254] : memref<11x176x256xf32, #tpu.memory_space<vmem>>, vector<1x16x256xf32>
    %414 = vector.shape_cast %413 : vector<1x16x256xf32> to vector<16x256xf32>
    %415 = vector.shape_cast %412 : vector<16x256xf32> to vector<1x16x256xf32>
    tpu.vector_store %arg11[%c5_252, %c80_253, %c0_254], %415 {strides = array<i32>} : memref<11x176x256xf32, #tpu.memory_space<vmem>>, vector<1x16x256xf32>,
    %c0_255 = arith.constant 0 : index
    %c101 = arith.constant 101 : index
    %416 = vector.load %arg10[%c0_255, %c101] : memref<16x426xf32, #tpu.memory_space<vmem>>, vector<16x256xf32>
    %c6_256 = arith.constant 6 : index
    %c80_257 = arith.constant 80 : index
    %c0_258 = arith.constant 0 : index
    %417 = vector.load %arg11[%c6_256, %c80_257, %c0_258] : memref<11x176x256xf32, #tpu.memory_space<vmem>>, vector<1x16x256xf32>
    %418 = vector.shape_cast %417 : vector<1x16x256xf32> to vector<16x256xf32>
    %419 = vector.shape_cast %416 : vector<16x256xf32> to vector<1x16x256xf32>
    tpu.vector_store %arg11[%c6_256, %c80_257, %c0_258], %419 {strides = array<i32>} : memref<11x176x256xf32, #tpu.memory_space<vmem>>, vector<1x16x256xf32>,
    %c0_259 = arith.constant 0 : index
    %c117 = arith.constant 117 : index
    %420 = vector.load %arg10[%c0_259, %c117] : memref<16x426xf32, #tpu.memory_space<vmem>>, vector<16x256xf32>
    %c7_260 = arith.constant 7 : index
    %c80_261 = arith.constant 80 : index
    %c0_262 = arith.constant 0 : index
    %421 = vector.load %arg11[%c7_260, %c80_261, %c0_262] : memref<11x176x256xf32, #tpu.memory_space<vmem>>, vector<1x16x256xf32>
    %422 = vector.shape_cast %421 : vector<1x16x256xf32> to vector<16x256xf32>
    %423 = vector.shape_cast %420 : vector<16x256xf32> to vector<1x16x256xf32>
    tpu.vector_store %arg11[%c7_260, %c80_261, %c0_262], %423 {strides = array<i32>} : memref<11x176x256xf32, #tpu.memory_space<vmem>>, vector<1x16x256xf32>,
    %c0_263 = arith.constant 0 : index
    %c133 = arith.constant 133 : index
    %424 = vector.load %arg10[%c0_263, %c133] : memref<16x426xf32, #tpu.memory_space<vmem>>, vector<16x256xf32>
    %c8_264 = arith.constant 8 : index
    %c80_265 = arith.constant 80 : index
    %c0_266 = arith.constant 0 : index
    %425 = vector.load %arg11[%c8_264, %c80_265, %c0_266] : memref<11x176x256xf32, #tpu.memory_space<vmem>>, vector<1x16x256xf32>
    %426 = vector.shape_cast %425 : vector<1x16x256xf32> to vector<16x256xf32>
    %427 = vector.shape_cast %424 : vector<16x256xf32> to vector<1x16x256xf32>
    tpu.vector_store %arg11[%c8_264, %c80_265, %c0_266], %427 {strides = array<i32>} : memref<11x176x256xf32, #tpu.memory_space<vmem>>, vector<1x16x256xf32>,
    %c0_267 = arith.constant 0 : index
    %c149 = arith.constant 149 : index
    %428 = vector.load %arg10[%c0_267, %c149] : memref<16x426xf32, #tpu.memory_space<vmem>>, vector<16x256xf32>
    %c9_268 = arith.constant 9 : index
    %c80_269 = arith.constant 80 : index
    %c0_270 = arith.constant 0 : index
    %429 = vector.load %arg11[%c9_268, %c80_269, %c0_270] : memref<11x176x256xf32, #tpu.memory_space<vmem>>, vector<1x16x256xf32>
    %430 = vector.shape_cast %429 : vector<1x16x256xf32> to vector<16x256xf32>
    %431 = vector.shape_cast %428 : vector<16x256xf32> to vector<1x16x256xf32>
    tpu.vector_store %arg11[%c9_268, %c80_269, %c0_270], %431 {strides = array<i32>} : memref<11x176x256xf32, #tpu.memory_space<vmem>>, vector<1x16x256xf32>,
    %c0_271 = arith.constant 0 : index
    %c165 = arith.constant 165 : index
    %432 = vector.load %arg10[%c0_271, %c165] : memref<16x426xf32, #tpu.memory_space<vmem>>, vector<16x256xf32>
    %c10_272 = arith.constant 10 : index
    %c80_273 = arith.constant 80 : index
    %c0_274 = arith.constant 0 : index
    %433 = vector.load %arg11[%c10_272, %c80_273, %c0_274] : memref<11x176x256xf32, #tpu.memory_space<vmem>>, vector<1x16x256xf32>
    %434 = vector.shape_cast %433 : vector<1x16x256xf32> to vector<16x256xf32>
    %435 = vector.shape_cast %432 : vector<16x256xf32> to vector<1x16x256xf32>
    tpu.vector_store %arg11[%c10_272, %c80_273, %c0_274], %435 {strides = array<i32>} : memref<11x176x256xf32, #tpu.memory_space<vmem>>, vector<1x16x256xf32>,
    %c-1_i32 = arith.constant -1 : i32
    %436 = vector.broadcast %c-1_i32 : i32 to vector<1x256xi32>
    %437 = arith.cmpi sge, %26, %436 : vector<1x256xi32>
    %c15_i32 = arith.constant 15 : i32
    %438 = vector.broadcast %c15_i32 : i32 to vector<1x256xi32>
    %439 = arith.cmpi slt, %26, %438 : vector<1x256xi32>
    %440 = arith.andi %437, %439 : vector<1x256xi1>
    %441 = arith.extui %440 : vector<1x256xi1> to vector<1x256xi32>
    %442 = arith.sitofp %441 : vector<1x256xi32> to vector<1x256xf32>
    %c0_275 = arith.constant 0 : index
    %c6_276 = arith.constant 6 : index
    %443 = vector.load %arg10[%c0_275, %c6_276] : memref<16x426xf32, #tpu.memory_space<vmem>>, vector<16x256xf32>
    %444 = vector.broadcast %442 : vector<1x256xf32> to vector<16x256xf32>
    %445 = arith.mulf %443, %444 : vector<16x256xf32>
    %c0_277 = arith.constant 0 : index
    %c96_278 = arith.constant 96 : index
    %c0_279 = arith.constant 0 : index
    %446 = vector.load %arg11[%c0_277, %c96_278, %c0_279] : memref<11x176x256xf32, #tpu.memory_space<vmem>>, vector<1x16x256xf32>
    %447 = vector.shape_cast %446 : vector<1x16x256xf32> to vector<16x256xf32>
    %448 = vector.shape_cast %445 : vector<16x256xf32> to vector<1x16x256xf32>
    tpu.vector_store %arg11[%c0_277, %c96_278, %c0_279], %448 {strides = array<i32>} : memref<11x176x256xf32, #tpu.memory_space<vmem>>, vector<1x16x256xf32>,
    %c0_280 = arith.constant 0 : index
    %c22 = arith.constant 22 : index
    %449 = vector.load %arg10[%c0_280, %c22] : memref<16x426xf32, #tpu.memory_space<vmem>>, vector<16x256xf32>
    %450 = vector.broadcast %442 : vector<1x256xf32> to vector<16x256xf32>
    %451 = arith.mulf %449, %450 : vector<16x256xf32>
    %c1_281 = arith.constant 1 : index
    %c96_282 = arith.constant 96 : index
    %c0_283 = arith.constant 0 : index
    %452 = vector.load %arg11[%c1_281, %c96_282, %c0_283] : memref<11x176x256xf32, #tpu.memory_space<vmem>>, vector<1x16x256xf32>
    %453 = vector.shape_cast %452 : vector<1x16x256xf32> to vector<16x256xf32>
    %454 = vector.shape_cast %451 : vector<16x256xf32> to vector<1x16x256xf32>
    tpu.vector_store %arg11[%c1_281, %c96_282, %c0_283], %454 {strides = array<i32>} : memref<11x176x256xf32, #tpu.memory_space<vmem>>, vector<1x16x256xf32>,
    %c0_284 = arith.constant 0 : index
    %c38 = arith.constant 38 : index
    %455 = vector.load %arg10[%c0_284, %c38] : memref<16x426xf32, #tpu.memory_space<vmem>>, vector<16x256xf32>
    %456 = vector.broadcast %442 : vector<1x256xf32> to vector<16x256xf32>
    %457 = arith.mulf %455, %456 : vector<16x256xf32>
    %c2_285 = arith.constant 2 : index
    %c96_286 = arith.constant 96 : index
    %c0_287 = arith.constant 0 : index
    %458 = vector.load %arg11[%c2_285, %c96_286, %c0_287] : memref<11x176x256xf32, #tpu.memory_space<vmem>>, vector<1x16x256xf32>
    %459 = vector.shape_cast %458 : vector<1x16x256xf32> to vector<16x256xf32>
    %460 = vector.shape_cast %457 : vector<16x256xf32> to vector<1x16x256xf32>
    tpu.vector_store %arg11[%c2_285, %c96_286, %c0_287], %460 {strides = array<i32>} : memref<11x176x256xf32, #tpu.memory_space<vmem>>, vector<1x16x256xf32>,
    %c0_288 = arith.constant 0 : index
    %c54 = arith.constant 54 : index
    %461 = vector.load %arg10[%c0_288, %c54] : memref<16x426xf32, #tpu.memory_space<vmem>>, vector<16x256xf32>
    %462 = vector.broadcast %442 : vector<1x256xf32> to vector<16x256xf32>
    %463 = arith.mulf %461, %462 : vector<16x256xf32>
    %c3_289 = arith.constant 3 : index
    %c96_290 = arith.constant 96 : index
    %c0_291 = arith.constant 0 : index
    %464 = vector.load %arg11[%c3_289, %c96_290, %c0_291] : memref<11x176x256xf32, #tpu.memory_space<vmem>>, vector<1x16x256xf32>
    %465 = vector.shape_cast %464 : vector<1x16x256xf32> to vector<16x256xf32>
    %466 = vector.shape_cast %463 : vector<16x256xf32> to vector<1x16x256xf32>
    tpu.vector_store %arg11[%c3_289, %c96_290, %c0_291], %466 {strides = array<i32>} : memref<11x176x256xf32, #tpu.memory_space<vmem>>, vector<1x16x256xf32>,
    %c0_292 = arith.constant 0 : index
    %c70 = arith.constant 70 : index
    %467 = vector.load %arg10[%c0_292, %c70] : memref<16x426xf32, #tpu.memory_space<vmem>>, vector<16x256xf32>
    %468 = vector.broadcast %442 : vector<1x256xf32> to vector<16x256xf32>
    %469 = arith.mulf %467, %468 : vector<16x256xf32>
    %c4_293 = arith.constant 4 : index
    %c96_294 = arith.constant 96 : index
    %c0_295 = arith.constant 0 : index
    %470 = vector.load %arg11[%c4_293, %c96_294, %c0_295] : memref<11x176x256xf32, #tpu.memory_space<vmem>>, vector<1x16x256xf32>
    %471 = vector.shape_cast %470 : vector<1x16x256xf32> to vector<16x256xf32>
    %472 = vector.shape_cast %469 : vector<16x256xf32> to vector<1x16x256xf32>
    tpu.vector_store %arg11[%c4_293, %c96_294, %c0_295], %472 {strides = array<i32>} : memref<11x176x256xf32, #tpu.memory_space<vmem>>, vector<1x16x256xf32>,
    %c0_296 = arith.constant 0 : index
    %c86 = arith.constant 86 : index
    %473 = vector.load %arg10[%c0_296, %c86] : memref<16x426xf32, #tpu.memory_space<vmem>>, vector<16x256xf32>
    %474 = vector.broadcast %442 : vector<1x256xf32> to vector<16x256xf32>
    %475 = arith.mulf %473, %474 : vector<16x256xf32>
    %c5_297 = arith.constant 5 : index
    %c96_298 = arith.constant 96 : index
    %c0_299 = arith.constant 0 : index
    %476 = vector.load %arg11[%c5_297, %c96_298, %c0_299] : memref<11x176x256xf32, #tpu.memory_space<vmem>>, vector<1x16x256xf32>
    %477 = vector.shape_cast %476 : vector<1x16x256xf32> to vector<16x256xf32>
    %478 = vector.shape_cast %475 : vector<16x256xf32> to vector<1x16x256xf32>
    tpu.vector_store %arg11[%c5_297, %c96_298, %c0_299], %478 {strides = array<i32>} : memref<11x176x256xf32, #tpu.memory_space<vmem>>, vector<1x16x256xf32>,
    %c0_300 = arith.constant 0 : index
    %c102 = arith.constant 102 : index
    %479 = vector.load %arg10[%c0_300, %c102] : memref<16x426xf32, #tpu.memory_space<vmem>>, vector<16x256xf32>
    %480 = vector.broadcast %442 : vector<1x256xf32> to vector<16x256xf32>
    %481 = arith.mulf %479, %480 : vector<16x256xf32>
    %c6_301 = arith.constant 6 : index
    %c96_302 = arith.constant 96 : index
    %c0_303 = arith.constant 0 : index
    %482 = vector.load %arg11[%c6_301, %c96_302, %c0_303] : memref<11x176x256xf32, #tpu.memory_space<vmem>>, vector<1x16x256xf32>
    %483 = vector.shape_cast %482 : vector<1x16x256xf32> to vector<16x256xf32>
    %484 = vector.shape_cast %481 : vector<16x256xf32> to vector<1x16x256xf32>
    tpu.vector_store %arg11[%c6_301, %c96_302, %c0_303], %484 {strides = array<i32>} : memref<11x176x256xf32, #tpu.memory_space<vmem>>, vector<1x16x256xf32>,
    %c0_304 = arith.constant 0 : index
    %c118 = arith.constant 118 : index
    %485 = vector.load %arg10[%c0_304, %c118] : memref<16x426xf32, #tpu.memory_space<vmem>>, vector<16x256xf32>
    %486 = vector.broadcast %442 : vector<1x256xf32> to vector<16x256xf32>
    %487 = arith.mulf %485, %486 : vector<16x256xf32>
    %c7_305 = arith.constant 7 : index
    %c96_306 = arith.constant 96 : index
    %c0_307 = arith.constant 0 : index
    %488 = vector.load %arg11[%c7_305, %c96_306, %c0_307] : memref<11x176x256xf32, #tpu.memory_space<vmem>>, vector<1x16x256xf32>
    %489 = vector.shape_cast %488 : vector<1x16x256xf32> to vector<16x256xf32>
    %490 = vector.shape_cast %487 : vector<16x256xf32> to vector<1x16x256xf32>
    tpu.vector_store %arg11[%c7_305, %c96_306, %c0_307], %490 {strides = array<i32>} : memref<11x176x256xf32, #tpu.memory_space<vmem>>, vector<1x16x256xf32>,
    %c0_308 = arith.constant 0 : index
    %c134 = arith.constant 134 : index
    %491 = vector.load %arg10[%c0_308, %c134] : memref<16x426xf32, #tpu.memory_space<vmem>>, vector<16x256xf32>
    %492 = vector.broadcast %442 : vector<1x256xf32> to vector<16x256xf32>
    %493 = arith.mulf %491, %492 : vector<16x256xf32>
    %c8_309 = arith.constant 8 : index
    %c96_310 = arith.constant 96 : index
    %c0_311 = arith.constant 0 : index
    %494 = vector.load %arg11[%c8_309, %c96_310, %c0_311] : memref<11x176x256xf32, #tpu.memory_space<vmem>>, vector<1x16x256xf32>
    %495 = vector.shape_cast %494 : vector<1x16x256xf32> to vector<16x256xf32>
    %496 = vector.shape_cast %493 : vector<16x256xf32> to vector<1x16x256xf32>
    tpu.vector_store %arg11[%c8_309, %c96_310, %c0_311], %496 {strides = array<i32>} : memref<11x176x256xf32, #tpu.memory_space<vmem>>, vector<1x16x256xf32>,
    %c0_312 = arith.constant 0 : index
    %c150 = arith.constant 150 : index
    %497 = vector.load %arg10[%c0_312, %c150] : memref<16x426xf32, #tpu.memory_space<vmem>>, vector<16x256xf32>
    %498 = vector.broadcast %442 : vector<1x256xf32> to vector<16x256xf32>
    %499 = arith.mulf %497, %498 : vector<16x256xf32>
    %c9_313 = arith.constant 9 : index
    %c96_314 = arith.constant 96 : index
    %c0_315 = arith.constant 0 : index
    %500 = vector.load %arg11[%c9_313, %c96_314, %c0_315] : memref<11x176x256xf32, #tpu.memory_space<vmem>>, vector<1x16x256xf32>
    %501 = vector.shape_cast %500 : vector<1x16x256xf32> to vector<16x256xf32>
    %502 = vector.shape_cast %499 : vector<16x256xf32> to vector<1x16x256xf32>
    tpu.vector_store %arg11[%c9_313, %c96_314, %c0_315], %502 {strides = array<i32>} : memref<11x176x256xf32, #tpu.memory_space<vmem>>, vector<1x16x256xf32>,
    %c0_316 = arith.constant 0 : index
    %c166 = arith.constant 166 : index
    %503 = vector.load %arg10[%c0_316, %c166] : memref<16x426xf32, #tpu.memory_space<vmem>>, vector<16x256xf32>
    %504 = vector.broadcast %442 : vector<1x256xf32> to vector<16x256xf32>
    %505 = arith.mulf %503, %504 : vector<16x256xf32>
    %c10_317 = arith.constant 10 : index
    %c96_318 = arith.constant 96 : index
    %c0_319 = arith.constant 0 : index
    %506 = vector.load %arg11[%c10_317, %c96_318, %c0_319] : memref<11x176x256xf32, #tpu.memory_space<vmem>>, vector<1x16x256xf32>
    %507 = vector.shape_cast %506 : vector<1x16x256xf32> to vector<16x256xf32>
    %508 = vector.shape_cast %505 : vector<16x256xf32> to vector<1x16x256xf32>
    tpu.vector_store %arg11[%c10_317, %c96_318, %c0_319], %508 {strides = array<i32>} : memref<11x176x256xf32, #tpu.memory_space<vmem>>, vector<1x16x256xf32>,
    %c-2_i32 = arith.constant -2 : i32
    %509 = vector.broadcast %c-2_i32 : i32 to vector<1x256xi32>
    %510 = arith.cmpi sge, %26, %509 : vector<1x256xi32>
    %c14_i32 = arith.constant 14 : i32
    %511 = vector.broadcast %c14_i32 : i32 to vector<1x256xi32>
    %512 = arith.cmpi slt, %26, %511 : vector<1x256xi32>
    %513 = arith.andi %510, %512 : vector<1x256xi1>
    %514 = arith.extui %513 : vector<1x256xi1> to vector<1x256xi32>
    %515 = arith.sitofp %514 : vector<1x256xi32> to vector<1x256xf32>
    %c0_320 = arith.constant 0 : index
    %c7_321 = arith.constant 7 : index
    %516 = vector.load %arg10[%c0_320, %c7_321] : memref<16x426xf32, #tpu.memory_space<vmem>>, vector<16x256xf32>
    %517 = vector.broadcast %515 : vector<1x256xf32> to vector<16x256xf32>
    %518 = arith.mulf %516, %517 : vector<16x256xf32>
    %c0_322 = arith.constant 0 : index
    %c112_323 = arith.constant 112 : index
    %c0_324 = arith.constant 0 : index
    %519 = vector.load %arg11[%c0_322, %c112_323, %c0_324] : memref<11x176x256xf32, #tpu.memory_space<vmem>>, vector<1x16x256xf32>
    %520 = vector.shape_cast %519 : vector<1x16x256xf32> to vector<16x256xf32>
    %521 = vector.shape_cast %518 : vector<16x256xf32> to vector<1x16x256xf32>
    tpu.vector_store %arg11[%c0_322, %c112_323, %c0_324], %521 {strides = array<i32>} : memref<11x176x256xf32, #tpu.memory_space<vmem>>, vector<1x16x256xf32>,
    %c0_325 = arith.constant 0 : index
    %c23 = arith.constant 23 : index
    %522 = vector.load %arg10[%c0_325, %c23] : memref<16x426xf32, #tpu.memory_space<vmem>>, vector<16x256xf32>
    %523 = vector.broadcast %515 : vector<1x256xf32> to vector<16x256xf32>
    %524 = arith.mulf %522, %523 : vector<16x256xf32>
    %c1_326 = arith.constant 1 : index
    %c112_327 = arith.constant 112 : index
    %c0_328 = arith.constant 0 : index
    %525 = vector.load %arg11[%c1_326, %c112_327, %c0_328] : memref<11x176x256xf32, #tpu.memory_space<vmem>>, vector<1x16x256xf32>
    %526 = vector.shape_cast %525 : vector<1x16x256xf32> to vector<16x256xf32>
    %527 = vector.shape_cast %524 : vector<16x256xf32> to vector<1x16x256xf32>
    tpu.vector_store %arg11[%c1_326, %c112_327, %c0_328], %527 {strides = array<i32>} : memref<11x176x256xf32, #tpu.memory_space<vmem>>, vector<1x16x256xf32>,
    %c0_329 = arith.constant 0 : index
    %c39 = arith.constant 39 : index
    %528 = vector.load %arg10[%c0_329, %c39] : memref<16x426xf32, #tpu.memory_space<vmem>>, vector<16x256xf32>
    %529 = vector.broadcast %515 : vector<1x256xf32> to vector<16x256xf32>
    %530 = arith.mulf %528, %529 : vector<16x256xf32>
    %c2_330 = arith.constant 2 : index
    %c112_331 = arith.constant 112 : index
    %c0_332 = arith.constant 0 : index
    %531 = vector.load %arg11[%c2_330, %c112_331, %c0_332] : memref<11x176x256xf32, #tpu.memory_space<vmem>>, vector<1x16x256xf32>
    %532 = vector.shape_cast %531 : vector<1x16x256xf32> to vector<16x256xf32>
    %533 = vector.shape_cast %530 : vector<16x256xf32> to vector<1x16x256xf32>
    tpu.vector_store %arg11[%c2_330, %c112_331, %c0_332], %533 {strides = array<i32>} : memref<11x176x256xf32, #tpu.memory_space<vmem>>, vector<1x16x256xf32>,
    %c0_333 = arith.constant 0 : index
    %c55 = arith.constant 55 : index
    %534 = vector.load %arg10[%c0_333, %c55] : memref<16x426xf32, #tpu.memory_space<vmem>>, vector<16x256xf32>
    %535 = vector.broadcast %515 : vector<1x256xf32> to vector<16x256xf32>
    %536 = arith.mulf %534, %535 : vector<16x256xf32>
    %c3_334 = arith.constant 3 : index
    %c112_335 = arith.constant 112 : index
    %c0_336 = arith.constant 0 : index
    %537 = vector.load %arg11[%c3_334, %c112_335, %c0_336] : memref<11x176x256xf32, #tpu.memory_space<vmem>>, vector<1x16x256xf32>
    %538 = vector.shape_cast %537 : vector<1x16x256xf32> to vector<16x256xf32>
    %539 = vector.shape_cast %536 : vector<16x256xf32> to vector<1x16x256xf32>
    tpu.vector_store %arg11[%c3_334, %c112_335, %c0_336], %539 {strides = array<i32>} : memref<11x176x256xf32, #tpu.memory_space<vmem>>, vector<1x16x256xf32>,
    %c0_337 = arith.constant 0 : index
    %c71 = arith.constant 71 : index
    %540 = vector.load %arg10[%c0_337, %c71] : memref<16x426xf32, #tpu.memory_space<vmem>>, vector<16x256xf32>
    %541 = vector.broadcast %515 : vector<1x256xf32> to vector<16x256xf32>
    %542 = arith.mulf %540, %541 : vector<16x256xf32>
    %c4_338 = arith.constant 4 : index
    %c112_339 = arith.constant 112 : index
    %c0_340 = arith.constant 0 : index
    %543 = vector.load %arg11[%c4_338, %c112_339, %c0_340] : memref<11x176x256xf32, #tpu.memory_space<vmem>>, vector<1x16x256xf32>
    %544 = vector.shape_cast %543 : vector<1x16x256xf32> to vector<16x256xf32>
    %545 = vector.shape_cast %542 : vector<16x256xf32> to vector<1x16x256xf32>
    tpu.vector_store %arg11[%c4_338, %c112_339, %c0_340], %545 {strides = array<i32>} : memref<11x176x256xf32, #tpu.memory_space<vmem>>, vector<1x16x256xf32>,
    %c0_341 = arith.constant 0 : index
    %c87 = arith.constant 87 : index
    %546 = vector.load %arg10[%c0_341, %c87] : memref<16x426xf32, #tpu.memory_space<vmem>>, vector<16x256xf32>
    %547 = vector.broadcast %515 : vector<1x256xf32> to vector<16x256xf32>
    %548 = arith.mulf %546, %547 : vector<16x256xf32>
    %c5_342 = arith.constant 5 : index
    %c112_343 = arith.constant 112 : index
    %c0_344 = arith.constant 0 : index
    %549 = vector.load %arg11[%c5_342, %c112_343, %c0_344] : memref<11x176x256xf32, #tpu.memory_space<vmem>>, vector<1x16x256xf32>
    %550 = vector.shape_cast %549 : vector<1x16x256xf32> to vector<16x256xf32>
    %551 = vector.shape_cast %548 : vector<16x256xf32> to vector<1x16x256xf32>
    tpu.vector_store %arg11[%c5_342, %c112_343, %c0_344], %551 {strides = array<i32>} : memref<11x176x256xf32, #tpu.memory_space<vmem>>, vector<1x16x256xf32>,
    %c0_345 = arith.constant 0 : index
    %c103 = arith.constant 103 : index
    %552 = vector.load %arg10[%c0_345, %c103] : memref<16x426xf32, #tpu.memory_space<vmem>>, vector<16x256xf32>
    %553 = vector.broadcast %515 : vector<1x256xf32> to vector<16x256xf32>
    %554 = arith.mulf %552, %553 : vector<16x256xf32>
    %c6_346 = arith.constant 6 : index
    %c112_347 = arith.constant 112 : index
    %c0_348 = arith.constant 0 : index
    %555 = vector.load %arg11[%c6_346, %c112_347, %c0_348] : memref<11x176x256xf32, #tpu.memory_space<vmem>>, vector<1x16x256xf32>
    %556 = vector.shape_cast %555 : vector<1x16x256xf32> to vector<16x256xf32>
    %557 = vector.shape_cast %554 : vector<16x256xf32> to vector<1x16x256xf32>
    tpu.vector_store %arg11[%c6_346, %c112_347, %c0_348], %557 {strides = array<i32>} : memref<11x176x256xf32, #tpu.memory_space<vmem>>, vector<1x16x256xf32>,
    %c0_349 = arith.constant 0 : index
    %c119 = arith.constant 119 : index
    %558 = vector.load %arg10[%c0_349, %c119] : memref<16x426xf32, #tpu.memory_space<vmem>>, vector<16x256xf32>
    %559 = vector.broadcast %515 : vector<1x256xf32> to vector<16x256xf32>
    %560 = arith.mulf %558, %559 : vector<16x256xf32>
    %c7_350 = arith.constant 7 : index
    %c112_351 = arith.constant 112 : index
    %c0_352 = arith.constant 0 : index
    %561 = vector.load %arg11[%c7_350, %c112_351, %c0_352] : memref<11x176x256xf32, #tpu.memory_space<vmem>>, vector<1x16x256xf32>
    %562 = vector.shape_cast %561 : vector<1x16x256xf32> to vector<16x256xf32>
    %563 = vector.shape_cast %560 : vector<16x256xf32> to vector<1x16x256xf32>
    tpu.vector_store %arg11[%c7_350, %c112_351, %c0_352], %563 {strides = array<i32>} : memref<11x176x256xf32, #tpu.memory_space<vmem>>, vector<1x16x256xf32>,
    %c0_353 = arith.constant 0 : index
    %c135 = arith.constant 135 : index
    %564 = vector.load %arg10[%c0_353, %c135] : memref<16x426xf32, #tpu.memory_space<vmem>>, vector<16x256xf32>
    %565 = vector.broadcast %515 : vector<1x256xf32> to vector<16x256xf32>
    %566 = arith.mulf %564, %565 : vector<16x256xf32>
    %c8_354 = arith.constant 8 : index
    %c112_355 = arith.constant 112 : index
    %c0_356 = arith.constant 0 : index
    %567 = vector.load %arg11[%c8_354, %c112_355, %c0_356] : memref<11x176x256xf32, #tpu.memory_space<vmem>>, vector<1x16x256xf32>
    %568 = vector.shape_cast %567 : vector<1x16x256xf32> to vector<16x256xf32>
    %569 = vector.shape_cast %566 : vector<16x256xf32> to vector<1x16x256xf32>
    tpu.vector_store %arg11[%c8_354, %c112_355, %c0_356], %569 {strides = array<i32>} : memref<11x176x256xf32, #tpu.memory_space<vmem>>, vector<1x16x256xf32>,
    %c0_357 = arith.constant 0 : index
    %c151 = arith.constant 151 : index
    %570 = vector.load %arg10[%c0_357, %c151] : memref<16x426xf32, #tpu.memory_space<vmem>>, vector<16x256xf32>
    %571 = vector.broadcast %515 : vector<1x256xf32> to vector<16x256xf32>
    %572 = arith.mulf %570, %571 : vector<16x256xf32>
    %c9_358 = arith.constant 9 : index
    %c112_359 = arith.constant 112 : index
    %c0_360 = arith.constant 0 : index
    %573 = vector.load %arg11[%c9_358, %c112_359, %c0_360] : memref<11x176x256xf32, #tpu.memory_space<vmem>>, vector<1x16x256xf32>
    %574 = vector.shape_cast %573 : vector<1x16x256xf32> to vector<16x256xf32>
    %575 = vector.shape_cast %572 : vector<16x256xf32> to vector<1x16x256xf32>
    tpu.vector_store %arg11[%c9_358, %c112_359, %c0_360], %575 {strides = array<i32>} : memref<11x176x256xf32, #tpu.memory_space<vmem>>, vector<1x16x256xf32>,
    %c0_361 = arith.constant 0 : index
    %c167 = arith.constant 167 : index
    %576 = vector.load %arg10[%c0_361, %c167] : memref<16x426xf32, #tpu.memory_space<vmem>>, vector<16x256xf32>
    %577 = vector.broadcast %515 : vector<1x256xf32> to vector<16x256xf32>
    %578 = arith.mulf %576, %577 : vector<16x256xf32>
    %c10_362 = arith.constant 10 : index
    %c112_363 = arith.constant 112 : index
    %c0_364 = arith.constant 0 : index
    %579 = vector.load %arg11[%c10_362, %c112_363, %c0_364] : memref<11x176x256xf32, #tpu.memory_space<vmem>>, vector<1x16x256xf32>
    %580 = vector.shape_cast %579 : vector<1x16x256xf32> to vector<16x256xf32>
    %581 = vector.shape_cast %578 : vector<16x256xf32> to vector<1x16x256xf32>
    tpu.vector_store %arg11[%c10_362, %c112_363, %c0_364], %581 {strides = array<i32>} : memref<11x176x256xf32, #tpu.memory_space<vmem>>, vector<1x16x256xf32>,
    %c-3_i32 = arith.constant -3 : i32
    %582 = vector.broadcast %c-3_i32 : i32 to vector<1x256xi32>
    %583 = arith.cmpi sge, %26, %582 : vector<1x256xi32>
    %c13_i32 = arith.constant 13 : i32
    %584 = vector.broadcast %c13_i32 : i32 to vector<1x256xi32>
    %585 = arith.cmpi slt, %26, %584 : vector<1x256xi32>
    %586 = arith.andi %583, %585 : vector<1x256xi1>
    %587 = arith.extui %586 : vector<1x256xi1> to vector<1x256xi32>
    %588 = arith.sitofp %587 : vector<1x256xi32> to vector<1x256xf32>
    %c0_365 = arith.constant 0 : index
    %c8_366 = arith.constant 8 : index
    %589 = vector.load %arg10[%c0_365, %c8_366] : memref<16x426xf32, #tpu.memory_space<vmem>>, vector<16x256xf32>
    %590 = vector.broadcast %588 : vector<1x256xf32> to vector<16x256xf32>
    %591 = arith.mulf %589, %590 : vector<16x256xf32>
    %c0_367 = arith.constant 0 : index
    %c128_368 = arith.constant 128 : index
    %c0_369 = arith.constant 0 : index
    %592 = vector.load %arg11[%c0_367, %c128_368, %c0_369] : memref<11x176x256xf32, #tpu.memory_space<vmem>>, vector<1x16x256xf32>
    %593 = vector.shape_cast %592 : vector<1x16x256xf32> to vector<16x256xf32>
    %594 = vector.shape_cast %591 : vector<16x256xf32> to vector<1x16x256xf32>
    tpu.vector_store %arg11[%c0_367, %c128_368, %c0_369], %594 {strides = array<i32>} : memref<11x176x256xf32, #tpu.memory_space<vmem>>, vector<1x16x256xf32>,
    %c0_370 = arith.constant 0 : index
    %c24 = arith.constant 24 : index
    %595 = vector.load %arg10[%c0_370, %c24] : memref<16x426xf32, #tpu.memory_space<vmem>>, vector<16x256xf32>
    %596 = vector.broadcast %588 : vector<1x256xf32> to vector<16x256xf32>
    %597 = arith.mulf %595, %596 : vector<16x256xf32>
    %c1_371 = arith.constant 1 : index
    %c128_372 = arith.constant 128 : index
    %c0_373 = arith.constant 0 : index
    %598 = vector.load %arg11[%c1_371, %c128_372, %c0_373] : memref<11x176x256xf32, #tpu.memory_space<vmem>>, vector<1x16x256xf32>
    %599 = vector.shape_cast %598 : vector<1x16x256xf32> to vector<16x256xf32>
    %600 = vector.shape_cast %597 : vector<16x256xf32> to vector<1x16x256xf32>
    tpu.vector_store %arg11[%c1_371, %c128_372, %c0_373], %600 {strides = array<i32>} : memref<11x176x256xf32, #tpu.memory_space<vmem>>, vector<1x16x256xf32>,
    %c0_374 = arith.constant 0 : index
    %c40 = arith.constant 40 : index
    %601 = vector.load %arg10[%c0_374, %c40] : memref<16x426xf32, #tpu.memory_space<vmem>>, vector<16x256xf32>
    %602 = vector.broadcast %588 : vector<1x256xf32> to vector<16x256xf32>
    %603 = arith.mulf %601, %602 : vector<16x256xf32>
    %c2_375 = arith.constant 2 : index
    %c128_376 = arith.constant 128 : index
    %c0_377 = arith.constant 0 : index
    %604 = vector.load %arg11[%c2_375, %c128_376, %c0_377] : memref<11x176x256xf32, #tpu.memory_space<vmem>>, vector<1x16x256xf32>
    %605 = vector.shape_cast %604 : vector<1x16x256xf32> to vector<16x256xf32>
    %606 = vector.shape_cast %603 : vector<16x256xf32> to vector<1x16x256xf32>
    tpu.vector_store %arg11[%c2_375, %c128_376, %c0_377], %606 {strides = array<i32>} : memref<11x176x256xf32, #tpu.memory_space<vmem>>, vector<1x16x256xf32>,
    %c0_378 = arith.constant 0 : index
    %c56 = arith.constant 56 : index
    %607 = vector.load %arg10[%c0_378, %c56] : memref<16x426xf32, #tpu.memory_space<vmem>>, vector<16x256xf32>
    %608 = vector.broadcast %588 : vector<1x256xf32> to vector<16x256xf32>
    %609 = arith.mulf %607, %608 : vector<16x256xf32>
    %c3_379 = arith.constant 3 : index
    %c128_380 = arith.constant 128 : index
    %c0_381 = arith.constant 0 : index
    %610 = vector.load %arg11[%c3_379, %c128_380, %c0_381] : memref<11x176x256xf32, #tpu.memory_space<vmem>>, vector<1x16x256xf32>
    %611 = vector.shape_cast %610 : vector<1x16x256xf32> to vector<16x256xf32>
    %612 = vector.shape_cast %609 : vector<16x256xf32> to vector<1x16x256xf32>
    tpu.vector_store %arg11[%c3_379, %c128_380, %c0_381], %612 {strides = array<i32>} : memref<11x176x256xf32, #tpu.memory_space<vmem>>, vector<1x16x256xf32>,
    %c0_382 = arith.constant 0 : index
    %c72 = arith.constant 72 : index
    %613 = vector.load %arg10[%c0_382, %c72] : memref<16x426xf32, #tpu.memory_space<vmem>>, vector<16x256xf32>
    %614 = vector.broadcast %588 : vector<1x256xf32> to vector<16x256xf32>
    %615 = arith.mulf %613, %614 : vector<16x256xf32>
    %c4_383 = arith.constant 4 : index
    %c128_384 = arith.constant 128 : index
    %c0_385 = arith.constant 0 : index
    %616 = vector.load %arg11[%c4_383, %c128_384, %c0_385] : memref<11x176x256xf32, #tpu.memory_space<vmem>>, vector<1x16x256xf32>
    %617 = vector.shape_cast %616 : vector<1x16x256xf32> to vector<16x256xf32>
    %618 = vector.shape_cast %615 : vector<16x256xf32> to vector<1x16x256xf32>
    tpu.vector_store %arg11[%c4_383, %c128_384, %c0_385], %618 {strides = array<i32>} : memref<11x176x256xf32, #tpu.memory_space<vmem>>, vector<1x16x256xf32>,
    %c0_386 = arith.constant 0 : index
    %c88 = arith.constant 88 : index
    %619 = vector.load %arg10[%c0_386, %c88] : memref<16x426xf32, #tpu.memory_space<vmem>>, vector<16x256xf32>
    %620 = vector.broadcast %588 : vector<1x256xf32> to vector<16x256xf32>
    %621 = arith.mulf %619, %620 : vector<16x256xf32>
    %c5_387 = arith.constant 5 : index
    %c128_388 = arith.constant 128 : index
    %c0_389 = arith.constant 0 : index
    %622 = vector.load %arg11[%c5_387, %c128_388, %c0_389] : memref<11x176x256xf32, #tpu.memory_space<vmem>>, vector<1x16x256xf32>
    %623 = vector.shape_cast %622 : vector<1x16x256xf32> to vector<16x256xf32>
    %624 = vector.shape_cast %621 : vector<16x256xf32> to vector<1x16x256xf32>
    tpu.vector_store %arg11[%c5_387, %c128_388, %c0_389], %624 {strides = array<i32>} : memref<11x176x256xf32, #tpu.memory_space<vmem>>, vector<1x16x256xf32>,
    %c0_390 = arith.constant 0 : index
    %c104 = arith.constant 104 : index
    %625 = vector.load %arg10[%c0_390, %c104] : memref<16x426xf32, #tpu.memory_space<vmem>>, vector<16x256xf32>
    %626 = vector.broadcast %588 : vector<1x256xf32> to vector<16x256xf32>
    %627 = arith.mulf %625, %626 : vector<16x256xf32>
    %c6_391 = arith.constant 6 : index
    %c128_392 = arith.constant 128 : index
    %c0_393 = arith.constant 0 : index
    %628 = vector.load %arg11[%c6_391, %c128_392, %c0_393] : memref<11x176x256xf32, #tpu.memory_space<vmem>>, vector<1x16x256xf32>
    %629 = vector.shape_cast %628 : vector<1x16x256xf32> to vector<16x256xf32>
    %630 = vector.shape_cast %627 : vector<16x256xf32> to vector<1x16x256xf32>
    tpu.vector_store %arg11[%c6_391, %c128_392, %c0_393], %630 {strides = array<i32>} : memref<11x176x256xf32, #tpu.memory_space<vmem>>, vector<1x16x256xf32>,
    %c0_394 = arith.constant 0 : index
    %c120 = arith.constant 120 : index
    %631 = vector.load %arg10[%c0_394, %c120] : memref<16x426xf32, #tpu.memory_space<vmem>>, vector<16x256xf32>
    %632 = vector.broadcast %588 : vector<1x256xf32> to vector<16x256xf32>
    %633 = arith.mulf %631, %632 : vector<16x256xf32>
    %c7_395 = arith.constant 7 : index
    %c128_396 = arith.constant 128 : index
    %c0_397 = arith.constant 0 : index
    %634 = vector.load %arg11[%c7_395, %c128_396, %c0_397] : memref<11x176x256xf32, #tpu.memory_space<vmem>>, vector<1x16x256xf32>
    %635 = vector.shape_cast %634 : vector<1x16x256xf32> to vector<16x256xf32>
    %636 = vector.shape_cast %633 : vector<16x256xf32> to vector<1x16x256xf32>
    tpu.vector_store %arg11[%c7_395, %c128_396, %c0_397], %636 {strides = array<i32>} : memref<11x176x256xf32, #tpu.memory_space<vmem>>, vector<1x16x256xf32>,
    %c0_398 = arith.constant 0 : index
    %c136 = arith.constant 136 : index
    %637 = vector.load %arg10[%c0_398, %c136] : memref<16x426xf32, #tpu.memory_space<vmem>>, vector<16x256xf32>
    %638 = vector.broadcast %588 : vector<1x256xf32> to vector<16x256xf32>
    %639 = arith.mulf %637, %638 : vector<16x256xf32>
    %c8_399 = arith.constant 8 : index
    %c128_400 = arith.constant 128 : index
    %c0_401 = arith.constant 0 : index
    %640 = vector.load %arg11[%c8_399, %c128_400, %c0_401] : memref<11x176x256xf32, #tpu.memory_space<vmem>>, vector<1x16x256xf32>
    %641 = vector.shape_cast %640 : vector<1x16x256xf32> to vector<16x256xf32>
    %642 = vector.shape_cast %639 : vector<16x256xf32> to vector<1x16x256xf32>
    tpu.vector_store %arg11[%c8_399, %c128_400, %c0_401], %642 {strides = array<i32>} : memref<11x176x256xf32, #tpu.memory_space<vmem>>, vector<1x16x256xf32>,
    %c0_402 = arith.constant 0 : index
    %c152 = arith.constant 152 : index
    %643 = vector.load %arg10[%c0_402, %c152] : memref<16x426xf32, #tpu.memory_space<vmem>>, vector<16x256xf32>
    %644 = vector.broadcast %588 : vector<1x256xf32> to vector<16x256xf32>
    %645 = arith.mulf %643, %644 : vector<16x256xf32>
    %c9_403 = arith.constant 9 : index
    %c128_404 = arith.constant 128 : index
    %c0_405 = arith.constant 0 : index
    %646 = vector.load %arg11[%c9_403, %c128_404, %c0_405] : memref<11x176x256xf32, #tpu.memory_space<vmem>>, vector<1x16x256xf32>
    %647 = vector.shape_cast %646 : vector<1x16x256xf32> to vector<16x256xf32>
    %648 = vector.shape_cast %645 : vector<16x256xf32> to vector<1x16x256xf32>
    tpu.vector_store %arg11[%c9_403, %c128_404, %c0_405], %648 {strides = array<i32>} : memref<11x176x256xf32, #tpu.memory_space<vmem>>, vector<1x16x256xf32>,
    %c0_406 = arith.constant 0 : index
    %c168 = arith.constant 168 : index
    %649 = vector.load %arg10[%c0_406, %c168] : memref<16x426xf32, #tpu.memory_space<vmem>>, vector<16x256xf32>
    %650 = vector.broadcast %588 : vector<1x256xf32> to vector<16x256xf32>
    %651 = arith.mulf %649, %650 : vector<16x256xf32>
    %c10_407 = arith.constant 10 : index
    %c128_408 = arith.constant 128 : index
    %c0_409 = arith.constant 0 : index
    %652 = vector.load %arg11[%c10_407, %c128_408, %c0_409] : memref<11x176x256xf32, #tpu.memory_space<vmem>>, vector<1x16x256xf32>
    %653 = vector.shape_cast %652 : vector<1x16x256xf32> to vector<16x256xf32>
    %654 = vector.shape_cast %651 : vector<16x256xf32> to vector<1x16x256xf32>
    tpu.vector_store %arg11[%c10_407, %c128_408, %c0_409], %654 {strides = array<i32>} : memref<11x176x256xf32, #tpu.memory_space<vmem>>, vector<1x16x256xf32>,
    %c-4_i32 = arith.constant -4 : i32
    %655 = vector.broadcast %c-4_i32 : i32 to vector<1x256xi32>
    %656 = arith.cmpi sge, %26, %655 : vector<1x256xi32>
    %c12_i32 = arith.constant 12 : i32
    %657 = vector.broadcast %c12_i32 : i32 to vector<1x256xi32>
    %658 = arith.cmpi slt, %26, %657 : vector<1x256xi32>
    %659 = arith.andi %656, %658 : vector<1x256xi1>
    %660 = arith.extui %659 : vector<1x256xi1> to vector<1x256xi32>
    %661 = arith.sitofp %660 : vector<1x256xi32> to vector<1x256xf32>
    %c0_410 = arith.constant 0 : index
    %c9_411 = arith.constant 9 : index
    %662 = vector.load %arg10[%c0_410, %c9_411] : memref<16x426xf32, #tpu.memory_space<vmem>>, vector<16x256xf32>
    %663 = vector.broadcast %661 : vector<1x256xf32> to vector<16x256xf32>
    %664 = arith.mulf %662, %663 : vector<16x256xf32>
    %c0_412 = arith.constant 0 : index
    %c144_413 = arith.constant 144 : index
    %c0_414 = arith.constant 0 : index
    %665 = vector.load %arg11[%c0_412, %c144_413, %c0_414] : memref<11x176x256xf32, #tpu.memory_space<vmem>>, vector<1x16x256xf32>
    %666 = vector.shape_cast %665 : vector<1x16x256xf32> to vector<16x256xf32>
    %667 = vector.shape_cast %664 : vector<16x256xf32> to vector<1x16x256xf32>
    tpu.vector_store %arg11[%c0_412, %c144_413, %c0_414], %667 {strides = array<i32>} : memref<11x176x256xf32, #tpu.memory_space<vmem>>, vector<1x16x256xf32>,
    %c0_415 = arith.constant 0 : index
    %c25 = arith.constant 25 : index
    %668 = vector.load %arg10[%c0_415, %c25] : memref<16x426xf32, #tpu.memory_space<vmem>>, vector<16x256xf32>
    %669 = vector.broadcast %661 : vector<1x256xf32> to vector<16x256xf32>
    %670 = arith.mulf %668, %669 : vector<16x256xf32>
    %c1_416 = arith.constant 1 : index
    %c144_417 = arith.constant 144 : index
    %c0_418 = arith.constant 0 : index
    %671 = vector.load %arg11[%c1_416, %c144_417, %c0_418] : memref<11x176x256xf32, #tpu.memory_space<vmem>>, vector<1x16x256xf32>
    %672 = vector.shape_cast %671 : vector<1x16x256xf32> to vector<16x256xf32>
    %673 = vector.shape_cast %670 : vector<16x256xf32> to vector<1x16x256xf32>
    tpu.vector_store %arg11[%c1_416, %c144_417, %c0_418], %673 {strides = array<i32>} : memref<11x176x256xf32, #tpu.memory_space<vmem>>, vector<1x16x256xf32>,
    %c0_419 = arith.constant 0 : index
    %c41 = arith.constant 41 : index
    %674 = vector.load %arg10[%c0_419, %c41] : memref<16x426xf32, #tpu.memory_space<vmem>>, vector<16x256xf32>
    %675 = vector.broadcast %661 : vector<1x256xf32> to vector<16x256xf32>
    %676 = arith.mulf %674, %675 : vector<16x256xf32>
    %c2_420 = arith.constant 2 : index
    %c144_421 = arith.constant 144 : index
    %c0_422 = arith.constant 0 : index
    %677 = vector.load %arg11[%c2_420, %c144_421, %c0_422] : memref<11x176x256xf32, #tpu.memory_space<vmem>>, vector<1x16x256xf32>
    %678 = vector.shape_cast %677 : vector<1x16x256xf32> to vector<16x256xf32>
    %679 = vector.shape_cast %676 : vector<16x256xf32> to vector<1x16x256xf32>
    tpu.vector_store %arg11[%c2_420, %c144_421, %c0_422], %679 {strides = array<i32>} : memref<11x176x256xf32, #tpu.memory_space<vmem>>, vector<1x16x256xf32>,
    %c0_423 = arith.constant 0 : index
    %c57 = arith.constant 57 : index
    %680 = vector.load %arg10[%c0_423, %c57] : memref<16x426xf32, #tpu.memory_space<vmem>>, vector<16x256xf32>
    %681 = vector.broadcast %661 : vector<1x256xf32> to vector<16x256xf32>
    %682 = arith.mulf %680, %681 : vector<16x256xf32>
    %c3_424 = arith.constant 3 : index
    %c144_425 = arith.constant 144 : index
    %c0_426 = arith.constant 0 : index
    %683 = vector.load %arg11[%c3_424, %c144_425, %c0_426] : memref<11x176x256xf32, #tpu.memory_space<vmem>>, vector<1x16x256xf32>
    %684 = vector.shape_cast %683 : vector<1x16x256xf32> to vector<16x256xf32>
    %685 = vector.shape_cast %682 : vector<16x256xf32> to vector<1x16x256xf32>
    tpu.vector_store %arg11[%c3_424, %c144_425, %c0_426], %685 {strides = array<i32>} : memref<11x176x256xf32, #tpu.memory_space<vmem>>, vector<1x16x256xf32>,
    %c0_427 = arith.constant 0 : index
    %c73 = arith.constant 73 : index
    %686 = vector.load %arg10[%c0_427, %c73] : memref<16x426xf32, #tpu.memory_space<vmem>>, vector<16x256xf32>
    %687 = vector.broadcast %661 : vector<1x256xf32> to vector<16x256xf32>
    %688 = arith.mulf %686, %687 : vector<16x256xf32>
    %c4_428 = arith.constant 4 : index
    %c144_429 = arith.constant 144 : index
    %c0_430 = arith.constant 0 : index
    %689 = vector.load %arg11[%c4_428, %c144_429, %c0_430] : memref<11x176x256xf32, #tpu.memory_space<vmem>>, vector<1x16x256xf32>
    %690 = vector.shape_cast %689 : vector<1x16x256xf32> to vector<16x256xf32>
    %691 = vector.shape_cast %688 : vector<16x256xf32> to vector<1x16x256xf32>
    tpu.vector_store %arg11[%c4_428, %c144_429, %c0_430], %691 {strides = array<i32>} : memref<11x176x256xf32, #tpu.memory_space<vmem>>, vector<1x16x256xf32>,
    %c0_431 = arith.constant 0 : index
    %c89 = arith.constant 89 : index
    %692 = vector.load %arg10[%c0_431, %c89] : memref<16x426xf32, #tpu.memory_space<vmem>>, vector<16x256xf32>
    %693 = vector.broadcast %661 : vector<1x256xf32> to vector<16x256xf32>
    %694 = arith.mulf %692, %693 : vector<16x256xf32>
    %c5_432 = arith.constant 5 : index
    %c144_433 = arith.constant 144 : index
    %c0_434 = arith.constant 0 : index
    %695 = vector.load %arg11[%c5_432, %c144_433, %c0_434] : memref<11x176x256xf32, #tpu.memory_space<vmem>>, vector<1x16x256xf32>
    %696 = vector.shape_cast %695 : vector<1x16x256xf32> to vector<16x256xf32>
    %697 = vector.shape_cast %694 : vector<16x256xf32> to vector<1x16x256xf32>
    tpu.vector_store %arg11[%c5_432, %c144_433, %c0_434], %697 {strides = array<i32>} : memref<11x176x256xf32, #tpu.memory_space<vmem>>, vector<1x16x256xf32>,
    %c0_435 = arith.constant 0 : index
    %c105 = arith.constant 105 : index
    %698 = vector.load %arg10[%c0_435, %c105] : memref<16x426xf32, #tpu.memory_space<vmem>>, vector<16x256xf32>
    %699 = vector.broadcast %661 : vector<1x256xf32> to vector<16x256xf32>
    %700 = arith.mulf %698, %699 : vector<16x256xf32>
    %c6_436 = arith.constant 6 : index
    %c144_437 = arith.constant 144 : index
    %c0_438 = arith.constant 0 : index
    %701 = vector.load %arg11[%c6_436, %c144_437, %c0_438] : memref<11x176x256xf32, #tpu.memory_space<vmem>>, vector<1x16x256xf32>
    %702 = vector.shape_cast %701 : vector<1x16x256xf32> to vector<16x256xf32>
    %703 = vector.shape_cast %700 : vector<16x256xf32> to vector<1x16x256xf32>
    tpu.vector_store %arg11[%c6_436, %c144_437, %c0_438], %703 {strides = array<i32>} : memref<11x176x256xf32, #tpu.memory_space<vmem>>, vector<1x16x256xf32>,
    %c0_439 = arith.constant 0 : index
    %c121 = arith.constant 121 : index
    %704 = vector.load %arg10[%c0_439, %c121] : memref<16x426xf32, #tpu.memory_space<vmem>>, vector<16x256xf32>
    %705 = vector.broadcast %661 : vector<1x256xf32> to vector<16x256xf32>
    %706 = arith.mulf %704, %705 : vector<16x256xf32>
    %c7_440 = arith.constant 7 : index
    %c144_441 = arith.constant 144 : index
    %c0_442 = arith.constant 0 : index
    %707 = vector.load %arg11[%c7_440, %c144_441, %c0_442] : memref<11x176x256xf32, #tpu.memory_space<vmem>>, vector<1x16x256xf32>
    %708 = vector.shape_cast %707 : vector<1x16x256xf32> to vector<16x256xf32>
    %709 = vector.shape_cast %706 : vector<16x256xf32> to vector<1x16x256xf32>
    tpu.vector_store %arg11[%c7_440, %c144_441, %c0_442], %709 {strides = array<i32>} : memref<11x176x256xf32, #tpu.memory_space<vmem>>, vector<1x16x256xf32>,
    %c0_443 = arith.constant 0 : index
    %c137 = arith.constant 137 : index
    %710 = vector.load %arg10[%c0_443, %c137] : memref<16x426xf32, #tpu.memory_space<vmem>>, vector<16x256xf32>
    %711 = vector.broadcast %661 : vector<1x256xf32> to vector<16x256xf32>
    %712 = arith.mulf %710, %711 : vector<16x256xf32>
    %c8_444 = arith.constant 8 : index
    %c144_445 = arith.constant 144 : index
    %c0_446 = arith.constant 0 : index
    %713 = vector.load %arg11[%c8_444, %c144_445, %c0_446] : memref<11x176x256xf32, #tpu.memory_space<vmem>>, vector<1x16x256xf32>
    %714 = vector.shape_cast %713 : vector<1x16x256xf32> to vector<16x256xf32>
    %715 = vector.shape_cast %712 : vector<16x256xf32> to vector<1x16x256xf32>
    tpu.vector_store %arg11[%c8_444, %c144_445, %c0_446], %715 {strides = array<i32>} : memref<11x176x256xf32, #tpu.memory_space<vmem>>, vector<1x16x256xf32>,
    %c0_447 = arith.constant 0 : index
    %c153 = arith.constant 153 : index
    %716 = vector.load %arg10[%c0_447, %c153] : memref<16x426xf32, #tpu.memory_space<vmem>>, vector<16x256xf32>
    %717 = vector.broadcast %661 : vector<1x256xf32> to vector<16x256xf32>
    %718 = arith.mulf %716, %717 : vector<16x256xf32>
    %c9_448 = arith.constant 9 : index
    %c144_449 = arith.constant 144 : index
    %c0_450 = arith.constant 0 : index
    %719 = vector.load %arg11[%c9_448, %c144_449, %c0_450] : memref<11x176x256xf32, #tpu.memory_space<vmem>>, vector<1x16x256xf32>
    %720 = vector.shape_cast %719 : vector<1x16x256xf32> to vector<16x256xf32>
    %721 = vector.shape_cast %718 : vector<16x256xf32> to vector<1x16x256xf32>
    tpu.vector_store %arg11[%c9_448, %c144_449, %c0_450], %721 {strides = array<i32>} : memref<11x176x256xf32, #tpu.memory_space<vmem>>, vector<1x16x256xf32>,
    %c0_451 = arith.constant 0 : index
    %c169 = arith.constant 169 : index
    %722 = vector.load %arg10[%c0_451, %c169] : memref<16x426xf32, #tpu.memory_space<vmem>>, vector<16x256xf32>
    %723 = vector.broadcast %661 : vector<1x256xf32> to vector<16x256xf32>
    %724 = arith.mulf %722, %723 : vector<16x256xf32>
    %c10_452 = arith.constant 10 : index
    %c144_453 = arith.constant 144 : index
    %c0_454 = arith.constant 0 : index
    %725 = vector.load %arg11[%c10_452, %c144_453, %c0_454] : memref<11x176x256xf32, #tpu.memory_space<vmem>>, vector<1x16x256xf32>
    %726 = vector.shape_cast %725 : vector<1x16x256xf32> to vector<16x256xf32>
    %727 = vector.shape_cast %724 : vector<16x256xf32> to vector<1x16x256xf32>
    tpu.vector_store %arg11[%c10_452, %c144_453, %c0_454], %727 {strides = array<i32>} : memref<11x176x256xf32, #tpu.memory_space<vmem>>, vector<1x16x256xf32>,
    %c-5_i32 = arith.constant -5 : i32
    %728 = vector.broadcast %c-5_i32 : i32 to vector<1x256xi32>
    %729 = arith.cmpi sge, %26, %728 : vector<1x256xi32>
    %c11_i32 = arith.constant 11 : i32
    %730 = vector.broadcast %c11_i32 : i32 to vector<1x256xi32>
    %731 = arith.cmpi slt, %26, %730 : vector<1x256xi32>
    %732 = arith.andi %729, %731 : vector<1x256xi1>
    %733 = arith.extui %732 : vector<1x256xi1> to vector<1x256xi32>
    %734 = arith.sitofp %733 : vector<1x256xi32> to vector<1x256xf32>
    %c0_455 = arith.constant 0 : index
    %c10_456 = arith.constant 10 : index
    %735 = vector.load %arg10[%c0_455, %c10_456] : memref<16x426xf32, #tpu.memory_space<vmem>>, vector<16x256xf32>
    %736 = vector.broadcast %734 : vector<1x256xf32> to vector<16x256xf32>
    %737 = arith.mulf %735, %736 : vector<16x256xf32>
    %c0_457 = arith.constant 0 : index
    %c160_458 = arith.constant 160 : index
    %c0_459 = arith.constant 0 : index
    %738 = vector.load %arg11[%c0_457, %c160_458, %c0_459] : memref<11x176x256xf32, #tpu.memory_space<vmem>>, vector<1x16x256xf32>
    %739 = vector.shape_cast %738 : vector<1x16x256xf32> to vector<16x256xf32>
    %740 = vector.shape_cast %737 : vector<16x256xf32> to vector<1x16x256xf32>
    tpu.vector_store %arg11[%c0_457, %c160_458, %c0_459], %740 {strides = array<i32>} : memref<11x176x256xf32, #tpu.memory_space<vmem>>, vector<1x16x256xf32>,
    %c0_460 = arith.constant 0 : index
    %c26 = arith.constant 26 : index
    %741 = vector.load %arg10[%c0_460, %c26] : memref<16x426xf32, #tpu.memory_space<vmem>>, vector<16x256xf32>
    %742 = vector.broadcast %734 : vector<1x256xf32> to vector<16x256xf32>
    %743 = arith.mulf %741, %742 : vector<16x256xf32>
    %c1_461 = arith.constant 1 : index
    %c160_462 = arith.constant 160 : index
    %c0_463 = arith.constant 0 : index
    %744 = vector.load %arg11[%c1_461, %c160_462, %c0_463] : memref<11x176x256xf32, #tpu.memory_space<vmem>>, vector<1x16x256xf32>
    %745 = vector.shape_cast %744 : vector<1x16x256xf32> to vector<16x256xf32>
    %746 = vector.shape_cast %743 : vector<16x256xf32> to vector<1x16x256xf32>
    tpu.vector_store %arg11[%c1_461, %c160_462, %c0_463], %746 {strides = array<i32>} : memref<11x176x256xf32, #tpu.memory_space<vmem>>, vector<1x16x256xf32>,
    %c0_464 = arith.constant 0 : index
    %c42 = arith.constant 42 : index
    %747 = vector.load %arg10[%c0_464, %c42] : memref<16x426xf32, #tpu.memory_space<vmem>>, vector<16x256xf32>
    %748 = vector.broadcast %734 : vector<1x256xf32> to vector<16x256xf32>
    %749 = arith.mulf %747, %748 : vector<16x256xf32>
    %c2_465 = arith.constant 2 : index
    %c160_466 = arith.constant 160 : index
    %c0_467 = arith.constant 0 : index
    %750 = vector.load %arg11[%c2_465, %c160_466, %c0_467] : memref<11x176x256xf32, #tpu.memory_space<vmem>>, vector<1x16x256xf32>
    %751 = vector.shape_cast %750 : vector<1x16x256xf32> to vector<16x256xf32>
    %752 = vector.shape_cast %749 : vector<16x256xf32> to vector<1x16x256xf32>
    tpu.vector_store %arg11[%c2_465, %c160_466, %c0_467], %752 {strides = array<i32>} : memref<11x176x256xf32, #tpu.memory_space<vmem>>, vector<1x16x256xf32>,
    %c0_468 = arith.constant 0 : index
    %c58 = arith.constant 58 : index
    %753 = vector.load %arg10[%c0_468, %c58] : memref<16x426xf32, #tpu.memory_space<vmem>>, vector<16x256xf32>
    %754 = vector.broadcast %734 : vector<1x256xf32> to vector<16x256xf32>
    %755 = arith.mulf %753, %754 : vector<16x256xf32>
    %c3_469 = arith.constant 3 : index
    %c160_470 = arith.constant 160 : index
    %c0_471 = arith.constant 0 : index
    %756 = vector.load %arg11[%c3_469, %c160_470, %c0_471] : memref<11x176x256xf32, #tpu.memory_space<vmem>>, vector<1x16x256xf32>
    %757 = vector.shape_cast %756 : vector<1x16x256xf32> to vector<16x256xf32>
    %758 = vector.shape_cast %755 : vector<16x256xf32> to vector<1x16x256xf32>
    tpu.vector_store %arg11[%c3_469, %c160_470, %c0_471], %758 {strides = array<i32>} : memref<11x176x256xf32, #tpu.memory_space<vmem>>, vector<1x16x256xf32>,
    %c0_472 = arith.constant 0 : index
    %c74 = arith.constant 74 : index
    %759 = vector.load %arg10[%c0_472, %c74] : memref<16x426xf32, #tpu.memory_space<vmem>>, vector<16x256xf32>
    %760 = vector.broadcast %734 : vector<1x256xf32> to vector<16x256xf32>
    %761 = arith.mulf %759, %760 : vector<16x256xf32>
    %c4_473 = arith.constant 4 : index
    %c160_474 = arith.constant 160 : index
    %c0_475 = arith.constant 0 : index
    %762 = vector.load %arg11[%c4_473, %c160_474, %c0_475] : memref<11x176x256xf32, #tpu.memory_space<vmem>>, vector<1x16x256xf32>
    %763 = vector.shape_cast %762 : vector<1x16x256xf32> to vector<16x256xf32>
    %764 = vector.shape_cast %761 : vector<16x256xf32> to vector<1x16x256xf32>
    tpu.vector_store %arg11[%c4_473, %c160_474, %c0_475], %764 {strides = array<i32>} : memref<11x176x256xf32, #tpu.memory_space<vmem>>, vector<1x16x256xf32>,
    %c0_476 = arith.constant 0 : index
    %c90 = arith.constant 90 : index
    %765 = vector.load %arg10[%c0_476, %c90] : memref<16x426xf32, #tpu.memory_space<vmem>>, vector<16x256xf32>
    %766 = vector.broadcast %734 : vector<1x256xf32> to vector<16x256xf32>
    %767 = arith.mulf %765, %766 : vector<16x256xf32>
    %c5_477 = arith.constant 5 : index
    %c160_478 = arith.constant 160 : index
    %c0_479 = arith.constant 0 : index
    %768 = vector.load %arg11[%c5_477, %c160_478, %c0_479] : memref<11x176x256xf32, #tpu.memory_space<vmem>>, vector<1x16x256xf32>
    %769 = vector.shape_cast %768 : vector<1x16x256xf32> to vector<16x256xf32>
    %770 = vector.shape_cast %767 : vector<16x256xf32> to vector<1x16x256xf32>
    tpu.vector_store %arg11[%c5_477, %c160_478, %c0_479], %770 {strides = array<i32>} : memref<11x176x256xf32, #tpu.memory_space<vmem>>, vector<1x16x256xf32>,
    %c0_480 = arith.constant 0 : index
    %c106 = arith.constant 106 : index
    %771 = vector.load %arg10[%c0_480, %c106] : memref<16x426xf32, #tpu.memory_space<vmem>>, vector<16x256xf32>
    %772 = vector.broadcast %734 : vector<1x256xf32> to vector<16x256xf32>
    %773 = arith.mulf %771, %772 : vector<16x256xf32>
    %c6_481 = arith.constant 6 : index
    %c160_482 = arith.constant 160 : index
    %c0_483 = arith.constant 0 : index
    %774 = vector.load %arg11[%c6_481, %c160_482, %c0_483] : memref<11x176x256xf32, #tpu.memory_space<vmem>>, vector<1x16x256xf32>
    %775 = vector.shape_cast %774 : vector<1x16x256xf32> to vector<16x256xf32>
    %776 = vector.shape_cast %773 : vector<16x256xf32> to vector<1x16x256xf32>
    tpu.vector_store %arg11[%c6_481, %c160_482, %c0_483], %776 {strides = array<i32>} : memref<11x176x256xf32, #tpu.memory_space<vmem>>, vector<1x16x256xf32>,
    %c0_484 = arith.constant 0 : index
    %c122 = arith.constant 122 : index
    %777 = vector.load %arg10[%c0_484, %c122] : memref<16x426xf32, #tpu.memory_space<vmem>>, vector<16x256xf32>
    %778 = vector.broadcast %734 : vector<1x256xf32> to vector<16x256xf32>
    %779 = arith.mulf %777, %778 : vector<16x256xf32>
    %c7_485 = arith.constant 7 : index
    %c160_486 = arith.constant 160 : index
    %c0_487 = arith.constant 0 : index
    %780 = vector.load %arg11[%c7_485, %c160_486, %c0_487] : memref<11x176x256xf32, #tpu.memory_space<vmem>>, vector<1x16x256xf32>
    %781 = vector.shape_cast %780 : vector<1x16x256xf32> to vector<16x256xf32>
    %782 = vector.shape_cast %779 : vector<16x256xf32> to vector<1x16x256xf32>
    tpu.vector_store %arg11[%c7_485, %c160_486, %c0_487], %782 {strides = array<i32>} : memref<11x176x256xf32, #tpu.memory_space<vmem>>, vector<1x16x256xf32>,
    %c0_488 = arith.constant 0 : index
    %c138 = arith.constant 138 : index
    %783 = vector.load %arg10[%c0_488, %c138] : memref<16x426xf32, #tpu.memory_space<vmem>>, vector<16x256xf32>
    %784 = vector.broadcast %734 : vector<1x256xf32> to vector<16x256xf32>
    %785 = arith.mulf %783, %784 : vector<16x256xf32>
    %c8_489 = arith.constant 8 : index
    %c160_490 = arith.constant 160 : index
    %c0_491 = arith.constant 0 : index
    %786 = vector.load %arg11[%c8_489, %c160_490, %c0_491] : memref<11x176x256xf32, #tpu.memory_space<vmem>>, vector<1x16x256xf32>
    %787 = vector.shape_cast %786 : vector<1x16x256xf32> to vector<16x256xf32>
    %788 = vector.shape_cast %785 : vector<16x256xf32> to vector<1x16x256xf32>
    tpu.vector_store %arg11[%c8_489, %c160_490, %c0_491], %788 {strides = array<i32>} : memref<11x176x256xf32, #tpu.memory_space<vmem>>, vector<1x16x256xf32>,
    %c0_492 = arith.constant 0 : index
    %c154 = arith.constant 154 : index
    %789 = vector.load %arg10[%c0_492, %c154] : memref<16x426xf32, #tpu.memory_space<vmem>>, vector<16x256xf32>
    %790 = vector.broadcast %734 : vector<1x256xf32> to vector<16x256xf32>
    %791 = arith.mulf %789, %790 : vector<16x256xf32>
    %c9_493 = arith.constant 9 : index
    %c160_494 = arith.constant 160 : index
    %c0_495 = arith.constant 0 : index
    %792 = vector.load %arg11[%c9_493, %c160_494, %c0_495] : memref<11x176x256xf32, #tpu.memory_space<vmem>>, vector<1x16x256xf32>
    %793 = vector.shape_cast %792 : vector<1x16x256xf32> to vector<16x256xf32>
    %794 = vector.shape_cast %791 : vector<16x256xf32> to vector<1x16x256xf32>
    tpu.vector_store %arg11[%c9_493, %c160_494, %c0_495], %794 {strides = array<i32>} : memref<11x176x256xf32, #tpu.memory_space<vmem>>, vector<1x16x256xf32>,
    %c0_496 = arith.constant 0 : index
    %c170 = arith.constant 170 : index
    %795 = vector.load %arg10[%c0_496, %c170] : memref<16x426xf32, #tpu.memory_space<vmem>>, vector<16x256xf32>
    %796 = vector.broadcast %734 : vector<1x256xf32> to vector<16x256xf32>
    %797 = arith.mulf %795, %796 : vector<16x256xf32>
    %c10_497 = arith.constant 10 : index
    %c160_498 = arith.constant 160 : index
    %c0_499 = arith.constant 0 : index
    %798 = vector.load %arg11[%c10_497, %c160_498, %c0_499] : memref<11x176x256xf32, #tpu.memory_space<vmem>>, vector<1x16x256xf32>
    %799 = vector.shape_cast %798 : vector<1x16x256xf32> to vector<16x256xf32>
    %800 = vector.shape_cast %797 : vector<16x256xf32> to vector<1x16x256xf32>
    tpu.vector_store %arg11[%c10_497, %c160_498, %c0_499], %800 {strides = array<i32>} : memref<11x176x256xf32, #tpu.memory_space<vmem>>, vector<1x16x256xf32>,
    %cst_500 = arith.constant 0.000000e+00 : f32
    %801 = vector.broadcast %cst_500 : f32 to vector<64x256xf32>
    %c0_501 = arith.constant 0 : index
    %c0_502 = arith.constant 0 : index
    %c0_503 = arith.constant 0 : index
    %802 = vector.load %arg4[%c0_501, %c0_502, %c0_503] : memref<11x64x176xf32, #tpu.memory_space<vmem>>, vector<1x64x176xf32>
    %803 = vector.shape_cast %802 : vector<1x64x176xf32> to vector<64x176xf32>
    %c0_504 = arith.constant 0 : index
    %c0_505 = arith.constant 0 : index
    %c0_506 = arith.constant 0 : index
    %804 = vector.load %arg11[%c0_504, %c0_505, %c0_506] : memref<11x176x256xf32, #tpu.memory_space<vmem>>, vector<1x176x256xf32>
    %805 = vector.shape_cast %804 : vector<1x176x256xf32> to vector<176x256xf32>
    %cst_507 = arith.constant dense<0.000000e+00> : vector<64x256xf32>
    %806 = tpu.matmul %803, %805, %cst_507 {dimension_numbers = #tpu.dot_dimension_numbers<[1], [0], [0], [1], [0, 0, 1, 1], [], []>} : vector<64x176xf32>, vector<176x256xf32>, vector<64x256xf32> -> vector<64x256xf32>
    %807 = arith.addf %801, %806 : vector<64x256xf32>
    %c1_508 = arith.constant 1 : index
    %c0_509 = arith.constant 0 : index
    %c0_510 = arith.constant 0 : index
    %808 = vector.load %arg4[%c1_508, %c0_509, %c0_510] : memref<11x64x176xf32, #tpu.memory_space<vmem>>, vector<1x64x176xf32>
    %809 = vector.shape_cast %808 : vector<1x64x176xf32> to vector<64x176xf32>
    %c1_511 = arith.constant 1 : index
    %c0_512 = arith.constant 0 : index
    %c0_513 = arith.constant 0 : index
    %810 = vector.load %arg11[%c1_511, %c0_512, %c0_513] : memref<11x176x256xf32, #tpu.memory_space<vmem>>, vector<1x176x256xf32>
    %811 = vector.shape_cast %810 : vector<1x176x256xf32> to vector<176x256xf32>
    %cst_514 = arith.constant dense<0.000000e+00> : vector<64x256xf32>
    %812 = tpu.matmul %809, %811, %cst_514 {dimension_numbers = #tpu.dot_dimension_numbers<[1], [0], [0], [1], [0, 0, 1, 1], [], []>} : vector<64x176xf32>, vector<176x256xf32>, vector<64x256xf32> -> vector<64x256xf32>
    %813 = arith.addf %807, %812 : vector<64x256xf32>
    %c2_515 = arith.constant 2 : index
    %c0_516 = arith.constant 0 : index
    %c0_517 = arith.constant 0 : index
    %814 = vector.load %arg4[%c2_515, %c0_516, %c0_517] : memref<11x64x176xf32, #tpu.memory_space<vmem>>, vector<1x64x176xf32>
    %815 = vector.shape_cast %814 : vector<1x64x176xf32> to vector<64x176xf32>
    %c2_518 = arith.constant 2 : index
    %c0_519 = arith.constant 0 : index
    %c0_520 = arith.constant 0 : index
    %816 = vector.load %arg11[%c2_518, %c0_519, %c0_520] : memref<11x176x256xf32, #tpu.memory_space<vmem>>, vector<1x176x256xf32>
    %817 = vector.shape_cast %816 : vector<1x176x256xf32> to vector<176x256xf32>
    %cst_521 = arith.constant dense<0.000000e+00> : vector<64x256xf32>
    %818 = tpu.matmul %815, %817, %cst_521 {dimension_numbers = #tpu.dot_dimension_numbers<[1], [0], [0], [1], [0, 0, 1, 1], [], []>} : vector<64x176xf32>, vector<176x256xf32>, vector<64x256xf32> -> vector<64x256xf32>
    %819 = arith.addf %813, %818 : vector<64x256xf32>
    %c3_522 = arith.constant 3 : index
    %c0_523 = arith.constant 0 : index
    %c0_524 = arith.constant 0 : index
    %820 = vector.load %arg4[%c3_522, %c0_523, %c0_524] : memref<11x64x176xf32, #tpu.memory_space<vmem>>, vector<1x64x176xf32>
    %821 = vector.shape_cast %820 : vector<1x64x176xf32> to vector<64x176xf32>
    %c3_525 = arith.constant 3 : index
    %c0_526 = arith.constant 0 : index
    %c0_527 = arith.constant 0 : index
    %822 = vector.load %arg11[%c3_525, %c0_526, %c0_527] : memref<11x176x256xf32, #tpu.memory_space<vmem>>, vector<1x176x256xf32>
    %823 = vector.shape_cast %822 : vector<1x176x256xf32> to vector<176x256xf32>
    %cst_528 = arith.constant dense<0.000000e+00> : vector<64x256xf32>
    %824 = tpu.matmul %821, %823, %cst_528 {dimension_numbers = #tpu.dot_dimension_numbers<[1], [0], [0], [1], [0, 0, 1, 1], [], []>} : vector<64x176xf32>, vector<176x256xf32>, vector<64x256xf32> -> vector<64x256xf32>
    %825 = arith.addf %819, %824 : vector<64x256xf32>
    %c4_529 = arith.constant 4 : index
    %c0_530 = arith.constant 0 : index
    %c0_531 = arith.constant 0 : index
    %826 = vector.load %arg4[%c4_529, %c0_530, %c0_531] : memref<11x64x176xf32, #tpu.memory_space<vmem>>, vector<1x64x176xf32>
    %827 = vector.shape_cast %826 : vector<1x64x176xf32> to vector<64x176xf32>
    %c4_532 = arith.constant 4 : index
    %c0_533 = arith.constant 0 : index
    %c0_534 = arith.constant 0 : index
    %828 = vector.load %arg11[%c4_532, %c0_533, %c0_534] : memref<11x176x256xf32, #tpu.memory_space<vmem>>, vector<1x176x256xf32>
    %829 = vector.shape_cast %828 : vector<1x176x256xf32> to vector<176x256xf32>
    %cst_535 = arith.constant dense<0.000000e+00> : vector<64x256xf32>
    %830 = tpu.matmul %827, %829, %cst_535 {dimension_numbers = #tpu.dot_dimension_numbers<[1], [0], [0], [1], [0, 0, 1, 1], [], []>} : vector<64x176xf32>, vector<176x256xf32>, vector<64x256xf32> -> vector<64x256xf32>
    %831 = arith.addf %825, %830 : vector<64x256xf32>
    %c5_536 = arith.constant 5 : index
    %c0_537 = arith.constant 0 : index
    %c0_538 = arith.constant 0 : index
    %832 = vector.load %arg4[%c5_536, %c0_537, %c0_538] : memref<11x64x176xf32, #tpu.memory_space<vmem>>, vector<1x64x176xf32>
    %833 = vector.shape_cast %832 : vector<1x64x176xf32> to vector<64x176xf32>
    %c5_539 = arith.constant 5 : index
    %c0_540 = arith.constant 0 : index
    %c0_541 = arith.constant 0 : index
    %834 = vector.load %arg11[%c5_539, %c0_540, %c0_541] : memref<11x176x256xf32, #tpu.memory_space<vmem>>, vector<1x176x256xf32>
    %835 = vector.shape_cast %834 : vector<1x176x256xf32> to vector<176x256xf32>
    %cst_542 = arith.constant dense<0.000000e+00> : vector<64x256xf32>
    %836 = tpu.matmul %833, %835, %cst_542 {dimension_numbers = #tpu.dot_dimension_numbers<[1], [0], [0], [1], [0, 0, 1, 1], [], []>} : vector<64x176xf32>, vector<176x256xf32>, vector<64x256xf32> -> vector<64x256xf32>
    %837 = arith.addf %831, %836 : vector<64x256xf32>
    %c6_543 = arith.constant 6 : index
    %c0_544 = arith.constant 0 : index
    %c0_545 = arith.constant 0 : index
    %838 = vector.load %arg4[%c6_543, %c0_544, %c0_545] : memref<11x64x176xf32, #tpu.memory_space<vmem>>, vector<1x64x176xf32>
    %839 = vector.shape_cast %838 : vector<1x64x176xf32> to vector<64x176xf32>
    %c6_546 = arith.constant 6 : index
    %c0_547 = arith.constant 0 : index
    %c0_548 = arith.constant 0 : index
    %840 = vector.load %arg11[%c6_546, %c0_547, %c0_548] : memref<11x176x256xf32, #tpu.memory_space<vmem>>, vector<1x176x256xf32>
    %841 = vector.shape_cast %840 : vector<1x176x256xf32> to vector<176x256xf32>
    %cst_549 = arith.constant dense<0.000000e+00> : vector<64x256xf32>
    %842 = tpu.matmul %839, %841, %cst_549 {dimension_numbers = #tpu.dot_dimension_numbers<[1], [0], [0], [1], [0, 0, 1, 1], [], []>} : vector<64x176xf32>, vector<176x256xf32>, vector<64x256xf32> -> vector<64x256xf32>
    %843 = arith.addf %837, %842 : vector<64x256xf32>
    %c7_550 = arith.constant 7 : index
    %c0_551 = arith.constant 0 : index
    %c0_552 = arith.constant 0 : index
    %844 = vector.load %arg4[%c7_550, %c0_551, %c0_552] : memref<11x64x176xf32, #tpu.memory_space<vmem>>, vector<1x64x176xf32>
    %845 = vector.shape_cast %844 : vector<1x64x176xf32> to vector<64x176xf32>
    %c7_553 = arith.constant 7 : index
    %c0_554 = arith.constant 0 : index
    %c0_555 = arith.constant 0 : index
    %846 = vector.load %arg11[%c7_553, %c0_554, %c0_555] : memref<11x176x256xf32, #tpu.memory_space<vmem>>, vector<1x176x256xf32>
    %847 = vector.shape_cast %846 : vector<1x176x256xf32> to vector<176x256xf32>
    %cst_556 = arith.constant dense<0.000000e+00> : vector<64x256xf32>
    %848 = tpu.matmul %845, %847, %cst_556 {dimension_numbers = #tpu.dot_dimension_numbers<[1], [0], [0], [1], [0, 0, 1, 1], [], []>} : vector<64x176xf32>, vector<176x256xf32>, vector<64x256xf32> -> vector<64x256xf32>
    %849 = arith.addf %843, %848 : vector<64x256xf32>
    %c8_557 = arith.constant 8 : index
    %c0_558 = arith.constant 0 : index
    %c0_559 = arith.constant 0 : index
    %850 = vector.load %arg4[%c8_557, %c0_558, %c0_559] : memref<11x64x176xf32, #tpu.memory_space<vmem>>, vector<1x64x176xf32>
    %851 = vector.shape_cast %850 : vector<1x64x176xf32> to vector<64x176xf32>
    %c8_560 = arith.constant 8 : index
    %c0_561 = arith.constant 0 : index
    %c0_562 = arith.constant 0 : index
    %852 = vector.load %arg11[%c8_560, %c0_561, %c0_562] : memref<11x176x256xf32, #tpu.memory_space<vmem>>, vector<1x176x256xf32>
    %853 = vector.shape_cast %852 : vector<1x176x256xf32> to vector<176x256xf32>
    %cst_563 = arith.constant dense<0.000000e+00> : vector<64x256xf32>
    %854 = tpu.matmul %851, %853, %cst_563 {dimension_numbers = #tpu.dot_dimension_numbers<[1], [0], [0], [1], [0, 0, 1, 1], [], []>} : vector<64x176xf32>, vector<176x256xf32>, vector<64x256xf32> -> vector<64x256xf32>
    %855 = arith.addf %849, %854 : vector<64x256xf32>
    %c9_564 = arith.constant 9 : index
    %c0_565 = arith.constant 0 : index
    %c0_566 = arith.constant 0 : index
    %856 = vector.load %arg4[%c9_564, %c0_565, %c0_566] : memref<11x64x176xf32, #tpu.memory_space<vmem>>, vector<1x64x176xf32>
    %857 = vector.shape_cast %856 : vector<1x64x176xf32> to vector<64x176xf32>
    %c9_567 = arith.constant 9 : index
    %c0_568 = arith.constant 0 : index
    %c0_569 = arith.constant 0 : index
    %858 = vector.load %arg11[%c9_567, %c0_568, %c0_569] : memref<11x176x256xf32, #tpu.memory_space<vmem>>, vector<1x176x256xf32>
    %859 = vector.shape_cast %858 : vector<1x176x256xf32> to vector<176x256xf32>
    %cst_570 = arith.constant dense<0.000000e+00> : vector<64x256xf32>
    %860 = tpu.matmul %857, %859, %cst_570 {dimension_numbers = #tpu.dot_dimension_numbers<[1], [0], [0], [1], [0, 0, 1, 1], [], []>} : vector<64x176xf32>, vector<176x256xf32>, vector<64x256xf32> -> vector<64x256xf32>
    %861 = arith.addf %855, %860 : vector<64x256xf32>
    %c10_571 = arith.constant 10 : index
    %c0_572 = arith.constant 0 : index
    %c0_573 = arith.constant 0 : index
    %862 = vector.load %arg4[%c10_571, %c0_572, %c0_573] : memref<11x64x176xf32, #tpu.memory_space<vmem>>, vector<1x64x176xf32>
    %863 = vector.shape_cast %862 : vector<1x64x176xf32> to vector<64x176xf32>
    %c10_574 = arith.constant 10 : index
    %c0_575 = arith.constant 0 : index
    %c0_576 = arith.constant 0 : index
    %864 = vector.load %arg11[%c10_574, %c0_575, %c0_576] : memref<11x176x256xf32, #tpu.memory_space<vmem>>, vector<1x176x256xf32>
    %865 = vector.shape_cast %864 : vector<1x176x256xf32> to vector<176x256xf32>
    %cst_577 = arith.constant dense<0.000000e+00> : vector<64x256xf32>
    %866 = tpu.matmul %863, %865, %cst_577 {dimension_numbers = #tpu.dot_dimension_numbers<[1], [0], [0], [1], [0, 0, 1, 1], [], []>} : vector<64x176xf32>, vector<176x256xf32>, vector<64x256xf32> -> vector<64x256xf32>
    %867 = arith.addf %861, %866 : vector<64x256xf32>
    %c0_578 = arith.constant 0 : index
    %c0_579 = arith.constant 0 : index
    %868 = vector.load %arg5[%c0_578, %c0_579] : memref<64x1xf32, #tpu.memory_space<vmem>>, vector<64x1xf32>
    %869 = vector.broadcast %868 : vector<64x1xf32> to vector<64x256xf32>
    %870 = arith.addf %867, %869 : vector<64x256xf32>
    %c0_580 = arith.constant 0 : index
    %c0_581 = arith.constant 0 : index
    %871 = vector.load %arg8[%c0_580, %c0_581] : memref<64x64xf32, #tpu.memory_space<vmem>>, vector<64x64xf32>
    %cst_582 = arith.constant dense<0.000000e+00> : vector<64x256xf32>
    %872 = tpu.matmul %871, %870, %cst_582 {dimension_numbers = #tpu.dot_dimension_numbers<[1], [0], [0], [1], [0, 0, 1, 1], [], []>} : vector<64x64xf32>, vector<64x256xf32>, vector<64x256xf32> -> vector<64x256xf32>
    %cst_583 = arith.constant dense<0.000000e+00> : vector<64xf32>
    %873 = vector.multi_reduction <add>, %872, %cst_583 [1] : vector<64x256xf32> to vector<64xf32>
    %874 = vector.shape_cast %873 : vector<64xf32> to vector<64x1xf32>
    %875 = vector.broadcast %874 : vector<64x1xf32> to vector<64x256xf32>
    %876 = arith.subf %870, %875 : vector<64x256xf32>
    %c0_584 = arith.constant 0 : index
    %c0_585 = arith.constant 0 : index
    %877 = vector.load %arg8[%c0_584, %c0_585] : memref<64x64xf32, #tpu.memory_space<vmem>>, vector<64x64xf32>
    %878 = arith.mulf %876, %876 : vector<64x256xf32>
    %cst_586 = arith.constant dense<0.000000e+00> : vector<64x256xf32>
    %879 = tpu.matmul %877, %878, %cst_586 {dimension_numbers = #tpu.dot_dimension_numbers<[1], [0], [0], [1], [0, 0, 1, 1], [], []>} : vector<64x64xf32>, vector<64x256xf32>, vector<64x256xf32> -> vector<64x256xf32>
    %cst_587 = arith.constant dense<0.000000e+00> : vector<64xf32>
    %880 = vector.multi_reduction <add>, %879, %cst_587 [1] : vector<64x256xf32> to vector<64xf32>
    %881 = vector.shape_cast %880 : vector<64xf32> to vector<64x1xf32>
    %cst_588 = arith.constant 9.99999974E-6 : f32
    %882 = vector.broadcast %cst_588 : f32 to vector<64x1xf32>
    %883 = arith.addf %881, %882 : vector<64x1xf32>
    %884 = math.rsqrt %883 : vector<64x1xf32>
    %885 = vector.broadcast %884 : vector<64x1xf32> to vector<64x256xf32>
    %886 = arith.mulf %876, %885 : vector<64x256xf32>
    %c0_589 = arith.constant 0 : index
    %c0_590 = arith.constant 0 : index
    %887 = vector.load %arg6[%c0_589, %c0_590] : memref<64x1xf32, #tpu.memory_space<vmem>>, vector<64x1xf32>
    %888 = vector.broadcast %887 : vector<64x1xf32> to vector<64x256xf32>
    %889 = arith.mulf %886, %888 : vector<64x256xf32>
    %c0_591 = arith.constant 0 : index
    %c0_592 = arith.constant 0 : index
    %890 = vector.load %arg7[%c0_591, %c0_592] : memref<64x1xf32, #tpu.memory_space<vmem>>, vector<64x1xf32>
    %891 = vector.broadcast %890 : vector<64x1xf32> to vector<64x256xf32>
    %892 = arith.addf %889, %891 : vector<64x256xf32>
    %cst_593 = arith.constant 0.000000e+00 : f32
    %893 = vector.broadcast %cst_593 : f32 to vector<64x256xf32>
    %894 = arith.cmpf oge, %892, %893 : vector<64x256xf32>
    %cst_594 = arith.constant 2.000000e-01 : f32
    %895 = vector.broadcast %cst_594 : f32 to vector<64x256xf32>
    %896 = arith.mulf %895, %892 : vector<64x256xf32>
    %897 = arith.select %894, %892, %896 : vector<64x256xi1>, vector<64x256xf32>
    %898 = vector.extract_strided_slice %897 {offsets = [0, 0], sizes = [16, 256], strides = [1, 1]} : vector<64x256xf32> to vector<16x256xf32>
    %899 = vector.extract_strided_slice %897 {offsets = [16, 0], sizes = [16, 256], strides = [1, 1]} : vector<64x256xf32> to vector<16x256xf32>
    %900 = arith.addf %898, %899 : vector<16x256xf32>
    %901 = vector.extract_strided_slice %897 {offsets = [32, 0], sizes = [16, 256], strides = [1, 1]} : vector<64x256xf32> to vector<16x256xf32>
    %902 = arith.addf %900, %901 : vector<16x256xf32>
    %903 = vector.extract_strided_slice %897 {offsets = [48, 0], sizes = [16, 256], strides = [1, 1]} : vector<64x256xf32> to vector<16x256xf32>
    %904 = arith.addf %902, %903 : vector<16x256xf32>
    %905 = vector.shape_cast %904 : vector<16x256xf32> to vector<1x16x256xf32>
    %c0_595 = arith.constant 0 : index
    %c0_596 = arith.constant 0 : index
    %c0_597 = arith.constant 0 : index
    %906 = vector.load %arg9[%c0_595, %c0_596, %c0_597] : memref<1x16x256xf32, #tpu.memory_space<vmem>>, vector<1x16x256xf32>
    tpu.vector_store %arg9[%c0_595, %c0_596, %c0_597], %905 {strides = array<i32>} : memref<1x16x256xf32, #tpu.memory_space<vmem>>, vector<1x16x256xf32>,
    return
  }
  func.func @transform_0(%arg0: i32) -> (i32, i32, i32) {
    %c0_i32 = arith.constant 0 : i32
    %c0_i32_0 = arith.constant 0 : i32
    %c0_i32_1 = arith.constant 0 : i32
    return %arg0, %c0_i32, %c0_i32_0 : i32, i32, i32
  }
  func.func @transform_1(%arg0: i32) -> (i32, i32) {
    %c0_i32 = arith.constant 0 : i32
    %c0_i32_0 = arith.constant 0 : i32
    %c0_i32_1 = arith.constant 0 : i32
    return %c0_i32, %c0_i32_0 : i32, i32
  }
  func.func @transform_2(%arg0: i32) -> (i32, i32) {
    %c0_i32 = arith.constant 0 : i32
    %c0_i32_0 = arith.constant 0 : i32
    %c0_i32_1 = arith.constant 0 : i32
    return %c0_i32, %c0_i32_0 : i32, i32
  }
  func.func @transform_3(%arg0: i32) -> (i32, i32, i32) {
    %c0_i32 = arith.constant 0 : i32
    %c0_i32_0 = arith.constant 0 : i32
    %c0_i32_1 = arith.constant 0 : i32
    %c0_i32_2 = arith.constant 0 : i32
    return %c0_i32, %c0_i32_0, %c0_i32_1 : i32, i32, i32
  }
  func.func @transform_4(%arg0: i32) -> (i32, i32) {
    %c0_i32 = arith.constant 0 : i32
    %c0_i32_0 = arith.constant 0 : i32
    %c0_i32_1 = arith.constant 0 : i32
    return %c0_i32, %c0_i32_0 : i32, i32
  }
  func.func @transform_5(%arg0: i32) -> (i32, i32) {
    %c0_i32 = arith.constant 0 : i32
    %c0_i32_0 = arith.constant 0 : i32
    %c0_i32_1 = arith.constant 0 : i32
    return %c0_i32, %c0_i32_0 : i32, i32
  }
  func.func @transform_6(%arg0: i32) -> (i32, i32) {
    %c0_i32 = arith.constant 0 : i32
    %c0_i32_0 = arith.constant 0 : i32
    %c0_i32_1 = arith.constant 0 : i32
    return %c0_i32, %c0_i32_0 : i32, i32
  }
  func.func @transform_7(%arg0: i32) -> (i32, i32) {
    %c0_i32 = arith.constant 0 : i32
    %c0_i32_0 = arith.constant 0 : i32
    %c0_i32_1 = arith.constant 0 : i32
    return %c0_i32, %c0_i32_0 : i32, i32
  }
  func.func @transform_8(%arg0: i32) -> (i32, i32, i32) {
    %c0_i32 = arith.constant 0 : i32
    %c0_i32_0 = arith.constant 0 : i32
    %c0_i32_1 = arith.constant 0 : i32
    return %arg0, %c0_i32, %c0_i32_0 : i32, i32, i32
  }
}

</mosaic_0001>

<llo_original>
// kernel: ginception_st_forward.1
$region0: #{ginception_st_forward.1}
  #allocation0 [shape = 'u32[]', space=smem, size = 0x4, offset = 0x4, fixed_abs, tag = 'smem constant byte address 0x4 - core index']
  #allocation1 [shape = 'u32[144,128]{1,0:T(1,128)}', space=vmem, size = 0x12000, scoped, tag = 'internal scratch']
  #allocation2 [shape = 'f32[16,426]{1,0:T(8,128)}', space=vmem, size = 0x8000, scoped, tag = 'scratch operand']
  #allocation3 [shape = 'f32[11,176,256]{2,1,0:T(8,128)}', space=vmem, size = 0x1e4000, scoped, tag = 'scratch operand']
  %s0 = inlined_call_operand.vmem [shape: f32[2,8,256], index: 0, kind: input, shape index: {}]
  %s1 = inlined_call_operand.vmem [shape: f32[16,8], index: 1, kind: input, shape index: {}]
  %s2 = inlined_call_operand.vmem [shape: f32[16,1], index: 2, kind: input, shape index: {}]
  %s3 = inlined_call_operand.vmem [shape: f32[11,64,176], index: 3, kind: input, shape index: {}]
  %s4 = inlined_call_operand.vmem [shape: f32[64,1], index: 4, kind: input, shape index: {}]
  %s5 = inlined_call_operand.vmem [shape: f32[64,1], index: 5, kind: input, shape index: {}]
  %s6 = inlined_call_operand.vmem [shape: f32[64,1], index: 6, kind: input, shape index: {}]
  %s7 = inlined_call_operand.vmem [shape: f32[64,64], index: 7, kind: input, shape index: {}]
  %s8 = inlined_call_operand.vmem [shape: f32[2,16,256], index: 8, kind: output, shape index: {}]
  %s9 = sld [smem:[#allocation0]]
  $region65: #{ginception_st_forward.1} parent=0
    _
  %s11 = ssub.s32 1, %s9
  %s12 = scalar_select 0, %s11, %s9
  loop: start=0, step=1, limit=4
  $region2: #{ginception_st_forward.1} parent=0 // loop_pre_header
    _
  $region3: #{ginception_st_forward.1} parent=0 // loop_header
    %s14 = sphi 0, %s18
    %p15 = scmp.ge.s32.totalorder %s14, 4
    %s24 = sphi 0, %s26
    %s27 = sphi 0, %s24
    %s28 = sphi 0, %s27
    %s44 = sphi 0, %s28
    %s48 = sphi 0, %s48
    %s50 = sphi 0, %s48
    %s51 = sphi 0, %s50
    %s65 = sphi 0, %s51
    %s69 = sphi 0, %s69
    %s71 = sphi 0, %s69
    %s72 = sphi 0, %s71
    %s86 = sphi 0, %s72
    %s90 = sphi 0, %s90
    %s92 = sphi 0, %s90
    %s93 = sphi 0, %s92
    %s107 = sphi 0, %s93
    %s111 = sphi 0, %s111
    %s113 = sphi 0, %s111
    %s114 = sphi 0, %s113
    %s128 = sphi 0, %s114
    %s132 = sphi 0, %s132
    %s134 = sphi 0, %s132
    %s135 = sphi 0, %s134
    %s149 = sphi 0, %s135
    %s153 = sphi 0, %s153
    %s155 = sphi 0, %s153
    %s156 = sphi 0, %s155
    %s170 = sphi 0, %s156
    %s174 = sphi 0, %s174
    %s176 = sphi 0, %s174
    %s177 = sphi 0, %s176
    %s191 = sphi 0, %s177
    %s197 = sphi 0, %s199
    %s200 = sphi 0, %s197
    %s201 = sphi 0, %s200
    %s217 = sphi 0, %s201
  $region4: #{ginception_st_forward.1} parent=0 // loop_header_branch
    %17 = sbr.rel (%p15) target = $region8
  $region5: #{ginception_st_forward.1} parent=0 // loop_body
    %s19 = ssub.s32 %s14, 1
    %s20 = ssub.s32 %s14, 2
    %s21 = sadd.s32 %s14, 1
    %s22 = ssub.s32 %s14, %s21
    %p23 = scmp.eq.s32.totalorder %s22, 0
    %s25 = sadd.s32 %s24, 1
    %s26 = scalar_select %p23, %s24, %s25
    %p29 = pneg %p23
    %p30 = scmp.eq.s32.totalorder %s14, 1
    %p31 = por %p29, %p30
    %p32 = scmp.ne.s32.totalorder %s24, %s27
    %p33 = scmp.eq.s32.totalorder %s14, 0
    %p34 = por %p32, %p33
    %p35 = scmp.ne.s32.totalorder %s24, %s27
    %p36 = scmp.eq.s32.totalorder %s19, 1
    %p37 = por %p35, %p36
    %p38 = scmp.ne.s32.totalorder %s27, %s28
    %p39 = scmp.eq.s32.totalorder %s19, 0
    %p40 = por %p38, %p39
    %p41 = scmp.ne.s32.totalorder %s27, %s28
    %p42 = scmp.eq.s32.totalorder %s20, 1
    %p43 = por %p41, %p42
    %p45 = scmp.ne.s32.totalorder %s28, %s44
    %p46 = scmp.eq.s32.totalorder %s20, 0
    %p47 = por %p45, %p46
    %s49 = sadd.s32 %s48, 1
    %p52 = scmp.eq.s32.totalorder %s14, 1
    %p53 = scmp.ne.s32.totalorder %s48, %s50
    %p54 = scmp.eq.s32.totalorder %s14, 0
    %p55 = por %p53, %p54
    %p56 = scmp.ne.s32.totalorder %s48, %s50
    %p57 = scmp.eq.s32.totalorder %s19, 1
    %p58 = por %p56, %p57
    %p59 = scmp.ne.s32.totalorder %s50, %s51
    %p60 = scmp.eq.s32.totalorder %s19, 0
    %p61 = por %p59, %p60
    %p62 = scmp.ne.s32.totalorder %s50, %s51
    %p63 = scmp.eq.s32.totalorder %s20, 1
    %p64 = por %p62, %p63
    %p66 = scmp.ne.s32.totalorder %s51, %s65
    %p67 = scmp.eq.s32.totalorder %s20, 0
    %p68 = por %p66, %p67
    %s70 = sadd.s32 %s69, 1
    %p73 = scmp.eq.s32.totalorder %s14, 1
    %p74 = scmp.ne.s32.totalorder %s69, %s71
    %p75 = scmp.eq.s32.totalorder %s14, 0
    %p76 = por %p74, %p75
    %p77 = scmp.ne.s32.totalorder %s69, %s71
    %p78 = scmp.eq.s32.totalorder %s19, 1
    %p79 = por %p77, %p78
    %p80 = scmp.ne.s32.totalorder %s71, %s72
    %p81 = scmp.eq.s32.totalorder %s19, 0
    %p82 = por %p80, %p81
    %p83 = scmp.ne.s32.totalorder %s71, %s72
    %p84 = scmp.eq.s32.totalorder %s20, 1
    %p85 = por %p83, %p84
    %p87 = scmp.ne.s32.totalorder %s72, %s86
    %p88 = scmp.eq.s32.totalorder %s20, 0
    %p89 = por %p87, %p88
    %s91 = sadd.s32 %s90, 1
    %p94 = scmp.eq.s32.totalorder %s14, 1
    %p95 = scmp.ne.s32.totalorder %s90, %s92
    %p96 = scmp.eq.s32.totalorder %s14, 0
    %p97 = por %p95, %p96
    %p98 = scmp.ne.s32.totalorder %s90, %s92
    %p99 = scmp.eq.s32.totalorder %s19, 1
    %p100 = por %p98, %p99
    %p101 = scmp.ne.s32.totalorder %s92, %s93
    %p102 = scmp.eq.s32.totalorder %s19, 0
    %p103 = por %p101, %p102
    %p104 = scmp.ne.s32.totalorder %s92, %s93
    %p105 = scmp.eq.s32.totalorder %s20, 1
    %p106 = por %p104, %p105
    %p108 = scmp.ne.s32.totalorder %s93, %s107
    %p109 = scmp.eq.s32.totalorder %s20, 0
    %p110 = por %p108, %p109
    %s112 = sadd.s32 %s111, 1
    %p115 = scmp.eq.s32.totalorder %s14, 1
    %p116 = scmp.ne.s32.totalorder %s111, %s113
    %p117 = scmp.eq.s32.totalorder %s14, 0
    %p118 = por %p116, %p117
    %p119 = scmp.ne.s32.totalorder %s111, %s113
    %p120 = scmp.eq.s32.totalorder %s19, 1
    %p121 = por %p119, %p120
    %p122 = scmp.ne.s32.totalorder %s113, %s114
    %p123 = scmp.eq.s32.totalorder %s19, 0
    %p124 = por %p122, %p123
    %p125 = scmp.ne.s32.totalorder %s113, %s114
    %p126 = scmp.eq.s32.totalorder %s20, 1
    %p127 = por %p125, %p126
    %p129 = scmp.ne.s32.totalorder %s114, %s128
    %p130 = scmp.eq.s32.totalorder %s20, 0
    %p131 = por %p129, %p130
    %s133 = sadd.s32 %s132, 1
    %p136 = scmp.eq.s32.totalorder %s14, 1
    %p137 = scmp.ne.s32.totalorder %s132, %s134
    %p138 = scmp.eq.s32.totalorder %s14, 0
    %p139 = por %p137, %p138
    %p140 = scmp.ne.s32.totalorder %s132, %s134
    %p141 = scmp.eq.s32.totalorder %s19, 1
    %p142 = por %p140, %p141
    %p143 = scmp.ne.s32.totalorder %s134, %s135
    %p144 = scmp.eq.s32.totalorder %s19, 0
    %p145 = por %p143, %p144
    %p146 = scmp.ne.s32.totalorder %s134, %s135
    %p147 = scmp.eq.s32.totalorder %s20, 1
    %p148 = por %p146, %p147
    %p150 = scmp.ne.s32.totalorder %s135, %s149
    %p151 = scmp.eq.s32.totalorder %s20, 0
    %p152 = por %p150, %p151
    %s154 = sadd.s32 %s153, 1
    %p157 = scmp.eq.s32.totalorder %s14, 1
    %p158 = scmp.ne.s32.totalorder %s153, %s155
    %p159 = scmp.eq.s32.totalorder %s14, 0
    %p160 = por %p158, %p159
    %p161 = scmp.ne.s32.totalorder %s153, %s155
    %p162 = scmp.eq.s32.totalorder %s19, 1
    %p163 = por %p161, %p162
    %p164 = scmp.ne.s32.totalorder %s155, %s156
    %p165 = scmp.eq.s32.totalorder %s19, 0
    %p166 = por %p164, %p165
    %p167 = scmp.ne.s32.totalorder %s155, %s156
    %p168 = scmp.eq.s32.totalorder %s20, 1
    %p169 = por %p167, %p168
    %p171 = scmp.ne.s32.totalorder %s156, %s170
    %p172 = scmp.eq.s32.totalorder %s20, 0
    %p173 = por %p171, %p172
    %s175 = sadd.s32 %s174, 1
    %p178 = scmp.eq.s32.totalorder %s14, 1
    %p179 = scmp.ne.s32.totalorder %s174, %s176
    %p180 = scmp.eq.s32.totalorder %s14, 0
    %p181 = por %p179, %p180
    %p182 = scmp.ne.s32.totalorder %s174, %s176
    %p183 = scmp.eq.s32.totalorder %s19, 1
    %p184 = por %p182, %p183
    %p185 = scmp.ne.s32.totalorder %s176, %s177
    %p186 = scmp.eq.s32.totalorder %s19, 0
    %p187 = por %p185, %p186
    %p188 = scmp.ne.s32.totalorder %s176, %s177
    %p189 = scmp.eq.s32.totalorder %s20, 1
    %p190 = por %p188, %p189
    %p192 = scmp.ne.s32.totalorder %s177, %s191
    %p193 = scmp.eq.s32.totalorder %s20, 0
    %p194 = por %p192, %p193
    %s195 = ssub.s32 %s14, %s21
    %p196 = scmp.eq.s32.totalorder %s195, 0
    %s198 = sadd.s32 %s197, 1
    %s199 = scalar_select %p196, %s197, %s198
    %p202 = pneg %p196
    %p203 = scmp.eq.s32.totalorder %s14, 1
    %p204 = por %p202, %p203
    %p205 = scmp.ne.s32.totalorder %s197, %s200
    %p206 = scmp.eq.s32.totalorder %s14, 0
    %p207 = por %p205, %p206
    %p208 = scmp.ne.s32.totalorder %s197, %s200
    %p209 = scmp.eq.s32.totalorder %s19, 1
    %p210 = por %p208, %p209
    %p211 = scmp.ne.s32.totalorder %s200, %s201
    %p212 = scmp.eq.s32.totalorder %s19, 0
    %p213 = por %p211, %p212
    %p214 = scmp.ne.s32.totalorder %s200, %s201
    %p215 = scmp.eq.s32.totalorder %s20, 1
    %p216 = por %p214, %p215
    %p218 = scmp.ne.s32.totalorder %s201, %s217
    %p219 = scmp.eq.s32.totalorder %s20, 0
    %p220 = por %p218, %p219
    %p221 = scmp.le.s32.totalorder 1, %s14
    %p222 = scmp.lt.s32.totalorder %s14, 3
    %p223 = pnand %p221, %p222
    %p224 = pneg %p223
    // Predicated region
    $region9: #{ginception_st_forward.1} parent=5 // pred_check
      _
    $region10: #{ginception_st_forward.1} parent=5 // pred_check_branch
      %226 = sbr.rel (%p223) target = $region12
    $region11: #{ginception_st_forward.1} parent=5 // pred_region
      %s227 = ssub.s32 %s14, 1
      // Predicated region
      $region13: #{ginception_st_forward.1} parent=11 // pred_check
        %p228 = pneg %p61
      $region14: #{ginception_st_forward.1} parent=11 // pred_check_branch
        %230 = sbr.rel (%p228) target = $region16
      $region15: #{ginception_st_forward.1} parent=11 // pred_region
        _
      $region16: #{ginception_st_forward.1} parent=11 // pred_fallthru
        _
      // Predicated region
      $region17: #{ginception_st_forward.1} parent=11 // pred_check
        %p231 = pneg %p82
      $region18: #{ginception_st_forward.1} parent=11 // pred_check_branch
        %233 = sbr.rel (%p231) target = $region20
      $region19: #{ginception_st_forward.1} parent=11 // pred_region
        _
      $region20: #{ginception_st_forward.1} parent=11 // pred_fallthru
        _
      // Predicated region
      $region21: #{ginception_st_forward.1} parent=11 // pred_check
        %p234 = pneg %p103
      $region22: #{ginception_st_forward.1} parent=11 // pred_check_branch
        %236 = sbr.rel (%p234) target = $region24
      $region23: #{ginception_st_forward.1} parent=11 // pred_region
        _
      $region24: #{ginception_st_forward.1} parent=11 // pred_fallthru
        _
      // Predicated region
      $region25: #{ginception_st_forward.1} parent=11 // pred_check
        %p237 = pneg %p124
      $region26: #{ginception_st_forward.1} parent=11 // pred_check_branch
        %239 = sbr.rel (%p237) target = $region28
      $region27: #{ginception_st_forward.1} parent=11 // pred_region
        _
      $region28: #{ginception_st_forward.1} parent=11 // pred_fallthru
        _
      // Predicated region
      $region29: #{ginception_st_forward.1} parent=11 // pred_check
        %p240 = pneg %p145
      $region30: #{ginception_st_forward.1} parent=11 // pred_check_branch
        %242 = sbr.rel (%p240) target = $region32
      $region31: #{ginception_st_forward.1} parent=11 // pred_region
        _
      $region32: #{ginception_st_forward.1} parent=11 // pred_fallthru
        _
      // Predicated region
      $region33: #{ginception_st_forward.1} parent=11 // pred_check
        %p243 = pneg %p166
      $region34: #{ginception_st_forward.1} parent=11 // pred_check_branch
        %245 = sbr.rel (%p243) target = $region36
      $region35: #{ginception_st_forward.1} parent=11 // pred_region
        _
      $region36: #{ginception_st_forward.1} parent=11 // pred_fallthru
        _
      // Predicated region
      $region37: #{ginception_st_forward.1} parent=11 // pred_check
        %p246 = pneg %p187
      $region38: #{ginception_st_forward.1} parent=11 // pred_check_branch
        %248 = sbr.rel (%p246) target = $region40
      $region39: #{ginception_st_forward.1} parent=11 // pred_region
        _
      $region40: #{ginception_st_forward.1} parent=11 // pred_fallthru
        _
    $region12: #{ginception_st_forward.1} parent=5 // pred_fallthru
      _
    %p249 = scmp.lt.s32.totalorder %s14, 2
    // Predicated region
    $region41: #{ginception_st_forward.1} parent=5 // pred_check
      %p250 = pneg %p249
    $region42: #{ginception_st_forward.1} parent=5 // pred_check_branch
      %252 = sbr.rel (%p250) target = $region44
    $region43: #{ginception_st_forward.1} parent=5 // pred_region
      // Predicated region
      $region45: #{ginception_st_forward.1} parent=43 // pred_check
        %p253 = pneg %p34
      $region46: #{ginception_st_forward.1} parent=43 // pred_check_branch
        %255 = sbr.rel (%p253) target = $region48
      $region47: #{ginception_st_forward.1} parent=43 // pred_region
        %p256 = scmp.lt.s32.totalorder %s14, 1
        %s257 = scalar_select %p256, %s14, 1
        %s258 = smul.addr %s257, 2
        %s259 = smul.addr %s258, 8
        %s260 = scalar_lea.vmem %s0, %s259
      $region48: #{ginception_st_forward.1} parent=43 // pred_fallthru
        _
    $region44: #{ginception_st_forward.1} parent=5 // pred_fallthru
      _
    %p261 = scmp.le.s32.totalorder 1, %s14
    %p262 = scmp.lt.s32.totalorder %s14, 3
    %p263 = pnand %p261, %p262
    %p264 = pneg %p263
    // Predicated region
    $region49: #{ginception_st_forward.1} parent=5 // pred_check
      _
    $region50: #{ginception_st_forward.1} parent=5 // pred_check_branch
      %266 = sbr.rel (%p263) target = $region52
    $region51: #{ginception_st_forward.1} parent=5 // pred_region
      %s267 = ssub.s32 %s14, 1
      %p268 = scmp.lt.s32.totalorder %s19, 1
      %s269 = scalar_select %p268, %s19, 1
      %s270 = smul.addr %s269, 2
      %s271 = smul.addr %s270, 8
      %s272 = scalar_lea.vmem %s0, %s271
      %p273 = pneg %p40
      %p274 = pneg %p37
      %p275 = pneg %p61
      %p276 = pneg %p58
      %p277 = pneg %p82
      %p278 = pneg %p79
      %p279 = pneg %p103
      %p280 = pneg %p100
      %p281 = pneg %p124
      %p282 = pneg %p121
      %p283 = pneg %p145
      %p284 = pneg %p142
      %p285 = pneg %p166
      %p286 = pneg %p163
      %p287 = pneg %p187
      %p288 = pneg %p184
      %p289 = pneg %p213
      %p290 = pneg %p210
      %p291 = scmp.lt.s32.totalorder %s19, 1
      %s292 = scalar_select %p291, %s19, 1
      %s293 = smul.addr %s292, 4
      %s294 = smul.addr %s293, 8
      %s295 = scalar_lea.vmem %s8, %s294
      %p296 = scmp.lt.s32.totalorder %s19, 1
      %s297 = scalar_select %p296, %s19, 1
      %s298 = smul.addr %s297, 2
      %s299 = smul.addr %s298, 8
      %s300 = scalar_lea.vmem %s0, %s299
      %p301 = scmp.lt.s32.totalorder %s19, 1
      %s302 = scalar_select %p301, %s19, 1
      %s303 = smul.addr %s302, 4
      %s304 = smul.addr %s303, 8
      %s305 = scalar_lea.vmem %s8, %s304
      %v306 = vld [vmem:[%s300] sm:$0xff]
      %v307 = vld [vmem:[%s300 + $0x8] sm:$0xff]
      %v308 = vld [vmem:[%s1] sm:$0xff]
      %v309 = vld [vmem:[%s1 + $0x8] sm:$0xff]
      %v310 = vld [vmem:[%s2] sm:$0xff]
      %v311 = vld [vmem:[%s2 + $0x8] sm:$0xff]
      %313 = vset.pattern.permute.xlu0 0
      %314 = vperm.xlu0 %313, %v310
      %v315 = vpop.permute.xlu0 %314
      %318 = vset.pattern.permute.xlu0 0
      %319 = vperm.xlu0 %318, %v311
      %v320 = vpop.permute.xlu0 %319
      %vm322 = vcmask 64512
      %v324 = vsel %vm322, %v308, 0
      %v327 = vsel %vm322, %v309, 0
      %329 = vmatprep.subr.mxu0 %v307
      %330 = vmatpush1.msra.mxu0 %v306
      %331 = vmatprep.subr.mxu0 0.0
      %332 = vmatpush1.msra.mxu0 0.0
      %333 = vmatprep.subr.mxu0 0.0
      %334 = vmatpush1.msra.mxu0 0.0
      %335 = vmatprep.subr.mxu0 0.0
      %336 = vmatpush1.msra.mxu0 0.0
      %337 = vmatprep.subr.mxu0 0.0
      %338 = vmatpush1.msra.mxu0 0.0
      %339 = vmatprep.subr.mxu0 0.0
      %340 = vmatpush1.msra.mxu0 0.0
      %341 = vmatprep.subr.mxu0 0.0
      %342 = vmatpush1.msra.mxu0 0.0
      %343 = vmatprep.subr.mxu0 0.0
      %344 = vmatpush1.msra.mxu0 0.0
      %345 = vmatprep.subr.mxu0 0.0
      %346 = vmatpush1.msra.mxu0 0.0
      %347 = vmatprep.subr.mxu0 0.0
      %348 = vmatpush1.msra.mxu0 0.0
      %349 = vmatprep.subr.mxu0 0.0
      %350 = vmatpush1.msra.mxu0 0.0
      %351 = vmatprep.subr.mxu0 0.0
      %352 = vmatpush1.msra.mxu0 0.0
      %353 = vmatprep.subr.mxu0 0.0
      %354 = vmatpush1.msra.mxu0 0.0
      %355 = vmatprep.subr.mxu0 0.0
      %356 = vmatpush1.msra.mxu0 0.0
      %357 = vmatprep.subr.mxu0 0.0
      %358 = vmatpush1.msra.mxu0 0.0
      %359 = vmatprep.subr.mxu0 0.0
      %360 = vmatpush1.msra.mxu0 0.0
      %361 = vmatprep.subr.mxu0 0.0
      %362 = vmatpush1.msra.mxu0 0.0
      %363 = vmatprep.subr.mxu0 0.0
      %364 = vmatpush1.msra.mxu0 0.0
      %365 = vmatprep.subr.mxu0 0.0
      %366 = vmatpush1.msra.mxu0 0.0
      %367 = vmatprep.subr.mxu0 0.0
      %368 = vmatpush1.msra.mxu0 0.0
      %369 = vmatprep.subr.mxu0 0.0
      %370 = vmatpush1.msra.mxu0 0.0
      %371 = vmatprep.subr.mxu0 0.0
      %372 = vmatpush1.msra.mxu0 0.0
      %373 = vmatprep.subr.mxu0 0.0
      %374 = vmatpush1.msra.mxu0 0.0
      %375 = vmatprep.subr.mxu0 0.0
      %376 = vmatpush1.msra.mxu0 0.0
      %377 = vmatprep.subr.mxu0 0.0
      %378 = vmatpush1.msra.mxu0 0.0
      %379 = vmatprep.subr.mxu0 0.0
      %380 = vmatpush1.msra.mxu0 0.0
      %381 = vmatprep.subr.mxu0 0.0
      %382 = vmatpush1.msra.mxu0 0.0
      %383 = vmatprep.subr.mxu0 0.0
      %384 = vmatpush1.msra.mxu0 0.0
      %385 = vmatprep.subr.mxu0 0.0
      %386 = vmatpush1.msra.mxu0 0.0
      %387 = vmatprep.subr.mxu0 0.0
      %388 = vmatpush1.msra.mxu0 0.0
      %389 = vmatprep.subr.mxu0 0.0
      %390 = vmatpush1.msra.mxu0 0.0
      %391 = vmatprep.subr.mxu0 0.0
      %392 = vmatpush1.msra.mxu0 0.0
      %393 = vmatprep.mubr.f32.mxu0 0.0
      %394 = vmatmul.mubr.f32.gmra.mrb[0].mxu0 %v324
      %v395 = vpop.f32.mrb[0].mxu0
      %v396 = vadd.f32 %v315, %v395
      %v397 = vpop.f32.mrb[0].mxu0
      %v398 = vadd.f32 %v315, %v397
      %399 = vmatprep.mubr.f32.mxu0 0.0
      %400 = vmatmul.mubr.f32.gmra.mrb[0].mxu0 %v327
      %v401 = vpop.f32.mrb[0].mxu0
      %v402 = vadd.f32 %v320, %v401
      %v403 = vpop.f32.mrb[0].mxu0
      %v404 = vadd.f32 %v320, %v403
      %405 = vdwg.mxu0
      %406 = vst [vmem:[#allocation2] sm:$0xff] 0.0
      %407 = vst [vmem:[#allocation2 + $0x8] sm:$0xff] 0.0
      %408 = vst [vmem:[#allocation2 + $0x10] sm:$0xff] 0.0
      %vm409 = vcmask 343040
      %410 = vst.msk [vmem:[#allocation2 + $0x18] sm:$0xff] %vm409, 0.0
      %411 = vst [vmem:[#allocation2 + $0x20] sm:$0xff] 0.0
      %412 = vst [vmem:[#allocation2 + $0x28] sm:$0xff] 0.0
      %413 = vst [vmem:[#allocation2 + $0x30] sm:$0xff] 0.0
      %414 = vst.msk [vmem:[#allocation2 + $0x38] sm:$0xff] %vm409, 0.0
      %419 = vrot.lane.b32.xlu0 %v396, 85
      %v420 = vpop.permute.xlu0 %419
      %421 = vrot.lane.b32.xlu0 %v398, 85
      %v422 = vpop.permute.xlu0 %421
      %423 = vrot.lane.b32.xlu0 %v402, 85
      %v424 = vpop.permute.xlu0 %423
      %425 = vrot.lane.b32.xlu0 %v404, 85
      %v426 = vpop.permute.xlu0 %425
      %vm427 = vcmask 695296
      %v428 = vsel %vm427, %v420, %v422
      %v429 = vsel %vm427, %v424, %v426
      %vm436 = vcmask 1048232
      %437 = vst.msk [vmem:[#allocation2] sm:$0xff] %vm436, %v420
      %438 = vst [vmem:[#allocation2 + $0x8] sm:$0xff] %v428
      %439 = vst.msk [vmem:[#allocation2 + $0x10] sm:$0xff] %vm427, %v422
      %440 = vst.msk [vmem:[#allocation2 + $0x20] sm:$0xff] %vm436, %v424
      %441 = vst [vmem:[#allocation2 + $0x28] sm:$0xff] %v429
      %442 = vst.msk [vmem:[#allocation2 + $0x30] sm:$0xff] %vm427, %v426
      %v443 = vlaneseq
      %v444 = vand.u32 %v443, 127
      %v445 = vadd.s32 %v444, 128
      %vm446 = vcmp.lt.s32.totalorder %v444, 0
      %v447 = vsub.s32 0, %v444
      %v448 = vsel %vm446, %v447, %v444
      %v449 = vshrl.u32 %v448, 4
      %v450 = vand.u32 %v448, 15
      %v451 = vsub.s32 0, %v450
      %v452 = vsel %vm446, %v451, %v450
      %vm453 = vcmp.lt.s32.totalorder %v445, 0
      %v454 = vsub.s32 0, %v445
      %v455 = vsel %vm453, %v454, %v445
      %v456 = vshrl.u32 %v455, 4
      %v457 = vand.u32 %v455, 15
      %v458 = vsub.s32 0, %v457
      %v459 = vsel %vm453, %v458, %v457
      %vm460 = vcmp.ne.s32.totalorder %v452, 0
      %vm461 = vcmp.ne.s32.totalorder %v459, 0
      %vm462 = vcmp.lt.s32.totalorder %v452, 0
      %vm463 = vcmp.lt.s32.totalorder %v459, 0
      %vm464 = vmand %vm462, %vm460
      %vm465 = vmand %vm463, %vm461
      %v466 = vadd.s32 %v452, 16
      %v467 = vadd.s32 %v459, 16
      %v468 = vsel %vm464, %v466, %v452
      %v469 = vsel %vm465, %v467, %v459
      %vm470 = vcmp.ge.s32.totalorder %v468, 5
      %vm471 = vcmp.ge.s32.totalorder %v469, 5
      %vm472 = vcmp.lt.s32.totalorder %v468, 21
      %vm473 = vcmp.lt.s32.totalorder %v469, 21
      %vm474 = vmand %vm470, %vm472
      %vm475 = vmand %vm471, %vm473
      %v476 = vsel %vm474, 1, 0
      %v477 = vsel %vm475, 1, 0
      %v478 = vcvt.s32.f32 %v476
      %v479 = vcvt.s32.f32 %v477
      %v480 = vld [vmem:[#allocation2] sm:$0xff]
      %v481 = vld [vmem:[#allocation2 + $0x8] sm:$0xff]
      %v482 = vld [vmem:[#allocation2 + $0x20] sm:$0xff]
      %v483 = vld [vmem:[#allocation2 + $0x28] sm:$0xff]
      %v484 = vmul.f32 %v480, %v478
      %v485 = vmul.f32 %v481, %v479
      %v486 = vmul.f32 %v482, %v478
      %v487 = vmul.f32 %v483, %v479
      %488 = vst [vmem:[#allocation3] sm:$0xff] %v484
      %489 = vst [vmem:[#allocation3 + $0x8] sm:$0xff] %v485
      %490 = vst [vmem:[#allocation3 + $0x10] sm:$0xff] %v486
      %491 = vst [vmem:[#allocation3 + $0x18] sm:$0xff] %v487
      %v492 = vld [vmem:[#allocation2] sm:$0xff]
      %v493 = vld [vmem:[#allocation2 + $0x8] sm:$0xff]
      %v494 = vld [vmem:[#allocation2 + $0x10] sm:$0xff]
      %v495 = vld [vmem:[#allocation2 + $0x20] sm:$0xff]
      %v496 = vld [vmem:[#allocation2 + $0x28] sm:$0xff]
      %v497 = vld [vmem:[#allocation2 + $0x30] sm:$0xff]
      %500 = vrot.lane.b32.xlu0 %v478, 16
      %v501 = vpop.permute.xlu0 %500
      %502 = vrot.lane.b32.xlu0 %v479, 16
      %v503 = vpop.permute.xlu0 %502
      %vm504 = vcmask 130048
      %v505 = vsel %vm504, %v501, %v503
      %v509 = vmul.f32 %v492, %v501
      %v510 = vmul.f32 %v493, %v505
      %v511 = vmul.f32 %v494, %v503
      %v512 = vmul.f32 %v495, %v501
      %v513 = vmul.f32 %v496, %v505
      %v514 = vmul.f32 %v497, %v503
      %521 = vrot.lane.b32.xlu0 %v509, 112
      %v522 = vpop.permute.xlu0 %521
      %523 = vrot.lane.b32.xlu0 %v510, 112
      %v524 = vpop.permute.xlu0 %523
      %525 = vrot.lane.b32.xlu0 %v511, 112
      %v526 = vpop.permute.xlu0 %525
      %527 = vrot.lane.b32.xlu0 %v512, 112
      %v528 = vpop.permute.xlu0 %527
      %529 = vrot.lane.b32.xlu0 %v513, 112
      %v530 = vpop.permute.xlu0 %529
      %531 = vrot.lane.b32.xlu0 %v514, 112
      %v532 = vpop.permute.xlu0 %531
      %vm533 = vcmask 916480
      %v534 = vsel %vm533, %v522, %v524
      %v535 = vsel %vm533, %v524, %v526
      %v536 = vsel %vm533, %v528, %v530
      %v537 = vsel %vm533, %v530, %v532
      %s542 = scalar_lea.vmem [#allocation3], 352
      %543 = vst [vmem:[%s542] sm:$0xff] %v534
      %544 = vst [vmem:[%s542 + $0x8] sm:$0xff] %v535
      %545 = vst [vmem:[%s542 + $0x10] sm:$0xff] %v536
      %546 = vst [vmem:[%s542 + $0x18] sm:$0xff] %v537
      %v547 = vld [vmem:[#allocation2] sm:$0xff]
      %v548 = vld [vmem:[#allocation2 + $0x8] sm:$0xff]
      %v549 = vld [vmem:[#allocation2 + $0x10] sm:$0xff]
      %v550 = vld [vmem:[#allocation2 + $0x20] sm:$0xff]
      %v551 = vld [vmem:[#allocation2 + $0x28] sm:$0xff]
      %v552 = vld [vmem:[#allocation2 + $0x30] sm:$0xff]
      %553 = vrot.lane.b32.xlu0 %v478, 32
      %v554 = vpop.permute.xlu0 %553
      %555 = vrot.lane.b32.xlu0 %v479, 32
      %v556 = vpop.permute.xlu0 %555
      %vm557 = vcmask 261120
      %v558 = vsel %vm557, %v554, %v556
      %v562 = vmul.f32 %v547, %v554
      %v563 = vmul.f32 %v548, %v558
      %v564 = vmul.f32 %v549, %v556
      %v565 = vmul.f32 %v550, %v554
      %v566 = vmul.f32 %v551, %v558
      %v567 = vmul.f32 %v552, %v556
      %574 = vrot.lane.b32.xlu0 %v562, 96
      %v575 = vpop.permute.xlu0 %574
      %576 = vrot.lane.b32.xlu0 %v563, 96
      %v577 = vpop.permute.xlu0 %576
      %578 = vrot.lane.b32.xlu0 %v564, 96
      %v579 = vpop.permute.xlu0 %578
      %580 = vrot.lane.b32.xlu0 %v565, 96
      %v581 = vpop.permute.xlu0 %580
      %582 = vrot.lane.b32.xlu0 %v566, 96
      %v583 = vpop.permute.xlu0 %582
      %584 = vrot.lane.b32.xlu0 %v567, 96
      %v585 = vpop.permute.xlu0 %584
      %vm586 = vcmask 785408
      %v587 = vsel %vm586, %v575, %v577
      %v588 = vsel %vm586, %v577, %v579
      %v589 = vsel %vm586, %v581, %v583
      %v590 = vsel %vm586, %v583, %v585
      %s595 = scalar_lea.vmem [#allocation3], 704
      %596 = vst [vmem:[%s595] sm:$0xff] %v587
      %597 = vst [vmem:[%s595 + $0x8] sm:$0xff] %v588
      %598 = vst [vmem:[%s595 + $0x10] sm:$0xff] %v589
      %599 = vst [vmem:[%s595 + $0x18] sm:$0xff] %v590
      %v600 = vld [vmem:[#allocation2] sm:$0xff]
      %v601 = vld [vmem:[#allocation2 + $0x8] sm:$0xff]
      %v602 = vld [vmem:[#allocation2 + $0x10] sm:$0xff]
      %v603 = vld [vmem:[#allocation2 + $0x20] sm:$0xff]
      %v604 = vld [vmem:[#allocation2 + $0x28] sm:$0xff]
      %v605 = vld [vmem:[#allocation2 + $0x30] sm:$0xff]
      %606 = vrot.lane.b32.xlu0 %v478, 48
      %v607 = vpop.permute.xlu0 %606
      %608 = vrot.lane.b32.xlu0 %v479, 48
      %v609 = vpop.permute.xlu0 %608
      %vm610 = vcmask 392192
      %v611 = vsel %vm610, %v607, %v609
      %v615 = vmul.f32 %v600, %v607
      %v616 = vmul.f32 %v601, %v611
      %v617 = vmul.f32 %v602, %v609
      %v618 = vmul.f32 %v603, %v607
      %v619 = vmul.f32 %v604, %v611
      %v620 = vmul.f32 %v605, %v609
      %627 = vrot.lane.b32.xlu0 %v615, 80
      %v628 = vpop.permute.xlu0 %627
      %629 = vrot.lane.b32.xlu0 %v616, 80
      %v630 = vpop.permute.xlu0 %629
      %631 = vrot.lane.b32.xlu0 %v617, 80
      %v632 = vpop.permute.xlu0 %631
      %633 = vrot.lane.b32.xlu0 %v618, 80
      %v634 = vpop.permute.xlu0 %633
      %635 = vrot.lane.b32.xlu0 %v619, 80
      %v636 = vpop.permute.xlu0 %635
      %637 = vrot.lane.b32.xlu0 %v620, 80
      %v638 = vpop.permute.xlu0 %637
      %vm639 = vcmask 654336
      %v640 = vsel %vm639, %v628, %v630
      %v641 = vsel %vm639, %v630, %v632
      %v642 = vsel %vm639, %v634, %v636
      %v643 = vsel %vm639, %v636, %v638
      %s648 = scalar_lea.vmem [#allocation3], 1056
      %649 = vst [vmem:[%s648] sm:$0xff] %v640
      %650 = vst [vmem:[%s648 + $0x8] sm:$0xff] %v641
      %651 = vst [vmem:[%s648 + $0x10] sm:$0xff] %v642
      %652 = vst [vmem:[%s648 + $0x18] sm:$0xff] %v643
      %v653 = vld [vmem:[#allocation2] sm:$0xff]
      %v654 = vld [vmem:[#allocation2 + $0x8] sm:$0xff]
      %v655 = vld [vmem:[#allocation2 + $0x10] sm:$0xff]
      %v656 = vld [vmem:[#allocation2 + $0x20] sm:$0xff]
      %v657 = vld [vmem:[#allocation2 + $0x28] sm:$0xff]
      %v658 = vld [vmem:[#allocation2 + $0x30] sm:$0xff]
      %659 = vrot.lane.b32.xlu0 %v478, 64
      %v660 = vpop.permute.xlu0 %659
      %661 = vrot.lane.b32.xlu0 %v479, 64
      %v662 = vpop.permute.xlu0 %661
      %vm663 = vcmask 523264
      %v664 = vsel %vm663, %v660, %v662
      %v668 = vmul.f32 %v653, %v660
      %v669 = vmul.f32 %v654, %v664
      %v670 = vmul.f32 %v655, %v662
      %v671 = vmul.f32 %v656, %v660
      %v672 = vmul.f32 %v657, %v664
      %v673 = vmul.f32 %v658, %v662
      %680 = vrot.lane.b32.xlu0 %v668, 64
      %v681 = vpop.permute.xlu0 %680
      %682 = vrot.lane.b32.xlu0 %v669, 64
      %v683 = vpop.permute.xlu0 %682
      %684 = vrot.lane.b32.xlu0 %v670, 64
      %v685 = vpop.permute.xlu0 %684
      %686 = vrot.lane.b32.xlu0 %v671, 64
      %v687 = vpop.permute.xlu0 %686
      %688 = vrot.lane.b32.xlu0 %v672, 64
      %v689 = vpop.permute.xlu0 %688
      %690 = vrot.lane.b32.xlu0 %v673, 64
      %v691 = vpop.permute.xlu0 %690
      %v692 = vsel %vm663, %v681, %v683
      %v693 = vsel %vm663, %v683, %v685
      %v694 = vsel %vm663, %v687, %v689
      %v695 = vsel %vm663, %v689, %v691
      %s700 = scalar_lea.vmem [#allocation3], 1408
      %701 = vst [vmem:[%s700] sm:$0xff] %v692
      %702 = vst [vmem:[%s700 + $0x8] sm:$0xff] %v693
      %703 = vst [vmem:[%s700 + $0x10] sm:$0xff] %v694
      %704 = vst [vmem:[%s700 + $0x18] sm:$0xff] %v695
      %v705 = vld [vmem:[#allocation2] sm:$0xff]
      %v706 = vld [vmem:[#allocation2 + $0x8] sm:$0xff]
      %v707 = vld [vmem:[#allocation2 + $0x10] sm:$0xff]
      %v708 = vld [vmem:[#allocation2 + $0x20] sm:$0xff]
      %v709 = vld [vmem:[#allocation2 + $0x28] sm:$0xff]
      %v710 = vld [vmem:[#allocation2 + $0x30] sm:$0xff]
      %711 = vrot.lane.b32.xlu0 %v478, 80
      %v712 = vpop.permute.xlu0 %711
      %713 = vrot.lane.b32.xlu0 %v479, 80
      %v714 = vpop.permute.xlu0 %713
      %v715 = vsel %vm639, %v712, %v714
      %v719 = vmul.f32 %v705, %v712
      %v720 = vmul.f32 %v706, %v715
      %v721 = vmul.f32 %v707, %v714
      %v722 = vmul.f32 %v708, %v712
      %v723 = vmul.f32 %v709, %v715
      %v724 = vmul.f32 %v710, %v714
      %731 = vrot.lane.b32.xlu0 %v719, 48
      %v732 = vpop.permute.xlu0 %731
      %733 = vrot.lane.b32.xlu0 %v720, 48
      %v734 = vpop.permute.xlu0 %733
      %735 = vrot.lane.b32.xlu0 %v721, 48
      %v736 = vpop.permute.xlu0 %735
      %737 = vrot.lane.b32.xlu0 %v722, 48
      %v738 = vpop.permute.xlu0 %737
      %739 = vrot.lane.b32.xlu0 %v723, 48
      %v740 = vpop.permute.xlu0 %739
      %741 = vrot.lane.b32.xlu0 %v724, 48
      %v742 = vpop.permute.xlu0 %741
      %v743 = vsel %vm610, %v732, %v734
      %v744 = vsel %vm610, %v734, %v736
      %v745 = vsel %vm610, %v738, %v740
      %v746 = vsel %vm610, %v740, %v742
      %s751 = scalar_lea.vmem [#allocation3], 1760
      %752 = vst [vmem:[%s751] sm:$0xff] %v743
      %753 = vst [vmem:[%s751 + $0x8] sm:$0xff] %v744
      %754 = vst [vmem:[%s751 + $0x10] sm:$0xff] %v745
      %755 = vst [vmem:[%s751 + $0x18] sm:$0xff] %v746
      %v756 = vld [vmem:[#allocation2] sm:$0xff]
      %v757 = vld [vmem:[#allocation2 + $0x8] sm:$0xff]
      %v758 = vld [vmem:[#allocation2 + $0x10] sm:$0xff]
      %v759 = vld [vmem:[#allocation2 + $0x20] sm:$0xff]
      %v760 = vld [vmem:[#allocation2 + $0x28] sm:$0xff]
      %v761 = vld [vmem:[#allocation2 + $0x30] sm:$0xff]
      %762 = vrot.lane.b32.xlu0 %v478, 96
      %v763 = vpop.permute.xlu0 %762
      %764 = vrot.lane.b32.xlu0 %v479, 96
      %v765 = vpop.permute.xlu0 %764
      %v766 = vsel %vm586, %v763, %v765
      %v770 = vmul.f32 %v756, %v763
      %v771 = vmul.f32 %v757, %v766
      %v772 = vmul.f32 %v758, %v765
      %v773 = vmul.f32 %v759, %v763
      %v774 = vmul.f32 %v760, %v766
      %v775 = vmul.f32 %v761, %v765
      %782 = vrot.lane.b32.xlu0 %v770, 32
      %v783 = vpop.permute.xlu0 %782
      %784 = vrot.lane.b32.xlu0 %v771, 32
      %v785 = vpop.permute.xlu0 %784
      %786 = vrot.lane.b32.xlu0 %v772, 32
      %v787 = vpop.permute.xlu0 %786
      %788 = vrot.lane.b32.xlu0 %v773, 32
      %v789 = vpop.permute.xlu0 %788
      %790 = vrot.lane.b32.xlu0 %v774, 32
      %v791 = vpop.permute.xlu0 %790
      %792 = vrot.lane.b32.xlu0 %v775, 32
      %v793 = vpop.permute.xlu0 %792
      %v794 = vsel %vm557, %v783, %v785
      %v795 = vsel %vm557, %v785, %v787
      %v796 = vsel %vm557, %v789, %v791
      %v797 = vsel %vm557, %v791, %v793
      %s802 = scalar_lea.vmem [#allocation3], 2112
      %803 = vst [vmem:[%s802] sm:$0xff] %v794
      %804 = vst [vmem:[%s802 + $0x8] sm:$0xff] %v795
      %805 = vst [vmem:[%s802 + $0x10] sm:$0xff] %v796
      %806 = vst [vmem:[%s802 + $0x18] sm:$0xff] %v797
      %v807 = vld [vmem:[#allocation2] sm:$0xff]
      %v808 = vld [vmem:[#allocation2 + $0x8] sm:$0xff]
      %v809 = vld [vmem:[#allocation2 + $0x10] sm:$0xff]
      %v810 = vld [vmem:[#allocation2 + $0x20] sm:$0xff]
      %v811 = vld [vmem:[#allocation2 + $0x28] sm:$0xff]
      %v812 = vld [vmem:[#allocation2 + $0x30] sm:$0xff]
      %813 = vrot.lane.b32.xlu0 %v478, 112
      %v814 = vpop.permute.xlu0 %813
      %815 = vrot.lane.b32.xlu0 %v479, 112
      %v816 = vpop.permute.xlu0 %815
      %v817 = vsel %vm533, %v814, %v816
      %v821 = vmul.f32 %v807, %v814
      %v822 = vmul.f32 %v808, %v817
      %v823 = vmul.f32 %v809, %v816
      %v824 = vmul.f32 %v810, %v814
      %v825 = vmul.f32 %v811, %v817
      %v826 = vmul.f32 %v812, %v816
      %833 = vrot.lane.b32.xlu0 %v821, 16
      %v834 = vpop.permute.xlu0 %833
      %835 = vrot.lane.b32.xlu0 %v822, 16
      %v836 = vpop.permute.xlu0 %835
      %837 = vrot.lane.b32.xlu0 %v823, 16
      %v838 = vpop.permute.xlu0 %837
      %839 = vrot.lane.b32.xlu0 %v824, 16
      %v840 = vpop.permute.xlu0 %839
      %841 = vrot.lane.b32.xlu0 %v825, 16
      %v842 = vpop.permute.xlu0 %841
      %843 = vrot.lane.b32.xlu0 %v826, 16
      %v844 = vpop.permute.xlu0 %843
      %v845 = vsel %vm504, %v834, %v836
      %v846 = vsel %vm504, %v836, %v838
      %v847 = vsel %vm504, %v840, %v842
      %v848 = vsel %vm504, %v842, %v844
      %s853 = scalar_lea.vmem [#allocation3], 2464
      %854 = vst [vmem:[%s853] sm:$0xff] %v845
      %855 = vst [vmem:[%s853 + $0x8] sm:$0xff] %v846
      %856 = vst [vmem:[%s853 + $0x10] sm:$0xff] %v847
      %857 = vst [vmem:[%s853 + $0x18] sm:$0xff] %v848
      %v858 = vld [vmem:[#allocation2 + $0x8] sm:$0xff]
      %v859 = vld [vmem:[#allocation2 + $0x10] sm:$0xff]
      %v860 = vld [vmem:[#allocation2 + $0x28] sm:$0xff]
      %v861 = vld [vmem:[#allocation2 + $0x30] sm:$0xff]
      %v862 = vmul.f32 %v858, %v478
      %v863 = vmul.f32 %v859, %v479
      %v864 = vmul.f32 %v860, %v478
      %v865 = vmul.f32 %v861, %v479
      %s866 = scalar_lea.vmem [#allocation3], 2816
      %867 = vst [vmem:[%s866] sm:$0xff] %v862
      %868 = vst [vmem:[%s866 + $0x8] sm:$0xff] %v863
      %869 = vst [vmem:[%s866 + $0x10] sm:$0xff] %v864
      %870 = vst [vmem:[%s866 + $0x18] sm:$0xff] %v865
      %v871 = vld [vmem:[#allocation2 + $0x8] sm:$0xff]
      %v872 = vld [vmem:[#allocation2 + $0x10] sm:$0xff]
      %v873 = vld [vmem:[#allocation2 + $0x18] sm:$0xff]
      %v874 = vld [vmem:[#allocation2 + $0x28] sm:$0xff]
      %v875 = vld [vmem:[#allocation2 + $0x30] sm:$0xff]
      %v876 = vld [vmem:[#allocation2 + $0x38] sm:$0xff]
      %v877 = vmul.f32 %v871, %v501
      %v878 = vmul.f32 %v872, %v505
      %v879 = vmul.f32 %v873, %v503
      %v880 = vmul.f32 %v874, %v501
      %v881 = vmul.f32 %v875, %v505
      %v882 = vmul.f32 %v876, %v503
      %889 = vrot.lane.b32.xlu0 %v877, 112
      %v890 = vpop.permute.xlu0 %889
      %891 = vrot.lane.b32.xlu0 %v878, 112
      %v892 = vpop.permute.xlu0 %891
      %893 = vrot.lane.b32.xlu0 %v879, 112
      %v894 = vpop.permute.xlu0 %893
      %895 = vrot.lane.b32.xlu0 %v880, 112
      %v896 = vpop.permute.xlu0 %895
      %897 = vrot.lane.b32.xlu0 %v881, 112
      %v898 = vpop.permute.xlu0 %897
      %899 = vrot.lane.b32.xlu0 %v882, 112
      %v900 = vpop.permute.xlu0 %899
      %v901 = vsel %vm533, %v890, %v892
      %v902 = vsel %vm533, %v892, %v894
      %v903 = vsel %vm533, %v896, %v898
      %v904 = vsel %vm533, %v898, %v900
      %s909 = scalar_lea.vmem [#allocation3], 3168
      %910 = vst [vmem:[%s909] sm:$0xff] %v901
      %911 = vst [vmem:[%s909 + $0x8] sm:$0xff] %v902
      %912 = vst [vmem:[%s909 + $0x10] sm:$0xff] %v903
      %913 = vst [vmem:[%s909 + $0x18] sm:$0xff] %v904
      %v914 = vld [vmem:[#allocation2 + $0x8] sm:$0xff]
      %v915 = vld [vmem:[#allocation2 + $0x10] sm:$0xff]
      %v916 = vld [vmem:[#allocation2 + $0x18] sm:$0xff]
      %v917 = vld [vmem:[#allocation2 + $0x28] sm:$0xff]
      %v918 = vld [vmem:[#allocation2 + $0x30] sm:$0xff]
      %v919 = vld [vmem:[#allocation2 + $0x38] sm:$0xff]
      %v920 = vmul.f32 %v914, %v554
      %v921 = vmul.f32 %v915, %v558
      %v922 = vmul.f32 %v916, %v556
      %v923 = vmul.f32 %v917, %v554
      %v924 = vmul.f32 %v918, %v558
      %v925 = vmul.f32 %v919, %v556
      %932 = vrot.lane.b32.xlu0 %v920, 96
      %v933 = vpop.permute.xlu0 %932
      %934 = vrot.lane.b32.xlu0 %v921, 96
      %v935 = vpop.permute.xlu0 %934
      %936 = vrot.lane.b32.xlu0 %v922, 96
      %v937 = vpop.permute.xlu0 %936
      %938 = vrot.lane.b32.xlu0 %v923, 96
      %v939 = vpop.permute.xlu0 %938
      %940 = vrot.lane.b32.xlu0 %v924, 96
      %v941 = vpop.permute.xlu0 %940
      %942 = vrot.lane.b32.xlu0 %v925, 96
      %v943 = vpop.permute.xlu0 %942
      %v944 = vsel %vm586, %v933, %v935
      %v945 = vsel %vm586, %v935, %v937
      %v946 = vsel %vm586, %v939, %v941
      %v947 = vsel %vm586, %v941, %v943
      %s952 = scalar_lea.vmem [#allocation3], 3520
      %953 = vst [vmem:[%s952] sm:$0xff] %v944
      %954 = vst [vmem:[%s952 + $0x8] sm:$0xff] %v945
      %955 = vst [vmem:[%s952 + $0x10] sm:$0xff] %v946
      %956 = vst [vmem:[%s952 + $0x18] sm:$0xff] %v947
      %vm957 = vcmp.ge.s32.totalorder %v468, 4
      %vm958 = vcmp.ge.s32.totalorder %v469, 4
      %vm959 = vcmp.lt.s32.totalorder %v468, 20
      %vm960 = vcmp.lt.s32.totalorder %v469, 20
      %vm961 = vmand %vm957, %vm959
      %vm962 = vmand %vm958, %vm960
      %v963 = vsel %vm961, 1, 0
      %v964 = vsel %vm962, 1, 0
      %v965 = vcvt.s32.f32 %v963
      %v966 = vcvt.s32.f32 %v964
      %v967 = vld [vmem:[#allocation2] sm:$0xff]
      %v968 = vld [vmem:[#allocation2 + $0x8] sm:$0xff]
      %v969 = vld [vmem:[#allocation2 + $0x10] sm:$0xff]
      %v970 = vld [vmem:[#allocation2 + $0x20] sm:$0xff]
      %v971 = vld [vmem:[#allocation2 + $0x28] sm:$0xff]
      %v972 = vld [vmem:[#allocation2 + $0x30] sm:$0xff]
      %975 = vrot.lane.b32.xlu0 %v965, 1
      %v976 = vpop.permute.xlu0 %975
      %977 = vrot.lane.b32.xlu0 %v966, 1
      %v978 = vpop.permute.xlu0 %977
      %vm979 = vcmask 7168
      %v980 = vsel %vm979, %v976, %v978
      %v984 = vmul.f32 %v967, %v976
      %v985 = vmul.f32 %v968, %v980
      %v986 = vmul.f32 %v969, %v978
      %v987 = vmul.f32 %v970, %v976
      %v988 = vmul.f32 %v971, %v980
      %v989 = vmul.f32 %v972, %v978
      %996 = vrot.lane.b32.xlu0 %v984, 127
      %v997 = vpop.permute.xlu0 %996
      %998 = vrot.lane.b32.xlu0 %v985, 127
      %v999 = vpop.permute.xlu0 %998
      %1000 = vrot.lane.b32.xlu0 %v986, 127
      %v1001 = vpop.permute.xlu0 %1000
      %1002 = vrot.lane.b32.xlu0 %v987, 127
      %v1003 = vpop.permute.xlu0 %1002
      %1004 = vrot.lane.b32.xlu0 %v988, 127
      %v1005 = vpop.permute.xlu0 %1004
      %1006 = vrot.lane.b32.xlu0 %v989, 127
      %v1007 = vpop.permute.xlu0 %1006
      %vm1008 = vcmask 1039360
      %v1009 = vsel %vm1008, %v997, %v999
      %v1010 = vsel %vm1008, %v999, %v1001
      %v1011 = vsel %vm1008, %v1003, %v1005
      %v1012 = vsel %vm1008, %v1005, %v1007
      %1017 = vst [vmem:[#allocation3 + $0x20] sm:$0xff] %v1009
      %1018 = vst [vmem:[#allocation3 + $0x28] sm:$0xff] %v1010
      %1019 = vst [vmem:[#allocation3 + $0x30] sm:$0xff] %v1011
      %1020 = vst [vmem:[#allocation3 + $0x38] sm:$0xff] %v1012
      %v1021 = vld [vmem:[#allocation2] sm:$0xff]
      %v1022 = vld [vmem:[#allocation2 + $0x8] sm:$0xff]
      %v1023 = vld [vmem:[#allocation2 + $0x10] sm:$0xff]
      %v1024 = vld [vmem:[#allocation2 + $0x20] sm:$0xff]
      %v1025 = vld [vmem:[#allocation2 + $0x28] sm:$0xff]
      %v1026 = vld [vmem:[#allocation2 + $0x30] sm:$0xff]
      %1027 = vrot.lane.b32.xlu0 %v965, 17
      %v1028 = vpop.permute.xlu0 %1027
      %1029 = vrot.lane.b32.xlu0 %v966, 17
      %v1030 = vpop.permute.xlu0 %1029
      %vm1031 = vcmask 138240
      %v1032 = vsel %vm1031, %v1028, %v1030
      %v1036 = vmul.f32 %v1021, %v1028
      %v1037 = vmul.f32 %v1022, %v1032
      %v1038 = vmul.f32 %v1023, %v1030
      %v1039 = vmul.f32 %v1024, %v1028
      %v1040 = vmul.f32 %v1025, %v1032
      %v1041 = vmul.f32 %v1026, %v1030
      %1048 = vrot.lane.b32.xlu0 %v1036, 111
      %v1049 = vpop.permute.xlu0 %1048
      %1050 = vrot.lane.b32.xlu0 %v1037, 111
      %v1051 = vpop.permute.xlu0 %1050
      %1052 = vrot.lane.b32.xlu0 %v1038, 111
      %v1053 = vpop.permute.xlu0 %1052
      %1054 = vrot.lane.b32.xlu0 %v1039, 111
      %v1055 = vpop.permute.xlu0 %1054
      %1056 = vrot.lane.b32.xlu0 %v1040, 111
      %v1057 = vpop.permute.xlu0 %1056
      %1058 = vrot.lane.b32.xlu0 %v1041, 111
      %v1059 = vpop.permute.xlu0 %1058
      %vm1060 = vcmask 908288
      %v1061 = vsel %vm1060, %v1049, %v1051
      %v1062 = vsel %vm1060, %v1051, %v1053
      %v1063 = vsel %vm1060, %v1055, %v1057
      %v1064 = vsel %vm1060, %v1057, %v1059
      %1069 = vst [vmem:[%s542 + $0x20] sm:$0xff] %v1061
      %1070 = vst [vmem:[%s542 + $0x28] sm:$0xff] %v1062
      %1071 = vst [vmem:[%s542 + $0x30] sm:$0xff] %v1063
      %1072 = vst [vmem:[%s542 + $0x38] sm:$0xff] %v1064
      %v1073 = vld [vmem:[#allocation2] sm:$0xff]
      %v1074 = vld [vmem:[#allocation2 + $0x8] sm:$0xff]
      %v1075 = vld [vmem:[#allocation2 + $0x10] sm:$0xff]
      %v1076 = vld [vmem:[#allocation2 + $0x20] sm:$0xff]
      %v1077 = vld [vmem:[#allocation2 + $0x28] sm:$0xff]
      %v1078 = vld [vmem:[#allocation2 + $0x30] sm:$0xff]
      %1079 = vrot.lane.b32.xlu0 %v965, 33
      %v1080 = vpop.permute.xlu0 %1079
      %1081 = vrot.lane.b32.xlu0 %v966, 33
      %v1082 = vpop.permute.xlu0 %1081
      %vm1083 = vcmask 269312
      %v1084 = vsel %vm1083, %v1080, %v1082
      %v1088 = vmul.f32 %v1073, %v1080
      %v1089 = vmul.f32 %v1074, %v1084
      %v1090 = vmul.f32 %v1075, %v1082
      %v1091 = vmul.f32 %v1076, %v1080
      %v1092 = vmul.f32 %v1077, %v1084
      %v1093 = vmul.f32 %v1078, %v1082
      %1100 = vrot.lane.b32.xlu0 %v1088, 95
      %v1101 = vpop.permute.xlu0 %1100
      %1102 = vrot.lane.b32.xlu0 %v1089, 95
      %v1103 = vpop.permute.xlu0 %1102
      %1104 = vrot.lane.b32.xlu0 %v1090, 95
      %v1105 = vpop.permute.xlu0 %1104
      %1106 = vrot.lane.b32.xlu0 %v1091, 95
      %v1107 = vpop.permute.xlu0 %1106
      %1108 = vrot.lane.b32.xlu0 %v1092, 95
      %v1109 = vpop.permute.xlu0 %1108
      %1110 = vrot.lane.b32.xlu0 %v1093, 95
      %v1111 = vpop.permute.xlu0 %1110
      %vm1112 = vcmask 777216
      %v1113 = vsel %vm1112, %v1101, %v1103
      %v1114 = vsel %vm1112, %v1103, %v1105
      %v1115 = vsel %vm1112, %v1107, %v1109
      %v1116 = vsel %vm1112, %v1109, %v1111
      %1121 = vst [vmem:[%s595 + $0x20] sm:$0xff] %v1113
      %1122 = vst [vmem:[%s595 + $0x28] sm:$0xff] %v1114
      %1123 = vst [vmem:[%s595 + $0x30] sm:$0xff] %v1115
      %1124 = vst [vmem:[%s595 + $0x38] sm:$0xff] %v1116
      %v1125 = vld [vmem:[#allocation2] sm:$0xff]
      %v1126 = vld [vmem:[#allocation2 + $0x8] sm:$0xff]
      %v1127 = vld [vmem:[#allocation2 + $0x10] sm:$0xff]
      %v1128 = vld [vmem:[#allocation2 + $0x20] sm:$0xff]
      %v1129 = vld [vmem:[#allocation2 + $0x28] sm:$0xff]
      %v1130 = vld [vmem:[#allocation2 + $0x30] sm:$0xff]
      %1131 = vrot.lane.b32.xlu0 %v965, 49
      %v1132 = vpop.permute.xlu0 %1131
      %1133 = vrot.lane.b32.xlu0 %v966, 49
      %v1134 = vpop.permute.xlu0 %1133
      %vm1135 = vcmask 400384
      %v1136 = vsel %vm1135, %v1132, %v1134
      %v1140 = vmul.f32 %v1125, %v1132
      %v1141 = vmul.f32 %v1126, %v1136
      %v1142 = vmul.f32 %v1127, %v1134
      %v1143 = vmul.f32 %v1128, %v1132
      %v1144 = vmul.f32 %v1129, %v1136
      %v1145 = vmul.f32 %v1130, %v1134
      %1152 = vrot.lane.b32.xlu0 %v1140, 79
      %v1153 = vpop.permute.xlu0 %1152
      %1154 = vrot.lane.b32.xlu0 %v1141, 79
      %v1155 = vpop.permute.xlu0 %1154
      %1156 = vrot.lane.b32.xlu0 %v1142, 79
      %v1157 = vpop.permute.xlu0 %1156
      %1158 = vrot.lane.b32.xlu0 %v1143, 79
      %v1159 = vpop.permute.xlu0 %1158
      %1160 = vrot.lane.b32.xlu0 %v1144, 79
      %v1161 = vpop.permute.xlu0 %1160
      %1162 = vrot.lane.b32.xlu0 %v1145, 79
      %v1163 = vpop.permute.xlu0 %1162
      %vm1164 = vcmask 646144
      %v1165 = vsel %vm1164, %v1153, %v1155
      %v1166 = vsel %vm1164, %v1155, %v1157
      %v1167 = vsel %vm1164, %v1159, %v1161
      %v1168 = vsel %vm1164, %v1161, %v1163
      %1173 = vst [vmem:[%s648 + $0x20] sm:$0xff] %v1165
      %1174 = vst [vmem:[%s648 + $0x28] sm:$0xff] %v1166
      %1175 = vst [vmem:[%s648 + $0x30] sm:$0xff] %v1167
      %1176 = vst [vmem:[%s648 + $0x38] sm:$0xff] %v1168
      %v1177 = vld [vmem:[#allocation2] sm:$0xff]
      %v1178 = vld [vmem:[#allocation2 + $0x8] sm:$0xff]
      %v1179 = vld [vmem:[#allocation2 + $0x10] sm:$0xff]
      %v1180 = vld [vmem:[#allocation2 + $0x20] sm:$0xff]
      %v1181 = vld [vmem:[#allocation2 + $0x28] sm:$0xff]
      %v1182 = vld [vmem:[#allocation2 + $0x30] sm:$0xff]
      %1183 = vrot.lane.b32.xlu0 %v965, 65
      %v1184 = vpop.permute.xlu0 %1183
      %1185 = vrot.lane.b32.xlu0 %v966, 65
      %v1186 = vpop.permute.xlu0 %1185
      %vm1187 = vcmask 531456
      %v1188 = vsel %vm1187, %v1184, %v1186
      %v1192 = vmul.f32 %v1177, %v1184
      %v1193 = vmul.f32 %v1178, %v1188
      %v1194 = vmul.f32 %v1179, %v1186
      %v1195 = vmul.f32 %v1180, %v1184
      %v1196 = vmul.f32 %v1181, %v1188
      %v1197 = vmul.f32 %v1182, %v1186
      %1204 = vrot.lane.b32.xlu0 %v1192, 63
      %v1205 = vpop.permute.xlu0 %1204
      %1206 = vrot.lane.b32.xlu0 %v1193, 63
      %v1207 = vpop.permute.xlu0 %1206
      %1208 = vrot.lane.b32.xlu0 %v1194, 63
      %v1209 = vpop.permute.xlu0 %1208
      %1210 = vrot.lane.b32.xlu0 %v1195, 63
      %v1211 = vpop.permute.xlu0 %1210
      %1212 = vrot.lane.b32.xlu0 %v1196, 63
      %v1213 = vpop.permute.xlu0 %1212
      %1214 = vrot.lane.b32.xlu0 %v1197, 63
      %v1215 = vpop.permute.xlu0 %1214
      %vm1216 = vcmask 515072
      %v1217 = vsel %vm1216, %v1205, %v1207
      %v1218 = vsel %vm1216, %v1207, %v1209
      %v1219 = vsel %vm1216, %v1211, %v1213
      %v1220 = vsel %vm1216, %v1213, %v1215
      %1225 = vst [vmem:[%s700 + $0x20] sm:$0xff] %v1217
      %1226 = vst [vmem:[%s700 + $0x28] sm:$0xff] %v1218
      %1227 = vst [vmem:[%s700 + $0x30] sm:$0xff] %v1219
      %1228 = vst [vmem:[%s700 + $0x38] sm:$0xff] %v1220
      %v1229 = vld [vmem:[#allocation2] sm:$0xff]
      %v1230 = vld [vmem:[#allocation2 + $0x8] sm:$0xff]
      %v1231 = vld [vmem:[#allocation2 + $0x10] sm:$0xff]
      %v1232 = vld [vmem:[#allocation2 + $0x20] sm:$0xff]
      %v1233 = vld [vmem:[#allocation2 + $0x28] sm:$0xff]
      %v1234 = vld [vmem:[#allocation2 + $0x30] sm:$0xff]
      %1235 = vrot.lane.b32.xlu0 %v965, 81
      %v1236 = vpop.permute.xlu0 %1235
      %1237 = vrot.lane.b32.xlu0 %v966, 81
      %v1238 = vpop.permute.xlu0 %1237
      %vm1239 = vcmask 662528
      %v1240 = vsel %vm1239, %v1236, %v1238
      %v1244 = vmul.f32 %v1229, %v1236
      %v1245 = vmul.f32 %v1230, %v1240
      %v1246 = vmul.f32 %v1231, %v1238
      %v1247 = vmul.f32 %v1232, %v1236
      %v1248 = vmul.f32 %v1233, %v1240
      %v1249 = vmul.f32 %v1234, %v1238
      %1256 = vrot.lane.b32.xlu0 %v1244, 47
      %v1257 = vpop.permute.xlu0 %1256
      %1258 = vrot.lane.b32.xlu0 %v1245, 47
      %v1259 = vpop.permute.xlu0 %1258
      %1260 = vrot.lane.b32.xlu0 %v1246, 47
      %v1261 = vpop.permute.xlu0 %1260
      %1262 = vrot.lane.b32.xlu0 %v1247, 47
      %v1263 = vpop.permute.xlu0 %1262
      %1264 = vrot.lane.b32.xlu0 %v1248, 47
      %v1265 = vpop.permute.xlu0 %1264
      %1266 = vrot.lane.b32.xlu0 %v1249, 47
      %v1267 = vpop.permute.xlu0 %1266
      %vm1268 = vcmask 384000
      %v1269 = vsel %vm1268, %v1257, %v1259
      %v1270 = vsel %vm1268, %v1259, %v1261
      %v1271 = vsel %vm1268, %v1263, %v1265
      %v1272 = vsel %vm1268, %v1265, %v1267
      %1277 = vst [vmem:[%s751 + $0x20] sm:$0xff] %v1269
      %1278 = vst [vmem:[%s751 + $0x28] sm:$0xff] %v1270
      %1279 = vst [vmem:[%s751 + $0x30] sm:$0xff] %v1271
      %1280 = vst [vmem:[%s751 + $0x38] sm:$0xff] %v1272
      %v1281 = vld [vmem:[#allocation2] sm:$0xff]
      %v1282 = vld [vmem:[#allocation2 + $0x8] sm:$0xff]
      %v1283 = vld [vmem:[#allocation2 + $0x10] sm:$0xff]
      %v1284 = vld [vmem:[#allocation2 + $0x20] sm:$0xff]
      %v1285 = vld [vmem:[#allocation2 + $0x28] sm:$0xff]
      %v1286 = vld [vmem:[#allocation2 + $0x30] sm:$0xff]
      %1287 = vrot.lane.b32.xlu0 %v965, 97
      %v1288 = vpop.permute.xlu0 %1287
      %1289 = vrot.lane.b32.xlu0 %v966, 97
      %v1290 = vpop.permute.xlu0 %1289
      %vm1291 = vcmask 793600
      %v1292 = vsel %vm1291, %v1288, %v1290
      %v1296 = vmul.f32 %v1281, %v1288
      %v1297 = vmul.f32 %v1282, %v1292
      %v1298 = vmul.f32 %v1283, %v1290
      %v1299 = vmul.f32 %v1284, %v1288
      %v1300 = vmul.f32 %v1285, %v1292
      %v1301 = vmul.f32 %v1286, %v1290
      %1308 = vrot.lane.b32.xlu0 %v1296, 31
      %v1309 = vpop.permute.xlu0 %1308
      %1310 = vrot.lane.b32.xlu0 %v1297, 31
      %v1311 = vpop.permute.xlu0 %1310
      %1312 = vrot.lane.b32.xlu0 %v1298, 31
      %v1313 = vpop.permute.xlu0 %1312
      %1314 = vrot.lane.b32.xlu0 %v1299, 31
      %v1315 = vpop.permute.xlu0 %1314
      %1316 = vrot.lane.b32.xlu0 %v1300, 31
      %v1317 = vpop.permute.xlu0 %1316
      %1318 = vrot.lane.b32.xlu0 %v1301, 31
      %v1319 = vpop.permute.xlu0 %1318
      %vm1320 = vcmask 252928
      %v1321 = vsel %vm1320, %v1309, %v1311
      %v1322 = vsel %vm1320, %v1311, %v1313
      %v1323 = vsel %vm1320, %v1315, %v1317
      %v1324 = vsel %vm1320, %v1317, %v1319
      %1329 = vst [vmem:[%s802 + $0x20] sm:$0xff] %v1321
      %1330 = vst [vmem:[%s802 + $0x28] sm:$0xff] %v1322
      %1331 = vst [vmem:[%s802 + $0x30] sm:$0xff] %v1323
      %1332 = vst [vmem:[%s802 + $0x38] sm:$0xff] %v1324
      %v1333 = vld [vmem:[#allocation2] sm:$0xff]
      %v1334 = vld [vmem:[#allocation2 + $0x8] sm:$0xff]
      %v1335 = vld [vmem:[#allocation2 + $0x10] sm:$0xff]
      %v1336 = vld [vmem:[#allocation2 + $0x20] sm:$0xff]
      %v1337 = vld [vmem:[#allocation2 + $0x28] sm:$0xff]
      %v1338 = vld [vmem:[#allocation2 + $0x30] sm:$0xff]
      %1339 = vrot.lane.b32.xlu0 %v965, 113
      %v1340 = vpop.permute.xlu0 %1339
      %1341 = vrot.lane.b32.xlu0 %v966, 113
      %v1342 = vpop.permute.xlu0 %1341
      %vm1343 = vcmask 924672
      %v1344 = vsel %vm1343, %v1340, %v1342
      %v1348 = vmul.f32 %v1333, %v1340
      %v1349 = vmul.f32 %v1334, %v1344
      %v1350 = vmul.f32 %v1335, %v1342
      %v1351 = vmul.f32 %v1336, %v1340
      %v1352 = vmul.f32 %v1337, %v1344
      %v1353 = vmul.f32 %v1338, %v1342
      %1360 = vrot.lane.b32.xlu0 %v1348, 15
      %v1361 = vpop.permute.xlu0 %1360
      %1362 = vrot.lane.b32.xlu0 %v1349, 15
      %v1363 = vpop.permute.xlu0 %1362
      %1364 = vrot.lane.b32.xlu0 %v1350, 15
      %v1365 = vpop.permute.xlu0 %1364
      %1366 = vrot.lane.b32.xlu0 %v1351, 15
      %v1367 = vpop.permute.xlu0 %1366
      %1368 = vrot.lane.b32.xlu0 %v1352, 15
      %v1369 = vpop.permute.xlu0 %1368
      %1370 = vrot.lane.b32.xlu0 %v1353, 15
      %v1371 = vpop.permute.xlu0 %1370
      %vm1372 = vcmask 121856
      %v1373 = vsel %vm1372, %v1361, %v1363
      %v1374 = vsel %vm1372, %v1363, %v1365
      %v1375 = vsel %vm1372, %v1367, %v1369
      %v1376 = vsel %vm1372, %v1369, %v1371
      %1381 = vst [vmem:[%s853 + $0x20] sm:$0xff] %v1373
      %1382 = vst [vmem:[%s853 + $0x28] sm:$0xff] %v1374
      %1383 = vst [vmem:[%s853 + $0x30] sm:$0xff] %v1375
      %1384 = vst [vmem:[%s853 + $0x38] sm:$0xff] %v1376
      %v1385 = vld [vmem:[#allocation2 + $0x8] sm:$0xff]
      %v1386 = vld [vmem:[#allocation2 + $0x10] sm:$0xff]
      %v1387 = vld [vmem:[#allocation2 + $0x18] sm:$0xff]
      %v1388 = vld [vmem:[#allocation2 + $0x28] sm:$0xff]
      %v1389 = vld [vmem:[#allocation2 + $0x30] sm:$0xff]
      %v1390 = vld [vmem:[#allocation2 + $0x38] sm:$0xff]
      %v1391 = vmul.f32 %v1385, %v976
      %v1392 = vmul.f32 %v1386, %v980
      %v1393 = vmul.f32 %v1387, %v978
      %v1394 = vmul.f32 %v1388, %v976
      %v1395 = vmul.f32 %v1389, %v980
      %v1396 = vmul.f32 %v1390, %v978
      %1403 = vrot.lane.b32.xlu0 %v1391, 127
      %v1404 = vpop.permute.xlu0 %1403
      %1405 = vrot.lane.b32.xlu0 %v1392, 127
      %v1406 = vpop.permute.xlu0 %1405
      %1407 = vrot.lane.b32.xlu0 %v1393, 127
      %v1408 = vpop.permute.xlu0 %1407
      %1409 = vrot.lane.b32.xlu0 %v1394, 127
      %v1410 = vpop.permute.xlu0 %1409
      %1411 = vrot.lane.b32.xlu0 %v1395, 127
      %v1412 = vpop.permute.xlu0 %1411
      %1413 = vrot.lane.b32.xlu0 %v1396, 127
      %v1414 = vpop.permute.xlu0 %1413
      %v1415 = vsel %vm1008, %v1404, %v1406
      %v1416 = vsel %vm1008, %v1406, %v1408
      %v1417 = vsel %vm1008, %v1410, %v1412
      %v1418 = vsel %vm1008, %v1412, %v1414
      %1423 = vst [vmem:[%s866 + $0x20] sm:$0xff] %v1415
      %1424 = vst [vmem:[%s866 + $0x28] sm:$0xff] %v1416
      %1425 = vst [vmem:[%s866 + $0x30] sm:$0xff] %v1417
      %1426 = vst [vmem:[%s866 + $0x38] sm:$0xff] %v1418
      %v1427 = vld [vmem:[#allocation2 + $0x8] sm:$0xff]
      %v1428 = vld [vmem:[#allocation2 + $0x10] sm:$0xff]
      %v1429 = vld [vmem:[#allocation2 + $0x18] sm:$0xff]
      %v1430 = vld [vmem:[#allocation2 + $0x28] sm:$0xff]
      %v1431 = vld [vmem:[#allocation2 + $0x30] sm:$0xff]
      %v1432 = vld [vmem:[#allocation2 + $0x38] sm:$0xff]
      %v1433 = vmul.f32 %v1427, %v1028
      %v1434 = vmul.f32 %v1428, %v1032
      %v1435 = vmul.f32 %v1429, %v1030
      %v1436 = vmul.f32 %v1430, %v1028
      %v1437 = vmul.f32 %v1431, %v1032
      %v1438 = vmul.f32 %v1432, %v1030
      %1445 = vrot.lane.b32.xlu0 %v1433, 111
      %v1446 = vpop.permute.xlu0 %1445
      %1447 = vrot.lane.b32.xlu0 %v1434, 111
      %v1448 = vpop.permute.xlu0 %1447
      %1449 = vrot.lane.b32.xlu0 %v1435, 111
      %v1450 = vpop.permute.xlu0 %1449
      %1451 = vrot.lane.b32.xlu0 %v1436, 111
      %v1452 = vpop.permute.xlu0 %1451
      %1453 = vrot.lane.b32.xlu0 %v1437, 111
      %v1454 = vpop.permute.xlu0 %1453
      %1455 = vrot.lane.b32.xlu0 %v1438, 111
      %v1456 = vpop.permute.xlu0 %1455
      %v1457 = vsel %vm1060, %v1446, %v1448
      %v1458 = vsel %vm1060, %v1448, %v1450
      %v1459 = vsel %vm1060, %v1452, %v1454
      %v1460 = vsel %vm1060, %v1454, %v1456
      %1465 = vst [vmem:[%s909 + $0x20] sm:$0xff] %v1457
      %1466 = vst [vmem:[%s909 + $0x28] sm:$0xff] %v1458
      %1467 = vst [vmem:[%s909 + $0x30] sm:$0xff] %v1459
      %1468 = vst [vmem:[%s909 + $0x38] sm:$0xff] %v1460
      %v1469 = vld [vmem:[#allocation2 + $0x8] sm:$0xff]
      %v1470 = vld [vmem:[#allocation2 + $0x10] sm:$0xff]
      %v1471 = vld [vmem:[#allocation2 + $0x18] sm:$0xff]
      %v1472 = vld [vmem:[#allocation2 + $0x28] sm:$0xff]
      %v1473 = vld [vmem:[#allocation2 + $0x30] sm:$0xff]
      %v1474 = vld [vmem:[#allocation2 + $0x38] sm:$0xff]
      %v1475 = vmul.f32 %v1469, %v1080
      %v1476 = vmul.f32 %v1470, %v1084
      %v1477 = vmul.f32 %v1471, %v1082
      %v1478 = vmul.f32 %v1472, %v1080
      %v1479 = vmul.f32 %v1473, %v1084
      %v1480 = vmul.f32 %v1474, %v1082
      %1487 = vrot.lane.b32.xlu0 %v1475, 95
      %v1488 = vpop.permute.xlu0 %1487
      %1489 = vrot.lane.b32.xlu0 %v1476, 95
      %v1490 = vpop.permute.xlu0 %1489
      %1491 = vrot.lane.b32.xlu0 %v1477, 95
      %v1492 = vpop.permute.xlu0 %1491
      %1493 = vrot.lane.b32.xlu0 %v1478, 95
      %v1494 = vpop.permute.xlu0 %1493
      %1495 = vrot.lane.b32.xlu0 %v1479, 95
      %v1496 = vpop.permute.xlu0 %1495
      %1497 = vrot.lane.b32.xlu0 %v1480, 95
      %v1498 = vpop.permute.xlu0 %1497
      %v1499 = vsel %vm1112, %v1488, %v1490
      %v1500 = vsel %vm1112, %v1490, %v1492
      %v1501 = vsel %vm1112, %v1494, %v1496
      %v1502 = vsel %vm1112, %v1496, %v1498
      %1507 = vst [vmem:[%s952 + $0x20] sm:$0xff] %v1499
      %1508 = vst [vmem:[%s952 + $0x28] sm:$0xff] %v1500
      %1509 = vst [vmem:[%s952 + $0x30] sm:$0xff] %v1501
      %1510 = vst [vmem:[%s952 + $0x38] sm:$0xff] %v1502
      %vm1511 = vcmp.ge.s32.totalorder %v468, 3
      %vm1512 = vcmp.ge.s32.totalorder %v469, 3
      %vm1513 = vcmp.lt.s32.totalorder %v468, 19
      %vm1514 = vcmp.lt.s32.totalorder %v469, 19
      %vm1515 = vmand %vm1511, %vm1513
      %vm1516 = vmand %vm1512, %vm1514
      %v1517 = vsel %vm1515, 1, 0
      %v1518 = vsel %vm1516, 1, 0
      %v1519 = vcvt.s32.f32 %v1517
      %v1520 = vcvt.s32.f32 %v1518
      %v1521 = vld [vmem:[#allocation2] sm:$0xff]
      %v1522 = vld [vmem:[#allocation2 + $0x8] sm:$0xff]
      %v1523 = vld [vmem:[#allocation2 + $0x10] sm:$0xff]
      %v1524 = vld [vmem:[#allocation2 + $0x20] sm:$0xff]
      %v1525 = vld [vmem:[#allocation2 + $0x28] sm:$0xff]
      %v1526 = vld [vmem:[#allocation2 + $0x30] sm:$0xff]
      %1529 = vrot.lane.b32.xlu0 %v1519, 2
      %v1530 = vpop.permute.xlu0 %1529
      %1531 = vrot.lane.b32.xlu0 %v1520, 2
      %v1532 = vpop.permute.xlu0 %1531
      %vm1533 = vcmask 15360
      %v1534 = vsel %vm1533, %v1530, %v1532
      %v1538 = vmul.f32 %v1521, %v1530
      %v1539 = vmul.f32 %v1522, %v1534
      %v1540 = vmul.f32 %v1523, %v1532
      %v1541 = vmul.f32 %v1524, %v1530
      %v1542 = vmul.f32 %v1525, %v1534
      %v1543 = vmul.f32 %v1526, %v1532
      %1550 = vrot.lane.b32.xlu0 %v1538, 126
      %v1551 = vpop.permute.xlu0 %1550
      %1552 = vrot.lane.b32.xlu0 %v1539, 126
      %v1553 = vpop.permute.xlu0 %1552
      %1554 = vrot.lane.b32.xlu0 %v1540, 126
      %v1555 = vpop.permute.xlu0 %1554
      %1556 = vrot.lane.b32.xlu0 %v1541, 126
      %v1557 = vpop.permute.xlu0 %1556
      %1558 = vrot.lane.b32.xlu0 %v1542, 126
      %v1559 = vpop.permute.xlu0 %1558
      %1560 = vrot.lane.b32.xlu0 %v1543, 126
      %v1561 = vpop.permute.xlu0 %1560
      %vm1562 = vcmask 1031168
      %v1563 = vsel %vm1562, %v1551, %v1553
      %v1564 = vsel %vm1562, %v1553, %v1555
      %v1565 = vsel %vm1562, %v1557, %v1559
      %v1566 = vsel %vm1562, %v1559, %v1561
      %1571 = vst [vmem:[#allocation3 + $0x40] sm:$0xff] %v1563
      %1572 = vst [vmem:[#allocation3 + $0x48] sm:$0xff] %v1564
      %1573 = vst [vmem:[#allocation3 + $0x50] sm:$0xff] %v1565
      %1574 = vst [vmem:[#allocation3 + $0x58] sm:$0xff] %v1566
      %v1575 = vld [vmem:[#allocation2] sm:$0xff]
      %v1576 = vld [vmem:[#allocation2 + $0x8] sm:$0xff]
      %v1577 = vld [vmem:[#allocation2 + $0x10] sm:$0xff]
      %v1578 = vld [vmem:[#allocation2 + $0x20] sm:$0xff]
      %v1579 = vld [vmem:[#allocation2 + $0x28] sm:$0xff]
      %v1580 = vld [vmem:[#allocation2 + $0x30] sm:$0xff]
      %1581 = vrot.lane.b32.xlu0 %v1519, 18
      %v1582 = vpop.permute.xlu0 %1581
      %1583 = vrot.lane.b32.xlu0 %v1520, 18
      %v1584 = vpop.permute.xlu0 %1583
      %vm1585 = vcmask 146432
      %v1586 = vsel %vm1585, %v1582, %v1584
      %v1590 = vmul.f32 %v1575, %v1582
      %v1591 = vmul.f32 %v1576, %v1586
      %v1592 = vmul.f32 %v1577, %v1584
      %v1593 = vmul.f32 %v1578, %v1582
      %v1594 = vmul.f32 %v1579, %v1586
      %v1595 = vmul.f32 %v1580, %v1584
      %1602 = vrot.lane.b32.xlu0 %v1590, 110
      %v1603 = vpop.permute.xlu0 %1602
      %1604 = vrot.lane.b32.xlu0 %v1591, 110
      %v1605 = vpop.permute.xlu0 %1604
      %1606 = vrot.lane.b32.xlu0 %v1592, 110
      %v1607 = vpop.permute.xlu0 %1606
      %1608 = vrot.lane.b32.xlu0 %v1593, 110
      %v1609 = vpop.permute.xlu0 %1608
      %1610 = vrot.lane.b32.xlu0 %v1594, 110
      %v1611 = vpop.permute.xlu0 %1610
      %1612 = vrot.lane.b32.xlu0 %v1595, 110
      %v1613 = vpop.permute.xlu0 %1612
      %vm1614 = vcmask 900096
      %v1615 = vsel %vm1614, %v1603, %v1605
      %v1616 = vsel %vm1614, %v1605, %v1607
      %v1617 = vsel %vm1614, %v1609, %v1611
      %v1618 = vsel %vm1614, %v1611, %v1613
      %1623 = vst [vmem:[%s542 + $0x40] sm:$0xff] %v1615
      %1624 = vst [vmem:[%s542 + $0x48] sm:$0xff] %v1616
      %1625 = vst [vmem:[%s542 + $0x50] sm:$0xff] %v1617
      %1626 = vst [vmem:[%s542 + $0x58] sm:$0xff] %v1618
      %v1627 = vld [vmem:[#allocation2] sm:$0xff]
      %v1628 = vld [vmem:[#allocation2 + $0x8] sm:$0xff]
      %v1629 = vld [vmem:[#allocation2 + $0x10] sm:$0xff]
      %v1630 = vld [vmem:[#allocation2 + $0x20] sm:$0xff]
      %v1631 = vld [vmem:[#allocation2 + $0x28] sm:$0xff]
      %v1632 = vld [vmem:[#allocation2 + $0x30] sm:$0xff]
      %1633 = vrot.lane.b32.xlu0 %v1519, 34
      %v1634 = vpop.permute.xlu0 %1633
      %1635 = vrot.lane.b32.xlu0 %v1520, 34
      %v1636 = vpop.permute.xlu0 %1635
      %vm1637 = vcmask 277504
      %v1638 = vsel %vm1637, %v1634, %v1636
      %v1642 = vmul.f32 %v1627, %v1634
      %v1643 = vmul.f32 %v1628, %v1638
      %v1644 = vmul.f32 %v1629, %v1636
      %v1645 = vmul.f32 %v1630, %v1634
      %v1646 = vmul.f32 %v1631, %v1638
      %v1647 = vmul.f32 %v1632, %v1636
      %1654 = vrot.lane.b32.xlu0 %v1642, 94
      %v1655 = vpop.permute.xlu0 %1654
      %1656 = vrot.lane.b32.xlu0 %v1643, 94
      %v1657 = vpop.permute.xlu0 %1656
      %1658 = vrot.lane.b32.xlu0 %v1644, 94
      %v1659 = vpop.permute.xlu0 %1658
      %1660 = vrot.lane.b32.xlu0 %v1645, 94
      %v1661 = vpop.permute.xlu0 %1660
      %1662 = vrot.lane.b32.xlu0 %v1646, 94
      %v1663 = vpop.permute.xlu0 %1662
      %1664 = vrot.lane.b32.xlu0 %v1647, 94
      %v1665 = vpop.permute.xlu0 %1664
      %vm1666 = vcmask 769024
      %v1667 = vsel %vm1666, %v1655, %v1657
      %v1668 = vsel %vm1666, %v1657, %v1659
      %v1669 = vsel %vm1666, %v1661, %v1663
      %v1670 = vsel %vm1666, %v1663, %v1665
      %1675 = vst [vmem:[%s595 + $0x40] sm:$0xff] %v1667
      %1676 = vst [vmem:[%s595 + $0x48] sm:$0xff] %v1668
      %1677 = vst [vmem:[%s595 + $0x50] sm:$0xff] %v1669
      %1678 = vst [vmem:[%s595 + $0x58] sm:$0xff] %v1670
      %v1679 = vld [vmem:[#allocation2] sm:$0xff]
      %v1680 = vld [vmem:[#allocation2 + $0x8] sm:$0xff]
      %v1681 = vld [vmem:[#allocation2 + $0x10] sm:$0xff]
      %v1682 = vld [vmem:[#allocation2 + $0x20] sm:$0xff]
      %v1683 = vld [vmem:[#allocation2 + $0x28] sm:$0xff]
      %v1684 = vld [vmem:[#allocation2 + $0x30] sm:$0xff]
      %1685 = vrot.lane.b32.xlu0 %v1519, 50
      %v1686 = vpop.permute.xlu0 %1685
      %1687 = vrot.lane.b32.xlu0 %v1520, 50
      %v1688 = vpop.permute.xlu0 %1687
      %vm1689 = vcmask 408576
      %v1690 = vsel %vm1689, %v1686, %v1688
      %v1694 = vmul.f32 %v1679, %v1686
      %v1695 = vmul.f32 %v1680, %v1690
      %v1696 = vmul.f32 %v1681, %v1688
      %v1697 = vmul.f32 %v1682, %v1686
      %v1698 = vmul.f32 %v1683, %v1690
      %v1699 = vmul.f32 %v1684, %v1688
      %1706 = vrot.lane.b32.xlu0 %v1694, 78
      %v1707 = vpop.permute.xlu0 %1706
      %1708 = vrot.lane.b32.xlu0 %v1695, 78
      %v1709 = vpop.permute.xlu0 %1708
      %1710 = vrot.lane.b32.xlu0 %v1696, 78
      %v1711 = vpop.permute.xlu0 %1710
      %1712 = vrot.lane.b32.xlu0 %v1697, 78
      %v1713 = vpop.permute.xlu0 %1712
      %1714 = vrot.lane.b32.xlu0 %v1698, 78
      %v1715 = vpop.permute.xlu0 %1714
      %1716 = vrot.lane.b32.xlu0 %v1699, 78
      %v1717 = vpop.permute.xlu0 %1716
      %vm1718 = vcmask 637952
      %v1719 = vsel %vm1718, %v1707, %v1709
      %v1720 = vsel %vm1718, %v1709, %v1711
      %v1721 = vsel %vm1718, %v1713, %v1715
      %v1722 = vsel %vm1718, %v1715, %v1717
      %1727 = vst [vmem:[%s648 + $0x40] sm:$0xff] %v1719
      %1728 = vst [vmem:[%s648 + $0x48] sm:$0xff] %v1720
      %1729 = vst [vmem:[%s648 + $0x50] sm:$0xff] %v1721
      %1730 = vst [vmem:[%s648 + $0x58] sm:$0xff] %v1722
      %v1731 = vld [vmem:[#allocation2] sm:$0xff]
      %v1732 = vld [vmem:[#allocation2 + $0x8] sm:$0xff]
      %v1733 = vld [vmem:[#allocation2 + $0x10] sm:$0xff]
      %v1734 = vld [vmem:[#allocation2 + $0x20] sm:$0xff]
      %v1735 = vld [vmem:[#allocation2 + $0x28] sm:$0xff]
      %v1736 = vld [vmem:[#allocation2 + $0x30] sm:$0xff]
      %1737 = vrot.lane.b32.xlu0 %v1519, 66
      %v1738 = vpop.permute.xlu0 %1737
      %1739 = vrot.lane.b32.xlu0 %v1520, 66
      %v1740 = vpop.permute.xlu0 %1739
      %vm1741 = vcmask 539648
      %v1742 = vsel %vm1741, %v1738, %v1740
      %v1746 = vmul.f32 %v1731, %v1738
      %v1747 = vmul.f32 %v1732, %v1742
      %v1748 = vmul.f32 %v1733, %v1740
      %v1749 = vmul.f32 %v1734, %v1738
      %v1750 = vmul.f32 %v1735, %v1742
      %v1751 = vmul.f32 %v1736, %v1740
      %1758 = vrot.lane.b32.xlu0 %v1746, 62
      %v1759 = vpop.permute.xlu0 %1758
      %1760 = vrot.lane.b32.xlu0 %v1747, 62
      %v1761 = vpop.permute.xlu0 %1760
      %1762 = vrot.lane.b32.xlu0 %v1748, 62
      %v1763 = vpop.permute.xlu0 %1762
      %1764 = vrot.lane.b32.xlu0 %v1749, 62
      %v1765 = vpop.permute.xlu0 %1764
      %1766 = vrot.lane.b32.xlu0 %v1750, 62
      %v1767 = vpop.permute.xlu0 %1766
      %1768 = vrot.lane.b32.xlu0 %v1751, 62
      %v1769 = vpop.permute.xlu0 %1768
      %vm1770 = vcmask 506880
      %v1771 = vsel %vm1770, %v1759, %v1761
      %v1772 = vsel %vm1770, %v1761, %v1763
      %v1773 = vsel %vm1770, %v1765, %v1767
      %v1774 = vsel %vm1770, %v1767, %v1769
      %1779 = vst [vmem:[%s700 + $0x40] sm:$0xff] %v1771
      %1780 = vst [vmem:[%s700 + $0x48] sm:$0xff] %v1772
      %1781 = vst [vmem:[%s700 + $0x50] sm:$0xff] %v1773
      %1782 = vst [vmem:[%s700 + $0x58] sm:$0xff] %v1774
      %v1783 = vld [vmem:[#allocation2] sm:$0xff]
      %v1784 = vld [vmem:[#allocation2 + $0x8] sm:$0xff]
      %v1785 = vld [vmem:[#allocation2 + $0x10] sm:$0xff]
      %v1786 = vld [vmem:[#allocation2 + $0x20] sm:$0xff]
      %v1787 = vld [vmem:[#allocation2 + $0x28] sm:$0xff]
      %v1788 = vld [vmem:[#allocation2 + $0x30] sm:$0xff]
      %1789 = vrot.lane.b32.xlu0 %v1519, 82
      %v1790 = vpop.permute.xlu0 %1789
      %1791 = vrot.lane.b32.xlu0 %v1520, 82
      %v1792 = vpop.permute.xlu0 %1791
      %vm1793 = vcmask 670720
      %v1794 = vsel %vm1793, %v1790, %v1792
      %v1798 = vmul.f32 %v1783, %v1790
      %v1799 = vmul.f32 %v1784, %v1794
      %v1800 = vmul.f32 %v1785, %v1792
      %v1801 = vmul.f32 %v1786, %v1790
      %v1802 = vmul.f32 %v1787, %v1794
      %v1803 = vmul.f32 %v1788, %v1792
      %1810 = vrot.lane.b32.xlu0 %v1798, 46
      %v1811 = vpop.permute.xlu0 %1810
      %1812 = vrot.lane.b32.xlu0 %v1799, 46
      %v1813 = vpop.permute.xlu0 %1812
      %1814 = vrot.lane.b32.xlu0 %v1800, 46
      %v1815 = vpop.permute.xlu0 %1814
      %1816 = vrot.lane.b32.xlu0 %v1801, 46
      %v1817 = vpop.permute.xlu0 %1816
      %1818 = vrot.lane.b32.xlu0 %v1802, 46
      %v1819 = vpop.permute.xlu0 %1818
      %1820 = vrot.lane.b32.xlu0 %v1803, 46
      %v1821 = vpop.permute.xlu0 %1820
      %vm1822 = vcmask 375808
      %v1823 = vsel %vm1822, %v1811, %v1813
      %v1824 = vsel %vm1822, %v1813, %v1815
      %v1825 = vsel %vm1822, %v1817, %v1819
      %v1826 = vsel %vm1822, %v1819, %v1821
      %1831 = vst [vmem:[%s751 + $0x40] sm:$0xff] %v1823
      %1832 = vst [vmem:[%s751 + $0x48] sm:$0xff] %v1824
      %1833 = vst [vmem:[%s751 + $0x50] sm:$0xff] %v1825
      %1834 = vst [vmem:[%s751 + $0x58] sm:$0xff] %v1826
      %v1835 = vld [vmem:[#allocation2] sm:$0xff]
      %v1836 = vld [vmem:[#allocation2 + $0x8] sm:$0xff]
      %v1837 = vld [vmem:[#allocation2 + $0x10] sm:$0xff]
      %v1838 = vld [vmem:[#allocation2 + $0x20] sm:$0xff]
      %v1839 = vld [vmem:[#allocation2 + $0x28] sm:$0xff]
      %v1840 = vld [vmem:[#allocation2 + $0x30] sm:$0xff]
      %1841 = vrot.lane.b32.xlu0 %v1519, 98
      %v1842 = vpop.permute.xlu0 %1841
      %1843 = vrot.lane.b32.xlu0 %v1520, 98
      %v1844 = vpop.permute.xlu0 %1843
      %vm1845 = vcmask 801792
      %v1846 = vsel %vm1845, %v1842, %v1844
      %v1850 = vmul.f32 %v1835, %v1842
      %v1851 = vmul.f32 %v1836, %v1846
      %v1852 = vmul.f32 %v1837, %v1844
      %v1853 = vmul.f32 %v1838, %v1842
      %v1854 = vmul.f32 %v1839, %v1846
      %v1855 = vmul.f32 %v1840, %v1844
      %1862 = vrot.lane.b32.xlu0 %v1850, 30
      %v1863 = vpop.permute.xlu0 %1862
      %1864 = vrot.lane.b32.xlu0 %v1851, 30
      %v1865 = vpop.permute.xlu0 %1864
      %1866 = vrot.lane.b32.xlu0 %v1852, 30
      %v1867 = vpop.permute.xlu0 %1866
      %1868 = vrot.lane.b32.xlu0 %v1853, 30
      %v1869 = vpop.permute.xlu0 %1868
      %1870 = vrot.lane.b32.xlu0 %v1854, 30
      %v1871 = vpop.permute.xlu0 %1870
      %1872 = vrot.lane.b32.xlu0 %v1855, 30
      %v1873 = vpop.permute.xlu0 %1872
      %vm1874 = vcmask 244736
      %v1875 = vsel %vm1874, %v1863, %v1865
      %v1876 = vsel %vm1874, %v1865, %v1867
      %v1877 = vsel %vm1874, %v1869, %v1871
      %v1878 = vsel %vm1874, %v1871, %v1873
      %1883 = vst [vmem:[%s802 + $0x40] sm:$0xff] %v1875
      %1884 = vst [vmem:[%s802 + $0x48] sm:$0xff] %v1876
      %1885 = vst [vmem:[%s802 + $0x50] sm:$0xff] %v1877
      %1886 = vst [vmem:[%s802 + $0x58] sm:$0xff] %v1878
      %v1887 = vld [vmem:[#allocation2] sm:$0xff]
      %v1888 = vld [vmem:[#allocation2 + $0x8] sm:$0xff]
      %v1889 = vld [vmem:[#allocation2 + $0x10] sm:$0xff]
      %v1890 = vld [vmem:[#allocation2 + $0x20] sm:$0xff]
      %v1891 = vld [vmem:[#allocation2 + $0x28] sm:$0xff]
      %v1892 = vld [vmem:[#allocation2 + $0x30] sm:$0xff]
      %1893 = vrot.lane.b32.xlu0 %v1519, 114
      %v1894 = vpop.permute.xlu0 %1893
      %1895 = vrot.lane.b32.xlu0 %v1520, 114
      %v1896 = vpop.permute.xlu0 %1895
      %vm1897 = vcmask 932864
      %v1898 = vsel %vm1897, %v1894, %v1896
      %v1902 = vmul.f32 %v1887, %v1894
      %v1903 = vmul.f32 %v1888, %v1898
      %v1904 = vmul.f32 %v1889, %v1896
      %v1905 = vmul.f32 %v1890, %v1894
      %v1906 = vmul.f32 %v1891, %v1898
      %v1907 = vmul.f32 %v1892, %v1896
      %1914 = vrot.lane.b32.xlu0 %v1902, 14
      %v1915 = vpop.permute.xlu0 %1914
      %1916 = vrot.lane.b32.xlu0 %v1903, 14
      %v1917 = vpop.permute.xlu0 %1916
      %1918 = vrot.lane.b32.xlu0 %v1904, 14
      %v1919 = vpop.permute.xlu0 %1918
      %1920 = vrot.lane.b32.xlu0 %v1905, 14
      %v1921 = vpop.permute.xlu0 %1920
      %1922 = vrot.lane.b32.xlu0 %v1906, 14
      %v1923 = vpop.permute.xlu0 %1922
      %1924 = vrot.lane.b32.xlu0 %v1907, 14
      %v1925 = vpop.permute.xlu0 %1924
      %vm1926 = vcmask 113664
      %v1927 = vsel %vm1926, %v1915, %v1917
      %v1928 = vsel %vm1926, %v1917, %v1919
      %v1929 = vsel %vm1926, %v1921, %v1923
      %v1930 = vsel %vm1926, %v1923, %v1925
      %1935 = vst [vmem:[%s853 + $0x40] sm:$0xff] %v1927
      %1936 = vst [vmem:[%s853 + $0x48] sm:$0xff] %v1928
      %1937 = vst [vmem:[%s853 + $0x50] sm:$0xff] %v1929
      %1938 = vst [vmem:[%s853 + $0x58] sm:$0xff] %v1930
      %v1939 = vld [vmem:[#allocation2 + $0x8] sm:$0xff]
      %v1940 = vld [vmem:[#allocation2 + $0x10] sm:$0xff]
      %v1941 = vld [vmem:[#allocation2 + $0x18] sm:$0xff]
      %v1942 = vld [vmem:[#allocation2 + $0x28] sm:$0xff]
      %v1943 = vld [vmem:[#allocation2 + $0x30] sm:$0xff]
      %v1944 = vld [vmem:[#allocation2 + $0x38] sm:$0xff]
      %v1945 = vmul.f32 %v1939, %v1530
      %v1946 = vmul.f32 %v1940, %v1534
      %v1947 = vmul.f32 %v1941, %v1532
      %v1948 = vmul.f32 %v1942, %v1530
      %v1949 = vmul.f32 %v1943, %v1534
      %v1950 = vmul.f32 %v1944, %v1532
      %1957 = vrot.lane.b32.xlu0 %v1945, 126
      %v1958 = vpop.permute.xlu0 %1957
      %1959 = vrot.lane.b32.xlu0 %v1946, 126
      %v1960 = vpop.permute.xlu0 %1959
      %1961 = vrot.lane.b32.xlu0 %v1947, 126
      %v1962 = vpop.permute.xlu0 %1961
      %1963 = vrot.lane.b32.xlu0 %v1948, 126
      %v1964 = vpop.permute.xlu0 %1963
      %1965 = vrot.lane.b32.xlu0 %v1949, 126
      %v1966 = vpop.permute.xlu0 %1965
      %1967 = vrot.lane.b32.xlu0 %v1950, 126
      %v1968 = vpop.permute.xlu0 %1967
      %v1969 = vsel %vm1562, %v1958, %v1960
      %v1970 = vsel %vm1562, %v1960, %v1962
      %v1971 = vsel %vm1562, %v1964, %v1966
      %v1972 = vsel %vm1562, %v1966, %v1968
      %1977 = vst [vmem:[%s866 + $0x40] sm:$0xff] %v1969
      %1978 = vst [vmem:[%s866 + $0x48] sm:$0xff] %v1970
      %1979 = vst [vmem:[%s866 + $0x50] sm:$0xff] %v1971
      %1980 = vst [vmem:[%s866 + $0x58] sm:$0xff] %v1972
      %v1981 = vld [vmem:[#allocation2 + $0x8] sm:$0xff]
      %v1982 = vld [vmem:[#allocation2 + $0x10] sm:$0xff]
      %v1983 = vld [vmem:[#allocation2 + $0x18] sm:$0xff]
      %v1984 = vld [vmem:[#allocation2 + $0x28] sm:$0xff]
      %v1985 = vld [vmem:[#allocation2 + $0x30] sm:$0xff]
      %v1986 = vld [vmem:[#allocation2 + $0x38] sm:$0xff]
      %v1987 = vmul.f32 %v1981, %v1582
      %v1988 = vmul.f32 %v1982, %v1586
      %v1989 = vmul.f32 %v1983, %v1584
      %v1990 = vmul.f32 %v1984, %v1582
      %v1991 = vmul.f32 %v1985, %v1586
      %v1992 = vmul.f32 %v1986, %v1584
      %1999 = vrot.lane.b32.xlu0 %v1987, 110
      %v2000 = vpop.permute.xlu0 %1999
      %2001 = vrot.lane.b32.xlu0 %v1988, 110
      %v2002 = vpop.permute.xlu0 %2001
      %2003 = vrot.lane.b32.xlu0 %v1989, 110
      %v2004 = vpop.permute.xlu0 %2003
      %2005 = vrot.lane.b32.xlu0 %v1990, 110
      %v2006 = vpop.permute.xlu0 %2005
      %2007 = vrot.lane.b32.xlu0 %v1991, 110
      %v2008 = vpop.permute.xlu0 %2007
      %2009 = vrot.lane.b32.xlu0 %v1992, 110
      %v2010 = vpop.permute.xlu0 %2009
      %v2011 = vsel %vm1614, %v2000, %v2002
      %v2012 = vsel %vm1614, %v2002, %v2004
      %v2013 = vsel %vm1614, %v2006, %v2008
      %v2014 = vsel %vm1614, %v2008, %v2010
      %2019 = vst [vmem:[%s909 + $0x40] sm:$0xff] %v2011
      %2020 = vst [vmem:[%s909 + $0x48] sm:$0xff] %v2012
      %2021 = vst [vmem:[%s909 + $0x50] sm:$0xff] %v2013
      %2022 = vst [vmem:[%s909 + $0x58] sm:$0xff] %v2014
      %v2023 = vld [vmem:[#allocation2 + $0x8] sm:$0xff]
      %v2024 = vld [vmem:[#allocation2 + $0x10] sm:$0xff]
      %v2025 = vld [vmem:[#allocation2 + $0x18] sm:$0xff]
      %v2026 = vld [vmem:[#allocation2 + $0x28] sm:$0xff]
      %v2027 = vld [vmem:[#allocation2 + $0x30] sm:$0xff]
      %v2028 = vld [vmem:[#allocation2 + $0x38] sm:$0xff]
      %v2029 = vmul.f32 %v2023, %v1634
      %v2030 = vmul.f32 %v2024, %v1638
      %v2031 = vmul.f32 %v2025, %v1636
      %v2032 = vmul.f32 %v2026, %v1634
      %v2033 = vmul.f32 %v2027, %v1638
      %v2034 = vmul.f32 %v2028, %v1636
      %2041 = vrot.lane.b32.xlu0 %v2029, 94
      %v2042 = vpop.permute.xlu0 %2041
      %2043 = vrot.lane.b32.xlu0 %v2030, 94
      %v2044 = vpop.permute.xlu0 %2043
      %2045 = vrot.lane.b32.xlu0 %v2031, 94
      %v2046 = vpop.permute.xlu0 %2045
      %2047 = vrot.lane.b32.xlu0 %v2032, 94
      %v2048 = vpop.permute.xlu0 %2047
      %2049 = vrot.lane.b32.xlu0 %v2033, 94
      %v2050 = vpop.permute.xlu0 %2049
      %2051 = vrot.lane.b32.xlu0 %v2034, 94
      %v2052 = vpop.permute.xlu0 %2051
      %v2053 = vsel %vm1666, %v2042, %v2044
      %v2054 = vsel %vm1666, %v2044, %v2046
      %v2055 = vsel %vm1666, %v2048, %v2050
      %v2056 = vsel %vm1666, %v2050, %v2052
      %2061 = vst [vmem:[%s952 + $0x40] sm:$0xff] %v2053
      %2062 = vst [vmem:[%s952 + $0x48] sm:$0xff] %v2054
      %2063 = vst [vmem:[%s952 + $0x50] sm:$0xff] %v2055
      %2064 = vst [vmem:[%s952 + $0x58] sm:$0xff] %v2056
      %vm2065 = vcmp.ge.s32.totalorder %v468, 2
      %vm2066 = vcmp.ge.s32.totalorder %v469, 2
      %vm2067 = vcmp.lt.s32.totalorder %v468, 18
      %vm2068 = vcmp.lt.s32.totalorder %v469, 18
      %vm2069 = vmand %vm2065, %vm2067
      %vm2070 = vmand %vm2066, %vm2068
      %v2071 = vsel %vm2069, 1, 0
      %v2072 = vsel %vm2070, 1, 0
      %v2073 = vcvt.s32.f32 %v2071
      %v2074 = vcvt.s32.f32 %v2072
      %v2075 = vld [vmem:[#allocation2] sm:$0xff]
      %v2076 = vld [vmem:[#allocation2 + $0x8] sm:$0xff]
      %v2077 = vld [vmem:[#allocation2 + $0x10] sm:$0xff]
      %v2078 = vld [vmem:[#allocation2 + $0x20] sm:$0xff]
      %v2079 = vld [vmem:[#allocation2 + $0x28] sm:$0xff]
      %v2080 = vld [vmem:[#allocation2 + $0x30] sm:$0xff]
      %2083 = vrot.lane.b32.xlu0 %v2073, 3
      %v2084 = vpop.permute.xlu0 %2083
      %2085 = vrot.lane.b32.xlu0 %v2074, 3
      %v2086 = vpop.permute.xlu0 %2085
      %vm2087 = vcmask 23552
      %v2088 = vsel %vm2087, %v2084, %v2086
      %v2092 = vmul.f32 %v2075, %v2084
      %v2093 = vmul.f32 %v2076, %v2088
      %v2094 = vmul.f32 %v2077, %v2086
      %v2095 = vmul.f32 %v2078, %v2084
      %v2096 = vmul.f32 %v2079, %v2088
      %v2097 = vmul.f32 %v2080, %v2086
      %2104 = vrot.lane.b32.xlu0 %v2092, 125
      %v2105 = vpop.permute.xlu0 %2104
      %2106 = vrot.lane.b32.xlu0 %v2093, 125
      %v2107 = vpop.permute.xlu0 %2106
      %2108 = vrot.lane.b32.xlu0 %v2094, 125
      %v2109 = vpop.permute.xlu0 %2108
      %2110 = vrot.lane.b32.xlu0 %v2095, 125
      %v2111 = vpop.permute.xlu0 %2110
      %2112 = vrot.lane.b32.xlu0 %v2096, 125
      %v2113 = vpop.permute.xlu0 %2112
      %2114 = vrot.lane.b32.xlu0 %v2097, 125
      %v2115 = vpop.permute.xlu0 %2114
      %vm2116 = vcmask 1022976
      %v2117 = vsel %vm2116, %v2105, %v2107
      %v2118 = vsel %vm2116, %v2107, %v2109
      %v2119 = vsel %vm2116, %v2111, %v2113
      %v2120 = vsel %vm2116, %v2113, %v2115
      %2125 = vst [vmem:[#allocation3 + $0x60] sm:$0xff] %v2117
      %2126 = vst [vmem:[#allocation3 + $0x68] sm:$0xff] %v2118
      %2127 = vst [vmem:[#allocation3 + $0x70] sm:$0xff] %v2119
      %2128 = vst [vmem:[#allocation3 + $0x78] sm:$0xff] %v2120
      %v2129 = vld [vmem:[#allocation2] sm:$0xff]
      %v2130 = vld [vmem:[#allocation2 + $0x8] sm:$0xff]
      %v2131 = vld [vmem:[#allocation2 + $0x10] sm:$0xff]
      %v2132 = vld [vmem:[#allocation2 + $0x20] sm:$0xff]
      %v2133 = vld [vmem:[#allocation2 + $0x28] sm:$0xff]
      %v2134 = vld [vmem:[#allocation2 + $0x30] sm:$0xff]
      %2135 = vrot.lane.b32.xlu0 %v2073, 19
      %v2136 = vpop.permute.xlu0 %2135
      %2137 = vrot.lane.b32.xlu0 %v2074, 19
      %v2138 = vpop.permute.xlu0 %2137
      %vm2139 = vcmask 154624
      %v2140 = vsel %vm2139, %v2136, %v2138
      %v2144 = vmul.f32 %v2129, %v2136
      %v2145 = vmul.f32 %v2130, %v2140
      %v2146 = vmul.f32 %v2131, %v2138
      %v2147 = vmul.f32 %v2132, %v2136
      %v2148 = vmul.f32 %v2133, %v2140
      %v2149 = vmul.f32 %v2134, %v2138
      %2156 = vrot.lane.b32.xlu0 %v2144, 109
      %v2157 = vpop.permute.xlu0 %2156
      %2158 = vrot.lane.b32.xlu0 %v2145, 109
      %v2159 = vpop.permute.xlu0 %2158
      %2160 = vrot.lane.b32.xlu0 %v2146, 109
      %v2161 = vpop.permute.xlu0 %2160
      %2162 = vrot.lane.b32.xlu0 %v2147, 109
      %v2163 = vpop.permute.xlu0 %2162
      %2164 = vrot.lane.b32.xlu0 %v2148, 109
      %v2165 = vpop.permute.xlu0 %2164
      %2166 = vrot.lane.b32.xlu0 %v2149, 109
      %v2167 = vpop.permute.xlu0 %2166
      %vm2168 = vcmask 891904
      %v2169 = vsel %vm2168, %v2157, %v2159
      %v2170 = vsel %vm2168, %v2159, %v2161
      %v2171 = vsel %vm2168, %v2163, %v2165
      %v2172 = vsel %vm2168, %v2165, %v2167
      %2177 = vst [vmem:[%s542 + $0x60] sm:$0xff] %v2169
      %2178 = vst [vmem:[%s542 + $0x68] sm:$0xff] %v2170
      %2179 = vst [vmem:[%s542 + $0x70] sm:$0xff] %v2171
      %2180 = vst [vmem:[%s542 + $0x78] sm:$0xff] %v2172
      %v2181 = vld [vmem:[#allocation2] sm:$0xff]
      %v2182 = vld [vmem:[#allocation2 + $0x8] sm:$0xff]
      %v2183 = vld [vmem:[#allocation2 + $0x10] sm:$0xff]
      %v2184 = vld [vmem:[#allocation2 + $0x20] sm:$0xff]
      %v2185 = vld [vmem:[#allocation2 + $0x28] sm:$0xff]
      %v2186 = vld [vmem:[#allocation2 + $0x30] sm:$0xff]
      %2187 = vrot.lane.b32.xlu0 %v2073, 35
      %v2188 = vpop.permute.xlu0 %2187
      %2189 = vrot.lane.b32.xlu0 %v2074, 35
      %v2190 = vpop.permute.xlu0 %2189
      %vm2191 = vcmask 285696
      %v2192 = vsel %vm2191, %v2188, %v2190
      %v2196 = vmul.f32 %v2181, %v2188
      %v2197 = vmul.f32 %v2182, %v2192
      %v2198 = vmul.f32 %v2183, %v2190
      %v2199 = vmul.f32 %v2184, %v2188
      %v2200 = vmul.f32 %v2185, %v2192
      %v2201 = vmul.f32 %v2186, %v2190
      %2208 = vrot.lane.b32.xlu0 %v2196, 93
      %v2209 = vpop.permute.xlu0 %2208
      %2210 = vrot.lane.b32.xlu0 %v2197, 93
      %v2211 = vpop.permute.xlu0 %2210
      %2212 = vrot.lane.b32.xlu0 %v2198, 93
      %v2213 = vpop.permute.xlu0 %2212
      %2214 = vrot.lane.b32.xlu0 %v2199, 93
      %v2215 = vpop.permute.xlu0 %2214
      %2216 = vrot.lane.b32.xlu0 %v2200, 93
      %v2217 = vpop.permute.xlu0 %2216
      %2218 = vrot.lane.b32.xlu0 %v2201, 93
      %v2219 = vpop.permute.xlu0 %2218
      %vm2220 = vcmask 760832
      %v2221 = vsel %vm2220, %v2209, %v2211
      %v2222 = vsel %vm2220, %v2211, %v2213
      %v2223 = vsel %vm2220, %v2215, %v2217
      %v2224 = vsel %vm2220, %v2217, %v2219
      %2229 = vst [vmem:[%s595 + $0x60] sm:$0xff] %v2221
      %2230 = vst [vmem:[%s595 + $0x68] sm:$0xff] %v2222
      %2231 = vst [vmem:[%s595 + $0x70] sm:$0xff] %v2223
      %2232 = vst [vmem:[%s595 + $0x78] sm:$0xff] %v2224
      %v2233 = vld [vmem:[#allocation2] sm:$0xff]
      %v2234 = vld [vmem:[#allocation2 + $0x8] sm:$0xff]
      %v2235 = vld [vmem:[#allocation2 + $0x10] sm:$0xff]
      %v2236 = vld [vmem:[#allocation2 + $0x20] sm:$0xff]
      %v2237 = vld [vmem:[#allocation2 + $0x28] sm:$0xff]
      %v2238 = vld [vmem:[#allocation2 + $0x30] sm:$0xff]
      %2239 = vrot.lane.b32.xlu0 %v2073, 51
      %v2240 = vpop.permute.xlu0 %2239
      %2241 = vrot.lane.b32.xlu0 %v2074, 51
      %v2242 = vpop.permute.xlu0 %2241
      %vm2243 = vcmask 416768
      %v2244 = vsel %vm2243, %v2240, %v2242
      %v2248 = vmul.f32 %v2233, %v2240
      %v2249 = vmul.f32 %v2234, %v2244
      %v2250 = vmul.f32 %v2235, %v2242
      %v2251 = vmul.f32 %v2236, %v2240
      %v2252 = vmul.f32 %v2237, %v2244
      %v2253 = vmul.f32 %v2238, %v2242
      %2260 = vrot.lane.b32.xlu0 %v2248, 77
      %v2261 = vpop.permute.xlu0 %2260
      %2262 = vrot.lane.b32.xlu0 %v2249, 77
      %v2263 = vpop.permute.xlu0 %2262
      %2264 = vrot.lane.b32.xlu0 %v2250, 77
      %v2265 = vpop.permute.xlu0 %2264
      %2266 = vrot.lane.b32.xlu0 %v2251, 77
      %v2267 = vpop.permute.xlu0 %2266
      %2268 = vrot.lane.b32.xlu0 %v2252, 77
      %v2269 = vpop.permute.xlu0 %2268
      %2270 = vrot.lane.b32.xlu0 %v2253, 77
      %v2271 = vpop.permute.xlu0 %2270
      %vm2272 = vcmask 629760
      %v2273 = vsel %vm2272, %v2261, %v2263
      %v2274 = vsel %vm2272, %v2263, %v2265
      %v2275 = vsel %vm2272, %v2267, %v2269
      %v2276 = vsel %vm2272, %v2269, %v2271
      %2281 = vst [vmem:[%s648 + $0x60] sm:$0xff] %v2273
      %2282 = vst [vmem:[%s648 + $0x68] sm:$0xff] %v2274
      %2283 = vst [vmem:[%s648 + $0x70] sm:$0xff] %v2275
      %2284 = vst [vmem:[%s648 + $0x78] sm:$0xff] %v2276
      %v2285 = vld [vmem:[#allocation2] sm:$0xff]
      %v2286 = vld [vmem:[#allocation2 + $0x8] sm:$0xff]
      %v2287 = vld [vmem:[#allocation2 + $0x10] sm:$0xff]
      %v2288 = vld [vmem:[#allocation2 + $0x20] sm:$0xff]
      %v2289 = vld [vmem:[#allocation2 + $0x28] sm:$0xff]
      %v2290 = vld [vmem:[#allocation2 + $0x30] sm:$0xff]
      %2291 = vrot.lane.b32.xlu0 %v2073, 67
      %v2292 = vpop.permute.xlu0 %2291
      %2293 = vrot.lane.b32.xlu0 %v2074, 67
      %v2294 = vpop.permute.xlu0 %2293
      %vm2295 = vcmask 547840
      %v2296 = vsel %vm2295, %v2292, %v2294
      %v2300 = vmul.f32 %v2285, %v2292
      %v2301 = vmul.f32 %v2286, %v2296
      %v2302 = vmul.f32 %v2287, %v2294
      %v2303 = vmul.f32 %v2288, %v2292
      %v2304 = vmul.f32 %v2289, %v2296
      %v2305 = vmul.f32 %v2290, %v2294
      %2312 = vrot.lane.b32.xlu0 %v2300, 61
      %v2313 = vpop.permute.xlu0 %2312
      %2314 = vrot.lane.b32.xlu0 %v2301, 61
      %v2315 = vpop.permute.xlu0 %2314
      %2316 = vrot.lane.b32.xlu0 %v2302, 61
      %v2317 = vpop.permute.xlu0 %2316
      %2318 = vrot.lane.b32.xlu0 %v2303, 61
      %v2319 = vpop.permute.xlu0 %2318
      %2320 = vrot.lane.b32.xlu0 %v2304, 61
      %v2321 = vpop.permute.xlu0 %2320
      %2322 = vrot.lane.b32.xlu0 %v2305, 61
      %v2323 = vpop.permute.xlu0 %2322
      %vm2324 = vcmask 498688
      %v2325 = vsel %vm2324, %v2313, %v2315
      %v2326 = vsel %vm2324, %v2315, %v2317
      %v2327 = vsel %vm2324, %v2319, %v2321
      %v2328 = vsel %vm2324, %v2321, %v2323
      %2333 = vst [vmem:[%s700 + $0x60] sm:$0xff] %v2325
      %2334 = vst [vmem:[%s700 + $0x68] sm:$0xff] %v2326
      %2335 = vst [vmem:[%s700 + $0x70] sm:$0xff] %v2327
      %2336 = vst [vmem:[%s700 + $0x78] sm:$0xff] %v2328
      %v2337 = vld [vmem:[#allocation2] sm:$0xff]
      %v2338 = vld [vmem:[#allocation2 + $0x8] sm:$0xff]
      %v2339 = vld [vmem:[#allocation2 + $0x10] sm:$0xff]
      %v2340 = vld [vmem:[#allocation2 + $0x20] sm:$0xff]
      %v2341 = vld [vmem:[#allocation2 + $0x28] sm:$0xff]
      %v2342 = vld [vmem:[#allocation2 + $0x30] sm:$0xff]
      %2343 = vrot.lane.b32.xlu0 %v2073, 83
      %v2344 = vpop.permute.xlu0 %2343
      %2345 = vrot.lane.b32.xlu0 %v2074, 83
      %v2346 = vpop.permute.xlu0 %2345
      %vm2347 = vcmask 678912
      %v2348 = vsel %vm2347, %v2344, %v2346
      %v2352 = vmul.f32 %v2337, %v2344
      %v2353 = vmul.f32 %v2338, %v2348
      %v2354 = vmul.f32 %v2339, %v2346
      %v2355 = vmul.f32 %v2340, %v2344
      %v2356 = vmul.f32 %v2341, %v2348
      %v2357 = vmul.f32 %v2342, %v2346
      %2364 = vrot.lane.b32.xlu0 %v2352, 45
      %v2365 = vpop.permute.xlu0 %2364
      %2366 = vrot.lane.b32.xlu0 %v2353, 45
      %v2367 = vpop.permute.xlu0 %2366
      %2368 = vrot.lane.b32.xlu0 %v2354, 45
      %v2369 = vpop.permute.xlu0 %2368
      %2370 = vrot.lane.b32.xlu0 %v2355, 45
      %v2371 = vpop.permute.xlu0 %2370
      %2372 = vrot.lane.b32.xlu0 %v2356, 45
      %v2373 = vpop.permute.xlu0 %2372
      %2374 = vrot.lane.b32.xlu0 %v2357, 45
      %v2375 = vpop.permute.xlu0 %2374
      %vm2376 = vcmask 367616
      %v2377 = vsel %vm2376, %v2365, %v2367
      %v2378 = vsel %vm2376, %v2367, %v2369
      %v2379 = vsel %vm2376, %v2371, %v2373
      %v2380 = vsel %vm2376, %v2373, %v2375
      %2385 = vst [vmem:[%s751 + $0x60] sm:$0xff] %v2377
      %2386 = vst [vmem:[%s751 + $0x68] sm:$0xff] %v2378
      %2387 = vst [vmem:[%s751 + $0x70] sm:$0xff] %v2379
      %2388 = vst [vmem:[%s751 + $0x78] sm:$0xff] %v2380
      %v2389 = vld [vmem:[#allocation2] sm:$0xff]
      %v2390 = vld [vmem:[#allocation2 + $0x8] sm:$0xff]
      %v2391 = vld [vmem:[#allocation2 + $0x10] sm:$0xff]
      %v2392 = vld [vmem:[#allocation2 + $0x20] sm:$0xff]
      %v2393 = vld [vmem:[#allocation2 + $0x28] sm:$0xff]
      %v2394 = vld [vmem:[#allocation2 + $0x30] sm:$0xff]
      %2395 = vrot.lane.b32.xlu0 %v2073, 99
      %v2396 = vpop.permute.xlu0 %2395
      %2397 = vrot.lane.b32.xlu0 %v2074, 99
      %v2398 = vpop.permute.xlu0 %2397
      %vm2399 = vcmask 809984
      %v2400 = vsel %vm2399, %v2396, %v2398
      %v2404 = vmul.f32 %v2389, %v2396
      %v2405 = vmul.f32 %v2390, %v2400
      %v2406 = vmul.f32 %v2391, %v2398
      %v2407 = vmul.f32 %v2392, %v2396
      %v2408 = vmul.f32 %v2393, %v2400
      %v2409 = vmul.f32 %v2394, %v2398
      %2416 = vrot.lane.b32.xlu0 %v2404, 29
      %v2417 = vpop.permute.xlu0 %2416
      %2418 = vrot.lane.b32.xlu0 %v2405, 29
      %v2419 = vpop.permute.xlu0 %2418
      %2420 = vrot.lane.b32.xlu0 %v2406, 29
      %v2421 = vpop.permute.xlu0 %2420
      %2422 = vrot.lane.b32.xlu0 %v2407, 29
      %v2423 = vpop.permute.xlu0 %2422
      %2424 = vrot.lane.b32.xlu0 %v2408, 29
      %v2425 = vpop.permute.xlu0 %2424
      %2426 = vrot.lane.b32.xlu0 %v2409, 29
      %v2427 = vpop.permute.xlu0 %2426
      %vm2428 = vcmask 236544
      %v2429 = vsel %vm2428, %v2417, %v2419
      %v2430 = vsel %vm2428, %v2419, %v2421
      %v2431 = vsel %vm2428, %v2423, %v2425
      %v2432 = vsel %vm2428, %v2425, %v2427
      %2437 = vst [vmem:[%s802 + $0x60] sm:$0xff] %v2429
      %2438 = vst [vmem:[%s802 + $0x68] sm:$0xff] %v2430
      %2439 = vst [vmem:[%s802 + $0x70] sm:$0xff] %v2431
      %2440 = vst [vmem:[%s802 + $0x78] sm:$0xff] %v2432
      %v2441 = vld [vmem:[#allocation2] sm:$0xff]
      %v2442 = vld [vmem:[#allocation2 + $0x8] sm:$0xff]
      %v2443 = vld [vmem:[#allocation2 + $0x10] sm:$0xff]
      %v2444 = vld [vmem:[#allocation2 + $0x20] sm:$0xff]
      %v2445 = vld [vmem:[#allocation2 + $0x28] sm:$0xff]
      %v2446 = vld [vmem:[#allocation2 + $0x30] sm:$0xff]
      %2447 = vrot.lane.b32.xlu0 %v2073, 115
      %v2448 = vpop.permute.xlu0 %2447
      %2449 = vrot.lane.b32.xlu0 %v2074, 115
      %v2450 = vpop.permute.xlu0 %2449
      %vm2451 = vcmask 941056
      %v2452 = vsel %vm2451, %v2448, %v2450
      %v2456 = vmul.f32 %v2441, %v2448
      %v2457 = vmul.f32 %v2442, %v2452
      %v2458 = vmul.f32 %v2443, %v2450
      %v2459 = vmul.f32 %v2444, %v2448
      %v2460 = vmul.f32 %v2445, %v2452
      %v2461 = vmul.f32 %v2446, %v2450
      %2468 = vrot.lane.b32.xlu0 %v2456, 13
      %v2469 = vpop.permute.xlu0 %2468
      %2470 = vrot.lane.b32.xlu0 %v2457, 13
      %v2471 = vpop.permute.xlu0 %2470
      %2472 = vrot.lane.b32.xlu0 %v2458, 13
      %v2473 = vpop.permute.xlu0 %2472
      %2474 = vrot.lane.b32.xlu0 %v2459, 13
      %v2475 = vpop.permute.xlu0 %2474
      %2476 = vrot.lane.b32.xlu0 %v2460, 13
      %v2477 = vpop.permute.xlu0 %2476
      %2478 = vrot.lane.b32.xlu0 %v2461, 13
      %v2479 = vpop.permute.xlu0 %2478
      %vm2480 = vcmask 105472
      %v2481 = vsel %vm2480, %v2469, %v2471
      %v2482 = vsel %vm2480, %v2471, %v2473
      %v2483 = vsel %vm2480, %v2475, %v2477
      %v2484 = vsel %vm2480, %v2477, %v2479
      %2489 = vst [vmem:[%s853 + $0x60] sm:$0xff] %v2481
      %2490 = vst [vmem:[%s853 + $0x68] sm:$0xff] %v2482
      %2491 = vst [vmem:[%s853 + $0x70] sm:$0xff] %v2483
      %2492 = vst [vmem:[%s853 + $0x78] sm:$0xff] %v2484
      %v2493 = vld [vmem:[#allocation2 + $0x8] sm:$0xff]
      %v2494 = vld [vmem:[#allocation2 + $0x10] sm:$0xff]
      %v2495 = vld [vmem:[#allocation2 + $0x18] sm:$0xff]
      %v2496 = vld [vmem:[#allocation2 + $0x28] sm:$0xff]
      %v2497 = vld [vmem:[#allocation2 + $0x30] sm:$0xff]
      %v2498 = vld [vmem:[#allocation2 + $0x38] sm:$0xff]
      %v2499 = vmul.f32 %v2493, %v2084
      %v2500 = vmul.f32 %v2494, %v2088
      %v2501 = vmul.f32 %v2495, %v2086
      %v2502 = vmul.f32 %v2496, %v2084
      %v2503 = vmul.f32 %v2497, %v2088
      %v2504 = vmul.f32 %v2498, %v2086
      %2511 = vrot.lane.b32.xlu0 %v2499, 125
      %v2512 = vpop.permute.xlu0 %2511
      %2513 = vrot.lane.b32.xlu0 %v2500, 125
      %v2514 = vpop.permute.xlu0 %2513
      %2515 = vrot.lane.b32.xlu0 %v2501, 125
      %v2516 = vpop.permute.xlu0 %2515
      %2517 = vrot.lane.b32.xlu0 %v2502, 125
      %v2518 = vpop.permute.xlu0 %2517
      %2519 = vrot.lane.b32.xlu0 %v2503, 125
      %v2520 = vpop.permute.xlu0 %2519
      %2521 = vrot.lane.b32.xlu0 %v2504, 125
      %v2522 = vpop.permute.xlu0 %2521
      %v2523 = vsel %vm2116, %v2512, %v2514
      %v2524 = vsel %vm2116, %v2514, %v2516
      %v2525 = vsel %vm2116, %v2518, %v2520
      %v2526 = vsel %vm2116, %v2520, %v2522
      %2531 = vst [vmem:[%s866 + $0x60] sm:$0xff] %v2523
      %2532 = vst [vmem:[%s866 + $0x68] sm:$0xff] %v2524
      %2533 = vst [vmem:[%s866 + $0x70] sm:$0xff] %v2525
      %2534 = vst [vmem:[%s866 + $0x78] sm:$0xff] %v2526
      %v2535 = vld [vmem:[#allocation2 + $0x8] sm:$0xff]
      %v2536 = vld [vmem:[#allocation2 + $0x10] sm:$0xff]
      %v2537 = vld [vmem:[#allocation2 + $0x18] sm:$0xff]
      %v2538 = vld [vmem:[#allocation2 + $0x28] sm:$0xff]
      %v2539 = vld [vmem:[#allocation2 + $0x30] sm:$0xff]
      %v2540 = vld [vmem:[#allocation2 + $0x38] sm:$0xff]
      %v2541 = vmul.f32 %v2535, %v2136
      %v2542 = vmul.f32 %v2536, %v2140
      %v2543 = vmul.f32 %v2537, %v2138
      %v2544 = vmul.f32 %v2538, %v2136
      %v2545 = vmul.f32 %v2539, %v2140
      %v2546 = vmul.f32 %v2540, %v2138
      %2553 = vrot.lane.b32.xlu0 %v2541, 109
      %v2554 = vpop.permute.xlu0 %2553
      %2555 = vrot.lane.b32.xlu0 %v2542, 109
      %v2556 = vpop.permute.xlu0 %2555
      %2557 = vrot.lane.b32.xlu0 %v2543, 109
      %v2558 = vpop.permute.xlu0 %2557
      %2559 = vrot.lane.b32.xlu0 %v2544, 109
      %v2560 = vpop.permute.xlu0 %2559
      %2561 = vrot.lane.b32.xlu0 %v2545, 109
      %v2562 = vpop.permute.xlu0 %2561
      %2563 = vrot.lane.b32.xlu0 %v2546, 109
      %v2564 = vpop.permute.xlu0 %2563
      %v2565 = vsel %vm2168, %v2554, %v2556
      %v2566 = vsel %vm2168, %v2556, %v2558
      %v2567 = vsel %vm2168, %v2560, %v2562
      %v2568 = vsel %vm2168, %v2562, %v2564
      %2573 = vst [vmem:[%s909 + $0x60] sm:$0xff] %v2565
      %2574 = vst [vmem:[%s909 + $0x68] sm:$0xff] %v2566
      %2575 = vst [vmem:[%s909 + $0x70] sm:$0xff] %v2567
      %2576 = vst [vmem:[%s909 + $0x78] sm:$0xff] %v2568
      %v2577 = vld [vmem:[#allocation2 + $0x8] sm:$0xff]
      %v2578 = vld [vmem:[#allocation2 + $0x10] sm:$0xff]
      %v2579 = vld [vmem:[#allocation2 + $0x18] sm:$0xff]
      %v2580 = vld [vmem:[#allocation2 + $0x28] sm:$0xff]
      %v2581 = vld [vmem:[#allocation2 + $0x30] sm:$0xff]
      %v2582 = vld [vmem:[#allocation2 + $0x38] sm:$0xff]
      %v2583 = vmul.f32 %v2577, %v2188
      %v2584 = vmul.f32 %v2578, %v2192
      %v2585 = vmul.f32 %v2579, %v2190
      %v2586 = vmul.f32 %v2580, %v2188
      %v2587 = vmul.f32 %v2581, %v2192
      %v2588 = vmul.f32 %v2582, %v2190
      %2595 = vrot.lane.b32.xlu0 %v2583, 93
      %v2596 = vpop.permute.xlu0 %2595
      %2597 = vrot.lane.b32.xlu0 %v2584, 93
      %v2598 = vpop.permute.xlu0 %2597
      %2599 = vrot.lane.b32.xlu0 %v2585, 93
      %v2600 = vpop.permute.xlu0 %2599
      %2601 = vrot.lane.b32.xlu0 %v2586, 93
      %v2602 = vpop.permute.xlu0 %2601
      %2603 = vrot.lane.b32.xlu0 %v2587, 93
      %v2604 = vpop.permute.xlu0 %2603
      %2605 = vrot.lane.b32.xlu0 %v2588, 93
      %v2606 = vpop.permute.xlu0 %2605
      %v2607 = vsel %vm2220, %v2596, %v2598
      %v2608 = vsel %vm2220, %v2598, %v2600
      %v2609 = vsel %vm2220, %v2602, %v2604
      %v2610 = vsel %vm2220, %v2604, %v2606
      %2615 = vst [vmem:[%s952 + $0x60] sm:$0xff] %v2607
      %2616 = vst [vmem:[%s952 + $0x68] sm:$0xff] %v2608
      %2617 = vst [vmem:[%s952 + $0x70] sm:$0xff] %v2609
      %2618 = vst [vmem:[%s952 + $0x78] sm:$0xff] %v2610
      %vm2619 = vcmp.ge.s32.totalorder %v468, 1
      %vm2620 = vcmp.ge.s32.totalorder %v469, 1
      %vm2621 = vcmp.lt.s32.totalorder %v468, 17
      %vm2622 = vcmp.lt.s32.totalorder %v469, 17
      %vm2623 = vmand %vm2619, %vm2621
      %vm2624 = vmand %vm2620, %vm2622
      %v2625 = vsel %vm2623, 1, 0
      %v2626 = vsel %vm2624, 1, 0
      %v2627 = vcvt.s32.f32 %v2625
      %v2628 = vcvt.s32.f32 %v2626
      %v2629 = vld [vmem:[#allocation2] sm:$0xff]
      %v2630 = vld [vmem:[#allocation2 + $0x8] sm:$0xff]
      %v2631 = vld [vmem:[#allocation2 + $0x10] sm:$0xff]
      %v2632 = vld [vmem:[#allocation2 + $0x20] sm:$0xff]
      %v2633 = vld [vmem:[#allocation2 + $0x28] sm:$0xff]
      %v2634 = vld [vmem:[#allocation2 + $0x30] sm:$0xff]
      %2637 = vrot.lane.b32.xlu0 %v2627, 4
      %v2638 = vpop.permute.xlu0 %2637
      %2639 = vrot.lane.b32.xlu0 %v2628, 4
      %v2640 = vpop.permute.xlu0 %2639
      %vm2641 = vcmask 31744
      %v2642 = vsel %vm2641, %v2638, %v2640
      %v2646 = vmul.f32 %v2629, %v2638
      %v2647 = vmul.f32 %v2630, %v2642
      %v2648 = vmul.f32 %v2631, %v2640
      %v2649 = vmul.f32 %v2632, %v2638
      %v2650 = vmul.f32 %v2633, %v2642
      %v2651 = vmul.f32 %v2634, %v2640
      %2658 = vrot.lane.b32.xlu0 %v2646, 124
      %v2659 = vpop.permute.xlu0 %2658
      %2660 = vrot.lane.b32.xlu0 %v2647, 124
      %v2661 = vpop.permute.xlu0 %2660
      %2662 = vrot.lane.b32.xlu0 %v2648, 124
      %v2663 = vpop.permute.xlu0 %2662
      %2664 = vrot.lane.b32.xlu0 %v2649, 124
      %v2665 = vpop.permute.xlu0 %2664
      %2666 = vrot.lane.b32.xlu0 %v2650, 124
      %v2667 = vpop.permute.xlu0 %2666
      %2668 = vrot.lane.b32.xlu0 %v2651, 124
      %v2669 = vpop.permute.xlu0 %2668
      %vm2670 = vcmask 1014784
      %v2671 = vsel %vm2670, %v2659, %v2661
      %v2672 = vsel %vm2670, %v2661, %v2663
      %v2673 = vsel %vm2670, %v2665, %v2667
      %v2674 = vsel %vm2670, %v2667, %v2669
      %2679 = vst [vmem:[#allocation3 + $0x80] sm:$0xff] %v2671
      %2680 = vst [vmem:[#allocation3 + $0x88] sm:$0xff] %v2672
      %2681 = vst [vmem:[#allocation3 + $0x90] sm:$0xff] %v2673
      %2682 = vst [vmem:[#allocation3 + $0x98] sm:$0xff] %v2674
      %v2683 = vld [vmem:[#allocation2] sm:$0xff]
      %v2684 = vld [vmem:[#allocation2 + $0x8] sm:$0xff]
      %v2685 = vld [vmem:[#allocation2 + $0x10] sm:$0xff]
      %v2686 = vld [vmem:[#allocation2 + $0x20] sm:$0xff]
      %v2687 = vld [vmem:[#allocation2 + $0x28] sm:$0xff]
      %v2688 = vld [vmem:[#allocation2 + $0x30] sm:$0xff]
      %2689 = vrot.lane.b32.xlu0 %v2627, 20
      %v2690 = vpop.permute.xlu0 %2689
      %2691 = vrot.lane.b32.xlu0 %v2628, 20
      %v2692 = vpop.permute.xlu0 %2691
      %vm2693 = vcmask 162816
      %v2694 = vsel %vm2693, %v2690, %v2692
      %v2698 = vmul.f32 %v2683, %v2690
      %v2699 = vmul.f32 %v2684, %v2694
      %v2700 = vmul.f32 %v2685, %v2692
      %v2701 = vmul.f32 %v2686, %v2690
      %v2702 = vmul.f32 %v2687, %v2694
      %v2703 = vmul.f32 %v2688, %v2692
      %2710 = vrot.lane.b32.xlu0 %v2698, 108
      %v2711 = vpop.permute.xlu0 %2710
      %2712 = vrot.lane.b32.xlu0 %v2699, 108
      %v2713 = vpop.permute.xlu0 %2712
      %2714 = vrot.lane.b32.xlu0 %v2700, 108
      %v2715 = vpop.permute.xlu0 %2714
      %2716 = vrot.lane.b32.xlu0 %v2701, 108
      %v2717 = vpop.permute.xlu0 %2716
      %2718 = vrot.lane.b32.xlu0 %v2702, 108
      %v2719 = vpop.permute.xlu0 %2718
      %2720 = vrot.lane.b32.xlu0 %v2703, 108
      %v2721 = vpop.permute.xlu0 %2720
      %vm2722 = vcmask 883712
      %v2723 = vsel %vm2722, %v2711, %v2713
      %v2724 = vsel %vm2722, %v2713, %v2715
      %v2725 = vsel %vm2722, %v2717, %v2719
      %v2726 = vsel %vm2722, %v2719, %v2721
      %2731 = vst [vmem:[%s542 + $0x80] sm:$0xff] %v2723
      %2732 = vst [vmem:[%s542 + $0x88] sm:$0xff] %v2724
      %2733 = vst [vmem:[%s542 + $0x90] sm:$0xff] %v2725
      %2734 = vst [vmem:[%s542 + $0x98] sm:$0xff] %v2726
      %v2735 = vld [vmem:[#allocation2] sm:$0xff]
      %v2736 = vld [vmem:[#allocation2 + $0x8] sm:$0xff]
      %v2737 = vld [vmem:[#allocation2 + $0x10] sm:$0xff]
      %v2738 = vld [vmem:[#allocation2 + $0x20] sm:$0xff]
      %v2739 = vld [vmem:[#allocation2 + $0x28] sm:$0xff]
      %v2740 = vld [vmem:[#allocation2 + $0x30] sm:$0xff]
      %2741 = vrot.lane.b32.xlu0 %v2627, 36
      %v2742 = vpop.permute.xlu0 %2741
      %2743 = vrot.lane.b32.xlu0 %v2628, 36
      %v2744 = vpop.permute.xlu0 %2743
      %vm2745 = vcmask 293888
      %v2746 = vsel %vm2745, %v2742, %v2744
      %v2750 = vmul.f32 %v2735, %v2742
      %v2751 = vmul.f32 %v2736, %v2746
      %v2752 = vmul.f32 %v2737, %v2744
      %v2753 = vmul.f32 %v2738, %v2742
      %v2754 = vmul.f32 %v2739, %v2746
      %v2755 = vmul.f32 %v2740, %v2744
      %2762 = vrot.lane.b32.xlu0 %v2750, 92
      %v2763 = vpop.permute.xlu0 %2762
      %2764 = vrot.lane.b32.xlu0 %v2751, 92
      %v2765 = vpop.permute.xlu0 %2764
      %2766 = vrot.lane.b32.xlu0 %v2752, 92
      %v2767 = vpop.permute.xlu0 %2766
      %2768 = vrot.lane.b32.xlu0 %v2753, 92
      %v2769 = vpop.permute.xlu0 %2768
      %2770 = vrot.lane.b32.xlu0 %v2754, 92
      %v2771 = vpop.permute.xlu0 %2770
      %2772 = vrot.lane.b32.xlu0 %v2755, 92
      %v2773 = vpop.permute.xlu0 %2772
      %vm2774 = vcmask 752640
      %v2775 = vsel %vm2774, %v2763, %v2765
      %v2776 = vsel %vm2774, %v2765, %v2767
      %v2777 = vsel %vm2774, %v2769, %v2771
      %v2778 = vsel %vm2774, %v2771, %v2773
      %2783 = vst [vmem:[%s595 + $0x80] sm:$0xff] %v2775
      %2784 = vst [vmem:[%s595 + $0x88] sm:$0xff] %v2776
      %2785 = vst [vmem:[%s595 + $0x90] sm:$0xff] %v2777
      %2786 = vst [vmem:[%s595 + $0x98] sm:$0xff] %v2778
      %v2787 = vld [vmem:[#allocation2] sm:$0xff]
      %v2788 = vld [vmem:[#allocation2 + $0x8] sm:$0xff]
      %v2789 = vld [vmem:[#allocation2 + $0x10] sm:$0xff]
      %v2790 = vld [vmem:[#allocation2 + $0x20] sm:$0xff]
      %v2791 = vld [vmem:[#allocation2 + $0x28] sm:$0xff]
      %v2792 = vld [vmem:[#allocation2 + $0x30] sm:$0xff]
      %2793 = vrot.lane.b32.xlu0 %v2627, 52
      %v2794 = vpop.permute.xlu0 %2793
      %2795 = vrot.lane.b32.xlu0 %v2628, 52
      %v2796 = vpop.permute.xlu0 %2795
      %vm2797 = vcmask 424960
      %v2798 = vsel %vm2797, %v2794, %v2796
      %v2802 = vmul.f32 %v2787, %v2794
      %v2803 = vmul.f32 %v2788, %v2798
      %v2804 = vmul.f32 %v2789, %v2796
      %v2805 = vmul.f32 %v2790, %v2794
      %v2806 = vmul.f32 %v2791, %v2798
      %v2807 = vmul.f32 %v2792, %v2796
      %2814 = vrot.lane.b32.xlu0 %v2802, 76
      %v2815 = vpop.permute.xlu0 %2814
      %2816 = vrot.lane.b32.xlu0 %v2803, 76
      %v2817 = vpop.permute.xlu0 %2816
      %2818 = vrot.lane.b32.xlu0 %v2804, 76
      %v2819 = vpop.permute.xlu0 %2818
      %2820 = vrot.lane.b32.xlu0 %v2805, 76
      %v2821 = vpop.permute.xlu0 %2820
      %2822 = vrot.lane.b32.xlu0 %v2806, 76
      %v2823 = vpop.permute.xlu0 %2822
      %2824 = vrot.lane.b32.xlu0 %v2807, 76
      %v2825 = vpop.permute.xlu0 %2824
      %vm2826 = vcmask 621568
      %v2827 = vsel %vm2826, %v2815, %v2817
      %v2828 = vsel %vm2826, %v2817, %v2819
      %v2829 = vsel %vm2826, %v2821, %v2823
      %v2830 = vsel %vm2826, %v2823, %v2825
      %2835 = vst [vmem:[%s648 + $0x80] sm:$0xff] %v2827
      %2836 = vst [vmem:[%s648 + $0x88] sm:$0xff] %v2828
      %2837 = vst [vmem:[%s648 + $0x90] sm:$0xff] %v2829
      %2838 = vst [vmem:[%s648 + $0x98] sm:$0xff] %v2830
      %v2839 = vld [vmem:[#allocation2] sm:$0xff]
      %v2840 = vld [vmem:[#allocation2 + $0x8] sm:$0xff]
      %v2841 = vld [vmem:[#allocation2 + $0x10] sm:$0xff]
      %v2842 = vld [vmem:[#allocation2 + $0x20] sm:$0xff]
      %v2843 = vld [vmem:[#allocation2 + $0x28] sm:$0xff]
      %v2844 = vld [vmem:[#allocation2 + $0x30] sm:$0xff]
      %2845 = vrot.lane.b32.xlu0 %v2627, 68
      %v2846 = vpop.permute.xlu0 %2845
      %2847 = vrot.lane.b32.xlu0 %v2628, 68
      %v2848 = vpop.permute.xlu0 %2847
      %vm2849 = vcmask 556032
      %v2850 = vsel %vm2849, %v2846, %v2848
      %v2854 = vmul.f32 %v2839, %v2846
      %v2855 = vmul.f32 %v2840, %v2850
      %v2856 = vmul.f32 %v2841, %v2848
      %v2857 = vmul.f32 %v2842, %v2846
      %v2858 = vmul.f32 %v2843, %v2850
      %v2859 = vmul.f32 %v2844, %v2848
      %2866 = vrot.lane.b32.xlu0 %v2854, 60
      %v2867 = vpop.permute.xlu0 %2866
      %2868 = vrot.lane.b32.xlu0 %v2855, 60
      %v2869 = vpop.permute.xlu0 %2868
      %2870 = vrot.lane.b32.xlu0 %v2856, 60
      %v2871 = vpop.permute.xlu0 %2870
      %2872 = vrot.lane.b32.xlu0 %v2857, 60
      %v2873 = vpop.permute.xlu0 %2872
      %2874 = vrot.lane.b32.xlu0 %v2858, 60
      %v2875 = vpop.permute.xlu0 %2874
      %2876 = vrot.lane.b32.xlu0 %v2859, 60
      %v2877 = vpop.permute.xlu0 %2876
      %vm2878 = vcmask 490496
      %v2879 = vsel %vm2878, %v2867, %v2869
      %v2880 = vsel %vm2878, %v2869, %v2871
      %v2881 = vsel %vm2878, %v2873, %v2875
      %v2882 = vsel %vm2878, %v2875, %v2877
      %2887 = vst [vmem:[%s700 + $0x80] sm:$0xff] %v2879
      %2888 = vst [vmem:[%s700 + $0x88] sm:$0xff] %v2880
      %2889 = vst [vmem:[%s700 + $0x90] sm:$0xff] %v2881
      %2890 = vst [vmem:[%s700 + $0x98] sm:$0xff] %v2882
      %v2891 = vld [vmem:[#allocation2] sm:$0xff]
      %v2892 = vld [vmem:[#allocation2 + $0x8] sm:$0xff]
      %v2893 = vld [vmem:[#allocation2 + $0x10] sm:$0xff]
      %v2894 = vld [vmem:[#allocation2 + $0x20] sm:$0xff]
      %v2895 = vld [vmem:[#allocation2 + $0x28] sm:$0xff]
      %v2896 = vld [vmem:[#allocation2 + $0x30] sm:$0xff]
      %2897 = vrot.lane.b32.xlu0 %v2627, 84
      %v2898 = vpop.permute.xlu0 %2897
      %2899 = vrot.lane.b32.xlu0 %v2628, 84
      %v2900 = vpop.permute.xlu0 %2899
      %vm2901 = vcmask 687104
      %v2902 = vsel %vm2901, %v2898, %v2900
      %v2906 = vmul.f32 %v2891, %v2898
      %v2907 = vmul.f32 %v2892, %v2902
      %v2908 = vmul.f32 %v2893, %v2900
      %v2909 = vmul.f32 %v2894, %v2898
      %v2910 = vmul.f32 %v2895, %v2902
      %v2911 = vmul.f32 %v2896, %v2900
      %2918 = vrot.lane.b32.xlu0 %v2906, 44
      %v2919 = vpop.permute.xlu0 %2918
      %2920 = vrot.lane.b32.xlu0 %v2907, 44
      %v2921 = vpop.permute.xlu0 %2920
      %2922 = vrot.lane.b32.xlu0 %v2908, 44
      %v2923 = vpop.permute.xlu0 %2922
      %2924 = vrot.lane.b32.xlu0 %v2909, 44
      %v2925 = vpop.permute.xlu0 %2924
      %2926 = vrot.lane.b32.xlu0 %v2910, 44
      %v2927 = vpop.permute.xlu0 %2926
      %2928 = vrot.lane.b32.xlu0 %v2911, 44
      %v2929 = vpop.permute.xlu0 %2928
      %vm2930 = vcmask 359424
      %v2931 = vsel %vm2930, %v2919, %v2921
      %v2932 = vsel %vm2930, %v2921, %v2923
      %v2933 = vsel %vm2930, %v2925, %v2927
      %v2934 = vsel %vm2930, %v2927, %v2929
      %2939 = vst [vmem:[%s751 + $0x80] sm:$0xff] %v2931
      %2940 = vst [vmem:[%s751 + $0x88] sm:$0xff] %v2932
      %2941 = vst [vmem:[%s751 + $0x90] sm:$0xff] %v2933
      %2942 = vst [vmem:[%s751 + $0x98] sm:$0xff] %v2934
      %v2943 = vld [vmem:[#allocation2] sm:$0xff]
      %v2944 = vld [vmem:[#allocation2 + $0x8] sm:$0xff]
      %v2945 = vld [vmem:[#allocation2 + $0x10] sm:$0xff]
      %v2946 = vld [vmem:[#allocation2 + $0x20] sm:$0xff]
      %v2947 = vld [vmem:[#allocation2 + $0x28] sm:$0xff]
      %v2948 = vld [vmem:[#allocation2 + $0x30] sm:$0xff]
      %2949 = vrot.lane.b32.xlu0 %v2627, 100
      %v2950 = vpop.permute.xlu0 %2949
      %2951 = vrot.lane.b32.xlu0 %v2628, 100
      %v2952 = vpop.permute.xlu0 %2951
      %vm2953 = vcmask 818176
      %v2954 = vsel %vm2953, %v2950, %v2952
      %v2958 = vmul.f32 %v2943, %v2950
      %v2959 = vmul.f32 %v2944, %v2954
      %v2960 = vmul.f32 %v2945, %v2952
      %v2961 = vmul.f32 %v2946, %v2950
      %v2962 = vmul.f32 %v2947, %v2954
      %v2963 = vmul.f32 %v2948, %v2952
      %2970 = vrot.lane.b32.xlu0 %v2958, 28
      %v2971 = vpop.permute.xlu0 %2970
      %2972 = vrot.lane.b32.xlu0 %v2959, 28
      %v2973 = vpop.permute.xlu0 %2972
      %2974 = vrot.lane.b32.xlu0 %v2960, 28
      %v2975 = vpop.permute.xlu0 %2974
      %2976 = vrot.lane.b32.xlu0 %v2961, 28
      %v2977 = vpop.permute.xlu0 %2976
      %2978 = vrot.lane.b32.xlu0 %v2962, 28
      %v2979 = vpop.permute.xlu0 %2978
      %2980 = vrot.lane.b32.xlu0 %v2963, 28
      %v2981 = vpop.permute.xlu0 %2980
      %vm2982 = vcmask 228352
      %v2983 = vsel %vm2982, %v2971, %v2973
      %v2984 = vsel %vm2982, %v2973, %v2975
      %v2985 = vsel %vm2982, %v2977, %v2979
      %v2986 = vsel %vm2982, %v2979, %v2981
      %2991 = vst [vmem:[%s802 + $0x80] sm:$0xff] %v2983
      %2992 = vst [vmem:[%s802 + $0x88] sm:$0xff] %v2984
      %2993 = vst [vmem:[%s802 + $0x90] sm:$0xff] %v2985
      %2994 = vst [vmem:[%s802 + $0x98] sm:$0xff] %v2986
      %v2995 = vld [vmem:[#allocation2] sm:$0xff]
      %v2996 = vld [vmem:[#allocation2 + $0x8] sm:$0xff]
      %v2997 = vld [vmem:[#allocation2 + $0x10] sm:$0xff]
      %v2998 = vld [vmem:[#allocation2 + $0x20] sm:$0xff]
      %v2999 = vld [vmem:[#allocation2 + $0x28] sm:$0xff]
      %v3000 = vld [vmem:[#allocation2 + $0x30] sm:$0xff]
      %3001 = vrot.lane.b32.xlu0 %v2627, 116
      %v3002 = vpop.permute.xlu0 %3001
      %3003 = vrot.lane.b32.xlu0 %v2628, 116
      %v3004 = vpop.permute.xlu0 %3003
      %vm3005 = vcmask 949248
      %v3006 = vsel %vm3005, %v3002, %v3004
      %v3010 = vmul.f32 %v2995, %v3002
      %v3011 = vmul.f32 %v2996, %v3006
      %v3012 = vmul.f32 %v2997, %v3004
      %v3013 = vmul.f32 %v2998, %v3002
      %v3014 = vmul.f32 %v2999, %v3006
      %v3015 = vmul.f32 %v3000, %v3004
      %3022 = vrot.lane.b32.xlu0 %v3010, 12
      %v3023 = vpop.permute.xlu0 %3022
      %3024 = vrot.lane.b32.xlu0 %v3011, 12
      %v3025 = vpop.permute.xlu0 %3024
      %3026 = vrot.lane.b32.xlu0 %v3012, 12
      %v3027 = vpop.permute.xlu0 %3026
      %3028 = vrot.lane.b32.xlu0 %v3013, 12
      %v3029 = vpop.permute.xlu0 %3028
      %3030 = vrot.lane.b32.xlu0 %v3014, 12
      %v3031 = vpop.permute.xlu0 %3030
      %3032 = vrot.lane.b32.xlu0 %v3015, 12
      %v3033 = vpop.permute.xlu0 %3032
      %vm3034 = vcmask 97280
      %v3035 = vsel %vm3034, %v3023, %v3025
      %v3036 = vsel %vm3034, %v3025, %v3027
      %v3037 = vsel %vm3034, %v3029, %v3031
      %v3038 = vsel %vm3034, %v3031, %v3033
      %3043 = vst [vmem:[%s853 + $0x80] sm:$0xff] %v3035
      %3044 = vst [vmem:[%s853 + $0x88] sm:$0xff] %v3036
      %3045 = vst [vmem:[%s853 + $0x90] sm:$0xff] %v3037
      %3046 = vst [vmem:[%s853 + $0x98] sm:$0xff] %v3038
      %v3047 = vld [vmem:[#allocation2 + $0x8] sm:$0xff]
      %v3048 = vld [vmem:[#allocation2 + $0x10] sm:$0xff]
      %v3049 = vld [vmem:[#allocation2 + $0x18] sm:$0xff]
      %v3050 = vld [vmem:[#allocation2 + $0x28] sm:$0xff]
      %v3051 = vld [vmem:[#allocation2 + $0x30] sm:$0xff]
      %v3052 = vld [vmem:[#allocation2 + $0x38] sm:$0xff]
      %v3053 = vmul.f32 %v3047, %v2638
      %v3054 = vmul.f32 %v3048, %v2642
      %v3055 = vmul.f32 %v3049, %v2640
      %v3056 = vmul.f32 %v3050, %v2638
      %v3057 = vmul.f32 %v3051, %v2642
      %v3058 = vmul.f32 %v3052, %v2640
      %3065 = vrot.lane.b32.xlu0 %v3053, 124
      %v3066 = vpop.permute.xlu0 %3065
      %3067 = vrot.lane.b32.xlu0 %v3054, 124
      %v3068 = vpop.permute.xlu0 %3067
      %3069 = vrot.lane.b32.xlu0 %v3055, 124
      %v3070 = vpop.permute.xlu0 %3069
      %3071 = vrot.lane.b32.xlu0 %v3056, 124
      %v3072 = vpop.permute.xlu0 %3071
      %3073 = vrot.lane.b32.xlu0 %v3057, 124
      %v3074 = vpop.permute.xlu0 %3073
      %3075 = vrot.lane.b32.xlu0 %v3058, 124
      %v3076 = vpop.permute.xlu0 %3075
      %v3077 = vsel %vm2670, %v3066, %v3068
      %v3078 = vsel %vm2670, %v3068, %v3070
      %v3079 = vsel %vm2670, %v3072, %v3074
      %v3080 = vsel %vm2670, %v3074, %v3076
      %3085 = vst [vmem:[%s866 + $0x80] sm:$0xff] %v3077
      %3086 = vst [vmem:[%s866 + $0x88] sm:$0xff] %v3078
      %3087 = vst [vmem:[%s866 + $0x90] sm:$0xff] %v3079
      %3088 = vst [vmem:[%s866 + $0x98] sm:$0xff] %v3080
      %v3089 = vld [vmem:[#allocation2 + $0x8] sm:$0xff]
      %v3090 = vld [vmem:[#allocation2 + $0x10] sm:$0xff]
      %v3091 = vld [vmem:[#allocation2 + $0x18] sm:$0xff]
      %v3092 = vld [vmem:[#allocation2 + $0x28] sm:$0xff]
      %v3093 = vld [vmem:[#allocation2 + $0x30] sm:$0xff]
      %v3094 = vld [vmem:[#allocation2 + $0x38] sm:$0xff]
      %v3095 = vmul.f32 %v3089, %v2690
      %v3096 = vmul.f32 %v3090, %v2694
      %v3097 = vmul.f32 %v3091, %v2692
      %v3098 = vmul.f32 %v3092, %v2690
      %v3099 = vmul.f32 %v3093, %v2694
      %v3100 = vmul.f32 %v3094, %v2692
      %3107 = vrot.lane.b32.xlu0 %v3095, 108
      %v3108 = vpop.permute.xlu0 %3107
      %3109 = vrot.lane.b32.xlu0 %v3096, 108
      %v3110 = vpop.permute.xlu0 %3109
      %3111 = vrot.lane.b32.xlu0 %v3097, 108
      %v3112 = vpop.permute.xlu0 %3111
      %3113 = vrot.lane.b32.xlu0 %v3098, 108
      %v3114 = vpop.permute.xlu0 %3113
      %3115 = vrot.lane.b32.xlu0 %v3099, 108
      %v3116 = vpop.permute.xlu0 %3115
      %3117 = vrot.lane.b32.xlu0 %v3100, 108
      %v3118 = vpop.permute.xlu0 %3117
      %v3119 = vsel %vm2722, %v3108, %v3110
      %v3120 = vsel %vm2722, %v3110, %v3112
      %v3121 = vsel %vm2722, %v3114, %v3116
      %v3122 = vsel %vm2722, %v3116, %v3118
      %3127 = vst [vmem:[%s909 + $0x80] sm:$0xff] %v3119
      %3128 = vst [vmem:[%s909 + $0x88] sm:$0xff] %v3120
      %3129 = vst [vmem:[%s909 + $0x90] sm:$0xff] %v3121
      %3130 = vst [vmem:[%s909 + $0x98] sm:$0xff] %v3122
      %v3131 = vld [vmem:[#allocation2 + $0x8] sm:$0xff]
      %v3132 = vld [vmem:[#allocation2 + $0x10] sm:$0xff]
      %v3133 = vld [vmem:[#allocation2 + $0x18] sm:$0xff]
      %v3134 = vld [vmem:[#allocation2 + $0x28] sm:$0xff]
      %v3135 = vld [vmem:[#allocation2 + $0x30] sm:$0xff]
      %v3136 = vld [vmem:[#allocation2 + $0x38] sm:$0xff]
      %v3137 = vmul.f32 %v3131, %v2742
      %v3138 = vmul.f32 %v3132, %v2746
      %v3139 = vmul.f32 %v3133, %v2744
      %v3140 = vmul.f32 %v3134, %v2742
      %v3141 = vmul.f32 %v3135, %v2746
      %v3142 = vmul.f32 %v3136, %v2744
      %3149 = vrot.lane.b32.xlu0 %v3137, 92
      %v3150 = vpop.permute.xlu0 %3149
      %3151 = vrot.lane.b32.xlu0 %v3138, 92
      %v3152 = vpop.permute.xlu0 %3151
      %3153 = vrot.lane.b32.xlu0 %v3139, 92
      %v3154 = vpop.permute.xlu0 %3153
      %3155 = vrot.lane.b32.xlu0 %v3140, 92
      %v3156 = vpop.permute.xlu0 %3155
      %3157 = vrot.lane.b32.xlu0 %v3141, 92
      %v3158 = vpop.permute.xlu0 %3157
      %3159 = vrot.lane.b32.xlu0 %v3142, 92
      %v3160 = vpop.permute.xlu0 %3159
      %v3161 = vsel %vm2774, %v3150, %v3152
      %v3162 = vsel %vm2774, %v3152, %v3154
      %v3163 = vsel %vm2774, %v3156, %v3158
      %v3164 = vsel %vm2774, %v3158, %v3160
      %3169 = vst [vmem:[%s952 + $0x80] sm:$0xff] %v3161
      %3170 = vst [vmem:[%s952 + $0x88] sm:$0xff] %v3162
      %3171 = vst [vmem:[%s952 + $0x90] sm:$0xff] %v3163
      %3172 = vst [vmem:[%s952 + $0x98] sm:$0xff] %v3164
      %v3173 = vld [vmem:[#allocation2] sm:$0xff]
      %v3174 = vld [vmem:[#allocation2 + $0x8] sm:$0xff]
      %v3175 = vld [vmem:[#allocation2 + $0x10] sm:$0xff]
      %v3176 = vld [vmem:[#allocation2 + $0x20] sm:$0xff]
      %v3177 = vld [vmem:[#allocation2 + $0x28] sm:$0xff]
      %v3178 = vld [vmem:[#allocation2 + $0x30] sm:$0xff]
      %3185 = vrot.lane.b32.xlu0 %v3173, 123
      %v3186 = vpop.permute.xlu0 %3185
      %3187 = vrot.lane.b32.xlu0 %v3174, 123
      %v3188 = vpop.permute.xlu0 %3187
      %3189 = vrot.lane.b32.xlu0 %v3175, 123
      %v3190 = vpop.permute.xlu0 %3189
      %3191 = vrot.lane.b32.xlu0 %v3176, 123
      %v3192 = vpop.permute.xlu0 %3191
      %3193 = vrot.lane.b32.xlu0 %v3177, 123
      %v3194 = vpop.permute.xlu0 %3193
      %3195 = vrot.lane.b32.xlu0 %v3178, 123
      %v3196 = vpop.permute.xlu0 %3195
      %vm3197 = vcmask 1006592
      %v3198 = vsel %vm3197, %v3186, %v3188
      %v3199 = vsel %vm3197, %v3188, %v3190
      %v3200 = vsel %vm3197, %v3192, %v3194
      %v3201 = vsel %vm3197, %v3194, %v3196
      %3206 = vst [vmem:[#allocation3 + $0xa0] sm:$0xff] %v3198
      %3207 = vst [vmem:[#allocation3 + $0xa8] sm:$0xff] %v3199
      %3208 = vst [vmem:[#allocation3 + $0xb0] sm:$0xff] %v3200
      %3209 = vst [vmem:[#allocation3 + $0xb8] sm:$0xff] %v3201
      %v3210 = vld [vmem:[#allocation2] sm:$0xff]
      %v3211 = vld [vmem:[#allocation2 + $0x8] sm:$0xff]
      %v3212 = vld [vmem:[#allocation2 + $0x10] sm:$0xff]
      %v3213 = vld [vmem:[#allocation2 + $0x20] sm:$0xff]
      %v3214 = vld [vmem:[#allocation2 + $0x28] sm:$0xff]
      %v3215 = vld [vmem:[#allocation2 + $0x30] sm:$0xff]
      %3222 = vrot.lane.b32.xlu0 %v3210, 107
      %v3223 = vpop.permute.xlu0 %3222
      %3224 = vrot.lane.b32.xlu0 %v3211, 107
      %v3225 = vpop.permute.xlu0 %3224
      %3226 = vrot.lane.b32.xlu0 %v3212, 107
      %v3227 = vpop.permute.xlu0 %3226
      %3228 = vrot.lane.b32.xlu0 %v3213, 107
      %v3229 = vpop.permute.xlu0 %3228
      %3230 = vrot.lane.b32.xlu0 %v3214, 107
      %v3231 = vpop.permute.xlu0 %3230
      %3232 = vrot.lane.b32.xlu0 %v3215, 107
      %v3233 = vpop.permute.xlu0 %3232
      %vm3234 = vcmask 875520
      %v3235 = vsel %vm3234, %v3223, %v3225
      %v3236 = vsel %vm3234, %v3225, %v3227
      %v3237 = vsel %vm3234, %v3229, %v3231
      %v3238 = vsel %vm3234, %v3231, %v3233
      %3243 = vst [vmem:[%s542 + $0xa0] sm:$0xff] %v3235
      %3244 = vst [vmem:[%s542 + $0xa8] sm:$0xff] %v3236
      %3245 = vst [vmem:[%s542 + $0xb0] sm:$0xff] %v3237
      %3246 = vst [vmem:[%s542 + $0xb8] sm:$0xff] %v3238
      %v3247 = vld [vmem:[#allocation2] sm:$0xff]
      %v3248 = vld [vmem:[#allocation2 + $0x8] sm:$0xff]
      %v3249 = vld [vmem:[#allocation2 + $0x10] sm:$0xff]
      %v3250 = vld [vmem:[#allocation2 + $0x20] sm:$0xff]
      %v3251 = vld [vmem:[#allocation2 + $0x28] sm:$0xff]
      %v3252 = vld [vmem:[#allocation2 + $0x30] sm:$0xff]
      %3259 = vrot.lane.b32.xlu0 %v3247, 91
      %v3260 = vpop.permute.xlu0 %3259
      %3261 = vrot.lane.b32.xlu0 %v3248, 91
      %v3262 = vpop.permute.xlu0 %3261
      %3263 = vrot.lane.b32.xlu0 %v3249, 91
      %v3264 = vpop.permute.xlu0 %3263
      %3265 = vrot.lane.b32.xlu0 %v3250, 91
      %v3266 = vpop.permute.xlu0 %3265
      %3267 = vrot.lane.b32.xlu0 %v3251, 91
      %v3268 = vpop.permute.xlu0 %3267
      %3269 = vrot.lane.b32.xlu0 %v3252, 91
      %v3270 = vpop.permute.xlu0 %3269
      %vm3271 = vcmask 744448
      %v3272 = vsel %vm3271, %v3260, %v3262
      %v3273 = vsel %vm3271, %v3262, %v3264
      %v3274 = vsel %vm3271, %v3266, %v3268
      %v3275 = vsel %vm3271, %v3268, %v3270
      %3280 = vst [vmem:[%s595 + $0xa0] sm:$0xff] %v3272
      %3281 = vst [vmem:[%s595 + $0xa8] sm:$0xff] %v3273
      %3282 = vst [vmem:[%s595 + $0xb0] sm:$0xff] %v3274
      %3283 = vst [vmem:[%s595 + $0xb8] sm:$0xff] %v3275
      %v3284 = vld [vmem:[#allocation2] sm:$0xff]
      %v3285 = vld [vmem:[#allocation2 + $0x8] sm:$0xff]
      %v3286 = vld [vmem:[#allocation2 + $0x10] sm:$0xff]
      %v3287 = vld [vmem:[#allocation2 + $0x20] sm:$0xff]
      %v3288 = vld [vmem:[#allocation2 + $0x28] sm:$0xff]
      %v3289 = vld [vmem:[#allocation2 + $0x30] sm:$0xff]
      %3296 = vrot.lane.b32.xlu0 %v3284, 75
      %v3297 = vpop.permute.xlu0 %3296
      %3298 = vrot.lane.b32.xlu0 %v3285, 75
      %v3299 = vpop.permute.xlu0 %3298
      %3300 = vrot.lane.b32.xlu0 %v3286, 75
      %v3301 = vpop.permute.xlu0 %3300
      %3302 = vrot.lane.b32.xlu0 %v3287, 75
      %v3303 = vpop.permute.xlu0 %3302
      %3304 = vrot.lane.b32.xlu0 %v3288, 75
      %v3305 = vpop.permute.xlu0 %3304
      %3306 = vrot.lane.b32.xlu0 %v3289, 75
      %v3307 = vpop.permute.xlu0 %3306
      %vm3308 = vcmask 613376
      %v3309 = vsel %vm3308, %v3297, %v3299
      %v3310 = vsel %vm3308, %v3299, %v3301
      %v3311 = vsel %vm3308, %v3303, %v3305
      %v3312 = vsel %vm3308, %v3305, %v3307
      %3317 = vst [vmem:[%s648 + $0xa0] sm:$0xff] %v3309
      %3318 = vst [vmem:[%s648 + $0xa8] sm:$0xff] %v3310
      %3319 = vst [vmem:[%s648 + $0xb0] sm:$0xff] %v3311
      %3320 = vst [vmem:[%s648 + $0xb8] sm:$0xff] %v3312
      %v3321 = vld [vmem:[#allocation2] sm:$0xff]
      %v3322 = vld [vmem:[#allocation2 + $0x8] sm:$0xff]
      %v3323 = vld [vmem:[#allocation2 + $0x10] sm:$0xff]
      %v3324 = vld [vmem:[#allocation2 + $0x20] sm:$0xff]
      %v3325 = vld [vmem:[#allocation2 + $0x28] sm:$0xff]
      %v3326 = vld [vmem:[#allocation2 + $0x30] sm:$0xff]
      %3333 = vrot.lane.b32.xlu0 %v3321, 59
      %v3334 = vpop.permute.xlu0 %3333
      %3335 = vrot.lane.b32.xlu0 %v3322, 59
      %v3336 = vpop.permute.xlu0 %3335
      %3337 = vrot.lane.b32.xlu0 %v3323, 59
      %v3338 = vpop.permute.xlu0 %3337
      %3339 = vrot.lane.b32.xlu0 %v3324, 59
      %v3340 = vpop.permute.xlu0 %3339
      %3341 = vrot.lane.b32.xlu0 %v3325, 59
      %v3342 = vpop.permute.xlu0 %3341
      %3343 = vrot.lane.b32.xlu0 %v3326, 59
      %v3344 = vpop.permute.xlu0 %3343
      %vm3345 = vcmask 482304
      %v3346 = vsel %vm3345, %v3334, %v3336
      %v3347 = vsel %vm3345, %v3336, %v3338
      %v3348 = vsel %vm3345, %v3340, %v3342
      %v3349 = vsel %vm3345, %v3342, %v3344
      %3354 = vst [vmem:[%s700 + $0xa0] sm:$0xff] %v3346
      %3355 = vst [vmem:[%s700 + $0xa8] sm:$0xff] %v3347
      %3356 = vst [vmem:[%s700 + $0xb0] sm:$0xff] %v3348
      %3357 = vst [vmem:[%s700 + $0xb8] sm:$0xff] %v3349
      %v3358 = vld [vmem:[#allocation2] sm:$0xff]
      %v3359 = vld [vmem:[#allocation2 + $0x8] sm:$0xff]
      %v3360 = vld [vmem:[#allocation2 + $0x10] sm:$0xff]
      %v3361 = vld [vmem:[#allocation2 + $0x20] sm:$0xff]
      %v3362 = vld [vmem:[#allocation2 + $0x28] sm:$0xff]
      %v3363 = vld [vmem:[#allocation2 + $0x30] sm:$0xff]
      %3370 = vrot.lane.b32.xlu0 %v3358, 43
      %v3371 = vpop.permute.xlu0 %3370
      %3372 = vrot.lane.b32.xlu0 %v3359, 43
      %v3373 = vpop.permute.xlu0 %3372
      %3374 = vrot.lane.b32.xlu0 %v3360, 43
      %v3375 = vpop.permute.xlu0 %3374
      %3376 = vrot.lane.b32.xlu0 %v3361, 43
      %v3377 = vpop.permute.xlu0 %3376
      %3378 = vrot.lane.b32.xlu0 %v3362, 43
      %v3379 = vpop.permute.xlu0 %3378
      %3380 = vrot.lane.b32.xlu0 %v3363, 43
      %v3381 = vpop.permute.xlu0 %3380
      %vm3382 = vcmask 351232
      %v3383 = vsel %vm3382, %v3371, %v3373
      %v3384 = vsel %vm3382, %v3373, %v3375
      %v3385 = vsel %vm3382, %v3377, %v3379
      %v3386 = vsel %vm3382, %v3379, %v3381
      %3391 = vst [vmem:[%s751 + $0xa0] sm:$0xff] %v3383
      %3392 = vst [vmem:[%s751 + $0xa8] sm:$0xff] %v3384
      %3393 = vst [vmem:[%s751 + $0xb0] sm:$0xff] %v3385
      %3394 = vst [vmem:[%s751 + $0xb8] sm:$0xff] %v3386
      %v3395 = vld [vmem:[#allocation2] sm:$0xff]
      %v3396 = vld [vmem:[#allocation2 + $0x8] sm:$0xff]
      %v3397 = vld [vmem:[#allocation2 + $0x10] sm:$0xff]
      %v3398 = vld [vmem:[#allocation2 + $0x20] sm:$0xff]
      %v3399 = vld [vmem:[#allocation2 + $0x28] sm:$0xff]
      %v3400 = vld [vmem:[#allocation2 + $0x30] sm:$0xff]
      %3407 = vrot.lane.b32.xlu0 %v3395, 27
      %v3408 = vpop.permute.xlu0 %3407
      %3409 = vrot.lane.b32.xlu0 %v3396, 27
      %v3410 = vpop.permute.xlu0 %3409
      %3411 = vrot.lane.b32.xlu0 %v3397, 27
      %v3412 = vpop.permute.xlu0 %3411
      %3413 = vrot.lane.b32.xlu0 %v3398, 27
      %v3414 = vpop.permute.xlu0 %3413
      %3415 = vrot.lane.b32.xlu0 %v3399, 27
      %v3416 = vpop.permute.xlu0 %3415
      %3417 = vrot.lane.b32.xlu0 %v3400, 27
      %v3418 = vpop.permute.xlu0 %3417
      %vm3419 = vcmask 220160
      %v3420 = vsel %vm3419, %v3408, %v3410
      %v3421 = vsel %vm3419, %v3410, %v3412
      %v3422 = vsel %vm3419, %v3414, %v3416
      %v3423 = vsel %vm3419, %v3416, %v3418
      %3428 = vst [vmem:[%s802 + $0xa0] sm:$0xff] %v3420
      %3429 = vst [vmem:[%s802 + $0xa8] sm:$0xff] %v3421
      %3430 = vst [vmem:[%s802 + $0xb0] sm:$0xff] %v3422
      %3431 = vst [vmem:[%s802 + $0xb8] sm:$0xff] %v3423
      %v3432 = vld [vmem:[#allocation2] sm:$0xff]
      %v3433 = vld [vmem:[#allocation2 + $0x8] sm:$0xff]
      %v3434 = vld [vmem:[#allocation2 + $0x10] sm:$0xff]
      %v3435 = vld [vmem:[#allocation2 + $0x20] sm:$0xff]
      %v3436 = vld [vmem:[#allocation2 + $0x28] sm:$0xff]
      %v3437 = vld [vmem:[#allocation2 + $0x30] sm:$0xff]
      %3444 = vrot.lane.b32.xlu0 %v3432, 11
      %v3445 = vpop.permute.xlu0 %3444
      %3446 = vrot.lane.b32.xlu0 %v3433, 11
      %v3447 = vpop.permute.xlu0 %3446
      %3448 = vrot.lane.b32.xlu0 %v3434, 11
      %v3449 = vpop.permute.xlu0 %3448
      %3450 = vrot.lane.b32.xlu0 %v3435, 11
      %v3451 = vpop.permute.xlu0 %3450
      %3452 = vrot.lane.b32.xlu0 %v3436, 11
      %v3453 = vpop.permute.xlu0 %3452
      %3454 = vrot.lane.b32.xlu0 %v3437, 11
      %v3455 = vpop.permute.xlu0 %3454
      %vm3456 = vcmask 89088
      %v3457 = vsel %vm3456, %v3445, %v3447
      %v3458 = vsel %vm3456, %v3447, %v3449
      %v3459 = vsel %vm3456, %v3451, %v3453
      %v3460 = vsel %vm3456, %v3453, %v3455
      %3465 = vst [vmem:[%s853 + $0xa0] sm:$0xff] %v3457
      %3466 = vst [vmem:[%s853 + $0xa8] sm:$0xff] %v3458
      %3467 = vst [vmem:[%s853 + $0xb0] sm:$0xff] %v3459
      %3468 = vst [vmem:[%s853 + $0xb8] sm:$0xff] %v3460
      %v3469 = vld [vmem:[#allocation2 + $0x8] sm:$0xff]
      %v3470 = vld [vmem:[#allocation2 + $0x10] sm:$0xff]
      %v3471 = vld [vmem:[#allocation2 + $0x18] sm:$0xff]
      %v3472 = vld [vmem:[#allocation2 + $0x28] sm:$0xff]
      %v3473 = vld [vmem:[#allocation2 + $0x30] sm:$0xff]
      %v3474 = vld [vmem:[#allocation2 + $0x38] sm:$0xff]
      %3481 = vrot.lane.b32.xlu0 %v3469, 123
      %v3482 = vpop.permute.xlu0 %3481
      %3483 = vrot.lane.b32.xlu0 %v3470, 123
      %v3484 = vpop.permute.xlu0 %3483
      %3485 = vrot.lane.b32.xlu0 %v3471, 123
      %v3486 = vpop.permute.xlu0 %3485
      %3487 = vrot.lane.b32.xlu0 %v3472, 123
      %v3488 = vpop.permute.xlu0 %3487
      %3489 = vrot.lane.b32.xlu0 %v3473, 123
      %v3490 = vpop.permute.xlu0 %3489
      %3491 = vrot.lane.b32.xlu0 %v3474, 123
      %v3492 = vpop.permute.xlu0 %3491
      %v3493 = vsel %vm3197, %v3482, %v3484
      %v3494 = vsel %vm3197, %v3484, %v3486
      %v3495 = vsel %vm3197, %v3488, %v3490
      %v3496 = vsel %vm3197, %v3490, %v3492
      %3501 = vst [vmem:[%s866 + $0xa0] sm:$0xff] %v3493
      %3502 = vst [vmem:[%s866 + $0xa8] sm:$0xff] %v3494
      %3503 = vst [vmem:[%s866 + $0xb0] sm:$0xff] %v3495
      %3504 = vst [vmem:[%s866 + $0xb8] sm:$0xff] %v3496
      %v3505 = vld [vmem:[#allocation2 + $0x8] sm:$0xff]
      %v3506 = vld [vmem:[#allocation2 + $0x10] sm:$0xff]
      %v3507 = vld [vmem:[#allocation2 + $0x18] sm:$0xff]
      %v3508 = vld [vmem:[#allocation2 + $0x28] sm:$0xff]
      %v3509 = vld [vmem:[#allocation2 + $0x30] sm:$0xff]
      %v3510 = vld [vmem:[#allocation2 + $0x38] sm:$0xff]
      %3517 = vrot.lane.b32.xlu0 %v3505, 107
      %v3518 = vpop.permute.xlu0 %3517
      %3519 = vrot.lane.b32.xlu0 %v3506, 107
      %v3520 = vpop.permute.xlu0 %3519
      %3521 = vrot.lane.b32.xlu0 %v3507, 107
      %v3522 = vpop.permute.xlu0 %3521
      %3523 = vrot.lane.b32.xlu0 %v3508, 107
      %v3524 = vpop.permute.xlu0 %3523
      %3525 = vrot.lane.b32.xlu0 %v3509, 107
      %v3526 = vpop.permute.xlu0 %3525
      %3527 = vrot.lane.b32.xlu0 %v3510, 107
      %v3528 = vpop.permute.xlu0 %3527
      %v3529 = vsel %vm3234, %v3518, %v3520
      %v3530 = vsel %vm3234, %v3520, %v3522
      %v3531 = vsel %vm3234, %v3524, %v3526
      %v3532 = vsel %vm3234, %v3526, %v3528
      %3537 = vst [vmem:[%s909 + $0xa0] sm:$0xff] %v3529
      %3538 = vst [vmem:[%s909 + $0xa8] sm:$0xff] %v3530
      %3539 = vst [vmem:[%s909 + $0xb0] sm:$0xff] %v3531
      %3540 = vst [vmem:[%s909 + $0xb8] sm:$0xff] %v3532
      %v3541 = vld [vmem:[#allocation2 + $0x8] sm:$0xff]
      %v3542 = vld [vmem:[#allocation2 + $0x10] sm:$0xff]
      %v3543 = vld [vmem:[#allocation2 + $0x18] sm:$0xff]
      %v3544 = vld [vmem:[#allocation2 + $0x28] sm:$0xff]
      %v3545 = vld [vmem:[#allocation2 + $0x30] sm:$0xff]
      %v3546 = vld [vmem:[#allocation2 + $0x38] sm:$0xff]
      %3553 = vrot.lane.b32.xlu0 %v3541, 91
      %v3554 = vpop.permute.xlu0 %3553
      %3555 = vrot.lane.b32.xlu0 %v3542, 91
      %v3556 = vpop.permute.xlu0 %3555
      %3557 = vrot.lane.b32.xlu0 %v3543, 91
      %v3558 = vpop.permute.xlu0 %3557
      %3559 = vrot.lane.b32.xlu0 %v3544, 91
      %v3560 = vpop.permute.xlu0 %3559
      %3561 = vrot.lane.b32.xlu0 %v3545, 91
      %v3562 = vpop.permute.xlu0 %3561
      %3563 = vrot.lane.b32.xlu0 %v3546, 91
      %v3564 = vpop.permute.xlu0 %3563
      %v3565 = vsel %vm3271, %v3554, %v3556
      %v3566 = vsel %vm3271, %v3556, %v3558
      %v3567 = vsel %vm3271, %v3560, %v3562
      %v3568 = vsel %vm3271, %v3562, %v3564
      %3573 = vst [vmem:[%s952 + $0xa0] sm:$0xff] %v3565
      %3574 = vst [vmem:[%s952 + $0xa8] sm:$0xff] %v3566
      %3575 = vst [vmem:[%s952 + $0xb0] sm:$0xff] %v3567
      %3576 = vst [vmem:[%s952 + $0xb8] sm:$0xff] %v3568
      %vm3577 = vcmp.ge.s32.totalorder %v468, 4294967295
      %vm3578 = vcmp.ge.s32.totalorder %v469, 4294967295
      %vm3579 = vcmp.lt.s32.totalorder %v468, 15
      %vm3580 = vcmp.lt.s32.totalorder %v469, 15
      %vm3581 = vmand %vm3577, %vm3579
      %vm3582 = vmand %vm3578, %vm3580
      %v3583 = vsel %vm3581, 1, 0
      %v3584 = vsel %vm3582, 1, 0
      %v3585 = vcvt.s32.f32 %v3583
      %v3586 = vcvt.s32.f32 %v3584
      %v3587 = vld [vmem:[#allocation2] sm:$0xff]
      %v3588 = vld [vmem:[#allocation2 + $0x8] sm:$0xff]
      %v3589 = vld [vmem:[#allocation2 + $0x10] sm:$0xff]
      %v3590 = vld [vmem:[#allocation2 + $0x20] sm:$0xff]
      %v3591 = vld [vmem:[#allocation2 + $0x28] sm:$0xff]
      %v3592 = vld [vmem:[#allocation2 + $0x30] sm:$0xff]
      %3595 = vrot.lane.b32.xlu0 %v3585, 6
      %v3596 = vpop.permute.xlu0 %3595
      %3597 = vrot.lane.b32.xlu0 %v3586, 6
      %v3598 = vpop.permute.xlu0 %3597
      %vm3599 = vcmask 48128
      %v3600 = vsel %vm3599, %v3596, %v3598
      %v3604 = vmul.f32 %v3587, %v3596
      %v3605 = vmul.f32 %v3588, %v3600
      %v3606 = vmul.f32 %v3589, %v3598
      %v3607 = vmul.f32 %v3590, %v3596
      %v3608 = vmul.f32 %v3591, %v3600
      %v3609 = vmul.f32 %v3592, %v3598
      %3616 = vrot.lane.b32.xlu0 %v3604, 122
      %v3617 = vpop.permute.xlu0 %3616
      %3618 = vrot.lane.b32.xlu0 %v3605, 122
      %v3619 = vpop.permute.xlu0 %3618
      %3620 = vrot.lane.b32.xlu0 %v3606, 122
      %v3621 = vpop.permute.xlu0 %3620
      %3622 = vrot.lane.b32.xlu0 %v3607, 122
      %v3623 = vpop.permute.xlu0 %3622
      %3624 = vrot.lane.b32.xlu0 %v3608, 122
      %v3625 = vpop.permute.xlu0 %3624
      %3626 = vrot.lane.b32.xlu0 %v3609, 122
      %v3627 = vpop.permute.xlu0 %3626
      %vm3628 = vcmask 998400
      %v3629 = vsel %vm3628, %v3617, %v3619
      %v3630 = vsel %vm3628, %v3619, %v3621
      %v3631 = vsel %vm3628, %v3623, %v3625
      %v3632 = vsel %vm3628, %v3625, %v3627
      %3637 = vst [vmem:[#allocation3 + $0xc0] sm:$0xff] %v3629
      %3638 = vst [vmem:[#allocation3 + $0xc8] sm:$0xff] %v3630
      %3639 = vst [vmem:[#allocation3 + $0xd0] sm:$0xff] %v3631
      %3640 = vst [vmem:[#allocation3 + $0xd8] sm:$0xff] %v3632
      %v3641 = vld [vmem:[#allocation2] sm:$0xff]
      %v3642 = vld [vmem:[#allocation2 + $0x8] sm:$0xff]
      %v3643 = vld [vmem:[#allocation2 + $0x10] sm:$0xff]
      %v3644 = vld [vmem:[#allocation2 + $0x20] sm:$0xff]
      %v3645 = vld [vmem:[#allocation2 + $0x28] sm:$0xff]
      %v3646 = vld [vmem:[#allocation2 + $0x30] sm:$0xff]
      %3647 = vrot.lane.b32.xlu0 %v3585, 22
      %v3648 = vpop.permute.xlu0 %3647
      %3649 = vrot.lane.b32.xlu0 %v3586, 22
      %v3650 = vpop.permute.xlu0 %3649
      %vm3651 = vcmask 179200
      %v3652 = vsel %vm3651, %v3648, %v3650
      %v3656 = vmul.f32 %v3641, %v3648
      %v3657 = vmul.f32 %v3642, %v3652
      %v3658 = vmul.f32 %v3643, %v3650
      %v3659 = vmul.f32 %v3644, %v3648
      %v3660 = vmul.f32 %v3645, %v3652
      %v3661 = vmul.f32 %v3646, %v3650
      %3668 = vrot.lane.b32.xlu0 %v3656, 106
      %v3669 = vpop.permute.xlu0 %3668
      %3670 = vrot.lane.b32.xlu0 %v3657, 106
      %v3671 = vpop.permute.xlu0 %3670
      %3672 = vrot.lane.b32.xlu0 %v3658, 106
      %v3673 = vpop.permute.xlu0 %3672
      %3674 = vrot.lane.b32.xlu0 %v3659, 106
      %v3675 = vpop.permute.xlu0 %3674
      %3676 = vrot.lane.b32.xlu0 %v3660, 106
      %v3677 = vpop.permute.xlu0 %3676
      %3678 = vrot.lane.b32.xlu0 %v3661, 106
      %v3679 = vpop.permute.xlu0 %3678
      %vm3680 = vcmask 867328
      %v3681 = vsel %vm3680, %v3669, %v3671
      %v3682 = vsel %vm3680, %v3671, %v3673
      %v3683 = vsel %vm3680, %v3675, %v3677
      %v3684 = vsel %vm3680, %v3677, %v3679
      %3689 = vst [vmem:[%s542 + $0xc0] sm:$0xff] %v3681
      %3690 = vst [vmem:[%s542 + $0xc8] sm:$0xff] %v3682
      %3691 = vst [vmem:[%s542 + $0xd0] sm:$0xff] %v3683
      %3692 = vst [vmem:[%s542 + $0xd8] sm:$0xff] %v3684
      %v3693 = vld [vmem:[#allocation2] sm:$0xff]
      %v3694 = vld [vmem:[#allocation2 + $0x8] sm:$0xff]
      %v3695 = vld [vmem:[#allocation2 + $0x10] sm:$0xff]
      %v3696 = vld [vmem:[#allocation2 + $0x20] sm:$0xff]
      %v3697 = vld [vmem:[#allocation2 + $0x28] sm:$0xff]
      %v3698 = vld [vmem:[#allocation2 + $0x30] sm:$0xff]
      %3699 = vrot.lane.b32.xlu0 %v3585, 38
      %v3700 = vpop.permute.xlu0 %3699
      %3701 = vrot.lane.b32.xlu0 %v3586, 38
      %v3702 = vpop.permute.xlu0 %3701
      %vm3703 = vcmask 310272
      %v3704 = vsel %vm3703, %v3700, %v3702
      %v3708 = vmul.f32 %v3693, %v3700
      %v3709 = vmul.f32 %v3694, %v3704
      %v3710 = vmul.f32 %v3695, %v3702
      %v3711 = vmul.f32 %v3696, %v3700
      %v3712 = vmul.f32 %v3697, %v3704
      %v3713 = vmul.f32 %v3698, %v3702
      %3720 = vrot.lane.b32.xlu0 %v3708, 90
      %v3721 = vpop.permute.xlu0 %3720
      %3722 = vrot.lane.b32.xlu0 %v3709, 90
      %v3723 = vpop.permute.xlu0 %3722
      %3724 = vrot.lane.b32.xlu0 %v3710, 90
      %v3725 = vpop.permute.xlu0 %3724
      %3726 = vrot.lane.b32.xlu0 %v3711, 90
      %v3727 = vpop.permute.xlu0 %3726
      %3728 = vrot.lane.b32.xlu0 %v3712, 90
      %v3729 = vpop.permute.xlu0 %3728
      %3730 = vrot.lane.b32.xlu0 %v3713, 90
      %v3731 = vpop.permute.xlu0 %3730
      %vm3732 = vcmask 736256
      %v3733 = vsel %vm3732, %v3721, %v3723
      %v3734 = vsel %vm3732, %v3723, %v3725
      %v3735 = vsel %vm3732, %v3727, %v3729
      %v3736 = vsel %vm3732, %v3729, %v3731
      %3741 = vst [vmem:[%s595 + $0xc0] sm:$0xff] %v3733
      %3742 = vst [vmem:[%s595 + $0xc8] sm:$0xff] %v3734
      %3743 = vst [vmem:[%s595 + $0xd0] sm:$0xff] %v3735
      %3744 = vst [vmem:[%s595 + $0xd8] sm:$0xff] %v3736
      %v3745 = vld [vmem:[#allocation2] sm:$0xff]
      %v3746 = vld [vmem:[#allocation2 + $0x8] sm:$0xff]
      %v3747 = vld [vmem:[#allocation2 + $0x10] sm:$0xff]
      %v3748 = vld [vmem:[#allocation2 + $0x20] sm:$0xff]
      %v3749 = vld [vmem:[#allocation2 + $0x28] sm:$0xff]
      %v3750 = vld [vmem:[#allocation2 + $0x30] sm:$0xff]
      %3751 = vrot.lane.b32.xlu0 %v3585, 54
      %v3752 = vpop.permute.xlu0 %3751
      %3753 = vrot.lane.b32.xlu0 %v3586, 54
      %v3754 = vpop.permute.xlu0 %3753
      %vm3755 = vcmask 441344
      %v3756 = vsel %vm3755, %v3752, %v3754
      %v3760 = vmul.f32 %v3745, %v3752
      %v3761 = vmul.f32 %v3746, %v3756
      %v3762 = vmul.f32 %v3747, %v3754
      %v3763 = vmul.f32 %v3748, %v3752
      %v3764 = vmul.f32 %v3749, %v3756
      %v3765 = vmul.f32 %v3750, %v3754
      %3772 = vrot.lane.b32.xlu0 %v3760, 74
      %v3773 = vpop.permute.xlu0 %3772
      %3774 = vrot.lane.b32.xlu0 %v3761, 74
      %v3775 = vpop.permute.xlu0 %3774
      %3776 = vrot.lane.b32.xlu0 %v3762, 74
      %v3777 = vpop.permute.xlu0 %3776
      %3778 = vrot.lane.b32.xlu0 %v3763, 74
      %v3779 = vpop.permute.xlu0 %3778
      %3780 = vrot.lane.b32.xlu0 %v3764, 74
      %v3781 = vpop.permute.xlu0 %3780
      %3782 = vrot.lane.b32.xlu0 %v3765, 74
      %v3783 = vpop.permute.xlu0 %3782
      %vm3784 = vcmask 605184
      %v3785 = vsel %vm3784, %v3773, %v3775
      %v3786 = vsel %vm3784, %v3775, %v3777
      %v3787 = vsel %vm3784, %v3779, %v3781
      %v3788 = vsel %vm3784, %v3781, %v3783
      %3793 = vst [vmem:[%s648 + $0xc0] sm:$0xff] %v3785
      %3794 = vst [vmem:[%s648 + $0xc8] sm:$0xff] %v3786
      %3795 = vst [vmem:[%s648 + $0xd0] sm:$0xff] %v3787
      %3796 = vst [vmem:[%s648 + $0xd8] sm:$0xff] %v3788
      %v3797 = vld [vmem:[#allocation2] sm:$0xff]
      %v3798 = vld [vmem:[#allocation2 + $0x8] sm:$0xff]
      %v3799 = vld [vmem:[#allocation2 + $0x10] sm:$0xff]
      %v3800 = vld [vmem:[#allocation2 + $0x20] sm:$0xff]
      %v3801 = vld [vmem:[#allocation2 + $0x28] sm:$0xff]
      %v3802 = vld [vmem:[#allocation2 + $0x30] sm:$0xff]
      %3803 = vrot.lane.b32.xlu0 %v3585, 70
      %v3804 = vpop.permute.xlu0 %3803
      %3805 = vrot.lane.b32.xlu0 %v3586, 70
      %v3806 = vpop.permute.xlu0 %3805
      %vm3807 = vcmask 572416
      %v3808 = vsel %vm3807, %v3804, %v3806
      %v3812 = vmul.f32 %v3797, %v3804
      %v3813 = vmul.f32 %v3798, %v3808
      %v3814 = vmul.f32 %v3799, %v3806
      %v3815 = vmul.f32 %v3800, %v3804
      %v3816 = vmul.f32 %v3801, %v3808
      %v3817 = vmul.f32 %v3802, %v3806
      %3824 = vrot.lane.b32.xlu0 %v3812, 58
      %v3825 = vpop.permute.xlu0 %3824
      %3826 = vrot.lane.b32.xlu0 %v3813, 58
      %v3827 = vpop.permute.xlu0 %3826
      %3828 = vrot.lane.b32.xlu0 %v3814, 58
      %v3829 = vpop.permute.xlu0 %3828
      %3830 = vrot.lane.b32.xlu0 %v3815, 58
      %v3831 = vpop.permute.xlu0 %3830
      %3832 = vrot.lane.b32.xlu0 %v3816, 58
      %v3833 = vpop.permute.xlu0 %3832
      %3834 = vrot.lane.b32.xlu0 %v3817, 58
      %v3835 = vpop.permute.xlu0 %3834
      %vm3836 = vcmask 474112
      %v3837 = vsel %vm3836, %v3825, %v3827
      %v3838 = vsel %vm3836, %v3827, %v3829
      %v3839 = vsel %vm3836, %v3831, %v3833
      %v3840 = vsel %vm3836, %v3833, %v3835
      %3845 = vst [vmem:[%s700 + $0xc0] sm:$0xff] %v3837
      %3846 = vst [vmem:[%s700 + $0xc8] sm:$0xff] %v3838
      %3847 = vst [vmem:[%s700 + $0xd0] sm:$0xff] %v3839
      %3848 = vst [vmem:[%s700 + $0xd8] sm:$0xff] %v3840
      %v3849 = vld [vmem:[#allocation2] sm:$0xff]
      %v3850 = vld [vmem:[#allocation2 + $0x8] sm:$0xff]
      %v3851 = vld [vmem:[#allocation2 + $0x10] sm:$0xff]
      %v3852 = vld [vmem:[#allocation2 + $0x20] sm:$0xff]
      %v3853 = vld [vmem:[#allocation2 + $0x28] sm:$0xff]
      %v3854 = vld [vmem:[#allocation2 + $0x30] sm:$0xff]
      %3855 = vrot.lane.b32.xlu0 %v3585, 86
      %v3856 = vpop.permute.xlu0 %3855
      %3857 = vrot.lane.b32.xlu0 %v3586, 86
      %v3858 = vpop.permute.xlu0 %3857
      %vm3859 = vcmask 703488
      %v3860 = vsel %vm3859, %v3856, %v3858
      %v3864 = vmul.f32 %v3849, %v3856
      %v3865 = vmul.f32 %v3850, %v3860
      %v3866 = vmul.f32 %v3851, %v3858
      %v3867 = vmul.f32 %v3852, %v3856
      %v3868 = vmul.f32 %v3853, %v3860
      %v3869 = vmul.f32 %v3854, %v3858
      %3876 = vrot.lane.b32.xlu0 %v3864, 42
      %v3877 = vpop.permute.xlu0 %3876
      %3878 = vrot.lane.b32.xlu0 %v3865, 42
      %v3879 = vpop.permute.xlu0 %3878
      %3880 = vrot.lane.b32.xlu0 %v3866, 42
      %v3881 = vpop.permute.xlu0 %3880
      %3882 = vrot.lane.b32.xlu0 %v3867, 42
      %v3883 = vpop.permute.xlu0 %3882
      %3884 = vrot.lane.b32.xlu0 %v3868, 42
      %v3885 = vpop.permute.xlu0 %3884
      %3886 = vrot.lane.b32.xlu0 %v3869, 42
      %v3887 = vpop.permute.xlu0 %3886
      %v3888 = vsel %vm409, %v3877, %v3879
      %v3889 = vsel %vm409, %v3879, %v3881
      %v3890 = vsel %vm409, %v3883, %v3885
      %v3891 = vsel %vm409, %v3885, %v3887
      %3896 = vst [vmem:[%s751 + $0xc0] sm:$0xff] %v3888
      %3897 = vst [vmem:[%s751 + $0xc8] sm:$0xff] %v3889
      %3898 = vst [vmem:[%s751 + $0xd0] sm:$0xff] %v3890
      %3899 = vst [vmem:[%s751 + $0xd8] sm:$0xff] %v3891
      %v3900 = vld [vmem:[#allocation2] sm:$0xff]
      %v3901 = vld [vmem:[#allocation2 + $0x8] sm:$0xff]
      %v3902 = vld [vmem:[#allocation2 + $0x10] sm:$0xff]
      %v3903 = vld [vmem:[#allocation2 + $0x20] sm:$0xff]
      %v3904 = vld [vmem:[#allocation2 + $0x28] sm:$0xff]
      %v3905 = vld [vmem:[#allocation2 + $0x30] sm:$0xff]
      %3906 = vrot.lane.b32.xlu0 %v3585, 102
      %v3907 = vpop.permute.xlu0 %3906
      %3908 = vrot.lane.b32.xlu0 %v3586, 102
      %v3909 = vpop.permute.xlu0 %3908
      %vm3910 = vcmask 834560
      %v3911 = vsel %vm3910, %v3907, %v3909
      %v3915 = vmul.f32 %v3900, %v3907
      %v3916 = vmul.f32 %v3901, %v3911
      %v3917 = vmul.f32 %v3902, %v3909
      %v3918 = vmul.f32 %v3903, %v3907
      %v3919 = vmul.f32 %v3904, %v3911
      %v3920 = vmul.f32 %v3905, %v3909
      %3927 = vrot.lane.b32.xlu0 %v3915, 26
      %v3928 = vpop.permute.xlu0 %3927
      %3929 = vrot.lane.b32.xlu0 %v3916, 26
      %v3930 = vpop.permute.xlu0 %3929
      %3931 = vrot.lane.b32.xlu0 %v3917, 26
      %v3932 = vpop.permute.xlu0 %3931
      %3933 = vrot.lane.b32.xlu0 %v3918, 26
      %v3934 = vpop.permute.xlu0 %3933
      %3935 = vrot.lane.b32.xlu0 %v3919, 26
      %v3936 = vpop.permute.xlu0 %3935
      %3937 = vrot.lane.b32.xlu0 %v3920, 26
      %v3938 = vpop.permute.xlu0 %3937
      %vm3939 = vcmask 211968
      %v3940 = vsel %vm3939, %v3928, %v3930
      %v3941 = vsel %vm3939, %v3930, %v3932
      %v3942 = vsel %vm3939, %v3934, %v3936
      %v3943 = vsel %vm3939, %v3936, %v3938
      %3948 = vst [vmem:[%s802 + $0xc0] sm:$0xff] %v3940
      %3949 = vst [vmem:[%s802 + $0xc8] sm:$0xff] %v3941
      %3950 = vst [vmem:[%s802 + $0xd0] sm:$0xff] %v3942
      %3951 = vst [vmem:[%s802 + $0xd8] sm:$0xff] %v3943
      %v3952 = vld [vmem:[#allocation2] sm:$0xff]
      %v3953 = vld [vmem:[#allocation2 + $0x8] sm:$0xff]
      %v3954 = vld [vmem:[#allocation2 + $0x10] sm:$0xff]
      %v3955 = vld [vmem:[#allocation2 + $0x20] sm:$0xff]
      %v3956 = vld [vmem:[#allocation2 + $0x28] sm:$0xff]
      %v3957 = vld [vmem:[#allocation2 + $0x30] sm:$0xff]
      %3958 = vrot.lane.b32.xlu0 %v3585, 118
      %v3959 = vpop.permute.xlu0 %3958
      %3960 = vrot.lane.b32.xlu0 %v3586, 118
      %v3961 = vpop.permute.xlu0 %3960
      %vm3962 = vcmask 965632
      %v3963 = vsel %vm3962, %v3959, %v3961
      %v3967 = vmul.f32 %v3952, %v3959
      %v3968 = vmul.f32 %v3953, %v3963
      %v3969 = vmul.f32 %v3954, %v3961
      %v3970 = vmul.f32 %v3955, %v3959
      %v3971 = vmul.f32 %v3956, %v3963
      %v3972 = vmul.f32 %v3957, %v3961
      %3979 = vrot.lane.b32.xlu0 %v3967, 10
      %v3980 = vpop.permute.xlu0 %3979
      %3981 = vrot.lane.b32.xlu0 %v3968, 10
      %v3982 = vpop.permute.xlu0 %3981
      %3983 = vrot.lane.b32.xlu0 %v3969, 10
      %v3984 = vpop.permute.xlu0 %3983
      %3985 = vrot.lane.b32.xlu0 %v3970, 10
      %v3986 = vpop.permute.xlu0 %3985
      %3987 = vrot.lane.b32.xlu0 %v3971, 10
      %v3988 = vpop.permute.xlu0 %3987
      %3989 = vrot.lane.b32.xlu0 %v3972, 10
      %v3990 = vpop.permute.xlu0 %3989
      %vm3991 = vcmask 80896
      %v3992 = vsel %vm3991, %v3980, %v3982
      %v3993 = vsel %vm3991, %v3982, %v3984
      %v3994 = vsel %vm3991, %v3986, %v3988
      %v3995 = vsel %vm3991, %v3988, %v3990
      %4000 = vst [vmem:[%s853 + $0xc0] sm:$0xff] %v3992
      %4001 = vst [vmem:[%s853 + $0xc8] sm:$0xff] %v3993
      %4002 = vst [vmem:[%s853 + $0xd0] sm:$0xff] %v3994
      %4003 = vst [vmem:[%s853 + $0xd8] sm:$0xff] %v3995
      %v4004 = vld [vmem:[#allocation2 + $0x8] sm:$0xff]
      %v4005 = vld [vmem:[#allocation2 + $0x10] sm:$0xff]
      %v4006 = vld [vmem:[#allocation2 + $0x18] sm:$0xff]
      %v4007 = vld [vmem:[#allocation2 + $0x28] sm:$0xff]
      %v4008 = vld [vmem:[#allocation2 + $0x30] sm:$0xff]
      %v4009 = vld [vmem:[#allocation2 + $0x38] sm:$0xff]
      %v4010 = vmul.f32 %v4004, %v3596
      %v4011 = vmul.f32 %v4005, %v3600
      %v4012 = vmul.f32 %v4006, %v3598
      %v4013 = vmul.f32 %v4007, %v3596
      %v4014 = vmul.f32 %v4008, %v3600
      %v4015 = vmul.f32 %v4009, %v3598
      %4022 = vrot.lane.b32.xlu0 %v4010, 122
      %v4023 = vpop.permute.xlu0 %4022
      %4024 = vrot.lane.b32.xlu0 %v4011, 122
      %v4025 = vpop.permute.xlu0 %4024
      %4026 = vrot.lane.b32.xlu0 %v4012, 122
      %v4027 = vpop.permute.xlu0 %4026
      %4028 = vrot.lane.b32.xlu0 %v4013, 122
      %v4029 = vpop.permute.xlu0 %4028
      %4030 = vrot.lane.b32.xlu0 %v4014, 122
      %v4031 = vpop.permute.xlu0 %4030
      %4032 = vrot.lane.b32.xlu0 %v4015, 122
      %v4033 = vpop.permute.xlu0 %4032
      %v4034 = vsel %vm3628, %v4023, %v4025
      %v4035 = vsel %vm3628, %v4025, %v4027
      %v4036 = vsel %vm3628, %v4029, %v4031
      %v4037 = vsel %vm3628, %v4031, %v4033
      %4042 = vst [vmem:[%s866 + $0xc0] sm:$0xff] %v4034
      %4043 = vst [vmem:[%s866 + $0xc8] sm:$0xff] %v4035
      %4044 = vst [vmem:[%s866 + $0xd0] sm:$0xff] %v4036
      %4045 = vst [vmem:[%s866 + $0xd8] sm:$0xff] %v4037
      %v4046 = vld [vmem:[#allocation2 + $0x8] sm:$0xff]
      %v4047 = vld [vmem:[#allocation2 + $0x10] sm:$0xff]
      %v4048 = vld [vmem:[#allocation2 + $0x18] sm:$0xff]
      %v4049 = vld [vmem:[#allocation2 + $0x28] sm:$0xff]
      %v4050 = vld [vmem:[#allocation2 + $0x30] sm:$0xff]
      %v4051 = vld [vmem:[#allocation2 + $0x38] sm:$0xff]
      %v4052 = vmul.f32 %v4046, %v3648
      %v4053 = vmul.f32 %v4047, %v3652
      %v4054 = vmul.f32 %v4048, %v3650
      %v4055 = vmul.f32 %v4049, %v3648
      %v4056 = vmul.f32 %v4050, %v3652
      %v4057 = vmul.f32 %v4051, %v3650
      %4064 = vrot.lane.b32.xlu0 %v4052, 106
      %v4065 = vpop.permute.xlu0 %4064
      %4066 = vrot.lane.b32.xlu0 %v4053, 106
      %v4067 = vpop.permute.xlu0 %4066
      %4068 = vrot.lane.b32.xlu0 %v4054, 106
      %v4069 = vpop.permute.xlu0 %4068
      %4070 = vrot.lane.b32.xlu0 %v4055, 106
      %v4071 = vpop.permute.xlu0 %4070
      %4072 = vrot.lane.b32.xlu0 %v4056, 106
      %v4073 = vpop.permute.xlu0 %4072
      %4074 = vrot.lane.b32.xlu0 %v4057, 106
      %v4075 = vpop.permute.xlu0 %4074
      %v4076 = vsel %vm3680, %v4065, %v4067
      %v4077 = vsel %vm3680, %v4067, %v4069
      %v4078 = vsel %vm3680, %v4071, %v4073
      %v4079 = vsel %vm3680, %v4073, %v4075
      %4084 = vst [vmem:[%s909 + $0xc0] sm:$0xff] %v4076
      %4085 = vst [vmem:[%s909 + $0xc8] sm:$0xff] %v4077
      %4086 = vst [vmem:[%s909 + $0xd0] sm:$0xff] %v4078
      %4087 = vst [vmem:[%s909 + $0xd8] sm:$0xff] %v4079
      %v4088 = vld [vmem:[#allocation2 + $0x8] sm:$0xff]
      %v4089 = vld [vmem:[#allocation2 + $0x10] sm:$0xff]
      %v4090 = vld [vmem:[#allocation2 + $0x18] sm:$0xff]
      %v4091 = vld [vmem:[#allocation2 + $0x28] sm:$0xff]
      %v4092 = vld [vmem:[#allocation2 + $0x30] sm:$0xff]
      %v4093 = vld [vmem:[#allocation2 + $0x38] sm:$0xff]
      %v4094 = vmul.f32 %v4088, %v3700
      %v4095 = vmul.f32 %v4089, %v3704
      %v4096 = vmul.f32 %v4090, %v3702
      %v4097 = vmul.f32 %v4091, %v3700
      %v4098 = vmul.f32 %v4092, %v3704
      %v4099 = vmul.f32 %v4093, %v3702
      %4106 = vrot.lane.b32.xlu0 %v4094, 90
      %v4107 = vpop.permute.xlu0 %4106
      %4108 = vrot.lane.b32.xlu0 %v4095, 90
      %v4109 = vpop.permute.xlu0 %4108
      %4110 = vrot.lane.b32.xlu0 %v4096, 90
      %v4111 = vpop.permute.xlu0 %4110
      %4112 = vrot.lane.b32.xlu0 %v4097, 90
      %v4113 = vpop.permute.xlu0 %4112
      %4114 = vrot.lane.b32.xlu0 %v4098, 90
      %v4115 = vpop.permute.xlu0 %4114
      %4116 = vrot.lane.b32.xlu0 %v4099, 90
      %v4117 = vpop.permute.xlu0 %4116
      %v4118 = vsel %vm3732, %v4107, %v4109
      %v4119 = vsel %vm3732, %v4109, %v4111
      %v4120 = vsel %vm3732, %v4113, %v4115
      %v4121 = vsel %vm3732, %v4115, %v4117
      %4126 = vst [vmem:[%s952 + $0xc0] sm:$0xff] %v4118
      %4127 = vst [vmem:[%s952 + $0xc8] sm:$0xff] %v4119
      %4128 = vst [vmem:[%s952 + $0xd0] sm:$0xff] %v4120
      %4129 = vst [vmem:[%s952 + $0xd8] sm:$0xff] %v4121
      %vm4130 = vcmp.ge.s32.totalorder %v468, 4294967294
      %vm4131 = vcmp.ge.s32.totalorder %v469, 4294967294
      %vm4132 = vcmp.lt.s32.totalorder %v468, 14
      %vm4133 = vcmp.lt.s32.totalorder %v469, 14
      %vm4134 = vmand %vm4130, %vm4132
      %vm4135 = vmand %vm4131, %vm4133
      %v4136 = vsel %vm4134, 1, 0
      %v4137 = vsel %vm4135, 1, 0
      %v4138 = vcvt.s32.f32 %v4136
      %v4139 = vcvt.s32.f32 %v4137
      %v4140 = vld [vmem:[#allocation2] sm:$0xff]
      %v4141 = vld [vmem:[#allocation2 + $0x8] sm:$0xff]
      %v4142 = vld [vmem:[#allocation2 + $0x10] sm:$0xff]
      %v4143 = vld [vmem:[#allocation2 + $0x20] sm:$0xff]
      %v4144 = vld [vmem:[#allocation2 + $0x28] sm:$0xff]
      %v4145 = vld [vmem:[#allocation2 + $0x30] sm:$0xff]
      %4148 = vrot.lane.b32.xlu0 %v4138, 7
      %v4149 = vpop.permute.xlu0 %4148
      %4150 = vrot.lane.b32.xlu0 %v4139, 7
      %v4151 = vpop.permute.xlu0 %4150
      %vm4152 = vcmask 56320
      %v4153 = vsel %vm4152, %v4149, %v4151
      %v4157 = vmul.f32 %v4140, %v4149
      %v4158 = vmul.f32 %v4141, %v4153
      %v4159 = vmul.f32 %v4142, %v4151
      %v4160 = vmul.f32 %v4143, %v4149
      %v4161 = vmul.f32 %v4144, %v4153
      %v4162 = vmul.f32 %v4145, %v4151
      %4169 = vrot.lane.b32.xlu0 %v4157, 121
      %v4170 = vpop.permute.xlu0 %4169
      %4171 = vrot.lane.b32.xlu0 %v4158, 121
      %v4172 = vpop.permute.xlu0 %4171
      %4173 = vrot.lane.b32.xlu0 %v4159, 121
      %v4174 = vpop.permute.xlu0 %4173
      %4175 = vrot.lane.b32.xlu0 %v4160, 121
      %v4176 = vpop.permute.xlu0 %4175
      %4177 = vrot.lane.b32.xlu0 %v4161, 121
      %v4178 = vpop.permute.xlu0 %4177
      %4179 = vrot.lane.b32.xlu0 %v4162, 121
      %v4180 = vpop.permute.xlu0 %4179
      %vm4181 = vcmask 990208
      %v4182 = vsel %vm4181, %v4170, %v4172
      %v4183 = vsel %vm4181, %v4172, %v4174
      %v4184 = vsel %vm4181, %v4176, %v4178
      %v4185 = vsel %vm4181, %v4178, %v4180
      %4190 = vst [vmem:[#allocation3 + $0xe0] sm:$0xff] %v4182
      %4191 = vst [vmem:[#allocation3 + $0xe8] sm:$0xff] %v4183
      %4192 = vst [vmem:[#allocation3 + $0xf0] sm:$0xff] %v4184
      %4193 = vst [vmem:[#allocation3 + $0xf8] sm:$0xff] %v4185
      %v4194 = vld [vmem:[#allocation2] sm:$0xff]
      %v4195 = vld [vmem:[#allocation2 + $0x8] sm:$0xff]
      %v4196 = vld [vmem:[#allocation2 + $0x10] sm:$0xff]
      %v4197 = vld [vmem:[#allocation2 + $0x20] sm:$0xff]
      %v4198 = vld [vmem:[#allocation2 + $0x28] sm:$0xff]
      %v4199 = vld [vmem:[#allocation2 + $0x30] sm:$0xff]
      %4200 = vrot.lane.b32.xlu0 %v4138, 23
      %v4201 = vpop.permute.xlu0 %4200
      %4202 = vrot.lane.b32.xlu0 %v4139, 23
      %v4203 = vpop.permute.xlu0 %4202
      %vm4204 = vcmask 187392
      %v4205 = vsel %vm4204, %v4201, %v4203
      %v4209 = vmul.f32 %v4194, %v4201
      %v4210 = vmul.f32 %v4195, %v4205
      %v4211 = vmul.f32 %v4196, %v4203
      %v4212 = vmul.f32 %v4197, %v4201
      %v4213 = vmul.f32 %v4198, %v4205
      %v4214 = vmul.f32 %v4199, %v4203
      %4221 = vrot.lane.b32.xlu0 %v4209, 105
      %v4222 = vpop.permute.xlu0 %4221
      %4223 = vrot.lane.b32.xlu0 %v4210, 105
      %v4224 = vpop.permute.xlu0 %4223
      %4225 = vrot.lane.b32.xlu0 %v4211, 105
      %v4226 = vpop.permute.xlu0 %4225
      %4227 = vrot.lane.b32.xlu0 %v4212, 105
      %v4228 = vpop.permute.xlu0 %4227
      %4229 = vrot.lane.b32.xlu0 %v4213, 105
      %v4230 = vpop.permute.xlu0 %4229
      %4231 = vrot.lane.b32.xlu0 %v4214, 105
      %v4232 = vpop.permute.xlu0 %4231
      %vm4233 = vcmask 859136
      %v4234 = vsel %vm4233, %v4222, %v4224
      %v4235 = vsel %vm4233, %v4224, %v4226
      %v4236 = vsel %vm4233, %v4228, %v4230
      %v4237 = vsel %vm4233, %v4230, %v4232
      %4242 = vst [vmem:[%s542 + $0xe0] sm:$0xff] %v4234
      %4243 = vst [vmem:[%s542 + $0xe8] sm:$0xff] %v4235
      %4244 = vst [vmem:[%s542 + $0xf0] sm:$0xff] %v4236
      %4245 = vst [vmem:[%s542 + $0xf8] sm:$0xff] %v4237
      %v4246 = vld [vmem:[#allocation2] sm:$0xff]
      %v4247 = vld [vmem:[#allocation2 + $0x8] sm:$0xff]
      %v4248 = vld [vmem:[#allocation2 + $0x10] sm:$0xff]
      %v4249 = vld [vmem:[#allocation2 + $0x20] sm:$0xff]
      %v4250 = vld [vmem:[#allocation2 + $0x28] sm:$0xff]
      %v4251 = vld [vmem:[#allocation2 + $0x30] sm:$0xff]
      %4252 = vrot.lane.b32.xlu0 %v4138, 39
      %v4253 = vpop.permute.xlu0 %4252
      %4254 = vrot.lane.b32.xlu0 %v4139, 39
      %v4255 = vpop.permute.xlu0 %4254
      %vm4256 = vcmask 318464
      %v4257 = vsel %vm4256, %v4253, %v4255
      %v4261 = vmul.f32 %v4246, %v4253
      %v4262 = vmul.f32 %v4247, %v4257
      %v4263 = vmul.f32 %v4248, %v4255
      %v4264 = vmul.f32 %v4249, %v4253
      %v4265 = vmul.f32 %v4250, %v4257
      %v4266 = vmul.f32 %v4251, %v4255
      %4273 = vrot.lane.b32.xlu0 %v4261, 89
      %v4274 = vpop.permute.xlu0 %4273
      %4275 = vrot.lane.b32.xlu0 %v4262, 89
      %v4276 = vpop.permute.xlu0 %4275
      %4277 = vrot.lane.b32.xlu0 %v4263, 89
      %v4278 = vpop.permute.xlu0 %4277
      %4279 = vrot.lane.b32.xlu0 %v4264, 89
      %v4280 = vpop.permute.xlu0 %4279
      %4281 = vrot.lane.b32.xlu0 %v4265, 89
      %v4282 = vpop.permute.xlu0 %4281
      %4283 = vrot.lane.b32.xlu0 %v4266, 89
      %v4284 = vpop.permute.xlu0 %4283
      %vm4285 = vcmask 728064
      %v4286 = vsel %vm4285, %v4274, %v4276
      %v4287 = vsel %vm4285, %v4276, %v4278
      %v4288 = vsel %vm4285, %v4280, %v4282
      %v4289 = vsel %vm4285, %v4282, %v4284
      %4294 = vst [vmem:[%s595 + $0xe0] sm:$0xff] %v4286
      %4295 = vst [vmem:[%s595 + $0xe8] sm:$0xff] %v4287
      %4296 = vst [vmem:[%s595 + $0xf0] sm:$0xff] %v4288
      %4297 = vst [vmem:[%s595 + $0xf8] sm:$0xff] %v4289
      %v4298 = vld [vmem:[#allocation2] sm:$0xff]
      %v4299 = vld [vmem:[#allocation2 + $0x8] sm:$0xff]
      %v4300 = vld [vmem:[#allocation2 + $0x10] sm:$0xff]
      %v4301 = vld [vmem:[#allocation2 + $0x20] sm:$0xff]
      %v4302 = vld [vmem:[#allocation2 + $0x28] sm:$0xff]
      %v4303 = vld [vmem:[#allocation2 + $0x30] sm:$0xff]
      %4304 = vrot.lane.b32.xlu0 %v4138, 55
      %v4305 = vpop.permute.xlu0 %4304
      %4306 = vrot.lane.b32.xlu0 %v4139, 55
      %v4307 = vpop.permute.xlu0 %4306
      %vm4308 = vcmask 449536
      %v4309 = vsel %vm4308, %v4305, %v4307
      %v4313 = vmul.f32 %v4298, %v4305
      %v4314 = vmul.f32 %v4299, %v4309
      %v4315 = vmul.f32 %v4300, %v4307
      %v4316 = vmul.f32 %v4301, %v4305
      %v4317 = vmul.f32 %v4302, %v4309
      %v4318 = vmul.f32 %v4303, %v4307
      %4325 = vrot.lane.b32.xlu0 %v4313, 73
      %v4326 = vpop.permute.xlu0 %4325
      %4327 = vrot.lane.b32.xlu0 %v4314, 73
      %v4328 = vpop.permute.xlu0 %4327
      %4329 = vrot.lane.b32.xlu0 %v4315, 73
      %v4330 = vpop.permute.xlu0 %4329
      %4331 = vrot.lane.b32.xlu0 %v4316, 73
      %v4332 = vpop.permute.xlu0 %4331
      %4333 = vrot.lane.b32.xlu0 %v4317, 73
      %v4334 = vpop.permute.xlu0 %4333
      %4335 = vrot.lane.b32.xlu0 %v4318, 73
      %v4336 = vpop.permute.xlu0 %4335
      %vm4337 = vcmask 596992
      %v4338 = vsel %vm4337, %v4326, %v4328
      %v4339 = vsel %vm4337, %v4328, %v4330
      %v4340 = vsel %vm4337, %v4332, %v4334
      %v4341 = vsel %vm4337, %v4334, %v4336
      %4346 = vst [vmem:[%s648 + $0xe0] sm:$0xff] %v4338
      %4347 = vst [vmem:[%s648 + $0xe8] sm:$0xff] %v4339
      %4348 = vst [vmem:[%s648 + $0xf0] sm:$0xff] %v4340
      %4349 = vst [vmem:[%s648 + $0xf8] sm:$0xff] %v4341
      %v4350 = vld [vmem:[#allocation2] sm:$0xff]
      %v4351 = vld [vmem:[#allocation2 + $0x8] sm:$0xff]
      %v4352 = vld [vmem:[#allocation2 + $0x10] sm:$0xff]
      %v4353 = vld [vmem:[#allocation2 + $0x20] sm:$0xff]
      %v4354 = vld [vmem:[#allocation2 + $0x28] sm:$0xff]
      %v4355 = vld [vmem:[#allocation2 + $0x30] sm:$0xff]
      %4356 = vrot.lane.b32.xlu0 %v4138, 71
      %v4357 = vpop.permute.xlu0 %4356
      %4358 = vrot.lane.b32.xlu0 %v4139, 71
      %v4359 = vpop.permute.xlu0 %4358
      %vm4360 = vcmask 580608
      %v4361 = vsel %vm4360, %v4357, %v4359
      %v4365 = vmul.f32 %v4350, %v4357
      %v4366 = vmul.f32 %v4351, %v4361
      %v4367 = vmul.f32 %v4352, %v4359
      %v4368 = vmul.f32 %v4353, %v4357
      %v4369 = vmul.f32 %v4354, %v4361
      %v4370 = vmul.f32 %v4355, %v4359
      %4377 = vrot.lane.b32.xlu0 %v4365, 57
      %v4378 = vpop.permute.xlu0 %4377
      %4379 = vrot.lane.b32.xlu0 %v4366, 57
      %v4380 = vpop.permute.xlu0 %4379
      %4381 = vrot.lane.b32.xlu0 %v4367, 57
      %v4382 = vpop.permute.xlu0 %4381
      %4383 = vrot.lane.b32.xlu0 %v4368, 57
      %v4384 = vpop.permute.xlu0 %4383
      %4385 = vrot.lane.b32.xlu0 %v4369, 57
      %v4386 = vpop.permute.xlu0 %4385
      %4387 = vrot.lane.b32.xlu0 %v4370, 57
      %v4388 = vpop.permute.xlu0 %4387
      %vm4389 = vcmask 465920
      %v4390 = vsel %vm4389, %v4378, %v4380
      %v4391 = vsel %vm4389, %v4380, %v4382
      %v4392 = vsel %vm4389, %v4384, %v4386
      %v4393 = vsel %vm4389, %v4386, %v4388
      %4398 = vst [vmem:[%s700 + $0xe0] sm:$0xff] %v4390
      %4399 = vst [vmem:[%s700 + $0xe8] sm:$0xff] %v4391
      %4400 = vst [vmem:[%s700 + $0xf0] sm:$0xff] %v4392
      %4401 = vst [vmem:[%s700 + $0xf8] sm:$0xff] %v4393
      %v4402 = vld [vmem:[#allocation2] sm:$0xff]
      %v4403 = vld [vmem:[#allocation2 + $0x8] sm:$0xff]
      %v4404 = vld [vmem:[#allocation2 + $0x10] sm:$0xff]
      %v4405 = vld [vmem:[#allocation2 + $0x20] sm:$0xff]
      %v4406 = vld [vmem:[#allocation2 + $0x28] sm:$0xff]
      %v4407 = vld [vmem:[#allocation2 + $0x30] sm:$0xff]
      %4408 = vrot.lane.b32.xlu0 %v4138, 87
      %v4409 = vpop.permute.xlu0 %4408
      %4410 = vrot.lane.b32.xlu0 %v4139, 87
      %v4411 = vpop.permute.xlu0 %4410
      %vm4412 = vcmask 711680
      %v4413 = vsel %vm4412, %v4409, %v4411
      %v4417 = vmul.f32 %v4402, %v4409
      %v4418 = vmul.f32 %v4403, %v4413
      %v4419 = vmul.f32 %v4404, %v4411
      %v4420 = vmul.f32 %v4405, %v4409
      %v4421 = vmul.f32 %v4406, %v4413
      %v4422 = vmul.f32 %v4407, %v4411
      %4429 = vrot.lane.b32.xlu0 %v4417, 41
      %v4430 = vpop.permute.xlu0 %4429
      %4431 = vrot.lane.b32.xlu0 %v4418, 41
      %v4432 = vpop.permute.xlu0 %4431
      %4433 = vrot.lane.b32.xlu0 %v4419, 41
      %v4434 = vpop.permute.xlu0 %4433
      %4435 = vrot.lane.b32.xlu0 %v4420, 41
      %v4436 = vpop.permute.xlu0 %4435
      %4437 = vrot.lane.b32.xlu0 %v4421, 41
      %v4438 = vpop.permute.xlu0 %4437
      %4439 = vrot.lane.b32.xlu0 %v4422, 41
      %v4440 = vpop.permute.xlu0 %4439
      %vm4441 = vcmask 334848
      %v4442 = vsel %vm4441, %v4430, %v4432
      %v4443 = vsel %vm4441, %v4432, %v4434
      %v4444 = vsel %vm4441, %v4436, %v4438
      %v4445 = vsel %vm4441, %v4438, %v4440
      %4450 = vst [vmem:[%s751 + $0xe0] sm:$0xff] %v4442
      %4451 = vst [vmem:[%s751 + $0xe8] sm:$0xff] %v4443
      %4452 = vst [vmem:[%s751 + $0xf0] sm:$0xff] %v4444
      %4453 = vst [vmem:[%s751 + $0xf8] sm:$0xff] %v4445
      %v4454 = vld [vmem:[#allocation2] sm:$0xff]
      %v4455 = vld [vmem:[#allocation2 + $0x8] sm:$0xff]
      %v4456 = vld [vmem:[#allocation2 + $0x10] sm:$0xff]
      %v4457 = vld [vmem:[#allocation2 + $0x20] sm:$0xff]
      %v4458 = vld [vmem:[#allocation2 + $0x28] sm:$0xff]
      %v4459 = vld [vmem:[#allocation2 + $0x30] sm:$0xff]
      %4460 = vrot.lane.b32.xlu0 %v4138, 103
      %v4461 = vpop.permute.xlu0 %4460
      %4462 = vrot.lane.b32.xlu0 %v4139, 103
      %v4463 = vpop.permute.xlu0 %4462
      %vm4464 = vcmask 842752
      %v4465 = vsel %vm4464, %v4461, %v4463
      %v4469 = vmul.f32 %v4454, %v4461
      %v4470 = vmul.f32 %v4455, %v4465
      %v4471 = vmul.f32 %v4456, %v4463
      %v4472 = vmul.f32 %v4457, %v4461
      %v4473 = vmul.f32 %v4458, %v4465
      %v4474 = vmul.f32 %v4459, %v4463
      %4481 = vrot.lane.b32.xlu0 %v4469, 25
      %v4482 = vpop.permute.xlu0 %4481
      %4483 = vrot.lane.b32.xlu0 %v4470, 25
      %v4484 = vpop.permute.xlu0 %4483
      %4485 = vrot.lane.b32.xlu0 %v4471, 25
      %v4486 = vpop.permute.xlu0 %4485
      %4487 = vrot.lane.b32.xlu0 %v4472, 25
      %v4488 = vpop.permute.xlu0 %4487
      %4489 = vrot.lane.b32.xlu0 %v4473, 25
      %v4490 = vpop.permute.xlu0 %4489
      %4491 = vrot.lane.b32.xlu0 %v4474, 25
      %v4492 = vpop.permute.xlu0 %4491
      %vm4493 = vcmask 203776
      %v4494 = vsel %vm4493, %v4482, %v4484
      %v4495 = vsel %vm4493, %v4484, %v4486
      %v4496 = vsel %vm4493, %v4488, %v4490
      %v4497 = vsel %vm4493, %v4490, %v4492
      %4502 = vst [vmem:[%s802 + $0xe0] sm:$0xff] %v4494
      %4503 = vst [vmem:[%s802 + $0xe8] sm:$0xff] %v4495
      %4504 = vst [vmem:[%s802 + $0xf0] sm:$0xff] %v4496
      %4505 = vst [vmem:[%s802 + $0xf8] sm:$0xff] %v4497
      %v4506 = vld [vmem:[#allocation2] sm:$0xff]
      %v4507 = vld [vmem:[#allocation2 + $0x8] sm:$0xff]
      %v4508 = vld [vmem:[#allocation2 + $0x10] sm:$0xff]
      %v4509 = vld [vmem:[#allocation2 + $0x20] sm:$0xff]
      %v4510 = vld [vmem:[#allocation2 + $0x28] sm:$0xff]
      %v4511 = vld [vmem:[#allocation2 + $0x30] sm:$0xff]
      %4512 = vrot.lane.b32.xlu0 %v4138, 119
      %v4513 = vpop.permute.xlu0 %4512
      %4514 = vrot.lane.b32.xlu0 %v4139, 119
      %v4515 = vpop.permute.xlu0 %4514
      %vm4516 = vcmask 973824
      %v4517 = vsel %vm4516, %v4513, %v4515
      %v4521 = vmul.f32 %v4506, %v4513
      %v4522 = vmul.f32 %v4507, %v4517
      %v4523 = vmul.f32 %v4508, %v4515
      %v4524 = vmul.f32 %v4509, %v4513
      %v4525 = vmul.f32 %v4510, %v4517
      %v4526 = vmul.f32 %v4511, %v4515
      %4533 = vrot.lane.b32.xlu0 %v4521, 9
      %v4534 = vpop.permute.xlu0 %4533
      %4535 = vrot.lane.b32.xlu0 %v4522, 9
      %v4536 = vpop.permute.xlu0 %4535
      %4537 = vrot.lane.b32.xlu0 %v4523, 9
      %v4538 = vpop.permute.xlu0 %4537
      %4539 = vrot.lane.b32.xlu0 %v4524, 9
      %v4540 = vpop.permute.xlu0 %4539
      %4541 = vrot.lane.b32.xlu0 %v4525, 9
      %v4542 = vpop.permute.xlu0 %4541
      %4543 = vrot.lane.b32.xlu0 %v4526, 9
      %v4544 = vpop.permute.xlu0 %4543
      %vm4545 = vcmask 72704
      %v4546 = vsel %vm4545, %v4534, %v4536
      %v4547 = vsel %vm4545, %v4536, %v4538
      %v4548 = vsel %vm4545, %v4540, %v4542
      %v4549 = vsel %vm4545, %v4542, %v4544
      %4554 = vst [vmem:[%s853 + $0xe0] sm:$0xff] %v4546
      %4555 = vst [vmem:[%s853 + $0xe8] sm:$0xff] %v4547
      %4556 = vst [vmem:[%s853 + $0xf0] sm:$0xff] %v4548
      %4557 = vst [vmem:[%s853 + $0xf8] sm:$0xff] %v4549
      %v4558 = vld [vmem:[#allocation2 + $0x8] sm:$0xff]
      %v4559 = vld [vmem:[#allocation2 + $0x10] sm:$0xff]
      %v4560 = vld [vmem:[#allocation2 + $0x18] sm:$0xff]
      %v4561 = vld [vmem:[#allocation2 + $0x28] sm:$0xff]
      %v4562 = vld [vmem:[#allocation2 + $0x30] sm:$0xff]
      %v4563 = vld [vmem:[#allocation2 + $0x38] sm:$0xff]
      %v4564 = vmul.f32 %v4558, %v4149
      %v4565 = vmul.f32 %v4559, %v4153
      %v4566 = vmul.f32 %v4560, %v4151
      %v4567 = vmul.f32 %v4561, %v4149
      %v4568 = vmul.f32 %v4562, %v4153
      %v4569 = vmul.f32 %v4563, %v4151
      %4576 = vrot.lane.b32.xlu0 %v4564, 121
      %v4577 = vpop.permute.xlu0 %4576
      %4578 = vrot.lane.b32.xlu0 %v4565, 121
      %v4579 = vpop.permute.xlu0 %4578
      %4580 = vrot.lane.b32.xlu0 %v4566, 121
      %v4581 = vpop.permute.xlu0 %4580
      %4582 = vrot.lane.b32.xlu0 %v4567, 121
      %v4583 = vpop.permute.xlu0 %4582
      %4584 = vrot.lane.b32.xlu0 %v4568, 121
      %v4585 = vpop.permute.xlu0 %4584
      %4586 = vrot.lane.b32.xlu0 %v4569, 121
      %v4587 = vpop.permute.xlu0 %4586
      %v4588 = vsel %vm4181, %v4577, %v4579
      %v4589 = vsel %vm4181, %v4579, %v4581
      %v4590 = vsel %vm4181, %v4583, %v4585
      %v4591 = vsel %vm4181, %v4585, %v4587
      %4596 = vst [vmem:[%s866 + $0xe0] sm:$0xff] %v4588
      %4597 = vst [vmem:[%s866 + $0xe8] sm:$0xff] %v4589
      %4598 = vst [vmem:[%s866 + $0xf0] sm:$0xff] %v4590
      %4599 = vst [vmem:[%s866 + $0xf8] sm:$0xff] %v4591
      %v4600 = vld [vmem:[#allocation2 + $0x8] sm:$0xff]
      %v4601 = vld [vmem:[#allocation2 + $0x10] sm:$0xff]
      %v4602 = vld [vmem:[#allocation2 + $0x18] sm:$0xff]
      %v4603 = vld [vmem:[#allocation2 + $0x28] sm:$0xff]
      %v4604 = vld [vmem:[#allocation2 + $0x30] sm:$0xff]
      %v4605 = vld [vmem:[#allocation2 + $0x38] sm:$0xff]
      %v4606 = vmul.f32 %v4600, %v4201
      %v4607 = vmul.f32 %v4601, %v4205
      %v4608 = vmul.f32 %v4602, %v4203
      %v4609 = vmul.f32 %v4603, %v4201
      %v4610 = vmul.f32 %v4604, %v4205
      %v4611 = vmul.f32 %v4605, %v4203
      %4618 = vrot.lane.b32.xlu0 %v4606, 105
      %v4619 = vpop.permute.xlu0 %4618
      %4620 = vrot.lane.b32.xlu0 %v4607, 105
      %v4621 = vpop.permute.xlu0 %4620
      %4622 = vrot.lane.b32.xlu0 %v4608, 105
      %v4623 = vpop.permute.xlu0 %4622
      %4624 = vrot.lane.b32.xlu0 %v4609, 105
      %v4625 = vpop.permute.xlu0 %4624
      %4626 = vrot.lane.b32.xlu0 %v4610, 105
      %v4627 = vpop.permute.xlu0 %4626
      %4628 = vrot.lane.b32.xlu0 %v4611, 105
      %v4629 = vpop.permute.xlu0 %4628
      %v4630 = vsel %vm4233, %v4619, %v4621
      %v4631 = vsel %vm4233, %v4621, %v4623
      %v4632 = vsel %vm4233, %v4625, %v4627
      %v4633 = vsel %vm4233, %v4627, %v4629
      %4638 = vst [vmem:[%s909 + $0xe0] sm:$0xff] %v4630
      %4639 = vst [vmem:[%s909 + $0xe8] sm:$0xff] %v4631
      %4640 = vst [vmem:[%s909 + $0xf0] sm:$0xff] %v4632
      %4641 = vst [vmem:[%s909 + $0xf8] sm:$0xff] %v4633
      %v4642 = vld [vmem:[#allocation2 + $0x8] sm:$0xff]
      %v4643 = vld [vmem:[#allocation2 + $0x10] sm:$0xff]
      %v4644 = vld [vmem:[#allocation2 + $0x18] sm:$0xff]
      %v4645 = vld [vmem:[#allocation2 + $0x28] sm:$0xff]
      %v4646 = vld [vmem:[#allocation2 + $0x30] sm:$0xff]
      %v4647 = vld [vmem:[#allocation2 + $0x38] sm:$0xff]
      %v4648 = vmul.f32 %v4642, %v4253
      %v4649 = vmul.f32 %v4643, %v4257
      %v4650 = vmul.f32 %v4644, %v4255
      %v4651 = vmul.f32 %v4645, %v4253
      %v4652 = vmul.f32 %v4646, %v4257
      %v4653 = vmul.f32 %v4647, %v4255
      %4660 = vrot.lane.b32.xlu0 %v4648, 89
      %v4661 = vpop.permute.xlu0 %4660
      %4662 = vrot.lane.b32.xlu0 %v4649, 89
      %v4663 = vpop.permute.xlu0 %4662
      %4664 = vrot.lane.b32.xlu0 %v4650, 89
      %v4665 = vpop.permute.xlu0 %4664
      %4666 = vrot.lane.b32.xlu0 %v4651, 89
      %v4667 = vpop.permute.xlu0 %4666
      %4668 = vrot.lane.b32.xlu0 %v4652, 89
      %v4669 = vpop.permute.xlu0 %4668
      %4670 = vrot.lane.b32.xlu0 %v4653, 89
      %v4671 = vpop.permute.xlu0 %4670
      %v4672 = vsel %vm4285, %v4661, %v4663
      %v4673 = vsel %vm4285, %v4663, %v4665
      %v4674 = vsel %vm4285, %v4667, %v4669
      %v4675 = vsel %vm4285, %v4669, %v4671
      %4680 = vst [vmem:[%s952 + $0xe0] sm:$0xff] %v4672
      %4681 = vst [vmem:[%s952 + $0xe8] sm:$0xff] %v4673
      %4682 = vst [vmem:[%s952 + $0xf0] sm:$0xff] %v4674
      %4683 = vst [vmem:[%s952 + $0xf8] sm:$0xff] %v4675
      %vm4684 = vcmp.ge.s32.totalorder %v468, 4294967293
      %vm4685 = vcmp.ge.s32.totalorder %v469, 4294967293
      %vm4686 = vcmp.lt.s32.totalorder %v468, 13
      %vm4687 = vcmp.lt.s32.totalorder %v469, 13
      %vm4688 = vmand %vm4684, %vm4686
      %vm4689 = vmand %vm4685, %vm4687
      %v4690 = vsel %vm4688, 1, 0
      %v4691 = vsel %vm4689, 1, 0
      %v4692 = vcvt.s32.f32 %v4690
      %v4693 = vcvt.s32.f32 %v4691
      %v4694 = vld [vmem:[#allocation2] sm:$0xff]
      %v4695 = vld [vmem:[#allocation2 + $0x8] sm:$0xff]
      %v4696 = vld [vmem:[#allocation2 + $0x10] sm:$0xff]
      %v4697 = vld [vmem:[#allocation2 + $0x20] sm:$0xff]
      %v4698 = vld [vmem:[#allocation2 + $0x28] sm:$0xff]
      %v4699 = vld [vmem:[#allocation2 + $0x30] sm:$0xff]
      %4702 = vrot.lane.b32.xlu0 %v4692, 8
      %v4703 = vpop.permute.xlu0 %4702
      %4704 = vrot.lane.b32.xlu0 %v4693, 8
      %v4705 = vpop.permute.xlu0 %4704
      %v4706 = vsel %vm322, %v4703, %v4705
      %v4710 = vmul.f32 %v4694, %v4703
      %v4711 = vmul.f32 %v4695, %v4706
      %v4712 = vmul.f32 %v4696, %v4705
      %v4713 = vmul.f32 %v4697, %v4703
      %v4714 = vmul.f32 %v4698, %v4706
      %v4715 = vmul.f32 %v4699, %v4705
      %4722 = vrot.lane.b32.xlu0 %v4710, 120
      %v4723 = vpop.permute.xlu0 %4722
      %4724 = vrot.lane.b32.xlu0 %v4711, 120
      %v4725 = vpop.permute.xlu0 %4724
      %4726 = vrot.lane.b32.xlu0 %v4712, 120
      %v4727 = vpop.permute.xlu0 %4726
      %4728 = vrot.lane.b32.xlu0 %v4713, 120
      %v4729 = vpop.permute.xlu0 %4728
      %4730 = vrot.lane.b32.xlu0 %v4714, 120
      %v4731 = vpop.permute.xlu0 %4730
      %4732 = vrot.lane.b32.xlu0 %v4715, 120
      %v4733 = vpop.permute.xlu0 %4732
      %vm4734 = vcmask 982016
      %v4735 = vsel %vm4734, %v4723, %v4725
      %v4736 = vsel %vm4734, %v4725, %v4727
      %v4737 = vsel %vm4734, %v4729, %v4731
      %v4738 = vsel %vm4734, %v4731, %v4733
      %4743 = vst [vmem:[#allocation3 + $0x100] sm:$0xff] %v4735
      %4744 = vst [vmem:[#allocation3 + $0x108] sm:$0xff] %v4736
      %4745 = vst [vmem:[#allocation3 + $0x110] sm:$0xff] %v4737
      %4746 = vst [vmem:[#allocation3 + $0x118] sm:$0xff] %v4738
      %v4747 = vld [vmem:[#allocation2] sm:$0xff]
      %v4748 = vld [vmem:[#allocation2 + $0x8] sm:$0xff]
      %v4749 = vld [vmem:[#allocation2 + $0x10] sm:$0xff]
      %v4750 = vld [vmem:[#allocation2 + $0x20] sm:$0xff]
      %v4751 = vld [vmem:[#allocation2 + $0x28] sm:$0xff]
      %v4752 = vld [vmem:[#allocation2 + $0x30] sm:$0xff]
      %4753 = vrot.lane.b32.xlu0 %v4692, 24
      %v4754 = vpop.permute.xlu0 %4753
      %4755 = vrot.lane.b32.xlu0 %v4693, 24
      %v4756 = vpop.permute.xlu0 %4755
      %vm4757 = vcmask 195584
      %v4758 = vsel %vm4757, %v4754, %v4756
      %v4762 = vmul.f32 %v4747, %v4754
      %v4763 = vmul.f32 %v4748, %v4758
      %v4764 = vmul.f32 %v4749, %v4756
      %v4765 = vmul.f32 %v4750, %v4754
      %v4766 = vmul.f32 %v4751, %v4758
      %v4767 = vmul.f32 %v4752, %v4756
      %4774 = vrot.lane.b32.xlu0 %v4762, 104
      %v4775 = vpop.permute.xlu0 %4774
      %4776 = vrot.lane.b32.xlu0 %v4763, 104
      %v4777 = vpop.permute.xlu0 %4776
      %4778 = vrot.lane.b32.xlu0 %v4764, 104
      %v4779 = vpop.permute.xlu0 %4778
      %4780 = vrot.lane.b32.xlu0 %v4765, 104
      %v4781 = vpop.permute.xlu0 %4780
      %4782 = vrot.lane.b32.xlu0 %v4766, 104
      %v4783 = vpop.permute.xlu0 %4782
      %4784 = vrot.lane.b32.xlu0 %v4767, 104
      %v4785 = vpop.permute.xlu0 %4784
      %vm4786 = vcmask 850944
      %v4787 = vsel %vm4786, %v4775, %v4777
      %v4788 = vsel %vm4786, %v4777, %v4779
      %v4789 = vsel %vm4786, %v4781, %v4783
      %v4790 = vsel %vm4786, %v4783, %v4785
      %4795 = vst [vmem:[%s542 + $0x100] sm:$0xff] %v4787
      %4796 = vst [vmem:[%s542 + $0x108] sm:$0xff] %v4788
      %4797 = vst [vmem:[%s542 + $0x110] sm:$0xff] %v4789
      %4798 = vst [vmem:[%s542 + $0x118] sm:$0xff] %v4790
      %v4799 = vld [vmem:[#allocation2] sm:$0xff]
      %v4800 = vld [vmem:[#allocation2 + $0x8] sm:$0xff]
      %v4801 = vld [vmem:[#allocation2 + $0x10] sm:$0xff]
      %v4802 = vld [vmem:[#allocation2 + $0x20] sm:$0xff]
      %v4803 = vld [vmem:[#allocation2 + $0x28] sm:$0xff]
      %v4804 = vld [vmem:[#allocation2 + $0x30] sm:$0xff]
      %4805 = vrot.lane.b32.xlu0 %v4692, 40
      %v4806 = vpop.permute.xlu0 %4805
      %4807 = vrot.lane.b32.xlu0 %v4693, 40
      %v4808 = vpop.permute.xlu0 %4807
      %vm4809 = vcmask 326656
      %v4810 = vsel %vm4809, %v4806, %v4808
      %v4814 = vmul.f32 %v4799, %v4806
      %v4815 = vmul.f32 %v4800, %v4810
      %v4816 = vmul.f32 %v4801, %v4808
      %v4817 = vmul.f32 %v4802, %v4806
      %v4818 = vmul.f32 %v4803, %v4810
      %v4819 = vmul.f32 %v4804, %v4808
      %4826 = vrot.lane.b32.xlu0 %v4814, 88
      %v4827 = vpop.permute.xlu0 %4826
      %4828 = vrot.lane.b32.xlu0 %v4815, 88
      %v4829 = vpop.permute.xlu0 %4828
      %4830 = vrot.lane.b32.xlu0 %v4816, 88
      %v4831 = vpop.permute.xlu0 %4830
      %4832 = vrot.lane.b32.xlu0 %v4817, 88
      %v4833 = vpop.permute.xlu0 %4832
      %4834 = vrot.lane.b32.xlu0 %v4818, 88
      %v4835 = vpop.permute.xlu0 %4834
      %4836 = vrot.lane.b32.xlu0 %v4819, 88
      %v4837 = vpop.permute.xlu0 %4836
      %vm4838 = vcmask 719872
      %v4839 = vsel %vm4838, %v4827, %v4829
      %v4840 = vsel %vm4838, %v4829, %v4831
      %v4841 = vsel %vm4838, %v4833, %v4835
      %v4842 = vsel %vm4838, %v4835, %v4837
      %4847 = vst [vmem:[%s595 + $0x100] sm:$0xff] %v4839
      %4848 = vst [vmem:[%s595 + $0x108] sm:$0xff] %v4840
      %4849 = vst [vmem:[%s595 + $0x110] sm:$0xff] %v4841
      %4850 = vst [vmem:[%s595 + $0x118] sm:$0xff] %v4842
      %v4851 = vld [vmem:[#allocation2] sm:$0xff]
      %v4852 = vld [vmem:[#allocation2 + $0x8] sm:$0xff]
      %v4853 = vld [vmem:[#allocation2 + $0x10] sm:$0xff]
      %v4854 = vld [vmem:[#allocation2 + $0x20] sm:$0xff]
      %v4855 = vld [vmem:[#allocation2 + $0x28] sm:$0xff]
      %v4856 = vld [vmem:[#allocation2 + $0x30] sm:$0xff]
      %4857 = vrot.lane.b32.xlu0 %v4692, 56
      %v4858 = vpop.permute.xlu0 %4857
      %4859 = vrot.lane.b32.xlu0 %v4693, 56
      %v4860 = vpop.permute.xlu0 %4859
      %vm4861 = vcmask 457728
      %v4862 = vsel %vm4861, %v4858, %v4860
      %v4866 = vmul.f32 %v4851, %v4858
      %v4867 = vmul.f32 %v4852, %v4862
      %v4868 = vmul.f32 %v4853, %v4860
      %v4869 = vmul.f32 %v4854, %v4858
      %v4870 = vmul.f32 %v4855, %v4862
      %v4871 = vmul.f32 %v4856, %v4860
      %4878 = vrot.lane.b32.xlu0 %v4866, 72
      %v4879 = vpop.permute.xlu0 %4878
      %4880 = vrot.lane.b32.xlu0 %v4867, 72
      %v4881 = vpop.permute.xlu0 %4880
      %4882 = vrot.lane.b32.xlu0 %v4868, 72
      %v4883 = vpop.permute.xlu0 %4882
      %4884 = vrot.lane.b32.xlu0 %v4869, 72
      %v4885 = vpop.permute.xlu0 %4884
      %4886 = vrot.lane.b32.xlu0 %v4870, 72
      %v4887 = vpop.permute.xlu0 %4886
      %4888 = vrot.lane.b32.xlu0 %v4871, 72
      %v4889 = vpop.permute.xlu0 %4888
      %vm4890 = vcmask 588800
      %v4891 = vsel %vm4890, %v4879, %v4881
      %v4892 = vsel %vm4890, %v4881, %v4883
      %v4893 = vsel %vm4890, %v4885, %v4887
      %v4894 = vsel %vm4890, %v4887, %v4889
      %4899 = vst [vmem:[%s648 + $0x100] sm:$0xff] %v4891
      %4900 = vst [vmem:[%s648 + $0x108] sm:$0xff] %v4892
      %4901 = vst [vmem:[%s648 + $0x110] sm:$0xff] %v4893
      %4902 = vst [vmem:[%s648 + $0x118] sm:$0xff] %v4894
      %v4903 = vld [vmem:[#allocation2] sm:$0xff]
      %v4904 = vld [vmem:[#allocation2 + $0x8] sm:$0xff]
      %v4905 = vld [vmem:[#allocation2 + $0x10] sm:$0xff]
      %v4906 = vld [vmem:[#allocation2 + $0x20] sm:$0xff]
      %v4907 = vld [vmem:[#allocation2 + $0x28] sm:$0xff]
      %v4908 = vld [vmem:[#allocation2 + $0x30] sm:$0xff]
      %4909 = vrot.lane.b32.xlu0 %v4692, 72
      %v4910 = vpop.permute.xlu0 %4909
      %4911 = vrot.lane.b32.xlu0 %v4693, 72
      %v4912 = vpop.permute.xlu0 %4911
      %v4913 = vsel %vm4890, %v4910, %v4912
      %v4917 = vmul.f32 %v4903, %v4910
      %v4918 = vmul.f32 %v4904, %v4913
      %v4919 = vmul.f32 %v4905, %v4912
      %v4920 = vmul.f32 %v4906, %v4910
      %v4921 = vmul.f32 %v4907, %v4913
      %v4922 = vmul.f32 %v4908, %v4912
      %4929 = vrot.lane.b32.xlu0 %v4917, 56
      %v4930 = vpop.permute.xlu0 %4929
      %4931 = vrot.lane.b32.xlu0 %v4918, 56
      %v4932 = vpop.permute.xlu0 %4931
      %4933 = vrot.lane.b32.xlu0 %v4919, 56
      %v4934 = vpop.permute.xlu0 %4933
      %4935 = vrot.lane.b32.xlu0 %v4920, 56
      %v4936 = vpop.permute.xlu0 %4935
      %4937 = vrot.lane.b32.xlu0 %v4921, 56
      %v4938 = vpop.permute.xlu0 %4937
      %4939 = vrot.lane.b32.xlu0 %v4922, 56
      %v4940 = vpop.permute.xlu0 %4939
      %v4941 = vsel %vm4861, %v4930, %v4932
      %v4942 = vsel %vm4861, %v4932, %v4934
      %v4943 = vsel %vm4861, %v4936, %v4938
      %v4944 = vsel %vm4861, %v4938, %v4940
      %4949 = vst [vmem:[%s700 + $0x100] sm:$0xff] %v4941
      %4950 = vst [vmem:[%s700 + $0x108] sm:$0xff] %v4942
      %4951 = vst [vmem:[%s700 + $0x110] sm:$0xff] %v4943
      %4952 = vst [vmem:[%s700 + $0x118] sm:$0xff] %v4944
      %v4953 = vld [vmem:[#allocation2] sm:$0xff]
      %v4954 = vld [vmem:[#allocation2 + $0x8] sm:$0xff]
      %v4955 = vld [vmem:[#allocation2 + $0x10] sm:$0xff]
      %v4956 = vld [vmem:[#allocation2 + $0x20] sm:$0xff]
      %v4957 = vld [vmem:[#allocation2 + $0x28] sm:$0xff]
      %v4958 = vld [vmem:[#allocation2 + $0x30] sm:$0xff]
      %4959 = vrot.lane.b32.xlu0 %v4692, 88
      %v4960 = vpop.permute.xlu0 %4959
      %4961 = vrot.lane.b32.xlu0 %v4693, 88
      %v4962 = vpop.permute.xlu0 %4961
      %v4963 = vsel %vm4838, %v4960, %v4962
      %v4967 = vmul.f32 %v4953, %v4960
      %v4968 = vmul.f32 %v4954, %v4963
      %v4969 = vmul.f32 %v4955, %v4962
      %v4970 = vmul.f32 %v4956, %v4960
      %v4971 = vmul.f32 %v4957, %v4963
      %v4972 = vmul.f32 %v4958, %v4962
      %4979 = vrot.lane.b32.xlu0 %v4967, 40
      %v4980 = vpop.permute.xlu0 %4979
      %4981 = vrot.lane.b32.xlu0 %v4968, 40
      %v4982 = vpop.permute.xlu0 %4981
      %4983 = vrot.lane.b32.xlu0 %v4969, 40
      %v4984 = vpop.permute.xlu0 %4983
      %4985 = vrot.lane.b32.xlu0 %v4970, 40
      %v4986 = vpop.permute.xlu0 %4985
      %4987 = vrot.lane.b32.xlu0 %v4971, 40
      %v4988 = vpop.permute.xlu0 %4987
      %4989 = vrot.lane.b32.xlu0 %v4972, 40
      %v4990 = vpop.permute.xlu0 %4989
      %v4991 = vsel %vm4809, %v4980, %v4982
      %v4992 = vsel %vm4809, %v4982, %v4984
      %v4993 = vsel %vm4809, %v4986, %v4988
      %v4994 = vsel %vm4809, %v4988, %v4990
      %4999 = vst [vmem:[%s751 + $0x100] sm:$0xff] %v4991
      %5000 = vst [vmem:[%s751 + $0x108] sm:$0xff] %v4992
      %5001 = vst [vmem:[%s751 + $0x110] sm:$0xff] %v4993
      %5002 = vst [vmem:[%s751 + $0x118] sm:$0xff] %v4994
      %v5003 = vld [vmem:[#allocation2] sm:$0xff]
      %v5004 = vld [vmem:[#allocation2 + $0x8] sm:$0xff]
      %v5005 = vld [vmem:[#allocation2 + $0x10] sm:$0xff]
      %v5006 = vld [vmem:[#allocation2 + $0x20] sm:$0xff]
      %v5007 = vld [vmem:[#allocation2 + $0x28] sm:$0xff]
      %v5008 = vld [vmem:[#allocation2 + $0x30] sm:$0xff]
      %5009 = vrot.lane.b32.xlu0 %v4692, 104
      %v5010 = vpop.permute.xlu0 %5009
      %5011 = vrot.lane.b32.xlu0 %v4693, 104
      %v5012 = vpop.permute.xlu0 %5011
      %v5013 = vsel %vm4786, %v5010, %v5012
      %v5017 = vmul.f32 %v5003, %v5010
      %v5018 = vmul.f32 %v5004, %v5013
      %v5019 = vmul.f32 %v5005, %v5012
      %v5020 = vmul.f32 %v5006, %v5010
      %v5021 = vmul.f32 %v5007, %v5013
      %v5022 = vmul.f32 %v5008, %v5012
      %5029 = vrot.lane.b32.xlu0 %v5017, 24
      %v5030 = vpop.permute.xlu0 %5029
      %5031 = vrot.lane.b32.xlu0 %v5018, 24
      %v5032 = vpop.permute.xlu0 %5031
      %5033 = vrot.lane.b32.xlu0 %v5019, 24
      %v5034 = vpop.permute.xlu0 %5033
      %5035 = vrot.lane.b32.xlu0 %v5020, 24
      %v5036 = vpop.permute.xlu0 %5035
      %5037 = vrot.lane.b32.xlu0 %v5021, 24
      %v5038 = vpop.permute.xlu0 %5037
      %5039 = vrot.lane.b32.xlu0 %v5022, 24
      %v5040 = vpop.permute.xlu0 %5039
      %v5041 = vsel %vm4757, %v5030, %v5032
      %v5042 = vsel %vm4757, %v5032, %v5034
      %v5043 = vsel %vm4757, %v5036, %v5038
      %v5044 = vsel %vm4757, %v5038, %v5040
      %5049 = vst [vmem:[%s802 + $0x100] sm:$0xff] %v5041
      %5050 = vst [vmem:[%s802 + $0x108] sm:$0xff] %v5042
      %5051 = vst [vmem:[%s802 + $0x110] sm:$0xff] %v5043
      %5052 = vst [vmem:[%s802 + $0x118] sm:$0xff] %v5044
      %v5053 = vld [vmem:[#allocation2] sm:$0xff]
      %v5054 = vld [vmem:[#allocation2 + $0x8] sm:$0xff]
      %v5055 = vld [vmem:[#allocation2 + $0x10] sm:$0xff]
      %v5056 = vld [vmem:[#allocation2 + $0x20] sm:$0xff]
      %v5057 = vld [vmem:[#allocation2 + $0x28] sm:$0xff]
      %v5058 = vld [vmem:[#allocation2 + $0x30] sm:$0xff]
      %5059 = vrot.lane.b32.xlu0 %v4692, 120
      %v5060 = vpop.permute.xlu0 %5059
      %5061 = vrot.lane.b32.xlu0 %v4693, 120
      %v5062 = vpop.permute.xlu0 %5061
      %v5063 = vsel %vm4734, %v5060, %v5062
      %v5067 = vmul.f32 %v5053, %v5060
      %v5068 = vmul.f32 %v5054, %v5063
      %v5069 = vmul.f32 %v5055, %v5062
      %v5070 = vmul.f32 %v5056, %v5060
      %v5071 = vmul.f32 %v5057, %v5063
      %v5072 = vmul.f32 %v5058, %v5062
      %5079 = vrot.lane.b32.xlu0 %v5067, 8
      %v5080 = vpop.permute.xlu0 %5079
      %5081 = vrot.lane.b32.xlu0 %v5068, 8
      %v5082 = vpop.permute.xlu0 %5081
      %5083 = vrot.lane.b32.xlu0 %v5069, 8
      %v5084 = vpop.permute.xlu0 %5083
      %5085 = vrot.lane.b32.xlu0 %v5070, 8
      %v5086 = vpop.permute.xlu0 %5085
      %5087 = vrot.lane.b32.xlu0 %v5071, 8
      %v5088 = vpop.permute.xlu0 %5087
      %5089 = vrot.lane.b32.xlu0 %v5072, 8
      %v5090 = vpop.permute.xlu0 %5089
      %v5091 = vsel %vm322, %v5080, %v5082
      %v5092 = vsel %vm322, %v5082, %v5084
      %v5093 = vsel %vm322, %v5086, %v5088
      %v5094 = vsel %vm322, %v5088, %v5090
      %5099 = vst [vmem:[%s853 + $0x100] sm:$0xff] %v5091
      %5100 = vst [vmem:[%s853 + $0x108] sm:$0xff] %v5092
      %5101 = vst [vmem:[%s853 + $0x110] sm:$0xff] %v5093
      %5102 = vst [vmem:[%s853 + $0x118] sm:$0xff] %v5094
      %v5103 = vld [vmem:[#allocation2 + $0x8] sm:$0xff]
      %v5104 = vld [vmem:[#allocation2 + $0x10] sm:$0xff]
      %v5105 = vld [vmem:[#allocation2 + $0x18] sm:$0xff]
      %v5106 = vld [vmem:[#allocation2 + $0x28] sm:$0xff]
      %v5107 = vld [vmem:[#allocation2 + $0x30] sm:$0xff]
      %v5108 = vld [vmem:[#allocation2 + $0x38] sm:$0xff]
      %v5109 = vmul.f32 %v5103, %v4703
      %v5110 = vmul.f32 %v5104, %v4706
      %v5111 = vmul.f32 %v5105, %v4705
      %v5112 = vmul.f32 %v5106, %v4703
      %v5113 = vmul.f32 %v5107, %v4706
      %v5114 = vmul.f32 %v5108, %v4705
      %5121 = vrot.lane.b32.xlu0 %v5109, 120
      %v5122 = vpop.permute.xlu0 %5121
      %5123 = vrot.lane.b32.xlu0 %v5110, 120
      %v5124 = vpop.permute.xlu0 %5123
      %5125 = vrot.lane.b32.xlu0 %v5111, 120
      %v5126 = vpop.permute.xlu0 %5125
      %5127 = vrot.lane.b32.xlu0 %v5112, 120
      %v5128 = vpop.permute.xlu0 %5127
      %5129 = vrot.lane.b32.xlu0 %v5113, 120
      %v5130 = vpop.permute.xlu0 %5129
      %5131 = vrot.lane.b32.xlu0 %v5114, 120
      %v5132 = vpop.permute.xlu0 %5131
      %v5133 = vsel %vm4734, %v5122, %v5124
      %v5134 = vsel %vm4734, %v5124, %v5126
      %v5135 = vsel %vm4734, %v5128, %v5130
      %v5136 = vsel %vm4734, %v5130, %v5132
      %5141 = vst [vmem:[%s866 + $0x100] sm:$0xff] %v5133
      %5142 = vst [vmem:[%s866 + $0x108] sm:$0xff] %v5134
      %5143 = vst [vmem:[%s866 + $0x110] sm:$0xff] %v5135
      %5144 = vst [vmem:[%s866 + $0x118] sm:$0xff] %v5136
      %v5145 = vld [vmem:[#allocation2 + $0x8] sm:$0xff]
      %v5146 = vld [vmem:[#allocation2 + $0x10] sm:$0xff]
      %v5147 = vld [vmem:[#allocation2 + $0x18] sm:$0xff]
      %v5148 = vld [vmem:[#allocation2 + $0x28] sm:$0xff]
      %v5149 = vld [vmem:[#allocation2 + $0x30] sm:$0xff]
      %v5150 = vld [vmem:[#allocation2 + $0x38] sm:$0xff]
      %v5151 = vmul.f32 %v5145, %v4754
      %v5152 = vmul.f32 %v5146, %v4758
      %v5153 = vmul.f32 %v5147, %v4756
      %v5154 = vmul.f32 %v5148, %v4754
      %v5155 = vmul.f32 %v5149, %v4758
      %v5156 = vmul.f32 %v5150, %v4756
      %5163 = vrot.lane.b32.xlu0 %v5151, 104
      %v5164 = vpop.permute.xlu0 %5163
      %5165 = vrot.lane.b32.xlu0 %v5152, 104
      %v5166 = vpop.permute.xlu0 %5165
      %5167 = vrot.lane.b32.xlu0 %v5153, 104
      %v5168 = vpop.permute.xlu0 %5167
      %5169 = vrot.lane.b32.xlu0 %v5154, 104
      %v5170 = vpop.permute.xlu0 %5169
      %5171 = vrot.lane.b32.xlu0 %v5155, 104
      %v5172 = vpop.permute.xlu0 %5171
      %5173 = vrot.lane.b32.xlu0 %v5156, 104
      %v5174 = vpop.permute.xlu0 %5173
      %v5175 = vsel %vm4786, %v5164, %v5166
      %v5176 = vsel %vm4786, %v5166, %v5168
      %v5177 = vsel %vm4786, %v5170, %v5172
      %v5178 = vsel %vm4786, %v5172, %v5174
      %5183 = vst [vmem:[%s909 + $0x100] sm:$0xff] %v5175
      %5184 = vst [vmem:[%s909 + $0x108] sm:$0xff] %v5176
      %5185 = vst [vmem:[%s909 + $0x110] sm:$0xff] %v5177
      %5186 = vst [vmem:[%s909 + $0x118] sm:$0xff] %v5178
      %v5187 = vld [vmem:[#allocation2 + $0x8] sm:$0xff]
      %v5188 = vld [vmem:[#allocation2 + $0x10] sm:$0xff]
      %v5189 = vld [vmem:[#allocation2 + $0x18] sm:$0xff]
      %v5190 = vld [vmem:[#allocation2 + $0x28] sm:$0xff]
      %v5191 = vld [vmem:[#allocation2 + $0x30] sm:$0xff]
      %v5192 = vld [vmem:[#allocation2 + $0x38] sm:$0xff]
      %v5193 = vmul.f32 %v5187, %v4806
      %v5194 = vmul.f32 %v5188, %v4810
      %v5195 = vmul.f32 %v5189, %v4808
      %v5196 = vmul.f32 %v5190, %v4806
      %v5197 = vmul.f32 %v5191, %v4810
      %v5198 = vmul.f32 %v5192, %v4808
      %5205 = vrot.lane.b32.xlu0 %v5193, 88
      %v5206 = vpop.permute.xlu0 %5205
      %5207 = vrot.lane.b32.xlu0 %v5194, 88
      %v5208 = vpop.permute.xlu0 %5207
      %5209 = vrot.lane.b32.xlu0 %v5195, 88
      %v5210 = vpop.permute.xlu0 %5209
      %5211 = vrot.lane.b32.xlu0 %v5196, 88
      %v5212 = vpop.permute.xlu0 %5211
      %5213 = vrot.lane.b32.xlu0 %v5197, 88
      %v5214 = vpop.permute.xlu0 %5213
      %5215 = vrot.lane.b32.xlu0 %v5198, 88
      %v5216 = vpop.permute.xlu0 %5215
      %v5217 = vsel %vm4838, %v5206, %v5208
      %v5218 = vsel %vm4838, %v5208, %v5210
      %v5219 = vsel %vm4838, %v5212, %v5214
      %v5220 = vsel %vm4838, %v5214, %v5216
      %5225 = vst [vmem:[%s952 + $0x100] sm:$0xff] %v5217
      %5226 = vst [vmem:[%s952 + $0x108] sm:$0xff] %v5218
      %5227 = vst [vmem:[%s952 + $0x110] sm:$0xff] %v5219
      %5228 = vst [vmem:[%s952 + $0x118] sm:$0xff] %v5220
      %vm5229 = vcmp.ge.s32.totalorder %v468, 4294967292
      %vm5230 = vcmp.ge.s32.totalorder %v469, 4294967292
      %vm5231 = vcmp.lt.s32.totalorder %v468, 12
      %vm5232 = vcmp.lt.s32.totalorder %v469, 12
      %vm5233 = vmand %vm5229, %vm5231
      %vm5234 = vmand %vm5230, %vm5232
      %v5235 = vsel %vm5233, 1, 0
      %v5236 = vsel %vm5234, 1, 0
      %v5237 = vcvt.s32.f32 %v5235
      %v5238 = vcvt.s32.f32 %v5236
      %v5239 = vld [vmem:[#allocation2] sm:$0xff]
      %v5240 = vld [vmem:[#allocation2 + $0x8] sm:$0xff]
      %v5241 = vld [vmem:[#allocation2 + $0x10] sm:$0xff]
      %v5242 = vld [vmem:[#allocation2 + $0x20] sm:$0xff]
      %v5243 = vld [vmem:[#allocation2 + $0x28] sm:$0xff]
      %v5244 = vld [vmem:[#allocation2 + $0x30] sm:$0xff]
      %5247 = vrot.lane.b32.xlu0 %v5237, 9
      %v5248 = vpop.permute.xlu0 %5247
      %5249 = vrot.lane.b32.xlu0 %v5238, 9
      %v5250 = vpop.permute.xlu0 %5249
      %v5251 = vsel %vm4545, %v5248, %v5250
      %v5255 = vmul.f32 %v5239, %v5248
      %v5256 = vmul.f32 %v5240, %v5251
      %v5257 = vmul.f32 %v5241, %v5250
      %v5258 = vmul.f32 %v5242, %v5248
      %v5259 = vmul.f32 %v5243, %v5251
      %v5260 = vmul.f32 %v5244, %v5250
      %5267 = vrot.lane.b32.xlu0 %v5255, 119
      %v5268 = vpop.permute.xlu0 %5267
      %5269 = vrot.lane.b32.xlu0 %v5256, 119
      %v5270 = vpop.permute.xlu0 %5269
      %5271 = vrot.lane.b32.xlu0 %v5257, 119
      %v5272 = vpop.permute.xlu0 %5271
      %5273 = vrot.lane.b32.xlu0 %v5258, 119
      %v5274 = vpop.permute.xlu0 %5273
      %5275 = vrot.lane.b32.xlu0 %v5259, 119
      %v5276 = vpop.permute.xlu0 %5275
      %5277 = vrot.lane.b32.xlu0 %v5260, 119
      %v5278 = vpop.permute.xlu0 %5277
      %v5279 = vsel %vm4516, %v5268, %v5270
      %v5280 = vsel %vm4516, %v5270, %v5272
      %v5281 = vsel %vm4516, %v5274, %v5276
      %v5282 = vsel %vm4516, %v5276, %v5278
      %5287 = vst [vmem:[#allocation3 + $0x120] sm:$0xff] %v5279
      %5288 = vst [vmem:[#allocation3 + $0x128] sm:$0xff] %v5280
      %5289 = vst [vmem:[#allocation3 + $0x130] sm:$0xff] %v5281
      %5290 = vst [vmem:[#allocation3 + $0x138] sm:$0xff] %v5282
      %v5291 = vld [vmem:[#allocation2] sm:$0xff]
      %v5292 = vld [vmem:[#allocation2 + $0x8] sm:$0xff]
      %v5293 = vld [vmem:[#allocation2 + $0x10] sm:$0xff]
      %v5294 = vld [vmem:[#allocation2 + $0x20] sm:$0xff]
      %v5295 = vld [vmem:[#allocation2 + $0x28] sm:$0xff]
      %v5296 = vld [vmem:[#allocation2 + $0x30] sm:$0xff]
      %5297 = vrot.lane.b32.xlu0 %v5237, 25
      %v5298 = vpop.permute.xlu0 %5297
      %5299 = vrot.lane.b32.xlu0 %v5238, 25
      %v5300 = vpop.permute.xlu0 %5299
      %v5301 = vsel %vm4493, %v5298, %v5300
      %v5305 = vmul.f32 %v5291, %v5298
      %v5306 = vmul.f32 %v5292, %v5301
      %v5307 = vmul.f32 %v5293, %v5300
      %v5308 = vmul.f32 %v5294, %v5298
      %v5309 = vmul.f32 %v5295, %v5301
      %v5310 = vmul.f32 %v5296, %v5300
      %5317 = vrot.lane.b32.xlu0 %v5305, 103
      %v5318 = vpop.permute.xlu0 %5317
      %5319 = vrot.lane.b32.xlu0 %v5306, 103
      %v5320 = vpop.permute.xlu0 %5319
      %5321 = vrot.lane.b32.xlu0 %v5307, 103
      %v5322 = vpop.permute.xlu0 %5321
      %5323 = vrot.lane.b32.xlu0 %v5308, 103
      %v5324 = vpop.permute.xlu0 %5323
      %5325 = vrot.lane.b32.xlu0 %v5309, 103
      %v5326 = vpop.permute.xlu0 %5325
      %5327 = vrot.lane.b32.xlu0 %v5310, 103
      %v5328 = vpop.permute.xlu0 %5327
      %v5329 = vsel %vm4464, %v5318, %v5320
      %v5330 = vsel %vm4464, %v5320, %v5322
      %v5331 = vsel %vm4464, %v5324, %v5326
      %v5332 = vsel %vm4464, %v5326, %v5328
      %5337 = vst [vmem:[%s542 + $0x120] sm:$0xff] %v5329
      %5338 = vst [vmem:[%s542 + $0x128] sm:$0xff] %v5330
      %5339 = vst [vmem:[%s542 + $0x130] sm:$0xff] %v5331
      %5340 = vst [vmem:[%s542 + $0x138] sm:$0xff] %v5332
      %v5341 = vld [vmem:[#allocation2] sm:$0xff]
      %v5342 = vld [vmem:[#allocation2 + $0x8] sm:$0xff]
      %v5343 = vld [vmem:[#allocation2 + $0x10] sm:$0xff]
      %v5344 = vld [vmem:[#allocation2 + $0x20] sm:$0xff]
      %v5345 = vld [vmem:[#allocation2 + $0x28] sm:$0xff]
      %v5346 = vld [vmem:[#allocation2 + $0x30] sm:$0xff]
      %5347 = vrot.lane.b32.xlu0 %v5237, 41
      %v5348 = vpop.permute.xlu0 %5347
      %5349 = vrot.lane.b32.xlu0 %v5238, 41
      %v5350 = vpop.permute.xlu0 %5349
      %v5351 = vsel %vm4441, %v5348, %v5350
      %v5355 = vmul.f32 %v5341, %v5348
      %v5356 = vmul.f32 %v5342, %v5351
      %v5357 = vmul.f32 %v5343, %v5350
      %v5358 = vmul.f32 %v5344, %v5348
      %v5359 = vmul.f32 %v5345, %v5351
      %v5360 = vmul.f32 %v5346, %v5350
      %5367 = vrot.lane.b32.xlu0 %v5355, 87
      %v5368 = vpop.permute.xlu0 %5367
      %5369 = vrot.lane.b32.xlu0 %v5356, 87
      %v5370 = vpop.permute.xlu0 %5369
      %5371 = vrot.lane.b32.xlu0 %v5357, 87
      %v5372 = vpop.permute.xlu0 %5371
      %5373 = vrot.lane.b32.xlu0 %v5358, 87
      %v5374 = vpop.permute.xlu0 %5373
      %5375 = vrot.lane.b32.xlu0 %v5359, 87
      %v5376 = vpop.permute.xlu0 %5375
      %5377 = vrot.lane.b32.xlu0 %v5360, 87
      %v5378 = vpop.permute.xlu0 %5377
      %v5379 = vsel %vm4412, %v5368, %v5370
      %v5380 = vsel %vm4412, %v5370, %v5372
      %v5381 = vsel %vm4412, %v5374, %v5376
      %v5382 = vsel %vm4412, %v5376, %v5378
      %5387 = vst [vmem:[%s595 + $0x120] sm:$0xff] %v5379
      %5388 = vst [vmem:[%s595 + $0x128] sm:$0xff] %v5380
      %5389 = vst [vmem:[%s595 + $0x130] sm:$0xff] %v5381
      %5390 = vst [vmem:[%s595 + $0x138] sm:$0xff] %v5382
      %v5391 = vld [vmem:[#allocation2] sm:$0xff]
      %v5392 = vld [vmem:[#allocation2 + $0x8] sm:$0xff]
      %v5393 = vld [vmem:[#allocation2 + $0x10] sm:$0xff]
      %v5394 = vld [vmem:[#allocation2 + $0x20] sm:$0xff]
      %v5395 = vld [vmem:[#allocation2 + $0x28] sm:$0xff]
      %v5396 = vld [vmem:[#allocation2 + $0x30] sm:$0xff]
      %5397 = vrot.lane.b32.xlu0 %v5237, 57
      %v5398 = vpop.permute.xlu0 %5397
      %5399 = vrot.lane.b32.xlu0 %v5238, 57
      %v5400 = vpop.permute.xlu0 %5399
      %v5401 = vsel %vm4389, %v5398, %v5400
      %v5405 = vmul.f32 %v5391, %v5398
      %v5406 = vmul.f32 %v5392, %v5401
      %v5407 = vmul.f32 %v5393, %v5400
      %v5408 = vmul.f32 %v5394, %v5398
      %v5409 = vmul.f32 %v5395, %v5401
      %v5410 = vmul.f32 %v5396, %v5400
      %5417 = vrot.lane.b32.xlu0 %v5405, 71
      %v5418 = vpop.permute.xlu0 %5417
      %5419 = vrot.lane.b32.xlu0 %v5406, 71
      %v5420 = vpop.permute.xlu0 %5419
      %5421 = vrot.lane.b32.xlu0 %v5407, 71
      %v5422 = vpop.permute.xlu0 %5421
      %5423 = vrot.lane.b32.xlu0 %v5408, 71
      %v5424 = vpop.permute.xlu0 %5423
      %5425 = vrot.lane.b32.xlu0 %v5409, 71
      %v5426 = vpop.permute.xlu0 %5425
      %5427 = vrot.lane.b32.xlu0 %v5410, 71
      %v5428 = vpop.permute.xlu0 %5427
      %v5429 = vsel %vm4360, %v5418, %v5420
      %v5430 = vsel %vm4360, %v5420, %v5422
      %v5431 = vsel %vm4360, %v5424, %v5426
      %v5432 = vsel %vm4360, %v5426, %v5428
      %5437 = vst [vmem:[%s648 + $0x120] sm:$0xff] %v5429
      %5438 = vst [vmem:[%s648 + $0x128] sm:$0xff] %v5430
      %5439 = vst [vmem:[%s648 + $0x130] sm:$0xff] %v5431
      %5440 = vst [vmem:[%s648 + $0x138] sm:$0xff] %v5432
      %v5441 = vld [vmem:[#allocation2] sm:$0xff]
      %v5442 = vld [vmem:[#allocation2 + $0x8] sm:$0xff]
      %v5443 = vld [vmem:[#allocation2 + $0x10] sm:$0xff]
      %v5444 = vld [vmem:[#allocation2 + $0x20] sm:$0xff]
      %v5445 = vld [vmem:[#allocation2 + $0x28] sm:$0xff]
      %v5446 = vld [vmem:[#allocation2 + $0x30] sm:$0xff]
      %5447 = vrot.lane.b32.xlu0 %v5237, 73
      %v5448 = vpop.permute.xlu0 %5447
      %5449 = vrot.lane.b32.xlu0 %v5238, 73
      %v5450 = vpop.permute.xlu0 %5449
      %v5451 = vsel %vm4337, %v5448, %v5450
      %v5455 = vmul.f32 %v5441, %v5448
      %v5456 = vmul.f32 %v5442, %v5451
      %v5457 = vmul.f32 %v5443, %v5450
      %v5458 = vmul.f32 %v5444, %v5448
      %v5459 = vmul.f32 %v5445, %v5451
      %v5460 = vmul.f32 %v5446, %v5450
      %5467 = vrot.lane.b32.xlu0 %v5455, 55
      %v5468 = vpop.permute.xlu0 %5467
      %5469 = vrot.lane.b32.xlu0 %v5456, 55
      %v5470 = vpop.permute.xlu0 %5469
      %5471 = vrot.lane.b32.xlu0 %v5457, 55
      %v5472 = vpop.permute.xlu0 %5471
      %5473 = vrot.lane.b32.xlu0 %v5458, 55
      %v5474 = vpop.permute.xlu0 %5473
      %5475 = vrot.lane.b32.xlu0 %v5459, 55
      %v5476 = vpop.permute.xlu0 %5475
      %5477 = vrot.lane.b32.xlu0 %v5460, 55
      %v5478 = vpop.permute.xlu0 %5477
      %v5479 = vsel %vm4308, %v5468, %v5470
      %v5480 = vsel %vm4308, %v5470, %v5472
      %v5481 = vsel %vm4308, %v5474, %v5476
      %v5482 = vsel %vm4308, %v5476, %v5478
      %5487 = vst [vmem:[%s700 + $0x120] sm:$0xff] %v5479
      %5488 = vst [vmem:[%s700 + $0x128] sm:$0xff] %v5480
      %5489 = vst [vmem:[%s700 + $0x130] sm:$0xff] %v5481
      %5490 = vst [vmem:[%s700 + $0x138] sm:$0xff] %v5482
      %v5491 = vld [vmem:[#allocation2] sm:$0xff]
      %v5492 = vld [vmem:[#allocation2 + $0x8] sm:$0xff]
      %v5493 = vld [vmem:[#allocation2 + $0x10] sm:$0xff]
      %v5494 = vld [vmem:[#allocation2 + $0x20] sm:$0xff]
      %v5495 = vld [vmem:[#allocation2 + $0x28] sm:$0xff]
      %v5496 = vld [vmem:[#allocation2 + $0x30] sm:$0xff]
      %5497 = vrot.lane.b32.xlu0 %v5237, 89
      %v5498 = vpop.permute.xlu0 %5497
      %5499 = vrot.lane.b32.xlu0 %v5238, 89
      %v5500 = vpop.permute.xlu0 %5499
      %v5501 = vsel %vm4285, %v5498, %v5500
      %v5505 = vmul.f32 %v5491, %v5498
      %v5506 = vmul.f32 %v5492, %v5501
      %v5507 = vmul.f32 %v5493, %v5500
      %v5508 = vmul.f32 %v5494, %v5498
      %v5509 = vmul.f32 %v5495, %v5501
      %v5510 = vmul.f32 %v5496, %v5500
      %5517 = vrot.lane.b32.xlu0 %v5505, 39
      %v5518 = vpop.permute.xlu0 %5517
      %5519 = vrot.lane.b32.xlu0 %v5506, 39
      %v5520 = vpop.permute.xlu0 %5519
      %5521 = vrot.lane.b32.xlu0 %v5507, 39
      %v5522 = vpop.permute.xlu0 %5521
      %5523 = vrot.lane.b32.xlu0 %v5508, 39
      %v5524 = vpop.permute.xlu0 %5523
      %5525 = vrot.lane.b32.xlu0 %v5509, 39
      %v5526 = vpop.permute.xlu0 %5525
      %5527 = vrot.lane.b32.xlu0 %v5510, 39
      %v5528 = vpop.permute.xlu0 %5527
      %v5529 = vsel %vm4256, %v5518, %v5520
      %v5530 = vsel %vm4256, %v5520, %v5522
      %v5531 = vsel %vm4256, %v5524, %v5526
      %v5532 = vsel %vm4256, %v5526, %v5528
      %5537 = vst [vmem:[%s751 + $0x120] sm:$0xff] %v5529
      %5538 = vst [vmem:[%s751 + $0x128] sm:$0xff] %v5530
      %5539 = vst [vmem:[%s751 + $0x130] sm:$0xff] %v5531
      %5540 = vst [vmem:[%s751 + $0x138] sm:$0xff] %v5532
      %v5541 = vld [vmem:[#allocation2] sm:$0xff]
      %v5542 = vld [vmem:[#allocation2 + $0x8] sm:$0xff]
      %v5543 = vld [vmem:[#allocation2 + $0x10] sm:$0xff]
      %v5544 = vld [vmem:[#allocation2 + $0x20] sm:$0xff]
      %v5545 = vld [vmem:[#allocation2 + $0x28] sm:$0xff]
      %v5546 = vld [vmem:[#allocation2 + $0x30] sm:$0xff]
      %5547 = vrot.lane.b32.xlu0 %v5237, 105
      %v5548 = vpop.permute.xlu0 %5547
      %5549 = vrot.lane.b32.xlu0 %v5238, 105
      %v5550 = vpop.permute.xlu0 %5549
      %v5551 = vsel %vm4233, %v5548, %v5550
      %v5555 = vmul.f32 %v5541, %v5548
      %v5556 = vmul.f32 %v5542, %v5551
      %v5557 = vmul.f32 %v5543, %v5550
      %v5558 = vmul.f32 %v5544, %v5548
      %v5559 = vmul.f32 %v5545, %v5551
      %v5560 = vmul.f32 %v5546, %v5550
      %5567 = vrot.lane.b32.xlu0 %v5555, 23
      %v5568 = vpop.permute.xlu0 %5567
      %5569 = vrot.lane.b32.xlu0 %v5556, 23
      %v5570 = vpop.permute.xlu0 %5569
      %5571 = vrot.lane.b32.xlu0 %v5557, 23
      %v5572 = vpop.permute.xlu0 %5571
      %5573 = vrot.lane.b32.xlu0 %v5558, 23
      %v5574 = vpop.permute.xlu0 %5573
      %5575 = vrot.lane.b32.xlu0 %v5559, 23
      %v5576 = vpop.permute.xlu0 %5575
      %5577 = vrot.lane.b32.xlu0 %v5560, 23
      %v5578 = vpop.permute.xlu0 %5577
      %v5579 = vsel %vm4204, %v5568, %v5570
      %v5580 = vsel %vm4204, %v5570, %v5572
      %v5581 = vsel %vm4204, %v5574, %v5576
      %v5582 = vsel %vm4204, %v5576, %v5578
      %5587 = vst [vmem:[%s802 + $0x120] sm:$0xff] %v5579
      %5588 = vst [vmem:[%s802 + $0x128] sm:$0xff] %v5580
      %5589 = vst [vmem:[%s802 + $0x130] sm:$0xff] %v5581
      %5590 = vst [vmem:[%s802 + $0x138] sm:$0xff] %v5582
      %v5591 = vld [vmem:[#allocation2] sm:$0xff]
      %v5592 = vld [vmem:[#allocation2 + $0x8] sm:$0xff]
      %v5593 = vld [vmem:[#allocation2 + $0x10] sm:$0xff]
      %v5594 = vld [vmem:[#allocation2 + $0x20] sm:$0xff]
      %v5595 = vld [vmem:[#allocation2 + $0x28] sm:$0xff]
      %v5596 = vld [vmem:[#allocation2 + $0x30] sm:$0xff]
      %5597 = vrot.lane.b32.xlu0 %v5237, 121
      %v5598 = vpop.permute.xlu0 %5597
      %5599 = vrot.lane.b32.xlu0 %v5238, 121
      %v5600 = vpop.permute.xlu0 %5599
      %v5601 = vsel %vm4181, %v5598, %v5600
      %v5605 = vmul.f32 %v5591, %v5598
      %v5606 = vmul.f32 %v5592, %v5601
      %v5607 = vmul.f32 %v5593, %v5600
      %v5608 = vmul.f32 %v5594, %v5598
      %v5609 = vmul.f32 %v5595, %v5601
      %v5610 = vmul.f32 %v5596, %v5600
      %5617 = vrot.lane.b32.xlu0 %v5605, 7
      %v5618 = vpop.permute.xlu0 %5617
      %5619 = vrot.lane.b32.xlu0 %v5606, 7
      %v5620 = vpop.permute.xlu0 %5619
      %5621 = vrot.lane.b32.xlu0 %v5607, 7
      %v5622 = vpop.permute.xlu0 %5621
      %5623 = vrot.lane.b32.xlu0 %v5608, 7
      %v5624 = vpop.permute.xlu0 %5623
      %5625 = vrot.lane.b32.xlu0 %v5609, 7
      %v5626 = vpop.permute.xlu0 %5625
      %5627 = vrot.lane.b32.xlu0 %v5610, 7
      %v5628 = vpop.permute.xlu0 %5627
      %v5629 = vsel %vm4152, %v5618, %v5620
      %v5630 = vsel %vm4152, %v5620, %v5622
      %v5631 = vsel %vm4152, %v5624, %v5626
      %v5632 = vsel %vm4152, %v5626, %v5628
      %5637 = vst [vmem:[%s853 + $0x120] sm:$0xff] %v5629
      %5638 = vst [vmem:[%s853 + $0x128] sm:$0xff] %v5630
      %5639 = vst [vmem:[%s853 + $0x130] sm:$0xff] %v5631
      %5640 = vst [vmem:[%s853 + $0x138] sm:$0xff] %v5632
      %v5641 = vld [vmem:[#allocation2 + $0x8] sm:$0xff]
      %v5642 = vld [vmem:[#allocation2 + $0x10] sm:$0xff]
      %v5643 = vld [vmem:[#allocation2 + $0x18] sm:$0xff]
      %v5644 = vld [vmem:[#allocation2 + $0x28] sm:$0xff]
      %v5645 = vld [vmem:[#allocation2 + $0x30] sm:$0xff]
      %v5646 = vld [vmem:[#allocation2 + $0x38] sm:$0xff]
      %v5647 = vmul.f32 %v5641, %v5248
      %v5648 = vmul.f32 %v5642, %v5251
      %v5649 = vmul.f32 %v5643, %v5250
      %v5650 = vmul.f32 %v5644, %v5248
      %v5651 = vmul.f32 %v5645, %v5251
      %v5652 = vmul.f32 %v5646, %v5250
      %5659 = vrot.lane.b32.xlu0 %v5647, 119
      %v5660 = vpop.permute.xlu0 %5659
      %5661 = vrot.lane.b32.xlu0 %v5648, 119
      %v5662 = vpop.permute.xlu0 %5661
      %5663 = vrot.lane.b32.xlu0 %v5649, 119
      %v5664 = vpop.permute.xlu0 %5663
      %5665 = vrot.lane.b32.xlu0 %v5650, 119
      %v5666 = vpop.permute.xlu0 %5665
      %5667 = vrot.lane.b32.xlu0 %v5651, 119
      %v5668 = vpop.permute.xlu0 %5667
      %5669 = vrot.lane.b32.xlu0 %v5652, 119
      %v5670 = vpop.permute.xlu0 %5669
      %v5671 = vsel %vm4516, %v5660, %v5662
      %v5672 = vsel %vm4516, %v5662, %v5664
      %v5673 = vsel %vm4516, %v5666, %v5668
      %v5674 = vsel %vm4516, %v5668, %v5670
      %5679 = vst [vmem:[%s866 + $0x120] sm:$0xff] %v5671
      %5680 = vst [vmem:[%s866 + $0x128] sm:$0xff] %v5672
      %5681 = vst [vmem:[%s866 + $0x130] sm:$0xff] %v5673
      %5682 = vst [vmem:[%s866 + $0x138] sm:$0xff] %v5674
      %v5683 = vld [vmem:[#allocation2 + $0x8] sm:$0xff]
      %v5684 = vld [vmem:[#allocation2 + $0x10] sm:$0xff]
      %v5685 = vld [vmem:[#allocation2 + $0x18] sm:$0xff]
      %v5686 = vld [vmem:[#allocation2 + $0x28] sm:$0xff]
      %v5687 = vld [vmem:[#allocation2 + $0x30] sm:$0xff]
      %v5688 = vld [vmem:[#allocation2 + $0x38] sm:$0xff]
      %v5689 = vmul.f32 %v5683, %v5298
      %v5690 = vmul.f32 %v5684, %v5301
      %v5691 = vmul.f32 %v5685, %v5300
      %v5692 = vmul.f32 %v5686, %v5298
      %v5693 = vmul.f32 %v5687, %v5301
      %v5694 = vmul.f32 %v5688, %v5300
      %5701 = vrot.lane.b32.xlu0 %v5689, 103
      %v5702 = vpop.permute.xlu0 %5701
      %5703 = vrot.lane.b32.xlu0 %v5690, 103
      %v5704 = vpop.permute.xlu0 %5703
      %5705 = vrot.lane.b32.xlu0 %v5691, 103
      %v5706 = vpop.permute.xlu0 %5705
      %5707 = vrot.lane.b32.xlu0 %v5692, 103
      %v5708 = vpop.permute.xlu0 %5707
      %5709 = vrot.lane.b32.xlu0 %v5693, 103
      %v5710 = vpop.permute.xlu0 %5709
      %5711 = vrot.lane.b32.xlu0 %v5694, 103
      %v5712 = vpop.permute.xlu0 %5711
      %v5713 = vsel %vm4464, %v5702, %v5704
      %v5714 = vsel %vm4464, %v5704, %v5706
      %v5715 = vsel %vm4464, %v5708, %v5710
      %v5716 = vsel %vm4464, %v5710, %v5712
      %5721 = vst [vmem:[%s909 + $0x120] sm:$0xff] %v5713
      %5722 = vst [vmem:[%s909 + $0x128] sm:$0xff] %v5714
      %5723 = vst [vmem:[%s909 + $0x130] sm:$0xff] %v5715
      %5724 = vst [vmem:[%s909 + $0x138] sm:$0xff] %v5716
      %v5725 = vld [vmem:[#allocation2 + $0x8] sm:$0xff]
      %v5726 = vld [vmem:[#allocation2 + $0x10] sm:$0xff]
      %v5727 = vld [vmem:[#allocation2 + $0x18] sm:$0xff]
      %v5728 = vld [vmem:[#allocation2 + $0x28] sm:$0xff]
      %v5729 = vld [vmem:[#allocation2 + $0x30] sm:$0xff]
      %v5730 = vld [vmem:[#allocation2 + $0x38] sm:$0xff]
      %v5731 = vmul.f32 %v5725, %v5348
      %v5732 = vmul.f32 %v5726, %v5351
      %v5733 = vmul.f32 %v5727, %v5350
      %v5734 = vmul.f32 %v5728, %v5348
      %v5735 = vmul.f32 %v5729, %v5351
      %v5736 = vmul.f32 %v5730, %v5350
      %5743 = vrot.lane.b32.xlu0 %v5731, 87
      %v5744 = vpop.permute.xlu0 %5743
      %5745 = vrot.lane.b32.xlu0 %v5732, 87
      %v5746 = vpop.permute.xlu0 %5745
      %5747 = vrot.lane.b32.xlu0 %v5733, 87
      %v5748 = vpop.permute.xlu0 %5747
      %5749 = vrot.lane.b32.xlu0 %v5734, 87
      %v5750 = vpop.permute.xlu0 %5749
      %5751 = vrot.lane.b32.xlu0 %v5735, 87
      %v5752 = vpop.permute.xlu0 %5751
      %5753 = vrot.lane.b32.xlu0 %v5736, 87
      %v5754 = vpop.permute.xlu0 %5753
      %v5755 = vsel %vm4412, %v5744, %v5746
      %v5756 = vsel %vm4412, %v5746, %v5748
      %v5757 = vsel %vm4412, %v5750, %v5752
      %v5758 = vsel %vm4412, %v5752, %v5754
      %5763 = vst [vmem:[%s952 + $0x120] sm:$0xff] %v5755
      %5764 = vst [vmem:[%s952 + $0x128] sm:$0xff] %v5756
      %5765 = vst [vmem:[%s952 + $0x130] sm:$0xff] %v5757
      %5766 = vst [vmem:[%s952 + $0x138] sm:$0xff] %v5758
      %vm5767 = vcmp.ge.s32.totalorder %v468, 4294967291
      %vm5768 = vcmp.ge.s32.totalorder %v469, 4294967291
      %vm5769 = vcmp.lt.s32.totalorder %v468, 11
      %vm5770 = vcmp.lt.s32.totalorder %v469, 11
      %vm5771 = vmand %vm5767, %vm5769
      %vm5772 = vmand %vm5768, %vm5770
      %v5773 = vsel %vm5771, 1, 0
      %v5774 = vsel %vm5772, 1, 0
      %v5775 = vcvt.s32.f32 %v5773
      %v5776 = vcvt.s32.f32 %v5774
      %v5777 = vld [vmem:[#allocation2] sm:$0xff]
      %v5778 = vld [vmem:[#allocation2 + $0x8] sm:$0xff]
      %v5779 = vld [vmem:[#allocation2 + $0x10] sm:$0xff]
      %v5780 = vld [vmem:[#allocation2 + $0x20] sm:$0xff]
      %v5781 = vld [vmem:[#allocation2 + $0x28] sm:$0xff]
      %v5782 = vld [vmem:[#allocation2 + $0x30] sm:$0xff]
      %5785 = vrot.lane.b32.xlu0 %v5775, 10
      %v5786 = vpop.permute.xlu0 %5785
      %5787 = vrot.lane.b32.xlu0 %v5776, 10
      %v5788 = vpop.permute.xlu0 %5787
      %v5789 = vsel %vm3991, %v5786, %v5788
      %v5793 = vmul.f32 %v5777, %v5786
      %v5794 = vmul.f32 %v5778, %v5789
      %v5795 = vmul.f32 %v5779, %v5788
      %v5796 = vmul.f32 %v5780, %v5786
      %v5797 = vmul.f32 %v5781, %v5789
      %v5798 = vmul.f32 %v5782, %v5788
      %5805 = vrot.lane.b32.xlu0 %v5793, 118
      %v5806 = vpop.permute.xlu0 %5805
      %5807 = vrot.lane.b32.xlu0 %v5794, 118
      %v5808 = vpop.permute.xlu0 %5807
      %5809 = vrot.lane.b32.xlu0 %v5795, 118
      %v5810 = vpop.permute.xlu0 %5809
      %5811 = vrot.lane.b32.xlu0 %v5796, 118
      %v5812 = vpop.permute.xlu0 %5811
      %5813 = vrot.lane.b32.xlu0 %v5797, 118
      %v5814 = vpop.permute.xlu0 %5813
      %5815 = vrot.lane.b32.xlu0 %v5798, 118
      %v5816 = vpop.permute.xlu0 %5815
      %v5817 = vsel %vm3962, %v5806, %v5808
      %v5818 = vsel %vm3962, %v5808, %v5810
      %v5819 = vsel %vm3962, %v5812, %v5814
      %v5820 = vsel %vm3962, %v5814, %v5816
      %5825 = vst [vmem:[#allocation3 + $0x140] sm:$0xff] %v5817
      %5826 = vst [vmem:[#allocation3 + $0x148] sm:$0xff] %v5818
      %5827 = vst [vmem:[#allocation3 + $0x150] sm:$0xff] %v5819
      %5828 = vst [vmem:[#allocation3 + $0x158] sm:$0xff] %v5820
      %v5829 = vld [vmem:[#allocation2] sm:$0xff]
      %v5830 = vld [vmem:[#allocation2 + $0x8] sm:$0xff]
      %v5831 = vld [vmem:[#allocation2 + $0x10] sm:$0xff]
      %v5832 = vld [vmem:[#allocation2 + $0x20] sm:$0xff]
      %v5833 = vld [vmem:[#allocation2 + $0x28] sm:$0xff]
      %v5834 = vld [vmem:[#allocation2 + $0x30] sm:$0xff]
      %5835 = vrot.lane.b32.xlu0 %v5775, 26
      %v5836 = vpop.permute.xlu0 %5835
      %5837 = vrot.lane.b32.xlu0 %v5776, 26
      %v5838 = vpop.permute.xlu0 %5837
      %v5839 = vsel %vm3939, %v5836, %v5838
      %v5843 = vmul.f32 %v5829, %v5836
      %v5844 = vmul.f32 %v5830, %v5839
      %v5845 = vmul.f32 %v5831, %v5838
      %v5846 = vmul.f32 %v5832, %v5836
      %v5847 = vmul.f32 %v5833, %v5839
      %v5848 = vmul.f32 %v5834, %v5838
      %5855 = vrot.lane.b32.xlu0 %v5843, 102
      %v5856 = vpop.permute.xlu0 %5855
      %5857 = vrot.lane.b32.xlu0 %v5844, 102
      %v5858 = vpop.permute.xlu0 %5857
      %5859 = vrot.lane.b32.xlu0 %v5845, 102
      %v5860 = vpop.permute.xlu0 %5859
      %5861 = vrot.lane.b32.xlu0 %v5846, 102
      %v5862 = vpop.permute.xlu0 %5861
      %5863 = vrot.lane.b32.xlu0 %v5847, 102
      %v5864 = vpop.permute.xlu0 %5863
      %5865 = vrot.lane.b32.xlu0 %v5848, 102
      %v5866 = vpop.permute.xlu0 %5865
      %v5867 = vsel %vm3910, %v5856, %v5858
      %v5868 = vsel %vm3910, %v5858, %v5860
      %v5869 = vsel %vm3910, %v5862, %v5864
      %v5870 = vsel %vm3910, %v5864, %v5866
      %5875 = vst [vmem:[%s542 + $0x140] sm:$0xff] %v5867
      %5876 = vst [vmem:[%s542 + $0x148] sm:$0xff] %v5868
      %5877 = vst [vmem:[%s542 + $0x150] sm:$0xff] %v5869
      %5878 = vst [vmem:[%s542 + $0x158] sm:$0xff] %v5870
      %v5879 = vld [vmem:[#allocation2] sm:$0xff]
      %v5880 = vld [vmem:[#allocation2 + $0x8] sm:$0xff]
      %v5881 = vld [vmem:[#allocation2 + $0x10] sm:$0xff]
      %v5882 = vld [vmem:[#allocation2 + $0x20] sm:$0xff]
      %v5883 = vld [vmem:[#allocation2 + $0x28] sm:$0xff]
      %v5884 = vld [vmem:[#allocation2 + $0x30] sm:$0xff]
      %5885 = vrot.lane.b32.xlu0 %v5775, 42
      %v5886 = vpop.permute.xlu0 %5885
      %5887 = vrot.lane.b32.xlu0 %v5776, 42
      %v5888 = vpop.permute.xlu0 %5887
      %v5889 = vsel %vm409, %v5886, %v5888
      %v5893 = vmul.f32 %v5879, %v5886
      %v5894 = vmul.f32 %v5880, %v5889
      %v5895 = vmul.f32 %v5881, %v5888
      %v5896 = vmul.f32 %v5882, %v5886
      %v5897 = vmul.f32 %v5883, %v5889
      %v5898 = vmul.f32 %v5884, %v5888
      %5905 = vrot.lane.b32.xlu0 %v5893, 86
      %v5906 = vpop.permute.xlu0 %5905
      %5907 = vrot.lane.b32.xlu0 %v5894, 86
      %v5908 = vpop.permute.xlu0 %5907
      %5909 = vrot.lane.b32.xlu0 %v5895, 86
      %v5910 = vpop.permute.xlu0 %5909
      %5911 = vrot.lane.b32.xlu0 %v5896, 86
      %v5912 = vpop.permute.xlu0 %5911
      %5913 = vrot.lane.b32.xlu0 %v5897, 86
      %v5914 = vpop.permute.xlu0 %5913
      %5915 = vrot.lane.b32.xlu0 %v5898, 86
      %v5916 = vpop.permute.xlu0 %5915
      %v5917 = vsel %vm3859, %v5906, %v5908
      %v5918 = vsel %vm3859, %v5908, %v5910
      %v5919 = vsel %vm3859, %v5912, %v5914
      %v5920 = vsel %vm3859, %v5914, %v5916
      %5925 = vst [vmem:[%s595 + $0x140] sm:$0xff] %v5917
      %5926 = vst [vmem:[%s595 + $0x148] sm:$0xff] %v5918
      %5927 = vst [vmem:[%s595 + $0x150] sm:$0xff] %v5919
      %5928 = vst [vmem:[%s595 + $0x158] sm:$0xff] %v5920
      %v5929 = vld [vmem:[#allocation2] sm:$0xff]
      %v5930 = vld [vmem:[#allocation2 + $0x8] sm:$0xff]
      %v5931 = vld [vmem:[#allocation2 + $0x10] sm:$0xff]
      %v5932 = vld [vmem:[#allocation2 + $0x20] sm:$0xff]
      %v5933 = vld [vmem:[#allocation2 + $0x28] sm:$0xff]
      %v5934 = vld [vmem:[#allocation2 + $0x30] sm:$0xff]
      %5935 = vrot.lane.b32.xlu0 %v5775, 58
      %v5936 = vpop.permute.xlu0 %5935
      %5937 = vrot.lane.b32.xlu0 %v5776, 58
      %v5938 = vpop.permute.xlu0 %5937
      %v5939 = vsel %vm3836, %v5936, %v5938
      %v5943 = vmul.f32 %v5929, %v5936
      %v5944 = vmul.f32 %v5930, %v5939
      %v5945 = vmul.f32 %v5931, %v5938
      %v5946 = vmul.f32 %v5932, %v5936
      %v5947 = vmul.f32 %v5933, %v5939
      %v5948 = vmul.f32 %v5934, %v5938
      %5955 = vrot.lane.b32.xlu0 %v5943, 70
      %v5956 = vpop.permute.xlu0 %5955
      %5957 = vrot.lane.b32.xlu0 %v5944, 70
      %v5958 = vpop.permute.xlu0 %5957
      %5959 = vrot.lane.b32.xlu0 %v5945, 70
      %v5960 = vpop.permute.xlu0 %5959
      %5961 = vrot.lane.b32.xlu0 %v5946, 70
      %v5962 = vpop.permute.xlu0 %5961
      %5963 = vrot.lane.b32.xlu0 %v5947, 70
      %v5964 = vpop.permute.xlu0 %5963
      %5965 = vrot.lane.b32.xlu0 %v5948, 70
      %v5966 = vpop.permute.xlu0 %5965
      %v5967 = vsel %vm3807, %v5956, %v5958
      %v5968 = vsel %vm3807, %v5958, %v5960
      %v5969 = vsel %vm3807, %v5962, %v5964
      %v5970 = vsel %vm3807, %v5964, %v5966
      %5975 = vst [vmem:[%s648 + $0x140] sm:$0xff] %v5967
      %5976 = vst [vmem:[%s648 + $0x148] sm:$0xff] %v5968
      %5977 = vst [vmem:[%s648 + $0x150] sm:$0xff] %v5969
      %5978 = vst [vmem:[%s648 + $0x158] sm:$0xff] %v5970
      %v5979 = vld [vmem:[#allocation2] sm:$0xff]
      %v5980 = vld [vmem:[#allocation2 + $0x8] sm:$0xff]
      %v5981 = vld [vmem:[#allocation2 + $0x10] sm:$0xff]
      %v5982 = vld [vmem:[#allocation2 + $0x20] sm:$0xff]
      %v5983 = vld [vmem:[#allocation2 + $0x28] sm:$0xff]
      %v5984 = vld [vmem:[#allocation2 + $0x30] sm:$0xff]
      %5985 = vrot.lane.b32.xlu0 %v5775, 74
      %v5986 = vpop.permute.xlu0 %5985
      %5987 = vrot.lane.b32.xlu0 %v5776, 74
      %v5988 = vpop.permute.xlu0 %5987
      %v5989 = vsel %vm3784, %v5986, %v5988
      %v5993 = vmul.f32 %v5979, %v5986
      %v5994 = vmul.f32 %v5980, %v5989
      %v5995 = vmul.f32 %v5981, %v5988
      %v5996 = vmul.f32 %v5982, %v5986
      %v5997 = vmul.f32 %v5983, %v5989
      %v5998 = vmul.f32 %v5984, %v5988
      %6005 = vrot.lane.b32.xlu0 %v5993, 54
      %v6006 = vpop.permute.xlu0 %6005
      %6007 = vrot.lane.b32.xlu0 %v5994, 54
      %v6008 = vpop.permute.xlu0 %6007
      %6009 = vrot.lane.b32.xlu0 %v5995, 54
      %v6010 = vpop.permute.xlu0 %6009
      %6011 = vrot.lane.b32.xlu0 %v5996, 54
      %v6012 = vpop.permute.xlu0 %6011
      %6013 = vrot.lane.b32.xlu0 %v5997, 54
      %v6014 = vpop.permute.xlu0 %6013
      %6015 = vrot.lane.b32.xlu0 %v5998, 54
      %v6016 = vpop.permute.xlu0 %6015
      %v6017 = vsel %vm3755, %v6006, %v6008
      %v6018 = vsel %vm3755, %v6008, %v6010
      %v6019 = vsel %vm3755, %v6012, %v6014
      %v6020 = vsel %vm3755, %v6014, %v6016
      %6025 = vst [vmem:[%s700 + $0x140] sm:$0xff] %v6017
      %6026 = vst [vmem:[%s700 + $0x148] sm:$0xff] %v6018
      %6027 = vst [vmem:[%s700 + $0x150] sm:$0xff] %v6019
      %6028 = vst [vmem:[%s700 + $0x158] sm:$0xff] %v6020
      %v6029 = vld [vmem:[#allocation2] sm:$0xff]
      %v6030 = vld [vmem:[#allocation2 + $0x8] sm:$0xff]
      %v6031 = vld [vmem:[#allocation2 + $0x10] sm:$0xff]
      %v6032 = vld [vmem:[#allocation2 + $0x20] sm:$0xff]
      %v6033 = vld [vmem:[#allocation2 + $0x28] sm:$0xff]
      %v6034 = vld [vmem:[#allocation2 + $0x30] sm:$0xff]
      %6035 = vrot.lane.b32.xlu0 %v5775, 90
      %v6036 = vpop.permute.xlu0 %6035
      %6037 = vrot.lane.b32.xlu0 %v5776, 90
      %v6038 = vpop.permute.xlu0 %6037
      %v6039 = vsel %vm3732, %v6036, %v6038
      %v6043 = vmul.f32 %v6029, %v6036
      %v6044 = vmul.f32 %v6030, %v6039
      %v6045 = vmul.f32 %v6031, %v6038
      %v6046 = vmul.f32 %v6032, %v6036
      %v6047 = vmul.f32 %v6033, %v6039
      %v6048 = vmul.f32 %v6034, %v6038
      %6055 = vrot.lane.b32.xlu0 %v6043, 38
      %v6056 = vpop.permute.xlu0 %6055
      %6057 = vrot.lane.b32.xlu0 %v6044, 38
      %v6058 = vpop.permute.xlu0 %6057
      %6059 = vrot.lane.b32.xlu0 %v6045, 38
      %v6060 = vpop.permute.xlu0 %6059
      %6061 = vrot.lane.b32.xlu0 %v6046, 38
      %v6062 = vpop.permute.xlu0 %6061
      %6063 = vrot.lane.b32.xlu0 %v6047, 38
      %v6064 = vpop.permute.xlu0 %6063
      %6065 = vrot.lane.b32.xlu0 %v6048, 38
      %v6066 = vpop.permute.xlu0 %6065
      %v6067 = vsel %vm3703, %v6056, %v6058
      %v6068 = vsel %vm3703, %v6058, %v6060
      %v6069 = vsel %vm3703, %v6062, %v6064
      %v6070 = vsel %vm3703, %v6064, %v6066
      %6075 = vst [vmem:[%s751 + $0x140] sm:$0xff] %v6067
      %6076 = vst [vmem:[%s751 + $0x148] sm:$0xff] %v6068
      %6077 = vst [vmem:[%s751 + $0x150] sm:$0xff] %v6069
      %6078 = vst [vmem:[%s751 + $0x158] sm:$0xff] %v6070
      %v6079 = vld [vmem:[#allocation2] sm:$0xff]
      %v6080 = vld [vmem:[#allocation2 + $0x8] sm:$0xff]
      %v6081 = vld [vmem:[#allocation2 + $0x10] sm:$0xff]
      %v6082 = vld [vmem:[#allocation2 + $0x20] sm:$0xff]
      %v6083 = vld [vmem:[#allocation2 + $0x28] sm:$0xff]
      %v6084 = vld [vmem:[#allocation2 + $0x30] sm:$0xff]
      %6085 = vrot.lane.b32.xlu0 %v5775, 106
      %v6086 = vpop.permute.xlu0 %6085
      %6087 = vrot.lane.b32.xlu0 %v5776, 106
      %v6088 = vpop.permute.xlu0 %6087
      %v6089 = vsel %vm3680, %v6086, %v6088
      %v6093 = vmul.f32 %v6079, %v6086
      %v6094 = vmul.f32 %v6080, %v6089
      %v6095 = vmul.f32 %v6081, %v6088
      %v6096 = vmul.f32 %v6082, %v6086
      %v6097 = vmul.f32 %v6083, %v6089
      %v6098 = vmul.f32 %v6084, %v6088
      %6105 = vrot.lane.b32.xlu0 %v6093, 22
      %v6106 = vpop.permute.xlu0 %6105
      %6107 = vrot.lane.b32.xlu0 %v6094, 22
      %v6108 = vpop.permute.xlu0 %6107
      %6109 = vrot.lane.b32.xlu0 %v6095, 22
      %v6110 = vpop.permute.xlu0 %6109
      %6111 = vrot.lane.b32.xlu0 %v6096, 22
      %v6112 = vpop.permute.xlu0 %6111
      %6113 = vrot.lane.b32.xlu0 %v6097, 22
      %v6114 = vpop.permute.xlu0 %6113
      %6115 = vrot.lane.b32.xlu0 %v6098, 22
      %v6116 = vpop.permute.xlu0 %6115
      %v6117 = vsel %vm3651, %v6106, %v6108
      %v6118 = vsel %vm3651, %v6108, %v6110
      %v6119 = vsel %vm3651, %v6112, %v6114
      %v6120 = vsel %vm3651, %v6114, %v6116
      %6125 = vst [vmem:[%s802 + $0x140] sm:$0xff] %v6117
      %6126 = vst [vmem:[%s802 + $0x148] sm:$0xff] %v6118
      %6127 = vst [vmem:[%s802 + $0x150] sm:$0xff] %v6119
      %6128 = vst [vmem:[%s802 + $0x158] sm:$0xff] %v6120
      %v6129 = vld [vmem:[#allocation2] sm:$0xff]
      %v6130 = vld [vmem:[#allocation2 + $0x8] sm:$0xff]
      %v6131 = vld [vmem:[#allocation2 + $0x10] sm:$0xff]
      %v6132 = vld [vmem:[#allocation2 + $0x20] sm:$0xff]
      %v6133 = vld [vmem:[#allocation2 + $0x28] sm:$0xff]
      %v6134 = vld [vmem:[#allocation2 + $0x30] sm:$0xff]
      %6135 = vrot.lane.b32.xlu0 %v5775, 122
      %v6136 = vpop.permute.xlu0 %6135
      %6137 = vrot.lane.b32.xlu0 %v5776, 122
      %v6138 = vpop.permute.xlu0 %6137
      %v6139 = vsel %vm3628, %v6136, %v6138
      %v6143 = vmul.f32 %v6129, %v6136
      %v6144 = vmul.f32 %v6130, %v6139
      %v6145 = vmul.f32 %v6131, %v6138
      %v6146 = vmul.f32 %v6132, %v6136
      %v6147 = vmul.f32 %v6133, %v6139
      %v6148 = vmul.f32 %v6134, %v6138
      %6155 = vrot.lane.b32.xlu0 %v6143, 6
      %v6156 = vpop.permute.xlu0 %6155
      %6157 = vrot.lane.b32.xlu0 %v6144, 6
      %v6158 = vpop.permute.xlu0 %6157
      %6159 = vrot.lane.b32.xlu0 %v6145, 6
      %v6160 = vpop.permute.xlu0 %6159
      %6161 = vrot.lane.b32.xlu0 %v6146, 6
      %v6162 = vpop.permute.xlu0 %6161
      %6163 = vrot.lane.b32.xlu0 %v6147, 6
      %v6164 = vpop.permute.xlu0 %6163
      %6165 = vrot.lane.b32.xlu0 %v6148, 6
      %v6166 = vpop.permute.xlu0 %6165
      %v6167 = vsel %vm3599, %v6156, %v6158
      %v6168 = vsel %vm3599, %v6158, %v6160
      %v6169 = vsel %vm3599, %v6162, %v6164
      %v6170 = vsel %vm3599, %v6164, %v6166
      %6175 = vst [vmem:[%s853 + $0x140] sm:$0xff] %v6167
      %6176 = vst [vmem:[%s853 + $0x148] sm:$0xff] %v6168
      %6177 = vst [vmem:[%s853 + $0x150] sm:$0xff] %v6169
      %6178 = vst [vmem:[%s853 + $0x158] sm:$0xff] %v6170
      %v6179 = vld [vmem:[#allocation2 + $0x8] sm:$0xff]
      %v6180 = vld [vmem:[#allocation2 + $0x10] sm:$0xff]
      %v6181 = vld [vmem:[#allocation2 + $0x18] sm:$0xff]
      %v6182 = vld [vmem:[#allocation2 + $0x28] sm:$0xff]
      %v6183 = vld [vmem:[#allocation2 + $0x30] sm:$0xff]
      %v6184 = vld [vmem:[#allocation2 + $0x38] sm:$0xff]
      %v6185 = vmul.f32 %v6179, %v5786
      %v6186 = vmul.f32 %v6180, %v5789
      %v6187 = vmul.f32 %v6181, %v5788
      %v6188 = vmul.f32 %v6182, %v5786
      %v6189 = vmul.f32 %v6183, %v5789
      %v6190 = vmul.f32 %v6184, %v5788
      %6197 = vrot.lane.b32.xlu0 %v6185, 118
      %v6198 = vpop.permute.xlu0 %6197
      %6199 = vrot.lane.b32.xlu0 %v6186, 118
      %v6200 = vpop.permute.xlu0 %6199
      %6201 = vrot.lane.b32.xlu0 %v6187, 118
      %v6202 = vpop.permute.xlu0 %6201
      %6203 = vrot.lane.b32.xlu0 %v6188, 118
      %v6204 = vpop.permute.xlu0 %6203
      %6205 = vrot.lane.b32.xlu0 %v6189, 118
      %v6206 = vpop.permute.xlu0 %6205
      %6207 = vrot.lane.b32.xlu0 %v6190, 118
      %v6208 = vpop.permute.xlu0 %6207
      %v6209 = vsel %vm3962, %v6198, %v6200
      %v6210 = vsel %vm3962, %v6200, %v6202
      %v6211 = vsel %vm3962, %v6204, %v6206
      %v6212 = vsel %vm3962, %v6206, %v6208
      %6217 = vst [vmem:[%s866 + $0x140] sm:$0xff] %v6209
      %6218 = vst [vmem:[%s866 + $0x148] sm:$0xff] %v6210
      %6219 = vst [vmem:[%s866 + $0x150] sm:$0xff] %v6211
      %6220 = vst [vmem:[%s866 + $0x158] sm:$0xff] %v6212
      %v6221 = vld [vmem:[#allocation2 + $0x8] sm:$0xff]
      %v6222 = vld [vmem:[#allocation2 + $0x10] sm:$0xff]
      %v6223 = vld [vmem:[#allocation2 + $0x18] sm:$0xff]
      %v6224 = vld [vmem:[#allocation2 + $0x28] sm:$0xff]
      %v6225 = vld [vmem:[#allocation2 + $0x30] sm:$0xff]
      %v6226 = vld [vmem:[#allocation2 + $0x38] sm:$0xff]
      %v6227 = vmul.f32 %v6221, %v5836
      %v6228 = vmul.f32 %v6222, %v5839
      %v6229 = vmul.f32 %v6223, %v5838
      %v6230 = vmul.f32 %v6224, %v5836
      %v6231 = vmul.f32 %v6225, %v5839
      %v6232 = vmul.f32 %v6226, %v5838
      %6239 = vrot.lane.b32.xlu0 %v6227, 102
      %v6240 = vpop.permute.xlu0 %6239
      %6241 = vrot.lane.b32.xlu0 %v6228, 102
      %v6242 = vpop.permute.xlu0 %6241
      %6243 = vrot.lane.b32.xlu0 %v6229, 102
      %v6244 = vpop.permute.xlu0 %6243
      %6245 = vrot.lane.b32.xlu0 %v6230, 102
      %v6246 = vpop.permute.xlu0 %6245
      %6247 = vrot.lane.b32.xlu0 %v6231, 102
      %v6248 = vpop.permute.xlu0 %6247
      %6249 = vrot.lane.b32.xlu0 %v6232, 102
      %v6250 = vpop.permute.xlu0 %6249
      %v6251 = vsel %vm3910, %v6240, %v6242
      %v6252 = vsel %vm3910, %v6242, %v6244
      %v6253 = vsel %vm3910, %v6246, %v6248
      %v6254 = vsel %vm3910, %v6248, %v6250
      %6259 = vst [vmem:[%s909 + $0x140] sm:$0xff] %v6251
      %6260 = vst [vmem:[%s909 + $0x148] sm:$0xff] %v6252
      %6261 = vst [vmem:[%s909 + $0x150] sm:$0xff] %v6253
      %6262 = vst [vmem:[%s909 + $0x158] sm:$0xff] %v6254
      %v6263 = vld [vmem:[#allocation2 + $0x8] sm:$0xff]
      %v6264 = vld [vmem:[#allocation2 + $0x10] sm:$0xff]
      %v6265 = vld [vmem:[#allocation2 + $0x18] sm:$0xff]
      %v6266 = vld [vmem:[#allocation2 + $0x28] sm:$0xff]
      %v6267 = vld [vmem:[#allocation2 + $0x30] sm:$0xff]
      %v6268 = vld [vmem:[#allocation2 + $0x38] sm:$0xff]
      %v6269 = vmul.f32 %v6263, %v5886
      %v6270 = vmul.f32 %v6264, %v5889
      %v6271 = vmul.f32 %v6265, %v5888
      %v6272 = vmul.f32 %v6266, %v5886
      %v6273 = vmul.f32 %v6267, %v5889
      %v6274 = vmul.f32 %v6268, %v5888
      %6281 = vrot.lane.b32.xlu0 %v6269, 86
      %v6282 = vpop.permute.xlu0 %6281
      %6283 = vrot.lane.b32.xlu0 %v6270, 86
      %v6284 = vpop.permute.xlu0 %6283
      %6285 = vrot.lane.b32.xlu0 %v6271, 86
      %v6286 = vpop.permute.xlu0 %6285
      %6287 = vrot.lane.b32.xlu0 %v6272, 86
      %v6288 = vpop.permute.xlu0 %6287
      %6289 = vrot.lane.b32.xlu0 %v6273, 86
      %v6290 = vpop.permute.xlu0 %6289
      %6291 = vrot.lane.b32.xlu0 %v6274, 86
      %v6292 = vpop.permute.xlu0 %6291
      %v6293 = vsel %vm3859, %v6282, %v6284
      %v6294 = vsel %vm3859, %v6284, %v6286
      %v6295 = vsel %vm3859, %v6288, %v6290
      %v6296 = vsel %vm3859, %v6290, %v6292
      %6301 = vst [vmem:[%s952 + $0x140] sm:$0xff] %v6293
      %6302 = vst [vmem:[%s952 + $0x148] sm:$0xff] %v6294
      %6303 = vst [vmem:[%s952 + $0x150] sm:$0xff] %v6295
      %6304 = vst [vmem:[%s952 + $0x158] sm:$0xff] %v6296
      %v6305 = vld [vmem:[%s3] sm:$0xff]
      %v6306 = vld [vmem:[%s3 + $0x8] sm:$0xff]
      %v6307 = vld [vmem:[%s3 + $0x10] sm:$0xff]
      %v6308 = vld [vmem:[%s3 + $0x18] sm:$0xff]
      %v6309 = vld [vmem:[%s3 + $0x20] sm:$0xff]
      %v6310 = vld [vmem:[%s3 + $0x28] sm:$0xff]
      %v6311 = vld [vmem:[%s3 + $0x30] sm:$0xff]
      %v6312 = vld [vmem:[%s3 + $0x38] sm:$0xff]
      %v6313 = vld [vmem:[%s3 + $0x40] sm:$0xff]
      %v6314 = vld [vmem:[%s3 + $0x48] sm:$0xff]
      %v6315 = vld [vmem:[%s3 + $0x50] sm:$0xff]
      %v6316 = vld [vmem:[%s3 + $0x58] sm:$0xff]
      %v6317 = vld [vmem:[%s3 + $0x60] sm:$0xff]
      %v6318 = vld [vmem:[%s3 + $0x68] sm:$0xff]
      %v6319 = vld [vmem:[%s3 + $0x70] sm:$0xff]
      %v6320 = vld [vmem:[%s3 + $0x78] sm:$0xff]
      %v6321 = vld [vmem:[#allocation3] sm:$0xff]
      %v6322 = vld [vmem:[#allocation3 + $0x8] sm:$0xff]
      %v6323 = vld [vmem:[#allocation3 + $0x10] sm:$0xff]
      %v6324 = vld [vmem:[#allocation3 + $0x18] sm:$0xff]
      %v6325 = vld [vmem:[#allocation3 + $0x20] sm:$0xff]
      %v6326 = vld [vmem:[#allocation3 + $0x28] sm:$0xff]
      %v6327 = vld [vmem:[#allocation3 + $0x30] sm:$0xff]
      %v6328 = vld [vmem:[#allocation3 + $0x38] sm:$0xff]
      %v6329 = vld [vmem:[#allocation3 + $0x40] sm:$0xff]
      %v6330 = vld [vmem:[#allocation3 + $0x48] sm:$0xff]
      %v6331 = vld [vmem:[#allocation3 + $0x50] sm:$0xff]
      %v6332 = vld [vmem:[#allocation3 + $0x58] sm:$0xff]
      %v6333 = vld [vmem:[#allocation3 + $0x60] sm:$0xff]
      %v6334 = vld [vmem:[#allocation3 + $0x68] sm:$0xff]
      %v6335 = vld [vmem:[#allocation3 + $0x70] sm:$0xff]
      %v6336 = vld [vmem:[#allocation3 + $0x78] sm:$0xff]
      %v6337 = vld [vmem:[#allocation3 + $0x80] sm:$0xff]
      %v6338 = vld [vmem:[#allocation3 + $0x88] sm:$0xff]
      %v6339 = vld [vmem:[#allocation3 + $0x90] sm:$0xff]
      %v6340 = vld [vmem:[#allocation3 + $0x98] sm:$0xff]
      %v6341 = vld [vmem:[#allocation3 + $0xa0] sm:$0xff]
      %v6342 = vld [vmem:[#allocation3 + $0xa8] sm:$0xff]
      %v6343 = vld [vmem:[#allocation3 + $0xb0] sm:$0xff]
      %v6344 = vld [vmem:[#allocation3 + $0xb8] sm:$0xff]
      %v6345 = vld [vmem:[#allocation3 + $0xc0] sm:$0xff]
      %v6346 = vld [vmem:[#allocation3 + $0xc8] sm:$0xff]
      %v6347 = vld [vmem:[#allocation3 + $0xd0] sm:$0xff]
      %v6348 = vld [vmem:[#allocation3 + $0xd8] sm:$0xff]
      %v6349 = vld [vmem:[#allocation3 + $0xe0] sm:$0xff]
      %v6350 = vld [vmem:[#allocation3 + $0xe8] sm:$0xff]
      %v6351 = vld [vmem:[#allocation3 + $0xf0] sm:$0xff]
      %v6352 = vld [vmem:[#allocation3 + $0xf8] sm:$0xff]
      %v6353 = vld [vmem:[#allocation3 + $0x100] sm:$0xff]
      %v6354 = vld [vmem:[#allocation3 + $0x108] sm:$0xff]
      %v6355 = vld [vmem:[#allocation3 + $0x110] sm:$0xff]
      %v6356 = vld [vmem:[#allocation3 + $0x118] sm:$0xff]
      %v6357 = vld [vmem:[#allocation3 + $0x120] sm:$0xff]
      %v6358 = vld [vmem:[#allocation3 + $0x128] sm:$0xff]
      %v6359 = vld [vmem:[#allocation3 + $0x130] sm:$0xff]
      %v6360 = vld [vmem:[#allocation3 + $0x138] sm:$0xff]
      %v6361 = vld [vmem:[#allocation3 + $0x140] sm:$0xff]
      %v6362 = vld [vmem:[#allocation3 + $0x148] sm:$0xff]
      %v6363 = vld [vmem:[#allocation3 + $0x150] sm:$0xff]
      %v6364 = vld [vmem:[#allocation3 + $0x158] sm:$0xff]
      %s6365 = scalar_lea.vmem %s3, 128
      %v6366 = vld [vmem:[%s6365] sm:$0xff]
      %v6367 = vld [vmem:[%s6365 + $0x8] sm:$0xff]
      %v6368 = vld [vmem:[%s6365 + $0x10] sm:$0xff]
      %v6369 = vld [vmem:[%s6365 + $0x18] sm:$0xff]
      %v6370 = vld [vmem:[%s6365 + $0x20] sm:$0xff]
      %v6371 = vld [vmem:[%s6365 + $0x28] sm:$0xff]
      %v6372 = vld [vmem:[%s6365 + $0x30] sm:$0xff]
      %v6373 = vld [vmem:[%s6365 + $0x38] sm:$0xff]
      %v6374 = vld [vmem:[%s6365 + $0x40] sm:$0xff]
      %v6375 = vld [vmem:[%s6365 + $0x48] sm:$0xff]
      %v6376 = vld [vmem:[%s6365 + $0x50] sm:$0xff]
      %v6377 = vld [vmem:[%s6365 + $0x58] sm:$0xff]
      %v6378 = vld [vmem:[%s6365 + $0x60] sm:$0xff]
      %v6379 = vld [vmem:[%s6365 + $0x68] sm:$0xff]
      %v6380 = vld [vmem:[%s6365 + $0x70] sm:$0xff]
      %v6381 = vld [vmem:[%s6365 + $0x78] sm:$0xff]
      %v6382 = vld [vmem:[%s542] sm:$0xff]
      %v6383 = vld [vmem:[%s542 + $0x8] sm:$0xff]
      %v6384 = vld [vmem:[%s542 + $0x10] sm:$0xff]
      %v6385 = vld [vmem:[%s542 + $0x18] sm:$0xff]
      %v6386 = vld [vmem:[%s542 + $0x20] sm:$0xff]
      %v6387 = vld [vmem:[%s542 + $0x28] sm:$0xff]
      %v6388 = vld [vmem:[%s542 + $0x30] sm:$0xff]
      %v6389 = vld [vmem:[%s542 + $0x38] sm:$0xff]
      %v6390 = vld [vmem:[%s542 + $0x40] sm:$0xff]
      %v6391 = vld [vmem:[%s542 + $0x48] sm:$0xff]
      %v6392 = vld [vmem:[%s542 + $0x50] sm:$0xff]
      %v6393 = vld [vmem:[%s542 + $0x58] sm:$0xff]
      %v6394 = vld [vmem:[%s542 + $0x60] sm:$0xff]
      %v6395 = vld [vmem:[%s542 + $0x68] sm:$0xff]
      %v6396 = vld [vmem:[%s542 + $0x70] sm:$0xff]
      %v6397 = vld [vmem:[%s542 + $0x78] sm:$0xff]
      %v6398 = vld [vmem:[%s542 + $0x80] sm:$0xff]
      %v6399 = vld [vmem:[%s542 + $0x88] sm:$0xff]
      %v6400 = vld [vmem:[%s542 + $0x90] sm:$0xff]
      %v6401 = vld [vmem:[%s542 + $0x98] sm:$0xff]
      %v6402 = vld [vmem:[%s542 + $0xa0] sm:$0xff]
      %v6403 = vld [vmem:[%s542 + $0xa8] sm:$0xff]
      %v6404 = vld [vmem:[%s542 + $0xb0] sm:$0xff]
      %v6405 = vld [vmem:[%s542 + $0xb8] sm:$0xff]
      %v6406 = vld [vmem:[%s542 + $0xc0] sm:$0xff]
      %v6407 = vld [vmem:[%s542 + $0xc8] sm:$0xff]
      %v6408 = vld [vmem:[%s542 + $0xd0] sm:$0xff]
      %v6409 = vld [vmem:[%s542 + $0xd8] sm:$0xff]
      %v6410 = vld [vmem:[%s542 + $0xe0] sm:$0xff]
      %v6411 = vld [vmem:[%s542 + $0xe8] sm:$0xff]
      %v6412 = vld [vmem:[%s542 + $0xf0] sm:$0xff]
      %v6413 = vld [vmem:[%s542 + $0xf8] sm:$0xff]
      %v6414 = vld [vmem:[%s542 + $0x100] sm:$0xff]
      %v6415 = vld [vmem:[%s542 + $0x108] sm:$0xff]
      %v6416 = vld [vmem:[%s542 + $0x110] sm:$0xff]
      %v6417 = vld [vmem:[%s542 + $0x118] sm:$0xff]
      %v6418 = vld [vmem:[%s542 + $0x120] sm:$0xff]
      %v6419 = vld [vmem:[%s542 + $0x128] sm:$0xff]
      %v6420 = vld [vmem:[%s542 + $0x130] sm:$0xff]
      %v6421 = vld [vmem:[%s542 + $0x138] sm:$0xff]
      %v6422 = vld [vmem:[%s542 + $0x140] sm:$0xff]
      %v6423 = vld [vmem:[%s542 + $0x148] sm:$0xff]
      %v6424 = vld [vmem:[%s542 + $0x150] sm:$0xff]
      %v6425 = vld [vmem:[%s542 + $0x158] sm:$0xff]
      %v6427 = vsel %vm610, %v6367, 0
      %v6430 = vsel %vm610, %v6369, 0
      %v6433 = vsel %vm610, %v6371, 0
      %v6436 = vsel %vm610, %v6373, 0
      %v6439 = vsel %vm610, %v6375, 0
      %v6442 = vsel %vm610, %v6377, 0
      %v6445 = vsel %vm610, %v6379, 0
      %v6448 = vsel %vm610, %v6381, 0
      %6450 = vmatprep.subr.mxu0 %v6383
      %6451 = vmatpush1.msra.mxu0 %v6382
      %6452 = vmatprep.subr.mxu0 %v6385
      %6453 = vmatpush1.msra.mxu0 %v6384
      %6454 = vmatprep.subr.mxu0 %v6387
      %6455 = vmatpush1.msra.mxu0 %v6386
      %6456 = vmatprep.subr.mxu0 %v6389
      %6457 = vmatpush1.msra.mxu0 %v6388
      %6458 = vmatprep.subr.mxu0 %v6391
      %6459 = vmatpush1.msra.mxu0 %v6390
      %6460 = vmatprep.subr.mxu0 %v6393
      %6461 = vmatpush1.msra.mxu0 %v6392
      %6462 = vmatprep.subr.mxu0 %v6395
      %6463 = vmatpush1.msra.mxu0 %v6394
      %6464 = vmatprep.subr.mxu0 %v6397
      %6465 = vmatpush1.msra.mxu0 %v6396
      %6466 = vmatprep.subr.mxu0 %v6399
      %6467 = vmatpush1.msra.mxu0 %v6398
      %6468 = vmatprep.subr.mxu0 %v6401
      %6469 = vmatpush1.msra.mxu0 %v6400
      %6470 = vmatprep.subr.mxu0 %v6403
      %6471 = vmatpush1.msra.mxu0 %v6402
      %6472 = vmatprep.subr.mxu0 %v6405
      %6473 = vmatpush1.msra.mxu0 %v6404
      %6474 = vmatprep.subr.mxu0 %v6407
      %6475 = vmatpush1.msra.mxu0 %v6406
      %6476 = vmatprep.subr.mxu0 %v6409
      %6477 = vmatpush1.msra.mxu0 %v6408
      %6478 = vmatprep.subr.mxu0 %v6411
      %6479 = vmatpush1.msra.mxu0 %v6410
      %6480 = vmatprep.subr.mxu0 %v6413
      %6481 = vmatpush1.msra.mxu0 %v6412
      %6482 = vmatprep.subr.mxu0 %v6415
      %6483 = vmatpush1.msra.mxu0 %v6414
      %6484 = vmatprep.subr.mxu0 %v6417
      %6485 = vmatpush1.msra.mxu0 %v6416
      %6486 = vmatprep.subr.mxu0 %v6419
      %6487 = vmatpush1.msra.mxu0 %v6418
      %6488 = vmatprep.subr.mxu0 %v6421
      %6489 = vmatpush1.msra.mxu0 %v6420
      %6490 = vmatprep.subr.mxu0 %v6423
      %6491 = vmatpush1.msra.mxu0 %v6422
      %6492 = vmatprep.subr.mxu0 %v6425
      %6493 = vmatpush1.msra.mxu0 %v6424
      %6494 = vmatprep.subr.mxu0 0.0
      %6495 = vmatpush1.msra.mxu0 0.0
      %6496 = vmatprep.subr.mxu0 0.0
      %6497 = vmatpush1.msra.mxu0 0.0
      %6498 = vmatprep.subr.mxu0 0.0
      %6499 = vmatpush1.msra.mxu0 0.0
      %6500 = vmatprep.subr.mxu0 0.0
      %6501 = vmatpush1.msra.mxu0 0.0
      %6502 = vmatprep.subr.mxu0 0.0
      %6503 = vmatpush1.msra.mxu0 0.0
      %6504 = vmatprep.subr.mxu0 0.0
      %6505 = vmatpush1.msra.mxu0 0.0
      %6506 = vmatprep.subr.mxu0 0.0
      %6507 = vmatpush1.msra.mxu0 0.0
      %6508 = vmatprep.subr.mxu0 0.0
      %6509 = vmatpush1.msra.mxu0 0.0
      %6510 = vmatprep.subr.mxu0 0.0
      %6511 = vmatpush1.msra.mxu0 0.0
      %6512 = vmatprep.subr.mxu0 0.0
      %6513 = vmatpush1.msra.mxu0 0.0
      %6514 = vmatprep.mubr.f32.mxu0 %v6427
      %6515 = vmatmul.mubr.f32.gmra.mrb[0].mxu0 %v6366
      %v6516 = vpop.f32.mrb[0].mxu0
      %v6517 = vadd.f32 0.0, %v6516
      %v6518 = vpop.f32.mrb[0].mxu0
      %v6519 = vadd.f32 0.0, %v6518
      %6520 = vmatprep.mubr.f32.mxu0 %v6430
      %6521 = vmatmul.mubr.f32.gmra.mrb[0].mxu0 %v6368
      %v6522 = vpop.f32.mrb[0].mxu0
      %v6523 = vadd.f32 0.0, %v6522
      %v6524 = vpop.f32.mrb[0].mxu0
      %v6525 = vadd.f32 0.0, %v6524
      %6526 = vmatprep.mubr.f32.mxu0 %v6433
      %6527 = vmatmul.mubr.f32.gmra.mrb[0].mxu0 %v6370
      %v6528 = vpop.f32.mrb[0].mxu0
      %v6529 = vadd.f32 0.0, %v6528
      %v6530 = vpop.f32.mrb[0].mxu0
      %v6531 = vadd.f32 0.0, %v6530
      %6532 = vmatprep.mubr.f32.mxu0 %v6436
      %6533 = vmatmul.mubr.f32.gmra.mrb[0].mxu0 %v6372
      %v6534 = vpop.f32.mrb[0].mxu0
      %v6535 = vadd.f32 0.0, %v6534
      %v6536 = vpop.f32.mrb[0].mxu0
      %v6537 = vadd.f32 0.0, %v6536
      %6538 = vmatprep.mubr.f32.mxu0 %v6439
      %6539 = vmatmul.mubr.f32.gmra.mrb[0].mxu0 %v6374
      %v6540 = vpop.f32.mrb[0].mxu0
      %v6541 = vadd.f32 0.0, %v6540
      %v6542 = vpop.f32.mrb[0].mxu0
      %v6543 = vadd.f32 0.0, %v6542
      %6544 = vmatprep.mubr.f32.mxu0 %v6442
      %6545 = vmatmul.mubr.f32.gmra.mrb[0].mxu0 %v6376
      %v6546 = vpop.f32.mrb[0].mxu0
      %v6547 = vadd.f32 0.0, %v6546
      %v6548 = vpop.f32.mrb[0].mxu0
      %v6549 = vadd.f32 0.0, %v6548
      %6550 = vmatprep.mubr.f32.mxu0 %v6445
      %6551 = vmatmul.mubr.f32.gmra.mrb[0].mxu0 %v6378
      %v6552 = vpop.f32.mrb[0].mxu0
      %v6553 = vadd.f32 0.0, %v6552
      %v6554 = vpop.f32.mrb[0].mxu0
      %v6555 = vadd.f32 0.0, %v6554
      %6556 = vmatprep.mubr.f32.mxu0 %v6448
      %6557 = vmatmul.mubr.f32.gmra.mrb[0].mxu0 %v6380
      %v6558 = vpop.f32.mrb[0].mxu0
      %v6559 = vadd.f32 0.0, %v6558
      %v6560 = vpop.f32.mrb[0].mxu0
      %v6561 = vadd.f32 0.0, %v6560
      %6562 = vdwg.mxu0
      %v6564 = vsel %vm610, %v6306, 0
      %v6567 = vsel %vm610, %v6308, 0
      %v6570 = vsel %vm610, %v6310, 0
      %v6573 = vsel %vm610, %v6312, 0
      %v6576 = vsel %vm610, %v6314, 0
      %v6579 = vsel %vm610, %v6316, 0
      %v6582 = vsel %vm610, %v6318, 0
      %v6585 = vsel %vm610, %v6320, 0
      %6587 = vmatprep.subr.mxu0 %v6322
      %6588 = vmatpush1.msra.mxu0 %v6321
      %6589 = vmatprep.subr.mxu0 %v6324
      %6590 = vmatpush1.msra.mxu0 %v6323
      %6591 = vmatprep.subr.mxu0 %v6326
      %6592 = vmatpush1.msra.mxu0 %v6325
      %6593 = vmatprep.subr.mxu0 %v6328
      %6594 = vmatpush1.msra.mxu0 %v6327
      %6595 = vmatprep.subr.mxu0 %v6330
      %6596 = vmatpush1.msra.mxu0 %v6329
      %6597 = vmatprep.subr.mxu0 %v6332
      %6598 = vmatpush1.msra.mxu0 %v6331
      %6599 = vmatprep.subr.mxu0 %v6334
      %6600 = vmatpush1.msra.mxu0 %v6333
      %6601 = vmatprep.subr.mxu0 %v6336
      %6602 = vmatpush1.msra.mxu0 %v6335
      %6603 = vmatprep.subr.mxu0 %v6338
      %6604 = vmatpush1.msra.mxu0 %v6337
      %6605 = vmatprep.subr.mxu0 %v6340
      %6606 = vmatpush1.msra.mxu0 %v6339
      %6607 = vmatprep.subr.mxu0 %v6342
      %6608 = vmatpush1.msra.mxu0 %v6341
      %6609 = vmatprep.subr.mxu0 %v6344
      %6610 = vmatpush1.msra.mxu0 %v6343
      %6611 = vmatprep.subr.mxu0 %v6346
      %6612 = vmatpush1.msra.mxu0 %v6345
      %6613 = vmatprep.subr.mxu0 %v6348
      %6614 = vmatpush1.msra.mxu0 %v6347
      %6615 = vmatprep.subr.mxu0 %v6350
      %6616 = vmatpush1.msra.mxu0 %v6349
      %6617 = vmatprep.subr.mxu0 %v6352
      %6618 = vmatpush1.msra.mxu0 %v6351
      %6619 = vmatprep.subr.mxu0 %v6354
      %6620 = vmatpush1.msra.mxu0 %v6353
      %6621 = vmatprep.subr.mxu0 %v6356
      %6622 = vmatpush1.msra.mxu0 %v6355
      %6623 = vmatprep.subr.mxu0 %v6358
      %6624 = vmatpush1.msra.mxu0 %v6357
      %6625 = vmatprep.subr.mxu0 %v6360
      %6626 = vmatpush1.msra.mxu0 %v6359
      %6627 = vmatprep.subr.mxu0 %v6362
      %6628 = vmatpush1.msra.mxu0 %v6361
      %6629 = vmatprep.subr.mxu0 %v6364
      %6630 = vmatpush1.msra.mxu0 %v6363
      %6631 = vmatprep.subr.mxu0 0.0
      %6632 = vmatpush1.msra.mxu0 0.0
      %6633 = vmatprep.subr.mxu0 0.0
      %6634 = vmatpush1.msra.mxu0 0.0
      %6635 = vmatprep.subr.mxu0 0.0
      %6636 = vmatpush1.msra.mxu0 0.0
      %6637 = vmatprep.subr.mxu0 0.0
      %6638 = vmatpush1.msra.mxu0 0.0
      %6639 = vmatprep.subr.mxu0 0.0
      %6640 = vmatpush1.msra.mxu0 0.0
      %6641 = vmatprep.subr.mxu0 0.0
      %6642 = vmatpush1.msra.mxu0 0.0
      %6643 = vmatprep.subr.mxu0 0.0
      %6644 = vmatpush1.msra.mxu0 0.0
      %6645 = vmatprep.subr.mxu0 0.0
      %6646 = vmatpush1.msra.mxu0 0.0
      %6647 = vmatprep.subr.mxu0 0.0
      %6648 = vmatpush1.msra.mxu0 0.0
      %6649 = vmatprep.subr.mxu0 0.0
      %6650 = vmatpush1.msra.mxu0 0.0
      %6651 = vmatprep.mubr.f32.mxu0 %v6564
      %6652 = vmatmul.mubr.f32.gmra.mrb[0].mxu0 %v6305
      %v6653 = vpop.f32.mrb[0].mxu0
      %v6654 = vadd.f32 %v6517, %v6653
      %v6655 = vpop.f32.mrb[0].mxu0
      %v6656 = vadd.f32 %v6519, %v6655
      %6657 = vmatprep.mubr.f32.mxu0 %v6567
      %6658 = vmatmul.mubr.f32.gmra.mrb[0].mxu0 %v6307
      %v6659 = vpop.f32.mrb[0].mxu0
      %v6660 = vadd.f32 %v6523, %v6659
      %v6661 = vpop.f32.mrb[0].mxu0
      %v6662 = vadd.f32 %v6525, %v6661
      %6663 = vmatprep.mubr.f32.mxu0 %v6570
      %6664 = vmatmul.mubr.f32.gmra.mrb[0].mxu0 %v6309
      %v6665 = vpop.f32.mrb[0].mxu0
      %v6666 = vadd.f32 %v6529, %v6665
      %v6667 = vpop.f32.mrb[0].mxu0
      %v6668 = vadd.f32 %v6531, %v6667
      %6669 = vmatprep.mubr.f32.mxu0 %v6573
      %6670 = vmatmul.mubr.f32.gmra.mrb[0].mxu0 %v6311
      %v6671 = vpop.f32.mrb[0].mxu0
      %v6672 = vadd.f32 %v6535, %v6671
      %v6673 = vpop.f32.mrb[0].mxu0
      %v6674 = vadd.f32 %v6537, %v6673
      %6675 = vmatprep.mubr.f32.mxu0 %v6576
      %6676 = vmatmul.mubr.f32.gmra.mrb[0].mxu0 %v6313
      %v6677 = vpop.f32.mrb[0].mxu0
      %v6678 = vadd.f32 %v6541, %v6677
      %v6679 = vpop.f32.mrb[0].mxu0
      %v6680 = vadd.f32 %v6543, %v6679
      %6681 = vmatprep.mubr.f32.mxu0 %v6579
      %6682 = vmatmul.mubr.f32.gmra.mrb[0].mxu0 %v6315
      %v6683 = vpop.f32.mrb[0].mxu0
      %v6684 = vadd.f32 %v6547, %v6683
      %v6685 = vpop.f32.mrb[0].mxu0
      %v6686 = vadd.f32 %v6549, %v6685
      %6687 = vmatprep.mubr.f32.mxu0 %v6582
      %6688 = vmatmul.mubr.f32.gmra.mrb[0].mxu0 %v6317
      %v6689 = vpop.f32.mrb[0].mxu0
      %v6690 = vadd.f32 %v6553, %v6689
      %v6691 = vpop.f32.mrb[0].mxu0
      %v6692 = vadd.f32 %v6555, %v6691
      %6693 = vmatprep.mubr.f32.mxu0 %v6585
      %6694 = vmatmul.mubr.f32.gmra.mrb[0].mxu0 %v6319
      %v6695 = vpop.f32.mrb[0].mxu0
      %v6696 = vadd.f32 %v6559, %v6695
      %v6697 = vpop.f32.mrb[0].mxu0
      %v6698 = vadd.f32 %v6561, %v6697
      %6699 = vdwg.mxu0
      %s6700 = scalar_lea.vmem %s3, 256
      %v6701 = vld [vmem:[%s6700] sm:$0xff]
      %v6702 = vld [vmem:[%s6700 + $0x8] sm:$0xff]
      %v6703 = vld [vmem:[%s6700 + $0x10] sm:$0xff]
      %v6704 = vld [vmem:[%s6700 + $0x18] sm:$0xff]
      %v6705 = vld [vmem:[%s6700 + $0x20] sm:$0xff]
      %v6706 = vld [vmem:[%s6700 + $0x28] sm:$0xff]
      %v6707 = vld [vmem:[%s6700 + $0x30] sm:$0xff]
      %v6708 = vld [vmem:[%s6700 + $0x38] sm:$0xff]
      %v6709 = vld [vmem:[%s6700 + $0x40] sm:$0xff]
      %v6710 = vld [vmem:[%s6700 + $0x48] sm:$0xff]
      %v6711 = vld [vmem:[%s6700 + $0x50] sm:$0xff]
      %v6712 = vld [vmem:[%s6700 + $0x58] sm:$0xff]
      %v6713 = vld [vmem:[%s6700 + $0x60] sm:$0xff]
      %v6714 = vld [vmem:[%s6700 + $0x68] sm:$0xff]
      %v6715 = vld [vmem:[%s6700 + $0x70] sm:$0xff]
      %v6716 = vld [vmem:[%s6700 + $0x78] sm:$0xff]
      %v6717 = vld [vmem:[%s595] sm:$0xff]
      %v6718 = vld [vmem:[%s595 + $0x8] sm:$0xff]
      %v6719 = vld [vmem:[%s595 + $0x10] sm:$0xff]
      %v6720 = vld [vmem:[%s595 + $0x18] sm:$0xff]
      %v6721 = vld [vmem:[%s595 + $0x20] sm:$0xff]
      %v6722 = vld [vmem:[%s595 + $0x28] sm:$0xff]
      %v6723 = vld [vmem:[%s595 + $0x30] sm:$0xff]
      %v6724 = vld [vmem:[%s595 + $0x38] sm:$0xff]
      %v6725 = vld [vmem:[%s595 + $0x40] sm:$0xff]
      %v6726 = vld [vmem:[%s595 + $0x48] sm:$0xff]
      %v6727 = vld [vmem:[%s595 + $0x50] sm:$0xff]
      %v6728 = vld [vmem:[%s595 + $0x58] sm:$0xff]
      %v6729 = vld [vmem:[%s595 + $0x60] sm:$0xff]
      %v6730 = vld [vmem:[%s595 + $0x68] sm:$0xff]
      %v6731 = vld [vmem:[%s595 + $0x70] sm:$0xff]
      %v6732 = vld [vmem:[%s595 + $0x78] sm:$0xff]
      %v6733 = vld [vmem:[%s595 + $0x80] sm:$0xff]
      %v6734 = vld [vmem:[%s595 + $0x88] sm:$0xff]
      %v6735 = vld [vmem:[%s595 + $0x90] sm:$0xff]
      %v6736 = vld [vmem:[%s595 + $0x98] sm:$0xff]
      %v6737 = vld [vmem:[%s595 + $0xa0] sm:$0xff]
      %v6738 = vld [vmem:[%s595 + $0xa8] sm:$0xff]
      %v6739 = vld [vmem:[%s595 + $0xb0] sm:$0xff]
      %v6740 = vld [vmem:[%s595 + $0xb8] sm:$0xff]
      %v6741 = vld [vmem:[%s595 + $0xc0] sm:$0xff]
      %v6742 = vld [vmem:[%s595 + $0xc8] sm:$0xff]
      %v6743 = vld [vmem:[%s595 + $0xd0] sm:$0xff]
      %v6744 = vld [vmem:[%s595 + $0xd8] sm:$0xff]
      %v6745 = vld [vmem:[%s595 + $0xe0] sm:$0xff]
      %v6746 = vld [vmem:[%s595 + $0xe8] sm:$0xff]
      %v6747 = vld [vmem:[%s595 + $0xf0] sm:$0xff]
      %v6748 = vld [vmem:[%s595 + $0xf8] sm:$0xff]
      %v6749 = vld [vmem:[%s595 + $0x100] sm:$0xff]
      %v6750 = vld [vmem:[%s595 + $0x108] sm:$0xff]
      %v6751 = vld [vmem:[%s595 + $0x110] sm:$0xff]
      %v6752 = vld [vmem:[%s595 + $0x118] sm:$0xff]
      %v6753 = vld [vmem:[%s595 + $0x120] sm:$0xff]
      %v6754 = vld [vmem:[%s595 + $0x128] sm:$0xff]
      %v6755 = vld [vmem:[%s595 + $0x130] sm:$0xff]
      %v6756 = vld [vmem:[%s595 + $0x138] sm:$0xff]
      %v6757 = vld [vmem:[%s595 + $0x140] sm:$0xff]
      %v6758 = vld [vmem:[%s595 + $0x148] sm:$0xff]
      %v6759 = vld [vmem:[%s595 + $0x150] sm:$0xff]
      %v6760 = vld [vmem:[%s595 + $0x158] sm:$0xff]
      %v6762 = vsel %vm610, %v6702, 0
      %v6765 = vsel %vm610, %v6704, 0
      %v6768 = vsel %vm610, %v6706, 0
      %v6771 = vsel %vm610, %v6708, 0
      %v6774 = vsel %vm610, %v6710, 0
      %v6777 = vsel %vm610, %v6712, 0
      %v6780 = vsel %vm610, %v6714, 0
      %v6783 = vsel %vm610, %v6716, 0
      %6785 = vmatprep.subr.mxu0 %v6718
      %6786 = vmatpush1.msra.mxu0 %v6717
      %6787 = vmatprep.subr.mxu0 %v6720
      %6788 = vmatpush1.msra.mxu0 %v6719
      %6789 = vmatprep.subr.mxu0 %v6722
      %6790 = vmatpush1.msra.mxu0 %v6721
      %6791 = vmatprep.subr.mxu0 %v6724
      %6792 = vmatpush1.msra.mxu0 %v6723
      %6793 = vmatprep.subr.mxu0 %v6726
      %6794 = vmatpush1.msra.mxu0 %v6725
      %6795 = vmatprep.subr.mxu0 %v6728
      %6796 = vmatpush1.msra.mxu0 %v6727
      %6797 = vmatprep.subr.mxu0 %v6730
      %6798 = vmatpush1.msra.mxu0 %v6729
      %6799 = vmatprep.subr.mxu0 %v6732
      %6800 = vmatpush1.msra.mxu0 %v6731
      %6801 = vmatprep.subr.mxu0 %v6734
      %6802 = vmatpush1.msra.mxu0 %v6733
      %6803 = vmatprep.subr.mxu0 %v6736
      %6804 = vmatpush1.msra.mxu0 %v6735
      %6805 = vmatprep.subr.mxu0 %v6738
      %6806 = vmatpush1.msra.mxu0 %v6737
      %6807 = vmatprep.subr.mxu0 %v6740
      %6808 = vmatpush1.msra.mxu0 %v6739
      %6809 = vmatprep.subr.mxu0 %v6742
      %6810 = vmatpush1.msra.mxu0 %v6741
      %6811 = vmatprep.subr.mxu0 %v6744
      %6812 = vmatpush1.msra.mxu0 %v6743
      %6813 = vmatprep.subr.mxu0 %v6746
      %6814 = vmatpush1.msra.mxu0 %v6745
      %6815 = vmatprep.subr.mxu0 %v6748
      %6816 = vmatpush1.msra.mxu0 %v6747
      %6817 = vmatprep.subr.mxu0 %v6750
      %6818 = vmatpush1.msra.mxu0 %v6749
      %6819 = vmatprep.subr.mxu0 %v6752
      %6820 = vmatpush1.msra.mxu0 %v6751
      %6821 = vmatprep.subr.mxu0 %v6754
      %6822 = vmatpush1.msra.mxu0 %v6753
      %6823 = vmatprep.subr.mxu0 %v6756
      %6824 = vmatpush1.msra.mxu0 %v6755
      %6825 = vmatprep.subr.mxu0 %v6758
      %6826 = vmatpush1.msra.mxu0 %v6757
      %6827 = vmatprep.subr.mxu0 %v6760
      %6828 = vmatpush1.msra.mxu0 %v6759
      %6829 = vmatprep.subr.mxu0 0.0
      %6830 = vmatpush1.msra.mxu0 0.0
      %6831 = vmatprep.subr.mxu0 0.0
      %6832 = vmatpush1.msra.mxu0 0.0
      %6833 = vmatprep.subr.mxu0 0.0
      %6834 = vmatpush1.msra.mxu0 0.0
      %6835 = vmatprep.subr.mxu0 0.0
      %6836 = vmatpush1.msra.mxu0 0.0
      %6837 = vmatprep.subr.mxu0 0.0
      %6838 = vmatpush1.msra.mxu0 0.0
      %6839 = vmatprep.subr.mxu0 0.0
      %6840 = vmatpush1.msra.mxu0 0.0
      %6841 = vmatprep.subr.mxu0 0.0
      %6842 = vmatpush1.msra.mxu0 0.0
      %6843 = vmatprep.subr.mxu0 0.0
      %6844 = vmatpush1.msra.mxu0 0.0
      %6845 = vmatprep.subr.mxu0 0.0
      %6846 = vmatpush1.msra.mxu0 0.0
      %6847 = vmatprep.subr.mxu0 0.0
      %6848 = vmatpush1.msra.mxu0 0.0
      %6849 = vmatprep.mubr.f32.mxu0 %v6762
      %6850 = vmatmul.mubr.f32.gmra.mrb[0].mxu0 %v6701
      %v6851 = vpop.f32.mrb[0].mxu0
      %v6852 = vadd.f32 0.0, %v6851
      %v6853 = vpop.f32.mrb[0].mxu0
      %v6854 = vadd.f32 0.0, %v6853
      %6855 = vmatprep.mubr.f32.mxu0 %v6765
      %6856 = vmatmul.mubr.f32.gmra.mrb[0].mxu0 %v6703
      %v6857 = vpop.f32.mrb[0].mxu0
      %v6858 = vadd.f32 0.0, %v6857
      %v6859 = vpop.f32.mrb[0].mxu0
      %v6860 = vadd.f32 0.0, %v6859
      %6861 = vmatprep.mubr.f32.mxu0 %v6768
      %6862 = vmatmul.mubr.f32.gmra.mrb[0].mxu0 %v6705
      %v6863 = vpop.f32.mrb[0].mxu0
      %v6864 = vadd.f32 0.0, %v6863
      %v6865 = vpop.f32.mrb[0].mxu0
      %v6866 = vadd.f32 0.0, %v6865
      %6867 = vmatprep.mubr.f32.mxu0 %v6771
      %6868 = vmatmul.mubr.f32.gmra.mrb[0].mxu0 %v6707
      %v6869 = vpop.f32.mrb[0].mxu0
      %v6870 = vadd.f32 0.0, %v6869
      %v6871 = vpop.f32.mrb[0].mxu0
      %v6872 = vadd.f32 0.0, %v6871
      %6873 = vmatprep.mubr.f32.mxu0 %v6774
      %6874 = vmatmul.mubr.f32.gmra.mrb[0].mxu0 %v6709
      %v6875 = vpop.f32.mrb[0].mxu0
      %v6876 = vadd.f32 0.0, %v6875
      %v6877 = vpop.f32.mrb[0].mxu0
      %v6878 = vadd.f32 0.0, %v6877
      %6879 = vmatprep.mubr.f32.mxu0 %v6777
      %6880 = vmatmul.mubr.f32.gmra.mrb[0].mxu0 %v6711
      %v6881 = vpop.f32.mrb[0].mxu0
      %v6882 = vadd.f32 0.0, %v6881
      %v6883 = vpop.f32.mrb[0].mxu0
      %v6884 = vadd.f32 0.0, %v6883
      %6885 = vmatprep.mubr.f32.mxu0 %v6780
      %6886 = vmatmul.mubr.f32.gmra.mrb[0].mxu0 %v6713
      %v6887 = vpop.f32.mrb[0].mxu0
      %v6888 = vadd.f32 0.0, %v6887
      %v6889 = vpop.f32.mrb[0].mxu0
      %v6890 = vadd.f32 0.0, %v6889
      %6891 = vmatprep.mubr.f32.mxu0 %v6783
      %6892 = vmatmul.mubr.f32.gmra.mrb[0].mxu0 %v6715
      %v6893 = vpop.f32.mrb[0].mxu0
      %v6894 = vadd.f32 0.0, %v6893
      %v6895 = vpop.f32.mrb[0].mxu0
      %v6896 = vadd.f32 0.0, %v6895
      %6897 = vdwg.mxu0
      %v6898 = vadd.f32 %v6654, %v6852
      %v6899 = vadd.f32 %v6656, %v6854
      %v6900 = vadd.f32 %v6660, %v6858
      %v6901 = vadd.f32 %v6662, %v6860
      %v6902 = vadd.f32 %v6666, %v6864
      %v6903 = vadd.f32 %v6668, %v6866
      %v6904 = vadd.f32 %v6672, %v6870
      %v6905 = vadd.f32 %v6674, %v6872
      %v6906 = vadd.f32 %v6678, %v6876
      %v6907 = vadd.f32 %v6680, %v6878
      %v6908 = vadd.f32 %v6684, %v6882
      %v6909 = vadd.f32 %v6686, %v6884
      %v6910 = vadd.f32 %v6690, %v6888
      %v6911 = vadd.f32 %v6692, %v6890
      %v6912 = vadd.f32 %v6696, %v6894
      %v6913 = vadd.f32 %v6698, %v6896
      %s6914 = scalar_lea.vmem %s3, 384
      %v6915 = vld [vmem:[%s6914] sm:$0xff]
      %v6916 = vld [vmem:[%s6914 + $0x8] sm:$0xff]
      %v6917 = vld [vmem:[%s6914 + $0x10] sm:$0xff]
      %v6918 = vld [vmem:[%s6914 + $0x18] sm:$0xff]
      %v6919 = vld [vmem:[%s6914 + $0x20] sm:$0xff]
      %v6920 = vld [vmem:[%s6914 + $0x28] sm:$0xff]
      %v6921 = vld [vmem:[%s6914 + $0x30] sm:$0xff]
      %v6922 = vld [vmem:[%s6914 + $0x38] sm:$0xff]
      %v6923 = vld [vmem:[%s6914 + $0x40] sm:$0xff]
      %v6924 = vld [vmem:[%s6914 + $0x48] sm:$0xff]
      %v6925 = vld [vmem:[%s6914 + $0x50] sm:$0xff]
      %v6926 = vld [vmem:[%s6914 + $0x58] sm:$0xff]
      %v6927 = vld [vmem:[%s6914 + $0x60] sm:$0xff]
      %v6928 = vld [vmem:[%s6914 + $0x68] sm:$0xff]
      %v6929 = vld [vmem:[%s6914 + $0x70] sm:$0xff]
      %v6930 = vld [vmem:[%s6914 + $0x78] sm:$0xff]
      %v6931 = vld [vmem:[%s648] sm:$0xff]
      %v6932 = vld [vmem:[%s648 + $0x8] sm:$0xff]
      %v6933 = vld [vmem:[%s648 + $0x10] sm:$0xff]
      %v6934 = vld [vmem:[%s648 + $0x18] sm:$0xff]
      %v6935 = vld [vmem:[%s648 + $0x20] sm:$0xff]
      %v6936 = vld [vmem:[%s648 + $0x28] sm:$0xff]
      %v6937 = vld [vmem:[%s648 + $0x30] sm:$0xff]
      %v6938 = vld [vmem:[%s648 + $0x38] sm:$0xff]
      %v6939 = vld [vmem:[%s648 + $0x40] sm:$0xff]
      %v6940 = vld [vmem:[%s648 + $0x48] sm:$0xff]
      %v6941 = vld [vmem:[%s648 + $0x50] sm:$0xff]
      %v6942 = vld [vmem:[%s648 + $0x58] sm:$0xff]
      %v6943 = vld [vmem:[%s648 + $0x60] sm:$0xff]
      %v6944 = vld [vmem:[%s648 + $0x68] sm:$0xff]
      %v6945 = vld [vmem:[%s648 + $0x70] sm:$0xff]
      %v6946 = vld [vmem:[%s648 + $0x78] sm:$0xff]
      %v6947 = vld [vmem:[%s648 + $0x80] sm:$0xff]
      %v6948 = vld [vmem:[%s648 + $0x88] sm:$0xff]
      %v6949 = vld [vmem:[%s648 + $0x90] sm:$0xff]
      %v6950 = vld [vmem:[%s648 + $0x98] sm:$0xff]
      %v6951 = vld [vmem:[%s648 + $0xa0] sm:$0xff]
      %v6952 = vld [vmem:[%s648 + $0xa8] sm:$0xff]
      %v6953 = vld [vmem:[%s648 + $0xb0] sm:$0xff]
      %v6954 = vld [vmem:[%s648 + $0xb8] sm:$0xff]
      %v6955 = vld [vmem:[%s648 + $0xc0] sm:$0xff]
      %v6956 = vld [vmem:[%s648 + $0xc8] sm:$0xff]
      %v6957 = vld [vmem:[%s648 + $0xd0] sm:$0xff]
      %v6958 = vld [vmem:[%s648 + $0xd8] sm:$0xff]
      %v6959 = vld [vmem:[%s648 + $0xe0] sm:$0xff]
      %v6960 = vld [vmem:[%s648 + $0xe8] sm:$0xff]
      %v6961 = vld [vmem:[%s648 + $0xf0] sm:$0xff]
      %v6962 = vld [vmem:[%s648 + $0xf8] sm:$0xff]
      %v6963 = vld [vmem:[%s648 + $0x100] sm:$0xff]
      %v6964 = vld [vmem:[%s648 + $0x108] sm:$0xff]
      %v6965 = vld [vmem:[%s648 + $0x110] sm:$0xff]
      %v6966 = vld [vmem:[%s648 + $0x118] sm:$0xff]
      %v6967 = vld [vmem:[%s648 + $0x120] sm:$0xff]
      %v6968 = vld [vmem:[%s648 + $0x128] sm:$0xff]
      %v6969 = vld [vmem:[%s648 + $0x130] sm:$0xff]
      %v6970 = vld [vmem:[%s648 + $0x138] sm:$0xff]
      %v6971 = vld [vmem:[%s648 + $0x140] sm:$0xff]
      %v6972 = vld [vmem:[%s648 + $0x148] sm:$0xff]
      %v6973 = vld [vmem:[%s648 + $0x150] sm:$0xff]
      %v6974 = vld [vmem:[%s648 + $0x158] sm:$0xff]
      %v6976 = vsel %vm610, %v6916, 0
      %v6979 = vsel %vm610, %v6918, 0
      %v6982 = vsel %vm610, %v6920, 0
      %v6985 = vsel %vm610, %v6922, 0
      %v6988 = vsel %vm610, %v6924, 0
      %v6991 = vsel %vm610, %v6926, 0
      %v6994 = vsel %vm610, %v6928, 0
      %v6997 = vsel %vm610, %v6930, 0
      %6999 = vmatprep.subr.mxu0 %v6932
      %7000 = vmatpush1.msra.mxu0 %v6931
      %7001 = vmatprep.subr.mxu0 %v6934
      %7002 = vmatpush1.msra.mxu0 %v6933
      %7003 = vmatprep.subr.mxu0 %v6936
      %7004 = vmatpush1.msra.mxu0 %v6935
      %7005 = vmatprep.subr.mxu0 %v6938
      %7006 = vmatpush1.msra.mxu0 %v6937
      %7007 = vmatprep.subr.mxu0 %v6940
      %7008 = vmatpush1.msra.mxu0 %v6939
      %7009 = vmatprep.subr.mxu0 %v6942
      %7010 = vmatpush1.msra.mxu0 %v6941
      %7011 = vmatprep.subr.mxu0 %v6944
      %7012 = vmatpush1.msra.mxu0 %v6943
      %7013 = vmatprep.subr.mxu0 %v6946
      %7014 = vmatpush1.msra.mxu0 %v6945
      %7015 = vmatprep.subr.mxu0 %v6948
      %7016 = vmatpush1.msra.mxu0 %v6947
      %7017 = vmatprep.subr.mxu0 %v6950
      %7018 = vmatpush1.msra.mxu0 %v6949
      %7019 = vmatprep.subr.mxu0 %v6952
      %7020 = vmatpush1.msra.mxu0 %v6951
      %7021 = vmatprep.subr.mxu0 %v6954
      %7022 = vmatpush1.msra.mxu0 %v6953
      %7023 = vmatprep.subr.mxu0 %v6956
      %7024 = vmatpush1.msra.mxu0 %v6955
      %7025 = vmatprep.subr.mxu0 %v6958
      %7026 = vmatpush1.msra.mxu0 %v6957
      %7027 = vmatprep.subr.mxu0 %v6960
      %7028 = vmatpush1.msra.mxu0 %v6959
      %7029 = vmatprep.subr.mxu0 %v6962
      %7030 = vmatpush1.msra.mxu0 %v6961
      %7031 = vmatprep.subr.mxu0 %v6964
      %7032 = vmatpush1.msra.mxu0 %v6963
      %7033 = vmatprep.subr.mxu0 %v6966
      %7034 = vmatpush1.msra.mxu0 %v6965
      %7035 = vmatprep.subr.mxu0 %v6968
      %7036 = vmatpush1.msra.mxu0 %v6967
      %7037 = vmatprep.subr.mxu0 %v6970
      %7038 = vmatpush1.msra.mxu0 %v6969
      %7039 = vmatprep.subr.mxu0 %v6972
      %7040 = vmatpush1.msra.mxu0 %v6971
      %7041 = vmatprep.subr.mxu0 %v6974
      %7042 = vmatpush1.msra.mxu0 %v6973
      %7043 = vmatprep.subr.mxu0 0.0
      %7044 = vmatpush1.msra.mxu0 0.0
      %7045 = vmatprep.subr.mxu0 0.0
      %7046 = vmatpush1.msra.mxu0 0.0
      %7047 = vmatprep.subr.mxu0 0.0
      %7048 = vmatpush1.msra.mxu0 0.0
      %7049 = vmatprep.subr.mxu0 0.0
      %7050 = vmatpush1.msra.mxu0 0.0
      %7051 = vmatprep.subr.mxu0 0.0
      %7052 = vmatpush1.msra.mxu0 0.0
      %7053 = vmatprep.subr.mxu0 0.0
      %7054 = vmatpush1.msra.mxu0 0.0
      %7055 = vmatprep.subr.mxu0 0.0
      %7056 = vmatpush1.msra.mxu0 0.0
      %7057 = vmatprep.subr.mxu0 0.0
      %7058 = vmatpush1.msra.mxu0 0.0
      %7059 = vmatprep.subr.mxu0 0.0
      %7060 = vmatpush1.msra.mxu0 0.0
      %7061 = vmatprep.subr.mxu0 0.0
      %7062 = vmatpush1.msra.mxu0 0.0
      %7063 = vmatprep.mubr.f32.mxu0 %v6976
      %7064 = vmatmul.mubr.f32.gmra.mrb[0].mxu0 %v6915
      %v7065 = vpop.f32.mrb[0].mxu0
      %v7066 = vadd.f32 0.0, %v7065
      %v7067 = vpop.f32.mrb[0].mxu0
      %v7068 = vadd.f32 0.0, %v7067
      %7069 = vmatprep.mubr.f32.mxu0 %v6979
      %7070 = vmatmul.mubr.f32.gmra.mrb[0].mxu0 %v6917
      %v7071 = vpop.f32.mrb[0].mxu0
      %v7072 = vadd.f32 0.0, %v7071
      %v7073 = vpop.f32.mrb[0].mxu0
      %v7074 = vadd.f32 0.0, %v7073
      %7075 = vmatprep.mubr.f32.mxu0 %v6982
      %7076 = vmatmul.mubr.f32.gmra.mrb[0].mxu0 %v6919
      %v7077 = vpop.f32.mrb[0].mxu0
      %v7078 = vadd.f32 0.0, %v7077
      %v7079 = vpop.f32.mrb[0].mxu0
      %v7080 = vadd.f32 0.0, %v7079
      %7081 = vmatprep.mubr.f32.mxu0 %v6985
      %7082 = vmatmul.mubr.f32.gmra.mrb[0].mxu0 %v6921
      %v7083 = vpop.f32.mrb[0].mxu0
      %v7084 = vadd.f32 0.0, %v7083
      %v7085 = vpop.f32.mrb[0].mxu0
      %v7086 = vadd.f32 0.0, %v7085
      %7087 = vmatprep.mubr.f32.mxu0 %v6988
      %7088 = vmatmul.mubr.f32.gmra.mrb[0].mxu0 %v6923
      %v7089 = vpop.f32.mrb[0].mxu0
      %v7090 = vadd.f32 0.0, %v7089
      %v7091 = vpop.f32.mrb[0].mxu0
      %v7092 = vadd.f32 0.0, %v7091
      %7093 = vmatprep.mubr.f32.mxu0 %v6991
      %7094 = vmatmul.mubr.f32.gmra.mrb[0].mxu0 %v6925
      %v7095 = vpop.f32.mrb[0].mxu0
      %v7096 = vadd.f32 0.0, %v7095
      %v7097 = vpop.f32.mrb[0].mxu0
      %v7098 = vadd.f32 0.0, %v7097
      %7099 = vmatprep.mubr.f32.mxu0 %v6994
      %7100 = vmatmul.mubr.f32.gmra.mrb[0].mxu0 %v6927
      %v7101 = vpop.f32.mrb[0].mxu0
      %v7102 = vadd.f32 0.0, %v7101
      %v7103 = vpop.f32.mrb[0].mxu0
      %v7104 = vadd.f32 0.0, %v7103
      %7105 = vmatprep.mubr.f32.mxu0 %v6997
      %7106 = vmatmul.mubr.f32.gmra.mrb[0].mxu0 %v6929
      %v7107 = vpop.f32.mrb[0].mxu0
      %v7108 = vadd.f32 0.0, %v7107
      %v7109 = vpop.f32.mrb[0].mxu0
      %v7110 = vadd.f32 0.0, %v7109
      %7111 = vdwg.mxu0
      %v7112 = vadd.f32 %v6898, %v7066
      %v7113 = vadd.f32 %v6899, %v7068
      %v7114 = vadd.f32 %v6900, %v7072
      %v7115 = vadd.f32 %v6901, %v7074
      %v7116 = vadd.f32 %v6902, %v7078
      %v7117 = vadd.f32 %v6903, %v7080
      %v7118 = vadd.f32 %v6904, %v7084
      %v7119 = vadd.f32 %v6905, %v7086
      %v7120 = vadd.f32 %v6906, %v7090
      %v7121 = vadd.f32 %v6907, %v7092
      %v7122 = vadd.f32 %v6908, %v7096
      %v7123 = vadd.f32 %v6909, %v7098
      %v7124 = vadd.f32 %v6910, %v7102
      %v7125 = vadd.f32 %v6911, %v7104
      %v7126 = vadd.f32 %v6912, %v7108
      %v7127 = vadd.f32 %v6913, %v7110
      %s7128 = scalar_lea.vmem %s3, 512
      %v7129 = vld [vmem:[%s7128] sm:$0xff]
      %v7130 = vld [vmem:[%s7128 + $0x8] sm:$0xff]
      %v7131 = vld [vmem:[%s7128 + $0x10] sm:$0xff]
      %v7132 = vld [vmem:[%s7128 + $0x18] sm:$0xff]
      %v7133 = vld [vmem:[%s7128 + $0x20] sm:$0xff]
      %v7134 = vld [vmem:[%s7128 + $0x28] sm:$0xff]
      %v7135 = vld [vmem:[%s7128 + $0x30] sm:$0xff]
      %v7136 = vld [vmem:[%s7128 + $0x38] sm:$0xff]
      %v7137 = vld [vmem:[%s7128 + $0x40] sm:$0xff]
      %v7138 = vld [vmem:[%s7128 + $0x48] sm:$0xff]
      %v7139 = vld [vmem:[%s7128 + $0x50] sm:$0xff]
      %v7140 = vld [vmem:[%s7128 + $0x58] sm:$0xff]
      %v7141 = vld [vmem:[%s7128 + $0x60] sm:$0xff]
      %v7142 = vld [vmem:[%s7128 + $0x68] sm:$0xff]
      %v7143 = vld [vmem:[%s7128 + $0x70] sm:$0xff]
      %v7144 = vld [vmem:[%s7128 + $0x78] sm:$0xff]
      %v7145 = vld [vmem:[%s700] sm:$0xff]
      %v7146 = vld [vmem:[%s700 + $0x8] sm:$0xff]
      %v7147 = vld [vmem:[%s700 + $0x10] sm:$0xff]
      %v7148 = vld [vmem:[%s700 + $0x18] sm:$0xff]
      %v7149 = vld [vmem:[%s700 + $0x20] sm:$0xff]
      %v7150 = vld [vmem:[%s700 + $0x28] sm:$0xff]
      %v7151 = vld [vmem:[%s700 + $0x30] sm:$0xff]
      %v7152 = vld [vmem:[%s700 + $0x38] sm:$0xff]
      %v7153 = vld [vmem:[%s700 + $0x40] sm:$0xff]
      %v7154 = vld [vmem:[%s700 + $0x48] sm:$0xff]
      %v7155 = vld [vmem:[%s700 + $0x50] sm:$0xff]
      %v7156 = vld [vmem:[%s700 + $0x58] sm:$0xff]
      %v7157 = vld [vmem:[%s700 + $0x60] sm:$0xff]
      %v7158 = vld [vmem:[%s700 + $0x68] sm:$0xff]
      %v7159 = vld [vmem:[%s700 + $0x70] sm:$0xff]
      %v7160 = vld [vmem:[%s700 + $0x78] sm:$0xff]
      %v7161 = vld [vmem:[%s700 + $0x80] sm:$0xff]
      %v7162 = vld [vmem:[%s700 + $0x88] sm:$0xff]
      %v7163 = vld [vmem:[%s700 + $0x90] sm:$0xff]
      %v7164 = vld [vmem:[%s700 + $0x98] sm:$0xff]
      %v7165 = vld [vmem:[%s700 + $0xa0] sm:$0xff]
      %v7166 = vld [vmem:[%s700 + $0xa8] sm:$0xff]
      %v7167 = vld [vmem:[%s700 + $0xb0] sm:$0xff]
      %v7168 = vld [vmem:[%s700 + $0xb8] sm:$0xff]
      %v7169 = vld [vmem:[%s700 + $0xc0] sm:$0xff]
      %v7170 = vld [vmem:[%s700 + $0xc8] sm:$0xff]
      %v7171 = vld [vmem:[%s700 + $0xd0] sm:$0xff]
      %v7172 = vld [vmem:[%s700 + $0xd8] sm:$0xff]
      %v7173 = vld [vmem:[%s700 + $0xe0] sm:$0xff]
      %v7174 = vld [vmem:[%s700 + $0xe8] sm:$0xff]
      %v7175 = vld [vmem:[%s700 + $0xf0] sm:$0xff]
      %v7176 = vld [vmem:[%s700 + $0xf8] sm:$0xff]
      %v7177 = vld [vmem:[%s700 + $0x100] sm:$0xff]
      %v7178 = vld [vmem:[%s700 + $0x108] sm:$0xff]
      %v7179 = vld [vmem:[%s700 + $0x110] sm:$0xff]
      %v7180 = vld [vmem:[%s700 + $0x118] sm:$0xff]
      %v7181 = vld [vmem:[%s700 + $0x120] sm:$0xff]
      %v7182 = vld [vmem:[%s700 + $0x128] sm:$0xff]
      %v7183 = vld [vmem:[%s700 + $0x130] sm:$0xff]
      %v7184 = vld [vmem:[%s700 + $0x138] sm:$0xff]
      %v7185 = vld [vmem:[%s700 + $0x140] sm:$0xff]
      %v7186 = vld [vmem:[%s700 + $0x148] sm:$0xff]
      %v7187 = vld [vmem:[%s700 + $0x150] sm:$0xff]
      %v7188 = vld [vmem:[%s700 + $0x158] sm:$0xff]
      %v7190 = vsel %vm610, %v7130, 0
      %v7193 = vsel %vm610, %v7132, 0
      %v7196 = vsel %vm610, %v7134, 0
      %v7199 = vsel %vm610, %v7136, 0
      %v7202 = vsel %vm610, %v7138, 0
      %v7205 = vsel %vm610, %v7140, 0
      %v7208 = vsel %vm610, %v7142, 0
      %v7211 = vsel %vm610, %v7144, 0
      %7213 = vmatprep.subr.mxu0 %v7146
      %7214 = vmatpush1.msra.mxu0 %v7145
      %7215 = vmatprep.subr.mxu0 %v7148
      %7216 = vmatpush1.msra.mxu0 %v7147
      %7217 = vmatprep.subr.mxu0 %v7150
      %7218 = vmatpush1.msra.mxu0 %v7149
      %7219 = vmatprep.subr.mxu0 %v7152
      %7220 = vmatpush1.msra.mxu0 %v7151
      %7221 = vmatprep.subr.mxu0 %v7154
      %7222 = vmatpush1.msra.mxu0 %v7153
      %7223 = vmatprep.subr.mxu0 %v7156
      %7224 = vmatpush1.msra.mxu0 %v7155
      %7225 = vmatprep.subr.mxu0 %v7158
      %7226 = vmatpush1.msra.mxu0 %v7157
      %7227 = vmatprep.subr.mxu0 %v7160
      %7228 = vmatpush1.msra.mxu0 %v7159
      %7229 = vmatprep.subr.mxu0 %v7162
      %7230 = vmatpush1.msra.mxu0 %v7161
      %7231 = vmatprep.subr.mxu0 %v7164
      %7232 = vmatpush1.msra.mxu0 %v7163
      %7233 = vmatprep.subr.mxu0 %v7166
      %7234 = vmatpush1.msra.mxu0 %v7165
      %7235 = vmatprep.subr.mxu0 %v7168
      %7236 = vmatpush1.msra.mxu0 %v7167
      %7237 = vmatprep.subr.mxu0 %v7170
      %7238 = vmatpush1.msra.mxu0 %v7169
      %7239 = vmatprep.subr.mxu0 %v7172
      %7240 = vmatpush1.msra.mxu0 %v7171
      %7241 = vmatprep.subr.mxu0 %v7174
      %7242 = vmatpush1.msra.mxu0 %v7173
      %7243 = vmatprep.subr.mxu0 %v7176
      %7244 = vmatpush1.msra.mxu0 %v7175
      %7245 = vmatprep.subr.mxu0 %v7178
      %7246 = vmatpush1.msra.mxu0 %v7177
      %7247 = vmatprep.subr.mxu0 %v7180
      %7248 = vmatpush1.msra.mxu0 %v7179
      %7249 = vmatprep.subr.mxu0 %v7182
      %7250 = vmatpush1.msra.mxu0 %v7181
      %7251 = vmatprep.subr.mxu0 %v7184
      %7252 = vmatpush1.msra.mxu0 %v7183
      %7253 = vmatprep.subr.mxu0 %v7186
      %7254 = vmatpush1.msra.mxu0 %v7185
      %7255 = vmatprep.subr.mxu0 %v7188
      %7256 = vmatpush1.msra.mxu0 %v7187
      %7257 = vmatprep.subr.mxu0 0.0
      %7258 = vmatpush1.msra.mxu0 0.0
      %7259 = vmatprep.subr.mxu0 0.0
      %7260 = vmatpush1.msra.mxu0 0.0
      %7261 = vmatprep.subr.mxu0 0.0
      %7262 = vmatpush1.msra.mxu0 0.0
      %7263 = vmatprep.subr.mxu0 0.0
      %7264 = vmatpush1.msra.mxu0 0.0
      %7265 = vmatprep.subr.mxu0 0.0
      %7266 = vmatpush1.msra.mxu0 0.0
      %7267 = vmatprep.subr.mxu0 0.0
      %7268 = vmatpush1.msra.mxu0 0.0
      %7269 = vmatprep.subr.mxu0 0.0
      %7270 = vmatpush1.msra.mxu0 0.0
      %7271 = vmatprep.subr.mxu0 0.0
      %7272 = vmatpush1.msra.mxu0 0.0
      %7273 = vmatprep.subr.mxu0 0.0
      %7274 = vmatpush1.msra.mxu0 0.0
      %7275 = vmatprep.subr.mxu0 0.0
      %7276 = vmatpush1.msra.mxu0 0.0
      %7277 = vmatprep.mubr.f32.mxu0 %v7190
      %7278 = vmatmul.mubr.f32.gmra.mrb[0].mxu0 %v7129
      %v7279 = vpop.f32.mrb[0].mxu0
      %v7280 = vadd.f32 0.0, %v7279
      %v7281 = vpop.f32.mrb[0].mxu0
      %v7282 = vadd.f32 0.0, %v7281
      %7283 = vmatprep.mubr.f32.mxu0 %v7193
      %7284 = vmatmul.mubr.f32.gmra.mrb[0].mxu0 %v7131
      %v7285 = vpop.f32.mrb[0].mxu0
      %v7286 = vadd.f32 0.0, %v7285
      %v7287 = vpop.f32.mrb[0].mxu0
      %v7288 = vadd.f32 0.0, %v7287
      %7289 = vmatprep.mubr.f32.mxu0 %v7196
      %7290 = vmatmul.mubr.f32.gmra.mrb[0].mxu0 %v7133
      %v7291 = vpop.f32.mrb[0].mxu0
      %v7292 = vadd.f32 0.0, %v7291
      %v7293 = vpop.f32.mrb[0].mxu0
      %v7294 = vadd.f32 0.0, %v7293
      %7295 = vmatprep.mubr.f32.mxu0 %v7199
      %7296 = vmatmul.mubr.f32.gmra.mrb[0].mxu0 %v7135
      %v7297 = vpop.f32.mrb[0].mxu0
      %v7298 = vadd.f32 0.0, %v7297
      %v7299 = vpop.f32.mrb[0].mxu0
      %v7300 = vadd.f32 0.0, %v7299
      %7301 = vmatprep.mubr.f32.mxu0 %v7202
      %7302 = vmatmul.mubr.f32.gmra.mrb[0].mxu0 %v7137
      %v7303 = vpop.f32.mrb[0].mxu0
      %v7304 = vadd.f32 0.0, %v7303
      %v7305 = vpop.f32.mrb[0].mxu0
      %v7306 = vadd.f32 0.0, %v7305
      %7307 = vmatprep.mubr.f32.mxu0 %v7205
      %7308 = vmatmul.mubr.f32.gmra.mrb[0].mxu0 %v7139
      %v7309 = vpop.f32.mrb[0].mxu0
      %v7310 = vadd.f32 0.0, %v7309
      %v7311 = vpop.f32.mrb[0].mxu0
      %v7312 = vadd.f32 0.0, %v7311
      %7313 = vmatprep.mubr.f32.mxu0 %v7208
      %7314 = vmatmul.mubr.f32.gmra.mrb[0].mxu0 %v7141
      %v7315 = vpop.f32.mrb[0].mxu0
      %v7316 = vadd.f32 0.0, %v7315
      %v7317 = vpop.f32.mrb[0].mxu0
      %v7318 = vadd.f32 0.0, %v7317
      %7319 = vmatprep.mubr.f32.mxu0 %v7211
      %7320 = vmatmul.mubr.f32.gmra.mrb[0].mxu0 %v7143
      %v7321 = vpop.f32.mrb[0].mxu0
      %v7322 = vadd.f32 0.0, %v7321
      %v7323 = vpop.f32.mrb[0].mxu0
      %v7324 = vadd.f32 0.0, %v7323
      %7325 = vdwg.mxu0
      %v7326 = vadd.f32 %v7112, %v7280
      %v7327 = vadd.f32 %v7113, %v7282
      %v7328 = vadd.f32 %v7114, %v7286
      %v7329 = vadd.f32 %v7115, %v7288
      %v7330 = vadd.f32 %v7116, %v7292
      %v7331 = vadd.f32 %v7117, %v7294
      %v7332 = vadd.f32 %v7118, %v7298
      %v7333 = vadd.f32 %v7119, %v7300
      %v7334 = vadd.f32 %v7120, %v7304
      %v7335 = vadd.f32 %v7121, %v7306
      %v7336 = vadd.f32 %v7122, %v7310
      %v7337 = vadd.f32 %v7123, %v7312
      %v7338 = vadd.f32 %v7124, %v7316
      %v7339 = vadd.f32 %v7125, %v7318
      %v7340 = vadd.f32 %v7126, %v7322
      %v7341 = vadd.f32 %v7127, %v7324
      %s7342 = scalar_lea.vmem %s3, 640
      %v7343 = vld [vmem:[%s7342] sm:$0xff]
      %v7344 = vld [vmem:[%s7342 + $0x8] sm:$0xff]
      %v7345 = vld [vmem:[%s7342 + $0x10] sm:$0xff]
      %v7346 = vld [vmem:[%s7342 + $0x18] sm:$0xff]
      %v7347 = vld [vmem:[%s7342 + $0x20] sm:$0xff]
      %v7348 = vld [vmem:[%s7342 + $0x28] sm:$0xff]
      %v7349 = vld [vmem:[%s7342 + $0x30] sm:$0xff]
      %v7350 = vld [vmem:[%s7342 + $0x38] sm:$0xff]
      %v7351 = vld [vmem:[%s7342 + $0x40] sm:$0xff]
      %v7352 = vld [vmem:[%s7342 + $0x48] sm:$0xff]
      %v7353 = vld [vmem:[%s7342 + $0x50] sm:$0xff]
      %v7354 = vld [vmem:[%s7342 + $0x58] sm:$0xff]
      %v7355 = vld [vmem:[%s7342 + $0x60] sm:$0xff]
      %v7356 = vld [vmem:[%s7342 + $0x68] sm:$0xff]
      %v7357 = vld [vmem:[%s7342 + $0x70] sm:$0xff]
      %v7358 = vld [vmem:[%s7342 + $0x78] sm:$0xff]
      %v7359 = vld [vmem:[%s751] sm:$0xff]
      %v7360 = vld [vmem:[%s751 + $0x8] sm:$0xff]
      %v7361 = vld [vmem:[%s751 + $0x10] sm:$0xff]
      %v7362 = vld [vmem:[%s751 + $0x18] sm:$0xff]
      %v7363 = vld [vmem:[%s751 + $0x20] sm:$0xff]
      %v7364 = vld [vmem:[%s751 + $0x28] sm:$0xff]
      %v7365 = vld [vmem:[%s751 + $0x30] sm:$0xff]
      %v7366 = vld [vmem:[%s751 + $0x38] sm:$0xff]
      %v7367 = vld [vmem:[%s751 + $0x40] sm:$0xff]
      %v7368 = vld [vmem:[%s751 + $0x48] sm:$0xff]
      %v7369 = vld [vmem:[%s751 + $0x50] sm:$0xff]
      %v7370 = vld [vmem:[%s751 + $0x58] sm:$0xff]
      %v7371 = vld [vmem:[%s751 + $0x60] sm:$0xff]
      %v7372 = vld [vmem:[%s751 + $0x68] sm:$0xff]
      %v7373 = vld [vmem:[%s751 + $0x70] sm:$0xff]
      %v7374 = vld [vmem:[%s751 + $0x78] sm:$0xff]
      %v7375 = vld [vmem:[%s751 + $0x80] sm:$0xff]
      %v7376 = vld [vmem:[%s751 + $0x88] sm:$0xff]
      %v7377 = vld [vmem:[%s751 + $0x90] sm:$0xff]
      %v7378 = vld [vmem:[%s751 + $0x98] sm:$0xff]
      %v7379 = vld [vmem:[%s751 + $0xa0] sm:$0xff]
      %v7380 = vld [vmem:[%s751 + $0xa8] sm:$0xff]
      %v7381 = vld [vmem:[%s751 + $0xb0] sm:$0xff]
      %v7382 = vld [vmem:[%s751 + $0xb8] sm:$0xff]
      %v7383 = vld [vmem:[%s751 + $0xc0] sm:$0xff]
      %v7384 = vld [vmem:[%s751 + $0xc8] sm:$0xff]
      %v7385 = vld [vmem:[%s751 + $0xd0] sm:$0xff]
      %v7386 = vld [vmem:[%s751 + $0xd8] sm:$0xff]
      %v7387 = vld [vmem:[%s751 + $0xe0] sm:$0xff]
      %v7388 = vld [vmem:[%s751 + $0xe8] sm:$0xff]
      %v7389 = vld [vmem:[%s751 + $0xf0] sm:$0xff]
      %v7390 = vld [vmem:[%s751 + $0xf8] sm:$0xff]
      %v7391 = vld [vmem:[%s751 + $0x100] sm:$0xff]
      %v7392 = vld [vmem:[%s751 + $0x108] sm:$0xff]
      %v7393 = vld [vmem:[%s751 + $0x110] sm:$0xff]
      %v7394 = vld [vmem:[%s751 + $0x118] sm:$0xff]
      %v7395 = vld [vmem:[%s751 + $0x120] sm:$0xff]
      %v7396 = vld [vmem:[%s751 + $0x128] sm:$0xff]
      %v7397 = vld [vmem:[%s751 + $0x130] sm:$0xff]
      %v7398 = vld [vmem:[%s751 + $0x138] sm:$0xff]
      %v7399 = vld [vmem:[%s751 + $0x140] sm:$0xff]
      %v7400 = vld [vmem:[%s751 + $0x148] sm:$0xff]
      %v7401 = vld [vmem:[%s751 + $0x150] sm:$0xff]
      %v7402 = vld [vmem:[%s751 + $0x158] sm:$0xff]
      %v7404 = vsel %vm610, %v7344, 0
      %v7407 = vsel %vm610, %v7346, 0
      %v7410 = vsel %vm610, %v7348, 0
      %v7413 = vsel %vm610, %v7350, 0
      %v7416 = vsel %vm610, %v7352, 0
      %v7419 = vsel %vm610, %v7354, 0
      %v7422 = vsel %vm610, %v7356, 0
      %v7425 = vsel %vm610, %v7358, 0
      %7427 = vmatprep.subr.mxu0 %v7360
      %7428 = vmatpush1.msra.mxu0 %v7359
      %7429 = vmatprep.subr.mxu0 %v7362
      %7430 = vmatpush1.msra.mxu0 %v7361
      %7431 = vmatprep.subr.mxu0 %v7364
      %7432 = vmatpush1.msra.mxu0 %v7363
      %7433 = vmatprep.subr.mxu0 %v7366
      %7434 = vmatpush1.msra.mxu0 %v7365
      %7435 = vmatprep.subr.mxu0 %v7368
      %7436 = vmatpush1.msra.mxu0 %v7367
      %7437 = vmatprep.subr.mxu0 %v7370
      %7438 = vmatpush1.msra.mxu0 %v7369
      %7439 = vmatprep.subr.mxu0 %v7372
      %7440 = vmatpush1.msra.mxu0 %v7371
      %7441 = vmatprep.subr.mxu0 %v7374
      %7442 = vmatpush1.msra.mxu0 %v7373
      %7443 = vmatprep.subr.mxu0 %v7376
      %7444 = vmatpush1.msra.mxu0 %v7375
      %7445 = vmatprep.subr.mxu0 %v7378
      %7446 = vmatpush1.msra.mxu0 %v7377
      %7447 = vmatprep.subr.mxu0 %v7380
      %7448 = vmatpush1.msra.mxu0 %v7379
      %7449 = vmatprep.subr.mxu0 %v7382
      %7450 = vmatpush1.msra.mxu0 %v7381
      %7451 = vmatprep.subr.mxu0 %v7384
      %7452 = vmatpush1.msra.mxu0 %v7383
      %7453 = vmatprep.subr.mxu0 %v7386
      %7454 = vmatpush1.msra.mxu0 %v7385
      %7455 = vmatprep.subr.mxu0 %v7388
      %7456 = vmatpush1.msra.mxu0 %v7387
      %7457 = vmatprep.subr.mxu0 %v7390
      %7458 = vmatpush1.msra.mxu0 %v7389
      %7459 = vmatprep.subr.mxu0 %v7392
      %7460 = vmatpush1.msra.mxu0 %v7391
      %7461 = vmatprep.subr.mxu0 %v7394
      %7462 = vmatpush1.msra.mxu0 %v7393
      %7463 = vmatprep.subr.mxu0 %v7396
      %7464 = vmatpush1.msra.mxu0 %v7395
      %7465 = vmatprep.subr.mxu0 %v7398
      %7466 = vmatpush1.msra.mxu0 %v7397
      %7467 = vmatprep.subr.mxu0 %v7400
      %7468 = vmatpush1.msra.mxu0 %v7399
      %7469 = vmatprep.subr.mxu0 %v7402
      %7470 = vmatpush1.msra.mxu0 %v7401
      %7471 = vmatprep.subr.mxu0 0.0
      %7472 = vmatpush1.msra.mxu0 0.0
      %7473 = vmatprep.subr.mxu0 0.0
      %7474 = vmatpush1.msra.mxu0 0.0
      %7475 = vmatprep.subr.mxu0 0.0
      %7476 = vmatpush1.msra.mxu0 0.0
      %7477 = vmatprep.subr.mxu0 0.0
      %7478 = vmatpush1.msra.mxu0 0.0
      %7479 = vmatprep.subr.mxu0 0.0
      %7480 = vmatpush1.msra.mxu0 0.0
      %7481 = vmatprep.subr.mxu0 0.0
      %7482 = vmatpush1.msra.mxu0 0.0
      %7483 = vmatprep.subr.mxu0 0.0
      %7484 = vmatpush1.msra.mxu0 0.0
      %7485 = vmatprep.subr.mxu0 0.0
      %7486 = vmatpush1.msra.mxu0 0.0
      %7487 = vmatprep.subr.mxu0 0.0
      %7488 = vmatpush1.msra.mxu0 0.0
      %7489 = vmatprep.subr.mxu0 0.0
      %7490 = vmatpush1.msra.mxu0 0.0
      %7491 = vmatprep.mubr.f32.mxu0 %v7404
      %7492 = vmatmul.mubr.f32.gmra.mrb[0].mxu0 %v7343
      %v7493 = vpop.f32.mrb[0].mxu0
      %v7494 = vadd.f32 0.0, %v7493
      %v7495 = vpop.f32.mrb[0].mxu0
      %v7496 = vadd.f32 0.0, %v7495
      %7497 = vmatprep.mubr.f32.mxu0 %v7407
      %7498 = vmatmul.mubr.f32.gmra.mrb[0].mxu0 %v7345
      %v7499 = vpop.f32.mrb[0].mxu0
      %v7500 = vadd.f32 0.0, %v7499
      %v7501 = vpop.f32.mrb[0].mxu0
      %v7502 = vadd.f32 0.0, %v7501
      %7503 = vmatprep.mubr.f32.mxu0 %v7410
      %7504 = vmatmul.mubr.f32.gmra.mrb[0].mxu0 %v7347
      %v7505 = vpop.f32.mrb[0].mxu0
      %v7506 = vadd.f32 0.0, %v7505
      %v7507 = vpop.f32.mrb[0].mxu0
      %v7508 = vadd.f32 0.0, %v7507
      %7509 = vmatprep.mubr.f32.mxu0 %v7413
      %7510 = vmatmul.mubr.f32.gmra.mrb[0].mxu0 %v7349
      %v7511 = vpop.f32.mrb[0].mxu0
      %v7512 = vadd.f32 0.0, %v7511
      %v7513 = vpop.f32.mrb[0].mxu0
      %v7514 = vadd.f32 0.0, %v7513
      %7515 = vmatprep.mubr.f32.mxu0 %v7416
      %7516 = vmatmul.mubr.f32.gmra.mrb[0].mxu0 %v7351
      %v7517 = vpop.f32.mrb[0].mxu0
      %v7518 = vadd.f32 0.0, %v7517
      %v7519 = vpop.f32.mrb[0].mxu0
      %v7520 = vadd.f32 0.0, %v7519
      %7521 = vmatprep.mubr.f32.mxu0 %v7419
      %7522 = vmatmul.mubr.f32.gmra.mrb[0].mxu0 %v7353
      %v7523 = vpop.f32.mrb[0].mxu0
      %v7524 = vadd.f32 0.0, %v7523
      %v7525 = vpop.f32.mrb[0].mxu0
      %v7526 = vadd.f32 0.0, %v7525
      %7527 = vmatprep.mubr.f32.mxu0 %v7422
      %7528 = vmatmul.mubr.f32.gmra.mrb[0].mxu0 %v7355
      %v7529 = vpop.f32.mrb[0].mxu0
      %v7530 = vadd.f32 0.0, %v7529
      %v7531 = vpop.f32.mrb[0].mxu0
      %v7532 = vadd.f32 0.0, %v7531
      %7533 = vmatprep.mubr.f32.mxu0 %v7425
      %7534 = vmatmul.mubr.f32.gmra.mrb[0].mxu0 %v7357
      %v7535 = vpop.f32.mrb[0].mxu0
      %v7536 = vadd.f32 0.0, %v7535
      %v7537 = vpop.f32.mrb[0].mxu0
      %v7538 = vadd.f32 0.0, %v7537
      %7539 = vdwg.mxu0
      %v7540 = vadd.f32 %v7326, %v7494
      %v7541 = vadd.f32 %v7327, %v7496
      %v7542 = vadd.f32 %v7328, %v7500
      %v7543 = vadd.f32 %v7329, %v7502
      %v7544 = vadd.f32 %v7330, %v7506
      %v7545 = vadd.f32 %v7331, %v7508
      %v7546 = vadd.f32 %v7332, %v7512
      %v7547 = vadd.f32 %v7333, %v7514
      %v7548 = vadd.f32 %v7334, %v7518
      %v7549 = vadd.f32 %v7335, %v7520
      %v7550 = vadd.f32 %v7336, %v7524
      %v7551 = vadd.f32 %v7337, %v7526
      %v7552 = vadd.f32 %v7338, %v7530
      %v7553 = vadd.f32 %v7339, %v7532
      %v7554 = vadd.f32 %v7340, %v7536
      %v7555 = vadd.f32 %v7341, %v7538
      %s7556 = scalar_lea.vmem %s3, 768
      %v7557 = vld [vmem:[%s7556] sm:$0xff]
      %v7558 = vld [vmem:[%s7556 + $0x8] sm:$0xff]
      %v7559 = vld [vmem:[%s7556 + $0x10] sm:$0xff]
      %v7560 = vld [vmem:[%s7556 + $0x18] sm:$0xff]
      %v7561 = vld [vmem:[%s7556 + $0x20] sm:$0xff]
      %v7562 = vld [vmem:[%s7556 + $0x28] sm:$0xff]
      %v7563 = vld [vmem:[%s7556 + $0x30] sm:$0xff]
      %v7564 = vld [vmem:[%s7556 + $0x38] sm:$0xff]
      %v7565 = vld [vmem:[%s7556 + $0x40] sm:$0xff]
      %v7566 = vld [vmem:[%s7556 + $0x48] sm:$0xff]
      %v7567 = vld [vmem:[%s7556 + $0x50] sm:$0xff]
      %v7568 = vld [vmem:[%s7556 + $0x58] sm:$0xff]
      %v7569 = vld [vmem:[%s7556 + $0x60] sm:$0xff]
      %v7570 = vld [vmem:[%s7556 + $0x68] sm:$0xff]
      %v7571 = vld [vmem:[%s7556 + $0x70] sm:$0xff]
      %v7572 = vld [vmem:[%s7556 + $0x78] sm:$0xff]
      %v7573 = vld [vmem:[%s802] sm:$0xff]
      %v7574 = vld [vmem:[%s802 + $0x8] sm:$0xff]
      %v7575 = vld [vmem:[%s802 + $0x10] sm:$0xff]
      %v7576 = vld [vmem:[%s802 + $0x18] sm:$0xff]
      %v7577 = vld [vmem:[%s802 + $0x20] sm:$0xff]
      %v7578 = vld [vmem:[%s802 + $0x28] sm:$0xff]
      %v7579 = vld [vmem:[%s802 + $0x30] sm:$0xff]
      %v7580 = vld [vmem:[%s802 + $0x38] sm:$0xff]
      %v7581 = vld [vmem:[%s802 + $0x40] sm:$0xff]
      %v7582 = vld [vmem:[%s802 + $0x48] sm:$0xff]
      %v7583 = vld [vmem:[%s802 + $0x50] sm:$0xff]
      %v7584 = vld [vmem:[%s802 + $0x58] sm:$0xff]
      %v7585 = vld [vmem:[%s802 + $0x60] sm:$0xff]
      %v7586 = vld [vmem:[%s802 + $0x68] sm:$0xff]
      %v7587 = vld [vmem:[%s802 + $0x70] sm:$0xff]
      %v7588 = vld [vmem:[%s802 + $0x78] sm:$0xff]
      %v7589 = vld [vmem:[%s802 + $0x80] sm:$0xff]
      %v7590 = vld [vmem:[%s802 + $0x88] sm:$0xff]
      %v7591 = vld [vmem:[%s802 + $0x90] sm:$0xff]
      %v7592 = vld [vmem:[%s802 + $0x98] sm:$0xff]
      %v7593 = vld [vmem:[%s802 + $0xa0] sm:$0xff]
      %v7594 = vld [vmem:[%s802 + $0xa8] sm:$0xff]
      %v7595 = vld [vmem:[%s802 + $0xb0] sm:$0xff]
      %v7596 = vld [vmem:[%s802 + $0xb8] sm:$0xff]
      %v7597 = vld [vmem:[%s802 + $0xc0] sm:$0xff]
      %v7598 = vld [vmem:[%s802 + $0xc8] sm:$0xff]
      %v7599 = vld [vmem:[%s802 + $0xd0] sm:$0xff]
      %v7600 = vld [vmem:[%s802 + $0xd8] sm:$0xff]
      %v7601 = vld [vmem:[%s802 + $0xe0] sm:$0xff]
      %v7602 = vld [vmem:[%s802 + $0xe8] sm:$0xff]
      %v7603 = vld [vmem:[%s802 + $0xf0] sm:$0xff]
      %v7604 = vld [vmem:[%s802 + $0xf8] sm:$0xff]
      %v7605 = vld [vmem:[%s802 + $0x100] sm:$0xff]
      %v7606 = vld [vmem:[%s802 + $0x108] sm:$0xff]
      %v7607 = vld [vmem:[%s802 + $0x110] sm:$0xff]
      %v7608 = vld [vmem:[%s802 + $0x118] sm:$0xff]
      %v7609 = vld [vmem:[%s802 + $0x120] sm:$0xff]
      %v7610 = vld [vmem:[%s802 + $0x128] sm:$0xff]
      %v7611 = vld [vmem:[%s802 + $0x130] sm:$0xff]
      %v7612 = vld [vmem:[%s802 + $0x138] sm:$0xff]
      %v7613 = vld [vmem:[%s802 + $0x140] sm:$0xff]
      %v7614 = vld [vmem:[%s802 + $0x148] sm:$0xff]
      %v7615 = vld [vmem:[%s802 + $0x150] sm:$0xff]
      %v7616 = vld [vmem:[%s802 + $0x158] sm:$0xff]
      %v7618 = vsel %vm610, %v7558, 0
      %v7621 = vsel %vm610, %v7560, 0
      %v7624 = vsel %vm610, %v7562, 0
      %v7627 = vsel %vm610, %v7564, 0
      %v7630 = vsel %vm610, %v7566, 0
      %v7633 = vsel %vm610, %v7568, 0
      %v7636 = vsel %vm610, %v7570, 0
      %v7639 = vsel %vm610, %v7572, 0
      %7641 = vmatprep.subr.mxu0 %v7574
      %7642 = vmatpush1.msra.mxu0 %v7573
      %7643 = vmatprep.subr.mxu0 %v7576
      %7644 = vmatpush1.msra.mxu0 %v7575
      %7645 = vmatprep.subr.mxu0 %v7578
      %7646 = vmatpush1.msra.mxu0 %v7577
      %7647 = vmatprep.subr.mxu0 %v7580
      %7648 = vmatpush1.msra.mxu0 %v7579
      %7649 = vmatprep.subr.mxu0 %v7582
      %7650 = vmatpush1.msra.mxu0 %v7581
      %7651 = vmatprep.subr.mxu0 %v7584
      %7652 = vmatpush1.msra.mxu0 %v7583
      %7653 = vmatprep.subr.mxu0 %v7586
      %7654 = vmatpush1.msra.mxu0 %v7585
      %7655 = vmatprep.subr.mxu0 %v7588
      %7656 = vmatpush1.msra.mxu0 %v7587
      %7657 = vmatprep.subr.mxu0 %v7590
      %7658 = vmatpush1.msra.mxu0 %v7589
      %7659 = vmatprep.subr.mxu0 %v7592
      %7660 = vmatpush1.msra.mxu0 %v7591
      %7661 = vmatprep.subr.mxu0 %v7594
      %7662 = vmatpush1.msra.mxu0 %v7593
      %7663 = vmatprep.subr.mxu0 %v7596
      %7664 = vmatpush1.msra.mxu0 %v7595
      %7665 = vmatprep.subr.mxu0 %v7598
      %7666 = vmatpush1.msra.mxu0 %v7597
      %7667 = vmatprep.subr.mxu0 %v7600
      %7668 = vmatpush1.msra.mxu0 %v7599
      %7669 = vmatprep.subr.mxu0 %v7602
      %7670 = vmatpush1.msra.mxu0 %v7601
      %7671 = vmatprep.subr.mxu0 %v7604
      %7672 = vmatpush1.msra.mxu0 %v7603
      %7673 = vmatprep.subr.mxu0 %v7606
      %7674 = vmatpush1.msra.mxu0 %v7605
      %7675 = vmatprep.subr.mxu0 %v7608
      %7676 = vmatpush1.msra.mxu0 %v7607
      %7677 = vmatprep.subr.mxu0 %v7610
      %7678 = vmatpush1.msra.mxu0 %v7609
      %7679 = vmatprep.subr.mxu0 %v7612
      %7680 = vmatpush1.msra.mxu0 %v7611
      %7681 = vmatprep.subr.mxu0 %v7614
      %7682 = vmatpush1.msra.mxu0 %v7613
      %7683 = vmatprep.subr.mxu0 %v7616
      %7684 = vmatpush1.msra.mxu0 %v7615
      %7685 = vmatprep.subr.mxu0 0.0
      %7686 = vmatpush1.msra.mxu0 0.0
      %7687 = vmatprep.subr.mxu0 0.0
      %7688 = vmatpush1.msra.mxu0 0.0
      %7689 = vmatprep.subr.mxu0 0.0
      %7690 = vmatpush1.msra.mxu0 0.0
      %7691 = vmatprep.subr.mxu0 0.0
      %7692 = vmatpush1.msra.mxu0 0.0
      %7693 = vmatprep.subr.mxu0 0.0
      %7694 = vmatpush1.msra.mxu0 0.0
      %7695 = vmatprep.subr.mxu0 0.0
      %7696 = vmatpush1.msra.mxu0 0.0
      %7697 = vmatprep.subr.mxu0 0.0
      %7698 = vmatpush1.msra.mxu0 0.0
      %7699 = vmatprep.subr.mxu0 0.0
      %7700 = vmatpush1.msra.mxu0 0.0
      %7701 = vmatprep.subr.mxu0 0.0
      %7702 = vmatpush1.msra.mxu0 0.0
      %7703 = vmatprep.subr.mxu0 0.0
      %7704 = vmatpush1.msra.mxu0 0.0
      %7705 = vmatprep.mubr.f32.mxu0 %v7618
      %7706 = vmatmul.mubr.f32.gmra.mrb[0].mxu0 %v7557
      %v7707 = vpop.f32.mrb[0].mxu0
      %v7708 = vadd.f32 0.0, %v7707
      %v7709 = vpop.f32.mrb[0].mxu0
      %v7710 = vadd.f32 0.0, %v7709
      %7711 = vmatprep.mubr.f32.mxu0 %v7621
      %7712 = vmatmul.mubr.f32.gmra.mrb[0].mxu0 %v7559
      %v7713 = vpop.f32.mrb[0].mxu0
      %v7714 = vadd.f32 0.0, %v7713
      %v7715 = vpop.f32.mrb[0].mxu0
      %v7716 = vadd.f32 0.0, %v7715
      %7717 = vmatprep.mubr.f32.mxu0 %v7624
      %7718 = vmatmul.mubr.f32.gmra.mrb[0].mxu0 %v7561
      %v7719 = vpop.f32.mrb[0].mxu0
      %v7720 = vadd.f32 0.0, %v7719
      %v7721 = vpop.f32.mrb[0].mxu0
      %v7722 = vadd.f32 0.0, %v7721
      %7723 = vmatprep.mubr.f32.mxu0 %v7627
      %7724 = vmatmul.mubr.f32.gmra.mrb[0].mxu0 %v7563
      %v7725 = vpop.f32.mrb[0].mxu0
      %v7726 = vadd.f32 0.0, %v7725
      %v7727 = vpop.f32.mrb[0].mxu0
      %v7728 = vadd.f32 0.0, %v7727
      %7729 = vmatprep.mubr.f32.mxu0 %v7630
      %7730 = vmatmul.mubr.f32.gmra.mrb[0].mxu0 %v7565
      %v7731 = vpop.f32.mrb[0].mxu0
      %v7732 = vadd.f32 0.0, %v7731
      %v7733 = vpop.f32.mrb[0].mxu0
      %v7734 = vadd.f32 0.0, %v7733
      %7735 = vmatprep.mubr.f32.mxu0 %v7633
      %7736 = vmatmul.mubr.f32.gmra.mrb[0].mxu0 %v7567
      %v7737 = vpop.f32.mrb[0].mxu0
      %v7738 = vadd.f32 0.0, %v7737
      %v7739 = vpop.f32.mrb[0].mxu0
      %v7740 = vadd.f32 0.0, %v7739
      %7741 = vmatprep.mubr.f32.mxu0 %v7636
      %7742 = vmatmul.mubr.f32.gmra.mrb[0].mxu0 %v7569
      %v7743 = vpop.f32.mrb[0].mxu0
      %v7744 = vadd.f32 0.0, %v7743
      %v7745 = vpop.f32.mrb[0].mxu0
      %v7746 = vadd.f32 0.0, %v7745
      %7747 = vmatprep.mubr.f32.mxu0 %v7639
      %7748 = vmatmul.mubr.f32.gmra.mrb[0].mxu0 %v7571
      %v7749 = vpop.f32.mrb[0].mxu0
      %v7750 = vadd.f32 0.0, %v7749
      %v7751 = vpop.f32.mrb[0].mxu0
      %v7752 = vadd.f32 0.0, %v7751
      %7753 = vdwg.mxu0
      %v7754 = vadd.f32 %v7540, %v7708
      %v7755 = vadd.f32 %v7541, %v7710
      %v7756 = vadd.f32 %v7542, %v7714
      %v7757 = vadd.f32 %v7543, %v7716
      %v7758 = vadd.f32 %v7544, %v7720
      %v7759 = vadd.f32 %v7545, %v7722
      %v7760 = vadd.f32 %v7546, %v7726
      %v7761 = vadd.f32 %v7547, %v7728
      %v7762 = vadd.f32 %v7548, %v7732
      %v7763 = vadd.f32 %v7549, %v7734
      %v7764 = vadd.f32 %v7550, %v7738
      %v7765 = vadd.f32 %v7551, %v7740
      %v7766 = vadd.f32 %v7552, %v7744
      %v7767 = vadd.f32 %v7553, %v7746
      %v7768 = vadd.f32 %v7554, %v7750
      %v7769 = vadd.f32 %v7555, %v7752
      %s7770 = scalar_lea.vmem %s3, 896
      %v7771 = vld [vmem:[%s7770] sm:$0xff]
      %v7772 = vld [vmem:[%s7770 + $0x8] sm:$0xff]
      %v7773 = vld [vmem:[%s7770 + $0x10] sm:$0xff]
      %v7774 = vld [vmem:[%s7770 + $0x18] sm:$0xff]
      %v7775 = vld [vmem:[%s7770 + $0x20] sm:$0xff]
      %v7776 = vld [vmem:[%s7770 + $0x28] sm:$0xff]
      %v7777 = vld [vmem:[%s7770 + $0x30] sm:$0xff]
      %v7778 = vld [vmem:[%s7770 + $0x38] sm:$0xff]
      %v7779 = vld [vmem:[%s7770 + $0x40] sm:$0xff]
      %v7780 = vld [vmem:[%s7770 + $0x48] sm:$0xff]
      %v7781 = vld [vmem:[%s7770 + $0x50] sm:$0xff]
      %v7782 = vld [vmem:[%s7770 + $0x58] sm:$0xff]
      %v7783 = vld [vmem:[%s7770 + $0x60] sm:$0xff]
      %v7784 = vld [vmem:[%s7770 + $0x68] sm:$0xff]
      %v7785 = vld [vmem:[%s7770 + $0x70] sm:$0xff]
      %v7786 = vld [vmem:[%s7770 + $0x78] sm:$0xff]
      %v7787 = vld [vmem:[%s853] sm:$0xff]
      %v7788 = vld [vmem:[%s853 + $0x8] sm:$0xff]
      %v7789 = vld [vmem:[%s853 + $0x10] sm:$0xff]
      %v7790 = vld [vmem:[%s853 + $0x18] sm:$0xff]
      %v7791 = vld [vmem:[%s853 + $0x20] sm:$0xff]
      %v7792 = vld [vmem:[%s853 + $0x28] sm:$0xff]
      %v7793 = vld [vmem:[%s853 + $0x30] sm:$0xff]
      %v7794 = vld [vmem:[%s853 + $0x38] sm:$0xff]
      %v7795 = vld [vmem:[%s853 + $0x40] sm:$0xff]
      %v7796 = vld [vmem:[%s853 + $0x48] sm:$0xff]
      %v7797 = vld [vmem:[%s853 + $0x50] sm:$0xff]
      %v7798 = vld [vmem:[%s853 + $0x58] sm:$0xff]
      %v7799 = vld [vmem:[%s853 + $0x60] sm:$0xff]
      %v7800 = vld [vmem:[%s853 + $0x68] sm:$0xff]
      %v7801 = vld [vmem:[%s853 + $0x70] sm:$0xff]
      %v7802 = vld [vmem:[%s853 + $0x78] sm:$0xff]
      %v7803 = vld [vmem:[%s853 + $0x80] sm:$0xff]
      %v7804 = vld [vmem:[%s853 + $0x88] sm:$0xff]
      %v7805 = vld [vmem:[%s853 + $0x90] sm:$0xff]
      %v7806 = vld [vmem:[%s853 + $0x98] sm:$0xff]
      %v7807 = vld [vmem:[%s853 + $0xa0] sm:$0xff]
      %v7808 = vld [vmem:[%s853 + $0xa8] sm:$0xff]
      %v7809 = vld [vmem:[%s853 + $0xb0] sm:$0xff]
      %v7810 = vld [vmem:[%s853 + $0xb8] sm:$0xff]
      %v7811 = vld [vmem:[%s853 + $0xc0] sm:$0xff]
      %v7812 = vld [vmem:[%s853 + $0xc8] sm:$0xff]
      %v7813 = vld [vmem:[%s853 + $0xd0] sm:$0xff]
      %v7814 = vld [vmem:[%s853 + $0xd8] sm:$0xff]
      %v7815 = vld [vmem:[%s853 + $0xe0] sm:$0xff]
      %v7816 = vld [vmem:[%s853 + $0xe8] sm:$0xff]
      %v7817 = vld [vmem:[%s853 + $0xf0] sm:$0xff]
      %v7818 = vld [vmem:[%s853 + $0xf8] sm:$0xff]
      %v7819 = vld [vmem:[%s853 + $0x100] sm:$0xff]
      %v7820 = vld [vmem:[%s853 + $0x108] sm:$0xff]
      %v7821 = vld [vmem:[%s853 + $0x110] sm:$0xff]
      %v7822 = vld [vmem:[%s853 + $0x118] sm:$0xff]
      %v7823 = vld [vmem:[%s853 + $0x120] sm:$0xff]
      %v7824 = vld [vmem:[%s853 + $0x128] sm:$0xff]
      %v7825 = vld [vmem:[%s853 + $0x130] sm:$0xff]
      %v7826 = vld [vmem:[%s853 + $0x138] sm:$0xff]
      %v7827 = vld [vmem:[%s853 + $0x140] sm:$0xff]
      %v7828 = vld [vmem:[%s853 + $0x148] sm:$0xff]
      %v7829 = vld [vmem:[%s853 + $0x150] sm:$0xff]
      %v7830 = vld [vmem:[%s853 + $0x158] sm:$0xff]
      %v7832 = vsel %vm610, %v7772, 0
      %v7835 = vsel %vm610, %v7774, 0
      %v7838 = vsel %vm610, %v7776, 0
      %v7841 = vsel %vm610, %v7778, 0
      %v7844 = vsel %vm610, %v7780, 0
      %v7847 = vsel %vm610, %v7782, 0
      %v7850 = vsel %vm610, %v7784, 0
      %v7853 = vsel %vm610, %v7786, 0
      %7855 = vmatprep.subr.mxu0 %v7788
      %7856 = vmatpush1.msra.mxu0 %v7787
      %7857 = vmatprep.subr.mxu0 %v7790
      %7858 = vmatpush1.msra.mxu0 %v7789
      %7859 = vmatprep.subr.mxu0 %v7792
      %7860 = vmatpush1.msra.mxu0 %v7791
      %7861 = vmatprep.subr.mxu0 %v7794
      %7862 = vmatpush1.msra.mxu0 %v7793
      %7863 = vmatprep.subr.mxu0 %v7796
      %7864 = vmatpush1.msra.mxu0 %v7795
      %7865 = vmatprep.subr.mxu0 %v7798
      %7866 = vmatpush1.msra.mxu0 %v7797
      %7867 = vmatprep.subr.mxu0 %v7800
      %7868 = vmatpush1.msra.mxu0 %v7799
      %7869 = vmatprep.subr.mxu0 %v7802
      %7870 = vmatpush1.msra.mxu0 %v7801
      %7871 = vmatprep.subr.mxu0 %v7804
      %7872 = vmatpush1.msra.mxu0 %v7803
      %7873 = vmatprep.subr.mxu0 %v7806
      %7874 = vmatpush1.msra.mxu0 %v7805
      %7875 = vmatprep.subr.mxu0 %v7808
      %7876 = vmatpush1.msra.mxu0 %v7807
      %7877 = vmatprep.subr.mxu0 %v7810
      %7878 = vmatpush1.msra.mxu0 %v7809
      %7879 = vmatprep.subr.mxu0 %v7812
      %7880 = vmatpush1.msra.mxu0 %v7811
      %7881 = vmatprep.subr.mxu0 %v7814
      %7882 = vmatpush1.msra.mxu0 %v7813
      %7883 = vmatprep.subr.mxu0 %v7816
      %7884 = vmatpush1.msra.mxu0 %v7815
      %7885 = vmatprep.subr.mxu0 %v7818
      %7886 = vmatpush1.msra.mxu0 %v7817
      %7887 = vmatprep.subr.mxu0 %v7820
      %7888 = vmatpush1.msra.mxu0 %v7819
      %7889 = vmatprep.subr.mxu0 %v7822
      %7890 = vmatpush1.msra.mxu0 %v7821
      %7891 = vmatprep.subr.mxu0 %v7824
      %7892 = vmatpush1.msra.mxu0 %v7823
      %7893 = vmatprep.subr.mxu0 %v7826
      %7894 = vmatpush1.msra.mxu0 %v7825
      %7895 = vmatprep.subr.mxu0 %v7828
      %7896 = vmatpush1.msra.mxu0 %v7827
      %7897 = vmatprep.subr.mxu0 %v7830
      %7898 = vmatpush1.msra.mxu0 %v7829
      %7899 = vmatprep.subr.mxu0 0.0
      %7900 = vmatpush1.msra.mxu0 0.0
      %7901 = vmatprep.subr.mxu0 0.0
      %7902 = vmatpush1.msra.mxu0 0.0
      %7903 = vmatprep.subr.mxu0 0.0
      %7904 = vmatpush1.msra.mxu0 0.0
      %7905 = vmatprep.subr.mxu0 0.0
      %7906 = vmatpush1.msra.mxu0 0.0
      %7907 = vmatprep.subr.mxu0 0.0
      %7908 = vmatpush1.msra.mxu0 0.0
      %7909 = vmatprep.subr.mxu0 0.0
      %7910 = vmatpush1.msra.mxu0 0.0
      %7911 = vmatprep.subr.mxu0 0.0
      %7912 = vmatpush1.msra.mxu0 0.0
      %7913 = vmatprep.subr.mxu0 0.0
      %7914 = vmatpush1.msra.mxu0 0.0
      %7915 = vmatprep.subr.mxu0 0.0
      %7916 = vmatpush1.msra.mxu0 0.0
      %7917 = vmatprep.subr.mxu0 0.0
      %7918 = vmatpush1.msra.mxu0 0.0
      %7919 = vmatprep.mubr.f32.mxu0 %v7832
      %7920 = vmatmul.mubr.f32.gmra.mrb[0].mxu0 %v7771
      %v7921 = vpop.f32.mrb[0].mxu0
      %v7922 = vadd.f32 0.0, %v7921
      %v7923 = vpop.f32.mrb[0].mxu0
      %v7924 = vadd.f32 0.0, %v7923
      %7925 = vmatprep.mubr.f32.mxu0 %v7835
      %7926 = vmatmul.mubr.f32.gmra.mrb[0].mxu0 %v7773
      %v7927 = vpop.f32.mrb[0].mxu0
      %v7928 = vadd.f32 0.0, %v7927
      %v7929 = vpop.f32.mrb[0].mxu0
      %v7930 = vadd.f32 0.0, %v7929
      %7931 = vmatprep.mubr.f32.mxu0 %v7838
      %7932 = vmatmul.mubr.f32.gmra.mrb[0].mxu0 %v7775
      %v7933 = vpop.f32.mrb[0].mxu0
      %v7934 = vadd.f32 0.0, %v7933
      %v7935 = vpop.f32.mrb[0].mxu0
      %v7936 = vadd.f32 0.0, %v7935
      %7937 = vmatprep.mubr.f32.mxu0 %v7841
      %7938 = vmatmul.mubr.f32.gmra.mrb[0].mxu0 %v7777
      %v7939 = vpop.f32.mrb[0].mxu0
      %v7940 = vadd.f32 0.0, %v7939
      %v7941 = vpop.f32.mrb[0].mxu0
      %v7942 = vadd.f32 0.0, %v7941
      %7943 = vmatprep.mubr.f32.mxu0 %v7844
      %7944 = vmatmul.mubr.f32.gmra.mrb[0].mxu0 %v7779
      %v7945 = vpop.f32.mrb[0].mxu0
      %v7946 = vadd.f32 0.0, %v7945
      %v7947 = vpop.f32.mrb[0].mxu0
      %v7948 = vadd.f32 0.0, %v7947
      %7949 = vmatprep.mubr.f32.mxu0 %v7847
      %7950 = vmatmul.mubr.f32.gmra.mrb[0].mxu0 %v7781
      %v7951 = vpop.f32.mrb[0].mxu0
      %v7952 = vadd.f32 0.0, %v7951
      %v7953 = vpop.f32.mrb[0].mxu0
      %v7954 = vadd.f32 0.0, %v7953
      %7955 = vmatprep.mubr.f32.mxu0 %v7850
      %7956 = vmatmul.mubr.f32.gmra.mrb[0].mxu0 %v7783
      %v7957 = vpop.f32.mrb[0].mxu0
      %v7958 = vadd.f32 0.0, %v7957
      %v7959 = vpop.f32.mrb[0].mxu0
      %v7960 = vadd.f32 0.0, %v7959
      %7961 = vmatprep.mubr.f32.mxu0 %v7853
      %7962 = vmatmul.mubr.f32.gmra.mrb[0].mxu0 %v7785
      %v7963 = vpop.f32.mrb[0].mxu0
      %v7964 = vadd.f32 0.0, %v7963
      %v7965 = vpop.f32.mrb[0].mxu0
      %v7966 = vadd.f32 0.0, %v7965
      %7967 = vdwg.mxu0
      %v7968 = vadd.f32 %v7754, %v7922
      %v7969 = vadd.f32 %v7755, %v7924
      %v7970 = vadd.f32 %v7756, %v7928
      %v7971 = vadd.f32 %v7757, %v7930
      %v7972 = vadd.f32 %v7758, %v7934
      %v7973 = vadd.f32 %v7759, %v7936
      %v7974 = vadd.f32 %v7760, %v7940
      %v7975 = vadd.f32 %v7761, %v7942
      %v7976 = vadd.f32 %v7762, %v7946
      %v7977 = vadd.f32 %v7763, %v7948
      %v7978 = vadd.f32 %v7764, %v7952
      %v7979 = vadd.f32 %v7765, %v7954
      %v7980 = vadd.f32 %v7766, %v7958
      %v7981 = vadd.f32 %v7767, %v7960
      %v7982 = vadd.f32 %v7768, %v7964
      %v7983 = vadd.f32 %v7769, %v7966
      %s7984 = scalar_lea.vmem %s3, 1024
      %v7985 = vld [vmem:[%s7984] sm:$0xff]
      %v7986 = vld [vmem:[%s7984 + $0x8] sm:$0xff]
      %v7987 = vld [vmem:[%s7984 + $0x10] sm:$0xff]
      %v7988 = vld [vmem:[%s7984 + $0x18] sm:$0xff]
      %v7989 = vld [vmem:[%s7984 + $0x20] sm:$0xff]
      %v7990 = vld [vmem:[%s7984 + $0x28] sm:$0xff]
      %v7991 = vld [vmem:[%s7984 + $0x30] sm:$0xff]
      %v7992 = vld [vmem:[%s7984 + $0x38] sm:$0xff]
      %v7993 = vld [vmem:[%s7984 + $0x40] sm:$0xff]
      %v7994 = vld [vmem:[%s7984 + $0x48] sm:$0xff]
      %v7995 = vld [vmem:[%s7984 + $0x50] sm:$0xff]
      %v7996 = vld [vmem:[%s7984 + $0x58] sm:$0xff]
      %v7997 = vld [vmem:[%s7984 + $0x60] sm:$0xff]
      %v7998 = vld [vmem:[%s7984 + $0x68] sm:$0xff]
      %v7999 = vld [vmem:[%s7984 + $0x70] sm:$0xff]
      %v8000 = vld [vmem:[%s7984 + $0x78] sm:$0xff]
      %v8001 = vld [vmem:[%s866] sm:$0xff]
      %v8002 = vld [vmem:[%s866 + $0x8] sm:$0xff]
      %v8003 = vld [vmem:[%s866 + $0x10] sm:$0xff]
      %v8004 = vld [vmem:[%s866 + $0x18] sm:$0xff]
      %v8005 = vld [vmem:[%s866 + $0x20] sm:$0xff]
      %v8006 = vld [vmem:[%s866 + $0x28] sm:$0xff]
      %v8007 = vld [vmem:[%s866 + $0x30] sm:$0xff]
      %v8008 = vld [vmem:[%s866 + $0x38] sm:$0xff]
      %v8009 = vld [vmem:[%s866 + $0x40] sm:$0xff]
      %v8010 = vld [vmem:[%s866 + $0x48] sm:$0xff]
      %v8011 = vld [vmem:[%s866 + $0x50] sm:$0xff]
      %v8012 = vld [vmem:[%s866 + $0x58] sm:$0xff]
      %v8013 = vld [vmem:[%s866 + $0x60] sm:$0xff]
      %v8014 = vld [vmem:[%s866 + $0x68] sm:$0xff]
      %v8015 = vld [vmem:[%s866 + $0x70] sm:$0xff]
      %v8016 = vld [vmem:[%s866 + $0x78] sm:$0xff]
      %v8017 = vld [vmem:[%s866 + $0x80] sm:$0xff]
      %v8018 = vld [vmem:[%s866 + $0x88] sm:$0xff]
      %v8019 = vld [vmem:[%s866 + $0x90] sm:$0xff]
      %v8020 = vld [vmem:[%s866 + $0x98] sm:$0xff]
      %v8021 = vld [vmem:[%s866 + $0xa0] sm:$0xff]
      %v8022 = vld [vmem:[%s866 + $0xa8] sm:$0xff]
      %v8023 = vld [vmem:[%s866 + $0xb0] sm:$0xff]
      %v8024 = vld [vmem:[%s866 + $0xb8] sm:$0xff]
      %v8025 = vld [vmem:[%s866 + $0xc0] sm:$0xff]
      %v8026 = vld [vmem:[%s866 + $0xc8] sm:$0xff]
      %v8027 = vld [vmem:[%s866 + $0xd0] sm:$0xff]
      %v8028 = vld [vmem:[%s866 + $0xd8] sm:$0xff]
      %v8029 = vld [vmem:[%s866 + $0xe0] sm:$0xff]
      %v8030 = vld [vmem:[%s866 + $0xe8] sm:$0xff]
      %v8031 = vld [vmem:[%s866 + $0xf0] sm:$0xff]
      %v8032 = vld [vmem:[%s866 + $0xf8] sm:$0xff]
      %v8033 = vld [vmem:[%s866 + $0x100] sm:$0xff]
      %v8034 = vld [vmem:[%s866 + $0x108] sm:$0xff]
      %v8035 = vld [vmem:[%s866 + $0x110] sm:$0xff]
      %v8036 = vld [vmem:[%s866 + $0x118] sm:$0xff]
      %v8037 = vld [vmem:[%s866 + $0x120] sm:$0xff]
      %v8038 = vld [vmem:[%s866 + $0x128] sm:$0xff]
      %v8039 = vld [vmem:[%s866 + $0x130] sm:$0xff]
      %v8040 = vld [vmem:[%s866 + $0x138] sm:$0xff]
      %v8041 = vld [vmem:[%s866 + $0x140] sm:$0xff]
      %v8042 = vld [vmem:[%s866 + $0x148] sm:$0xff]
      %v8043 = vld [vmem:[%s866 + $0x150] sm:$0xff]
      %v8044 = vld [vmem:[%s866 + $0x158] sm:$0xff]
      %v8046 = vsel %vm610, %v7986, 0
      %v8049 = vsel %vm610, %v7988, 0
      %v8052 = vsel %vm610, %v7990, 0
      %v8055 = vsel %vm610, %v7992, 0
      %v8058 = vsel %vm610, %v7994, 0
      %v8061 = vsel %vm610, %v7996, 0
      %v8064 = vsel %vm610, %v7998, 0
      %v8067 = vsel %vm610, %v8000, 0
      %8069 = vmatprep.subr.mxu0 %v8002
      %8070 = vmatpush1.msra.mxu0 %v8001
      %8071 = vmatprep.subr.mxu0 %v8004
      %8072 = vmatpush1.msra.mxu0 %v8003
      %8073 = vmatprep.subr.mxu0 %v8006
      %8074 = vmatpush1.msra.mxu0 %v8005
      %8075 = vmatprep.subr.mxu0 %v8008
      %8076 = vmatpush1.msra.mxu0 %v8007
      %8077 = vmatprep.subr.mxu0 %v8010
      %8078 = vmatpush1.msra.mxu0 %v8009
      %8079 = vmatprep.subr.mxu0 %v8012
      %8080 = vmatpush1.msra.mxu0 %v8011
      %8081 = vmatprep.subr.mxu0 %v8014
      %8082 = vmatpush1.msra.mxu0 %v8013
      %8083 = vmatprep.subr.mxu0 %v8016
      %8084 = vmatpush1.msra.mxu0 %v8015
      %8085 = vmatprep.subr.mxu0 %v8018
      %8086 = vmatpush1.msra.mxu0 %v8017
      %8087 = vmatprep.subr.mxu0 %v8020
      %8088 = vmatpush1.msra.mxu0 %v8019
      %8089 = vmatprep.subr.mxu0 %v8022
      %8090 = vmatpush1.msra.mxu0 %v8021
      %8091 = vmatprep.subr.mxu0 %v8024
      %8092 = vmatpush1.msra.mxu0 %v8023
      %8093 = vmatprep.subr.mxu0 %v8026
      %8094 = vmatpush1.msra.mxu0 %v8025
      %8095 = vmatprep.subr.mxu0 %v8028
      %8096 = vmatpush1.msra.mxu0 %v8027
      %8097 = vmatprep.subr.mxu0 %v8030
      %8098 = vmatpush1.msra.mxu0 %v8029
      %8099 = vmatprep.subr.mxu0 %v8032
      %8100 = vmatpush1.msra.mxu0 %v8031
      %8101 = vmatprep.subr.mxu0 %v8034
      %8102 = vmatpush1.msra.mxu0 %v8033
      %8103 = vmatprep.subr.mxu0 %v8036
      %8104 = vmatpush1.msra.mxu0 %v8035
      %8105 = vmatprep.subr.mxu0 %v8038
      %8106 = vmatpush1.msra.mxu0 %v8037
      %8107 = vmatprep.subr.mxu0 %v8040
      %8108 = vmatpush1.msra.mxu0 %v8039
      %8109 = vmatprep.subr.mxu0 %v8042
      %8110 = vmatpush1.msra.mxu0 %v8041
      %8111 = vmatprep.subr.mxu0 %v8044
      %8112 = vmatpush1.msra.mxu0 %v8043
      %8113 = vmatprep.subr.mxu0 0.0
      %8114 = vmatpush1.msra.mxu0 0.0
      %8115 = vmatprep.subr.mxu0 0.0
      %8116 = vmatpush1.msra.mxu0 0.0
      %8117 = vmatprep.subr.mxu0 0.0
      %8118 = vmatpush1.msra.mxu0 0.0
      %8119 = vmatprep.subr.mxu0 0.0
      %8120 = vmatpush1.msra.mxu0 0.0
      %8121 = vmatprep.subr.mxu0 0.0
      %8122 = vmatpush1.msra.mxu0 0.0
      %8123 = vmatprep.subr.mxu0 0.0
      %8124 = vmatpush1.msra.mxu0 0.0
      %8125 = vmatprep.subr.mxu0 0.0
      %8126 = vmatpush1.msra.mxu0 0.0
      %8127 = vmatprep.subr.mxu0 0.0
      %8128 = vmatpush1.msra.mxu0 0.0
      %8129 = vmatprep.subr.mxu0 0.0
      %8130 = vmatpush1.msra.mxu0 0.0
      %8131 = vmatprep.subr.mxu0 0.0
      %8132 = vmatpush1.msra.mxu0 0.0
      %8133 = vmatprep.mubr.f32.mxu0 %v8046
      %8134 = vmatmul.mubr.f32.gmra.mrb[0].mxu0 %v7985
      %v8135 = vpop.f32.mrb[0].mxu0
      %v8136 = vadd.f32 0.0, %v8135
      %v8137 = vpop.f32.mrb[0].mxu0
      %v8138 = vadd.f32 0.0, %v8137
      %8139 = vmatprep.mubr.f32.mxu0 %v8049
      %8140 = vmatmul.mubr.f32.gmra.mrb[0].mxu0 %v7987
      %v8141 = vpop.f32.mrb[0].mxu0
      %v8142 = vadd.f32 0.0, %v8141
      %v8143 = vpop.f32.mrb[0].mxu0
      %v8144 = vadd.f32 0.0, %v8143
      %8145 = vmatprep.mubr.f32.mxu0 %v8052
      %8146 = vmatmul.mubr.f32.gmra.mrb[0].mxu0 %v7989
      %v8147 = vpop.f32.mrb[0].mxu0
      %v8148 = vadd.f32 0.0, %v8147
      %v8149 = vpop.f32.mrb[0].mxu0
      %v8150 = vadd.f32 0.0, %v8149
      %8151 = vmatprep.mubr.f32.mxu0 %v8055
      %8152 = vmatmul.mubr.f32.gmra.mrb[0].mxu0 %v7991
      %v8153 = vpop.f32.mrb[0].mxu0
      %v8154 = vadd.f32 0.0, %v8153
      %v8155 = vpop.f32.mrb[0].mxu0
      %v8156 = vadd.f32 0.0, %v8155
      %8157 = vmatprep.mubr.f32.mxu0 %v8058
      %8158 = vmatmul.mubr.f32.gmra.mrb[0].mxu0 %v7993
      %v8159 = vpop.f32.mrb[0].mxu0
      %v8160 = vadd.f32 0.0, %v8159
      %v8161 = vpop.f32.mrb[0].mxu0
      %v8162 = vadd.f32 0.0, %v8161
      %8163 = vmatprep.mubr.f32.mxu0 %v8061
      %8164 = vmatmul.mubr.f32.gmra.mrb[0].mxu0 %v7995
      %v8165 = vpop.f32.mrb[0].mxu0
      %v8166 = vadd.f32 0.0, %v8165
      %v8167 = vpop.f32.mrb[0].mxu0
      %v8168 = vadd.f32 0.0, %v8167
      %8169 = vmatprep.mubr.f32.mxu0 %v8064
      %8170 = vmatmul.mubr.f32.gmra.mrb[0].mxu0 %v7997
      %v8171 = vpop.f32.mrb[0].mxu0
      %v8172 = vadd.f32 0.0, %v8171
      %v8173 = vpop.f32.mrb[0].mxu0
      %v8174 = vadd.f32 0.0, %v8173
      %8175 = vmatprep.mubr.f32.mxu0 %v8067
      %8176 = vmatmul.mubr.f32.gmra.mrb[0].mxu0 %v7999
      %v8177 = vpop.f32.mrb[0].mxu0
      %v8178 = vadd.f32 0.0, %v8177
      %v8179 = vpop.f32.mrb[0].mxu0
      %v8180 = vadd.f32 0.0, %v8179
      %8181 = vdwg.mxu0
      %v8182 = vadd.f32 %v7968, %v8136
      %v8183 = vadd.f32 %v7969, %v8138
      %v8184 = vadd.f32 %v7970, %v8142
      %v8185 = vadd.f32 %v7971, %v8144
      %v8186 = vadd.f32 %v7972, %v8148
      %v8187 = vadd.f32 %v7973, %v8150
      %v8188 = vadd.f32 %v7974, %v8154
      %v8189 = vadd.f32 %v7975, %v8156
      %v8190 = vadd.f32 %v7976, %v8160
      %v8191 = vadd.f32 %v7977, %v8162
      %v8192 = vadd.f32 %v7978, %v8166
      %v8193 = vadd.f32 %v7979, %v8168
      %v8194 = vadd.f32 %v7980, %v8172
      %v8195 = vadd.f32 %v7981, %v8174
      %v8196 = vadd.f32 %v7982, %v8178
      %v8197 = vadd.f32 %v7983, %v8180
      %s8198 = scalar_lea.vmem %s3, 1152
      %v8199 = vld [vmem:[%s8198] sm:$0xff]
      %v8200 = vld [vmem:[%s8198 + $0x8] sm:$0xff]
      %v8201 = vld [vmem:[%s8198 + $0x10] sm:$0xff]
      %v8202 = vld [vmem:[%s8198 + $0x18] sm:$0xff]
      %v8203 = vld [vmem:[%s8198 + $0x20] sm:$0xff]
      %v8204 = vld [vmem:[%s8198 + $0x28] sm:$0xff]
      %v8205 = vld [vmem:[%s8198 + $0x30] sm:$0xff]
      %v8206 = vld [vmem:[%s8198 + $0x38] sm:$0xff]
      %v8207 = vld [vmem:[%s8198 + $0x40] sm:$0xff]
      %v8208 = vld [vmem:[%s8198 + $0x48] sm:$0xff]
      %v8209 = vld [vmem:[%s8198 + $0x50] sm:$0xff]
      %v8210 = vld [vmem:[%s8198 + $0x58] sm:$0xff]
      %v8211 = vld [vmem:[%s8198 + $0x60] sm:$0xff]
      %v8212 = vld [vmem:[%s8198 + $0x68] sm:$0xff]
      %v8213 = vld [vmem:[%s8198 + $0x70] sm:$0xff]
      %v8214 = vld [vmem:[%s8198 + $0x78] sm:$0xff]
      %v8215 = vld [vmem:[%s909] sm:$0xff]
      %v8216 = vld [vmem:[%s909 + $0x8] sm:$0xff]
      %v8217 = vld [vmem:[%s909 + $0x10] sm:$0xff]
      %v8218 = vld [vmem:[%s909 + $0x18] sm:$0xff]
      %v8219 = vld [vmem:[%s909 + $0x20] sm:$0xff]
      %v8220 = vld [vmem:[%s909 + $0x28] sm:$0xff]
      %v8221 = vld [vmem:[%s909 + $0x30] sm:$0xff]
      %v8222 = vld [vmem:[%s909 + $0x38] sm:$0xff]
      %v8223 = vld [vmem:[%s909 + $0x40] sm:$0xff]
      %v8224 = vld [vmem:[%s909 + $0x48] sm:$0xff]
      %v8225 = vld [vmem:[%s909 + $0x50] sm:$0xff]
      %v8226 = vld [vmem:[%s909 + $0x58] sm:$0xff]
      %v8227 = vld [vmem:[%s909 + $0x60] sm:$0xff]
      %v8228 = vld [vmem:[%s909 + $0x68] sm:$0xff]
      %v8229 = vld [vmem:[%s909 + $0x70] sm:$0xff]
      %v8230 = vld [vmem:[%s909 + $0x78] sm:$0xff]
      %v8231 = vld [vmem:[%s909 + $0x80] sm:$0xff]
      %v8232 = vld [vmem:[%s909 + $0x88] sm:$0xff]
      %v8233 = vld [vmem:[%s909 + $0x90] sm:$0xff]
      %v8234 = vld [vmem:[%s909 + $0x98] sm:$0xff]
      %v8235 = vld [vmem:[%s909 + $0xa0] sm:$0xff]
      %v8236 = vld [vmem:[%s909 + $0xa8] sm:$0xff]
      %v8237 = vld [vmem:[%s909 + $0xb0] sm:$0xff]
      %v8238 = vld [vmem:[%s909 + $0xb8] sm:$0xff]
      %v8239 = vld [vmem:[%s909 + $0xc0] sm:$0xff]
      %v8240 = vld [vmem:[%s909 + $0xc8] sm:$0xff]
      %v8241 = vld [vmem:[%s909 + $0xd0] sm:$0xff]
      %v8242 = vld [vmem:[%s909 + $0xd8] sm:$0xff]
      %v8243 = vld [vmem:[%s909 + $0xe0] sm:$0xff]
      %v8244 = vld [vmem:[%s909 + $0xe8] sm:$0xff]
      %v8245 = vld [vmem:[%s909 + $0xf0] sm:$0xff]
      %v8246 = vld [vmem:[%s909 + $0xf8] sm:$0xff]
      %v8247 = vld [vmem:[%s909 + $0x100] sm:$0xff]
      %v8248 = vld [vmem:[%s909 + $0x108] sm:$0xff]
      %v8249 = vld [vmem:[%s909 + $0x110] sm:$0xff]
      %v8250 = vld [vmem:[%s909 + $0x118] sm:$0xff]
      %v8251 = vld [vmem:[%s909 + $0x120] sm:$0xff]
      %v8252 = vld [vmem:[%s909 + $0x128] sm:$0xff]
      %v8253 = vld [vmem:[%s909 + $0x130] sm:$0xff]
      %v8254 = vld [vmem:[%s909 + $0x138] sm:$0xff]
      %v8255 = vld [vmem:[%s909 + $0x140] sm:$0xff]
      %v8256 = vld [vmem:[%s909 + $0x148] sm:$0xff]
      %v8257 = vld [vmem:[%s909 + $0x150] sm:$0xff]
      %v8258 = vld [vmem:[%s909 + $0x158] sm:$0xff]
      %v8260 = vsel %vm610, %v8200, 0
      %v8263 = vsel %vm610, %v8202, 0
      %v8266 = vsel %vm610, %v8204, 0
      %v8269 = vsel %vm610, %v8206, 0
      %v8272 = vsel %vm610, %v8208, 0
      %v8275 = vsel %vm610, %v8210, 0
      %v8278 = vsel %vm610, %v8212, 0
      %v8281 = vsel %vm610, %v8214, 0
      %8283 = vmatprep.subr.mxu0 %v8216
      %8284 = vmatpush1.msra.mxu0 %v8215
      %8285 = vmatprep.subr.mxu0 %v8218
      %8286 = vmatpush1.msra.mxu0 %v8217
      %8287 = vmatprep.subr.mxu0 %v8220
      %8288 = vmatpush1.msra.mxu0 %v8219
      %8289 = vmatprep.subr.mxu0 %v8222
      %8290 = vmatpush1.msra.mxu0 %v8221
      %8291 = vmatprep.subr.mxu0 %v8224
      %8292 = vmatpush1.msra.mxu0 %v8223
      %8293 = vmatprep.subr.mxu0 %v8226
      %8294 = vmatpush1.msra.mxu0 %v8225
      %8295 = vmatprep.subr.mxu0 %v8228
      %8296 = vmatpush1.msra.mxu0 %v8227
      %8297 = vmatprep.subr.mxu0 %v8230
      %8298 = vmatpush1.msra.mxu0 %v8229
      %8299 = vmatprep.subr.mxu0 %v8232
      %8300 = vmatpush1.msra.mxu0 %v8231
      %8301 = vmatprep.subr.mxu0 %v8234
      %8302 = vmatpush1.msra.mxu0 %v8233
      %8303 = vmatprep.subr.mxu0 %v8236
      %8304 = vmatpush1.msra.mxu0 %v8235
      %8305 = vmatprep.subr.mxu0 %v8238
      %8306 = vmatpush1.msra.mxu0 %v8237
      %8307 = vmatprep.subr.mxu0 %v8240
      %8308 = vmatpush1.msra.mxu0 %v8239
      %8309 = vmatprep.subr.mxu0 %v8242
      %8310 = vmatpush1.msra.mxu0 %v8241
      %8311 = vmatprep.subr.mxu0 %v8244
      %8312 = vmatpush1.msra.mxu0 %v8243
      %8313 = vmatprep.subr.mxu0 %v8246
      %8314 = vmatpush1.msra.mxu0 %v8245
      %8315 = vmatprep.subr.mxu0 %v8248
      %8316 = vmatpush1.msra.mxu0 %v8247
      %8317 = vmatprep.subr.mxu0 %v8250
      %8318 = vmatpush1.msra.mxu0 %v8249
      %8319 = vmatprep.subr.mxu0 %v8252
      %8320 = vmatpush1.msra.mxu0 %v8251
      %8321 = vmatprep.subr.mxu0 %v8254
      %8322 = vmatpush1.msra.mxu0 %v8253
      %8323 = vmatprep.subr.mxu0 %v8256
      %8324 = vmatpush1.msra.mxu0 %v8255
      %8325 = vmatprep.subr.mxu0 %v8258
      %8326 = vmatpush1.msra.mxu0 %v8257
      %8327 = vmatprep.subr.mxu0 0.0
      %8328 = vmatpush1.msra.mxu0 0.0
      %8329 = vmatprep.subr.mxu0 0.0
      %8330 = vmatpush1.msra.mxu0 0.0
      %8331 = vmatprep.subr.mxu0 0.0
      %8332 = vmatpush1.msra.mxu0 0.0
      %8333 = vmatprep.subr.mxu0 0.0
      %8334 = vmatpush1.msra.mxu0 0.0
      %8335 = vmatprep.subr.mxu0 0.0
      %8336 = vmatpush1.msra.mxu0 0.0
      %8337 = vmatprep.subr.mxu0 0.0
      %8338 = vmatpush1.msra.mxu0 0.0
      %8339 = vmatprep.subr.mxu0 0.0
      %8340 = vmatpush1.msra.mxu0 0.0
      %8341 = vmatprep.subr.mxu0 0.0
      %8342 = vmatpush1.msra.mxu0 0.0
      %8343 = vmatprep.subr.mxu0 0.0
      %8344 = vmatpush1.msra.mxu0 0.0
      %8345 = vmatprep.subr.mxu0 0.0
      %8346 = vmatpush1.msra.mxu0 0.0
      %8347 = vmatprep.mubr.f32.mxu0 %v8260
      %8348 = vmatmul.mubr.f32.gmra.mrb[0].mxu0 %v8199
      %v8349 = vpop.f32.mrb[0].mxu0
      %v8350 = vadd.f32 0.0, %v8349
      %v8351 = vpop.f32.mrb[0].mxu0
      %v8352 = vadd.f32 0.0, %v8351
      %8353 = vmatprep.mubr.f32.mxu0 %v8263
      %8354 = vmatmul.mubr.f32.gmra.mrb[0].mxu0 %v8201
      %v8355 = vpop.f32.mrb[0].mxu0
      %v8356 = vadd.f32 0.0, %v8355
      %v8357 = vpop.f32.mrb[0].mxu0
      %v8358 = vadd.f32 0.0, %v8357
      %8359 = vmatprep.mubr.f32.mxu0 %v8266
      %8360 = vmatmul.mubr.f32.gmra.mrb[0].mxu0 %v8203
      %v8361 = vpop.f32.mrb[0].mxu0
      %v8362 = vadd.f32 0.0, %v8361
      %v8363 = vpop.f32.mrb[0].mxu0
      %v8364 = vadd.f32 0.0, %v8363
      %8365 = vmatprep.mubr.f32.mxu0 %v8269
      %8366 = vmatmul.mubr.f32.gmra.mrb[0].mxu0 %v8205
      %v8367 = vpop.f32.mrb[0].mxu0
      %v8368 = vadd.f32 0.0, %v8367
      %v8369 = vpop.f32.mrb[0].mxu0
      %v8370 = vadd.f32 0.0, %v8369
      %8371 = vmatprep.mubr.f32.mxu0 %v8272
      %8372 = vmatmul.mubr.f32.gmra.mrb[0].mxu0 %v8207
      %v8373 = vpop.f32.mrb[0].mxu0
      %v8374 = vadd.f32 0.0, %v8373
      %v8375 = vpop.f32.mrb[0].mxu0
      %v8376 = vadd.f32 0.0, %v8375
      %8377 = vmatprep.mubr.f32.mxu0 %v8275
      %8378 = vmatmul.mubr.f32.gmra.mrb[0].mxu0 %v8209
      %v8379 = vpop.f32.mrb[0].mxu0
      %v8380 = vadd.f32 0.0, %v8379
      %v8381 = vpop.f32.mrb[0].mxu0
      %v8382 = vadd.f32 0.0, %v8381
      %8383 = vmatprep.mubr.f32.mxu0 %v8278
      %8384 = vmatmul.mubr.f32.gmra.mrb[0].mxu0 %v8211
      %v8385 = vpop.f32.mrb[0].mxu0
      %v8386 = vadd.f32 0.0, %v8385
      %v8387 = vpop.f32.mrb[0].mxu0
      %v8388 = vadd.f32 0.0, %v8387
      %8389 = vmatprep.mubr.f32.mxu0 %v8281
      %8390 = vmatmul.mubr.f32.gmra.mrb[0].mxu0 %v8213
      %v8391 = vpop.f32.mrb[0].mxu0
      %v8392 = vadd.f32 0.0, %v8391
      %v8393 = vpop.f32.mrb[0].mxu0
      %v8394 = vadd.f32 0.0, %v8393
      %8395 = vdwg.mxu0
      %v8396 = vadd.f32 %v8182, %v8350
      %v8397 = vadd.f32 %v8183, %v8352
      %v8398 = vadd.f32 %v8184, %v8356
      %v8399 = vadd.f32 %v8185, %v8358
      %v8400 = vadd.f32 %v8186, %v8362
      %v8401 = vadd.f32 %v8187, %v8364
      %v8402 = vadd.f32 %v8188, %v8368
      %v8403 = vadd.f32 %v8189, %v8370
      %v8404 = vadd.f32 %v8190, %v8374
      %v8405 = vadd.f32 %v8191, %v8376
      %v8406 = vadd.f32 %v8192, %v8380
      %v8407 = vadd.f32 %v8193, %v8382
      %v8408 = vadd.f32 %v8194, %v8386
      %v8409 = vadd.f32 %v8195, %v8388
      %v8410 = vadd.f32 %v8196, %v8392
      %v8411 = vadd.f32 %v8197, %v8394
      %s8412 = scalar_lea.vmem %s3, 1280
      %v8413 = vld [vmem:[%s8412] sm:$0xff]
      %v8414 = vld [vmem:[%s8412 + $0x8] sm:$0xff]
      %v8415 = vld [vmem:[%s8412 + $0x10] sm:$0xff]
      %v8416 = vld [vmem:[%s8412 + $0x18] sm:$0xff]
      %v8417 = vld [vmem:[%s8412 + $0x20] sm:$0xff]
      %v8418 = vld [vmem:[%s8412 + $0x28] sm:$0xff]
      %v8419 = vld [vmem:[%s8412 + $0x30] sm:$0xff]
      %v8420 = vld [vmem:[%s8412 + $0x38] sm:$0xff]
      %v8421 = vld [vmem:[%s8412 + $0x40] sm:$0xff]
      %v8422 = vld [vmem:[%s8412 + $0x48] sm:$0xff]
      %v8423 = vld [vmem:[%s8412 + $0x50] sm:$0xff]
      %v8424 = vld [vmem:[%s8412 + $0x58] sm:$0xff]
      %v8425 = vld [vmem:[%s8412 + $0x60] sm:$0xff]
      %v8426 = vld [vmem:[%s8412 + $0x68] sm:$0xff]
      %v8427 = vld [vmem:[%s8412 + $0x70] sm:$0xff]
      %v8428 = vld [vmem:[%s8412 + $0x78] sm:$0xff]
      %v8429 = vld [vmem:[%s952] sm:$0xff]
      %v8430 = vld [vmem:[%s952 + $0x8] sm:$0xff]
      %v8431 = vld [vmem:[%s952 + $0x10] sm:$0xff]
      %v8432 = vld [vmem:[%s952 + $0x18] sm:$0xff]
      %v8433 = vld [vmem:[%s952 + $0x20] sm:$0xff]
      %v8434 = vld [vmem:[%s952 + $0x28] sm:$0xff]
      %v8435 = vld [vmem:[%s952 + $0x30] sm:$0xff]
      %v8436 = vld [vmem:[%s952 + $0x38] sm:$0xff]
      %v8437 = vld [vmem:[%s952 + $0x40] sm:$0xff]
      %v8438 = vld [vmem:[%s952 + $0x48] sm:$0xff]
      %v8439 = vld [vmem:[%s952 + $0x50] sm:$0xff]
      %v8440 = vld [vmem:[%s952 + $0x58] sm:$0xff]
      %v8441 = vld [vmem:[%s952 + $0x60] sm:$0xff]
      %v8442 = vld [vmem:[%s952 + $0x68] sm:$0xff]
      %v8443 = vld [vmem:[%s952 + $0x70] sm:$0xff]
      %v8444 = vld [vmem:[%s952 + $0x78] sm:$0xff]
      %v8445 = vld [vmem:[%s952 + $0x80] sm:$0xff]
      %v8446 = vld [vmem:[%s952 + $0x88] sm:$0xff]
      %v8447 = vld [vmem:[%s952 + $0x90] sm:$0xff]
      %v8448 = vld [vmem:[%s952 + $0x98] sm:$0xff]
      %v8449 = vld [vmem:[%s952 + $0xa0] sm:$0xff]
      %v8450 = vld [vmem:[%s952 + $0xa8] sm:$0xff]
      %v8451 = vld [vmem:[%s952 + $0xb0] sm:$0xff]
      %v8452 = vld [vmem:[%s952 + $0xb8] sm:$0xff]
      %v8453 = vld [vmem:[%s952 + $0xc0] sm:$0xff]
      %v8454 = vld [vmem:[%s952 + $0xc8] sm:$0xff]
      %v8455 = vld [vmem:[%s952 + $0xd0] sm:$0xff]
      %v8456 = vld [vmem:[%s952 + $0xd8] sm:$0xff]
      %v8457 = vld [vmem:[%s952 + $0xe0] sm:$0xff]
      %v8458 = vld [vmem:[%s952 + $0xe8] sm:$0xff]
      %v8459 = vld [vmem:[%s952 + $0xf0] sm:$0xff]
      %v8460 = vld [vmem:[%s952 + $0xf8] sm:$0xff]
      %v8461 = vld [vmem:[%s952 + $0x100] sm:$0xff]
      %v8462 = vld [vmem:[%s952 + $0x108] sm:$0xff]
      %v8463 = vld [vmem:[%s952 + $0x110] sm:$0xff]
      %v8464 = vld [vmem:[%s952 + $0x118] sm:$0xff]
      %v8465 = vld [vmem:[%s952 + $0x120] sm:$0xff]
      %v8466 = vld [vmem:[%s952 + $0x128] sm:$0xff]
      %v8467 = vld [vmem:[%s952 + $0x130] sm:$0xff]
      %v8468 = vld [vmem:[%s952 + $0x138] sm:$0xff]
      %v8469 = vld [vmem:[%s952 + $0x140] sm:$0xff]
      %v8470 = vld [vmem:[%s952 + $0x148] sm:$0xff]
      %v8471 = vld [vmem:[%s952 + $0x150] sm:$0xff]
      %v8472 = vld [vmem:[%s952 + $0x158] sm:$0xff]
      %v8474 = vsel %vm610, %v8414, 0
      %v8477 = vsel %vm610, %v8416, 0
      %v8480 = vsel %vm610, %v8418, 0
      %v8483 = vsel %vm610, %v8420, 0
      %v8486 = vsel %vm610, %v8422, 0
      %v8489 = vsel %vm610, %v8424, 0
      %v8492 = vsel %vm610, %v8426, 0
      %v8495 = vsel %vm610, %v8428, 0
      %8497 = vmatprep.subr.mxu0 %v8430
      %8498 = vmatpush1.msra.mxu0 %v8429
      %8499 = vmatprep.subr.mxu0 %v8432
      %8500 = vmatpush1.msra.mxu0 %v8431
      %8501 = vmatprep.subr.mxu0 %v8434
      %8502 = vmatpush1.msra.mxu0 %v8433
      %8503 = vmatprep.subr.mxu0 %v8436
      %8504 = vmatpush1.msra.mxu0 %v8435
      %8505 = vmatprep.subr.mxu0 %v8438
      %8506 = vmatpush1.msra.mxu0 %v8437
      %8507 = vmatprep.subr.mxu0 %v8440
      %8508 = vmatpush1.msra.mxu0 %v8439
      %8509 = vmatprep.subr.mxu0 %v8442
      %8510 = vmatpush1.msra.mxu0 %v8441
      %8511 = vmatprep.subr.mxu0 %v8444
      %8512 = vmatpush1.msra.mxu0 %v8443
      %8513 = vmatprep.subr.mxu0 %v8446
      %8514 = vmatpush1.msra.mxu0 %v8445
      %8515 = vmatprep.subr.mxu0 %v8448
      %8516 = vmatpush1.msra.mxu0 %v8447
      %8517 = vmatprep.subr.mxu0 %v8450
      %8518 = vmatpush1.msra.mxu0 %v8449
      %8519 = vmatprep.subr.mxu0 %v8452
      %8520 = vmatpush1.msra.mxu0 %v8451
      %8521 = vmatprep.subr.mxu0 %v8454
      %8522 = vmatpush1.msra.mxu0 %v8453
      %8523 = vmatprep.subr.mxu0 %v8456
      %8524 = vmatpush1.msra.mxu0 %v8455
      %8525 = vmatprep.subr.mxu0 %v8458
      %8526 = vmatpush1.msra.mxu0 %v8457
      %8527 = vmatprep.subr.mxu0 %v8460
      %8528 = vmatpush1.msra.mxu0 %v8459
      %8529 = vmatprep.subr.mxu0 %v8462
      %8530 = vmatpush1.msra.mxu0 %v8461
      %8531 = vmatprep.subr.mxu0 %v8464
      %8532 = vmatpush1.msra.mxu0 %v8463
      %8533 = vmatprep.subr.mxu0 %v8466
      %8534 = vmatpush1.msra.mxu0 %v8465
      %8535 = vmatprep.subr.mxu0 %v8468
      %8536 = vmatpush1.msra.mxu0 %v8467
      %8537 = vmatprep.subr.mxu0 %v8470
      %8538 = vmatpush1.msra.mxu0 %v8469
      %8539 = vmatprep.subr.mxu0 %v8472
      %8540 = vmatpush1.msra.mxu0 %v8471
      %8541 = vmatprep.subr.mxu0 0.0
      %8542 = vmatpush1.msra.mxu0 0.0
      %8543 = vmatprep.subr.mxu0 0.0
      %8544 = vmatpush1.msra.mxu0 0.0
      %8545 = vmatprep.subr.mxu0 0.0
      %8546 = vmatpush1.msra.mxu0 0.0
      %8547 = vmatprep.subr.mxu0 0.0
      %8548 = vmatpush1.msra.mxu0 0.0
      %8549 = vmatprep.subr.mxu0 0.0
      %8550 = vmatpush1.msra.mxu0 0.0
      %8551 = vmatprep.subr.mxu0 0.0
      %8552 = vmatpush1.msra.mxu0 0.0
      %8553 = vmatprep.subr.mxu0 0.0
      %8554 = vmatpush1.msra.mxu0 0.0
      %8555 = vmatprep.subr.mxu0 0.0
      %8556 = vmatpush1.msra.mxu0 0.0
      %8557 = vmatprep.subr.mxu0 0.0
      %8558 = vmatpush1.msra.mxu0 0.0
      %8559 = vmatprep.subr.mxu0 0.0
      %8560 = vmatpush1.msra.mxu0 0.0
      %8561 = vmatprep.mubr.f32.mxu0 %v8474
      %8562 = vmatmul.mubr.f32.gmra.mrb[0].mxu0 %v8413
      %v8563 = vpop.f32.mrb[0].mxu0
      %v8564 = vadd.f32 0.0, %v8563
      %v8565 = vpop.f32.mrb[0].mxu0
      %v8566 = vadd.f32 0.0, %v8565
      %8567 = vmatprep.mubr.f32.mxu0 %v8477
      %8568 = vmatmul.mubr.f32.gmra.mrb[0].mxu0 %v8415
      %v8569 = vpop.f32.mrb[0].mxu0
      %v8570 = vadd.f32 0.0, %v8569
      %v8571 = vpop.f32.mrb[0].mxu0
      %v8572 = vadd.f32 0.0, %v8571
      %8573 = vmatprep.mubr.f32.mxu0 %v8480
      %8574 = vmatmul.mubr.f32.gmra.mrb[0].mxu0 %v8417
      %v8575 = vpop.f32.mrb[0].mxu0
      %v8576 = vadd.f32 0.0, %v8575
      %v8577 = vpop.f32.mrb[0].mxu0
      %v8578 = vadd.f32 0.0, %v8577
      %8579 = vmatprep.mubr.f32.mxu0 %v8483
      %8580 = vmatmul.mubr.f32.gmra.mrb[0].mxu0 %v8419
      %v8581 = vpop.f32.mrb[0].mxu0
      %v8582 = vadd.f32 0.0, %v8581
      %v8583 = vpop.f32.mrb[0].mxu0
      %v8584 = vadd.f32 0.0, %v8583
      %8585 = vmatprep.mubr.f32.mxu0 %v8486
      %8586 = vmatmul.mubr.f32.gmra.mrb[0].mxu0 %v8421
      %v8587 = vpop.f32.mrb[0].mxu0
      %v8588 = vadd.f32 0.0, %v8587
      %v8589 = vpop.f32.mrb[0].mxu0
      %v8590 = vadd.f32 0.0, %v8589
      %8591 = vmatprep.mubr.f32.mxu0 %v8489
      %8592 = vmatmul.mubr.f32.gmra.mrb[0].mxu0 %v8423
      %v8593 = vpop.f32.mrb[0].mxu0
      %v8594 = vadd.f32 0.0, %v8593
      %v8595 = vpop.f32.mrb[0].mxu0
      %v8596 = vadd.f32 0.0, %v8595
      %8597 = vmatprep.mubr.f32.mxu0 %v8492
      %8598 = vmatmul.mubr.f32.gmra.mrb[0].mxu0 %v8425
      %v8599 = vpop.f32.mrb[0].mxu0
      %v8600 = vadd.f32 0.0, %v8599
      %v8601 = vpop.f32.mrb[0].mxu0
      %v8602 = vadd.f32 0.0, %v8601
      %8603 = vmatprep.mubr.f32.mxu0 %v8495
      %8604 = vmatmul.mubr.f32.gmra.mrb[0].mxu0 %v8427
      %v8605 = vpop.f32.mrb[0].mxu0
      %v8606 = vadd.f32 0.0, %v8605
      %v8607 = vpop.f32.mrb[0].mxu0
      %v8608 = vadd.f32 0.0, %v8607
      %8609 = vdwg.mxu0
      %v8610 = vadd.f32 %v8396, %v8564
      %v8611 = vadd.f32 %v8397, %v8566
      %v8612 = vadd.f32 %v8398, %v8570
      %v8613 = vadd.f32 %v8399, %v8572
      %v8614 = vadd.f32 %v8400, %v8576
      %v8615 = vadd.f32 %v8401, %v8578
      %v8616 = vadd.f32 %v8402, %v8582
      %v8617 = vadd.f32 %v8403, %v8584
      %v8618 = vadd.f32 %v8404, %v8588
      %v8619 = vadd.f32 %v8405, %v8590
      %v8620 = vadd.f32 %v8406, %v8594
      %v8621 = vadd.f32 %v8407, %v8596
      %v8622 = vadd.f32 %v8408, %v8600
      %v8623 = vadd.f32 %v8409, %v8602
      %v8624 = vadd.f32 %v8410, %v8606
      %v8625 = vadd.f32 %v8411, %v8608
      %v8626 = vld [vmem:[%s4] sm:$0xff]
      %v8627 = vld [vmem:[%s4 + $0x8] sm:$0xff]
      %v8628 = vld [vmem:[%s4 + $0x10] sm:$0xff]
      %v8629 = vld [vmem:[%s4 + $0x18] sm:$0xff]
      %v8630 = vld [vmem:[%s4 + $0x20] sm:$0xff]
      %v8631 = vld [vmem:[%s4 + $0x28] sm:$0xff]
      %v8632 = vld [vmem:[%s4 + $0x30] sm:$0xff]
      %v8633 = vld [vmem:[%s4 + $0x38] sm:$0xff]
      %8635 = vset.pattern.permute.xlu0 0
      %8636 = vperm.xlu0 %8635, %v8626
      %v8637 = vpop.permute.xlu0 %8636
      %8640 = vset.pattern.permute.xlu0 0
      %8641 = vperm.xlu0 %8640, %v8627
      %v8642 = vpop.permute.xlu0 %8641
      %8645 = vset.pattern.permute.xlu0 0
      %8646 = vperm.xlu0 %8645, %v8628
      %v8647 = vpop.permute.xlu0 %8646
      %8650 = vset.pattern.permute.xlu0 0
      %8651 = vperm.xlu0 %8650, %v8629
      %v8652 = vpop.permute.xlu0 %8651
      %8655 = vset.pattern.permute.xlu0 0
      %8656 = vperm.xlu0 %8655, %v8630
      %v8657 = vpop.permute.xlu0 %8656
      %8660 = vset.pattern.permute.xlu0 0
      %8661 = vperm.xlu0 %8660, %v8631
      %v8662 = vpop.permute.xlu0 %8661
      %8665 = vset.pattern.permute.xlu0 0
      %8666 = vperm.xlu0 %8665, %v8632
      %v8667 = vpop.permute.xlu0 %8666
      %8670 = vset.pattern.permute.xlu0 0
      %8671 = vperm.xlu0 %8670, %v8633
      %v8672 = vpop.permute.xlu0 %8671
      %v8674 = vadd.f32 %v8610, %v8637
      %v8675 = vadd.f32 %v8611, %v8637
      %v8676 = vadd.f32 %v8612, %v8642
      %v8677 = vadd.f32 %v8613, %v8642
      %v8678 = vadd.f32 %v8614, %v8647
      %v8679 = vadd.f32 %v8615, %v8647
      %v8680 = vadd.f32 %v8616, %v8652
      %v8681 = vadd.f32 %v8617, %v8652
      %v8682 = vadd.f32 %v8618, %v8657
      %v8683 = vadd.f32 %v8619, %v8657
      %v8684 = vadd.f32 %v8620, %v8662
      %v8685 = vadd.f32 %v8621, %v8662
      %v8686 = vadd.f32 %v8622, %v8667
      %v8687 = vadd.f32 %v8623, %v8667
      %v8688 = vadd.f32 %v8624, %v8672
      %v8689 = vadd.f32 %v8625, %v8672
      %v8690 = vld [vmem:[%s7] sm:$0xff]
      %v8691 = vld [vmem:[%s7 + $0x8] sm:$0xff]
      %v8692 = vld [vmem:[%s7 + $0x10] sm:$0xff]
      %v8693 = vld [vmem:[%s7 + $0x18] sm:$0xff]
      %v8694 = vld [vmem:[%s7 + $0x20] sm:$0xff]
      %v8695 = vld [vmem:[%s7 + $0x28] sm:$0xff]
      %v8696 = vld [vmem:[%s7 + $0x30] sm:$0xff]
      %v8697 = vld [vmem:[%s7 + $0x38] sm:$0xff]
      %v8699 = vsel %vm663, %v8690, 0
      %v8702 = vsel %vm663, %v8691, 0
      %v8705 = vsel %vm663, %v8692, 0
      %v8708 = vsel %vm663, %v8693, 0
      %v8711 = vsel %vm663, %v8694, 0
      %v8714 = vsel %vm663, %v8695, 0
      %v8717 = vsel %vm663, %v8696, 0
      %v8720 = vsel %vm663, %v8697, 0
      %8722 = vmatprep.subr.mxu0 %v8675
      %8723 = vmatpush1.msra.mxu0 %v8674
      %8724 = vmatprep.subr.mxu0 %v8677
      %8725 = vmatpush1.msra.mxu0 %v8676
      %8726 = vmatprep.subr.mxu0 %v8679
      %8727 = vmatpush1.msra.mxu0 %v8678
      %8728 = vmatprep.subr.mxu0 %v8681
      %8729 = vmatpush1.msra.mxu0 %v8680
      %8730 = vmatprep.subr.mxu0 %v8683
      %8731 = vmatpush1.msra.mxu0 %v8682
      %8732 = vmatprep.subr.mxu0 %v8685
      %8733 = vmatpush1.msra.mxu0 %v8684
      %8734 = vmatprep.subr.mxu0 %v8687
      %8735 = vmatpush1.msra.mxu0 %v8686
      %8736 = vmatprep.subr.mxu0 %v8689
      %8737 = vmatpush1.msra.mxu0 %v8688
      %8738 = vmatprep.subr.mxu0 0.0
      %8739 = vmatpush1.msra.mxu0 0.0
      %8740 = vmatprep.subr.mxu0 0.0
      %8741 = vmatpush1.msra.mxu0 0.0
      %8742 = vmatprep.subr.mxu0 0.0
      %8743 = vmatpush1.msra.mxu0 0.0
      %8744 = vmatprep.subr.mxu0 0.0
      %8745 = vmatpush1.msra.mxu0 0.0
      %8746 = vmatprep.subr.mxu0 0.0
      %8747 = vmatpush1.msra.mxu0 0.0
      %8748 = vmatprep.subr.mxu0 0.0
      %8749 = vmatpush1.msra.mxu0 0.0
      %8750 = vmatprep.subr.mxu0 0.0
      %8751 = vmatpush1.msra.mxu0 0.0
      %8752 = vmatprep.subr.mxu0 0.0
      %8753 = vmatpush1.msra.mxu0 0.0
      %8754 = vmatprep.subr.mxu0 0.0
      %8755 = vmatpush1.msra.mxu0 0.0
      %8756 = vmatprep.subr.mxu0 0.0
      %8757 = vmatpush1.msra.mxu0 0.0
      %8758 = vmatprep.subr.mxu0 0.0
      %8759 = vmatpush1.msra.mxu0 0.0
      %8760 = vmatprep.subr.mxu0 0.0
      %8761 = vmatpush1.msra.mxu0 0.0
      %8762 = vmatprep.subr.mxu0 0.0
      %8763 = vmatpush1.msra.mxu0 0.0
      %8764 = vmatprep.subr.mxu0 0.0
      %8765 = vmatpush1.msra.mxu0 0.0
      %8766 = vmatprep.subr.mxu0 0.0
      %8767 = vmatpush1.msra.mxu0 0.0
      %8768 = vmatprep.subr.mxu0 0.0
      %8769 = vmatpush1.msra.mxu0 0.0
      %8770 = vmatprep.subr.mxu0 0.0
      %8771 = vmatpush1.msra.mxu0 0.0
      %8772 = vmatprep.subr.mxu0 0.0
      %8773 = vmatpush1.msra.mxu0 0.0
      %8774 = vmatprep.subr.mxu0 0.0
      %8775 = vmatpush1.msra.mxu0 0.0
      %8776 = vmatprep.subr.mxu0 0.0
      %8777 = vmatpush1.msra.mxu0 0.0
      %8778 = vmatprep.subr.mxu0 0.0
      %8779 = vmatpush1.msra.mxu0 0.0
      %8780 = vmatprep.subr.mxu0 0.0
      %8781 = vmatpush1.msra.mxu0 0.0
      %8782 = vmatprep.subr.mxu0 0.0
      %8783 = vmatpush1.msra.mxu0 0.0
      %8784 = vmatprep.subr.mxu0 0.0
      %8785 = vmatpush1.msra.mxu0 0.0
      %8786 = vmatprep.mubr.f32.mxu0 0.0
      %8787 = vmatmul.mubr.f32.gmra.mrb[0].mxu0 %v8699
      %v8788 = vpop.f32.mrb[0].mxu0
      %v8789 = vadd.f32 0.0, %v8788
      %v8790 = vpop.f32.mrb[0].mxu0
      %v8791 = vadd.f32 0.0, %v8790
      %8792 = vmatprep.mubr.f32.mxu0 0.0
      %8793 = vmatmul.mubr.f32.gmra.mrb[0].mxu0 %v8702
      %v8794 = vpop.f32.mrb[0].mxu0
      %v8795 = vadd.f32 0.0, %v8794
      %v8796 = vpop.f32.mrb[0].mxu0
      %v8797 = vadd.f32 0.0, %v8796
      %8798 = vmatprep.mubr.f32.mxu0 0.0
      %8799 = vmatmul.mubr.f32.gmra.mrb[0].mxu0 %v8705
      %v8800 = vpop.f32.mrb[0].mxu0
      %v8801 = vadd.f32 0.0, %v8800
      %v8802 = vpop.f32.mrb[0].mxu0
      %v8803 = vadd.f32 0.0, %v8802
      %8804 = vmatprep.mubr.f32.mxu0 0.0
      %8805 = vmatmul.mubr.f32.gmra.mrb[0].mxu0 %v8708
      %v8806 = vpop.f32.mrb[0].mxu0
      %v8807 = vadd.f32 0.0, %v8806
      %v8808 = vpop.f32.mrb[0].mxu0
      %v8809 = vadd.f32 0.0, %v8808
      %8810 = vmatprep.mubr.f32.mxu0 0.0
      %8811 = vmatmul.mubr.f32.gmra.mrb[0].mxu0 %v8711
      %v8812 = vpop.f32.mrb[0].mxu0
      %v8813 = vadd.f32 0.0, %v8812
      %v8814 = vpop.f32.mrb[0].mxu0
      %v8815 = vadd.f32 0.0, %v8814
      %8816 = vmatprep.mubr.f32.mxu0 0.0
      %8817 = vmatmul.mubr.f32.gmra.mrb[0].mxu0 %v8714
      %v8818 = vpop.f32.mrb[0].mxu0
      %v8819 = vadd.f32 0.0, %v8818
      %v8820 = vpop.f32.mrb[0].mxu0
      %v8821 = vadd.f32 0.0, %v8820
      %8822 = vmatprep.mubr.f32.mxu0 0.0
      %8823 = vmatmul.mubr.f32.gmra.mrb[0].mxu0 %v8717
      %v8824 = vpop.f32.mrb[0].mxu0
      %v8825 = vadd.f32 0.0, %v8824
      %v8826 = vpop.f32.mrb[0].mxu0
      %v8827 = vadd.f32 0.0, %v8826
      %8828 = vmatprep.mubr.f32.mxu0 0.0
      %8829 = vmatmul.mubr.f32.gmra.mrb[0].mxu0 %v8720
      %v8830 = vpop.f32.mrb[0].mxu0
      %v8831 = vadd.f32 0.0, %v8830
      %v8832 = vpop.f32.mrb[0].mxu0
      %v8833 = vadd.f32 0.0, %v8832
      %8834 = vdwg.mxu0
      %v8835 = vadd.f32 %v8789, %v8791
      %8836 = vadd.xlane.f32.xlu0 %v8835
      %v8837 = vpop.xlane.xlu0 %8836
      %v8838 = vadd.f32 %v8795, %v8797
      %8839 = vadd.xlane.f32.xlu0 %v8838
      %v8840 = vpop.xlane.xlu0 %8839
      %v8841 = vadd.f32 %v8801, %v8803
      %8842 = vadd.xlane.f32.xlu0 %v8841
      %v8843 = vpop.xlane.xlu0 %8842
      %v8844 = vadd.f32 %v8807, %v8809
      %8845 = vadd.xlane.f32.xlu0 %v8844
      %v8846 = vpop.xlane.xlu0 %8845
      %v8847 = vadd.f32 %v8813, %v8815
      %8848 = vadd.xlane.f32.xlu0 %v8847
      %v8849 = vpop.xlane.xlu0 %8848
      %v8850 = vadd.f32 %v8819, %v8821
      %8851 = vadd.xlane.f32.xlu0 %v8850
      %v8852 = vpop.xlane.xlu0 %8851
      %v8853 = vadd.f32 %v8825, %v8827
      %8854 = vadd.xlane.f32.xlu0 %v8853
      %v8855 = vpop.xlane.xlu0 %8854
      %v8856 = vadd.f32 %v8831, %v8833
      %8857 = vadd.xlane.f32.xlu0 %v8856
      %v8858 = vpop.xlane.xlu0 %8857
      %v8859 = vsub.f32 %v8674, %v8837
      %v8860 = vsub.f32 %v8675, %v8837
      %v8861 = vsub.f32 %v8676, %v8840
      %v8862 = vsub.f32 %v8677, %v8840
      %v8863 = vsub.f32 %v8678, %v8843
      %v8864 = vsub.f32 %v8679, %v8843
      %v8865 = vsub.f32 %v8680, %v8846
      %v8866 = vsub.f32 %v8681, %v8846
      %v8867 = vsub.f32 %v8682, %v8849
      %v8868 = vsub.f32 %v8683, %v8849
      %v8869 = vsub.f32 %v8684, %v8852
      %v8870 = vsub.f32 %v8685, %v8852
      %v8871 = vsub.f32 %v8686, %v8855
      %v8872 = vsub.f32 %v8687, %v8855
      %v8873 = vsub.f32 %v8688, %v8858
      %v8874 = vsub.f32 %v8689, %v8858
      %v8875 = vmul.f32 %v8859, %v8859
      %v8876 = vmul.f32 %v8860, %v8860
      %v8877 = vmul.f32 %v8861, %v8861
      %v8878 = vmul.f32 %v8862, %v8862
      %v8879 = vmul.f32 %v8863, %v8863
      %v8880 = vmul.f32 %v8864, %v8864
      %v8881 = vmul.f32 %v8865, %v8865
      %v8882 = vmul.f32 %v8866, %v8866
      %v8883 = vmul.f32 %v8867, %v8867
      %v8884 = vmul.f32 %v8868, %v8868
      %v8885 = vmul.f32 %v8869, %v8869
      %v8886 = vmul.f32 %v8870, %v8870
      %v8887 = vmul.f32 %v8871, %v8871
      %v8888 = vmul.f32 %v8872, %v8872
      %v8889 = vmul.f32 %v8873, %v8873
      %v8890 = vmul.f32 %v8874, %v8874
      %8891 = vmatprep.subr.mxu0 %v8876
      %8892 = vmatpush1.msra.mxu0 %v8875
      %8893 = vmatprep.subr.mxu0 %v8878
      %8894 = vmatpush1.msra.mxu0 %v8877
      %8895 = vmatprep.subr.mxu0 %v8880
      %8896 = vmatpush1.msra.mxu0 %v8879
      %8897 = vmatprep.subr.mxu0 %v8882
      %8898 = vmatpush1.msra.mxu0 %v8881
      %8899 = vmatprep.subr.mxu0 %v8884
      %8900 = vmatpush1.msra.mxu0 %v8883
      %8901 = vmatprep.subr.mxu0 %v8886
      %8902 = vmatpush1.msra.mxu0 %v8885
      %8903 = vmatprep.subr.mxu0 %v8888
      %8904 = vmatpush1.msra.mxu0 %v8887
      %8905 = vmatprep.subr.mxu0 %v8890
      %8906 = vmatpush1.msra.mxu0 %v8889
      %8907 = vmatprep.subr.mxu0 0.0
      %8908 = vmatpush1.msra.mxu0 0.0
      %8909 = vmatprep.subr.mxu0 0.0
      %8910 = vmatpush1.msra.mxu0 0.0
      %8911 = vmatprep.subr.mxu0 0.0
      %8912 = vmatpush1.msra.mxu0 0.0
      %8913 = vmatprep.subr.mxu0 0.0
      %8914 = vmatpush1.msra.mxu0 0.0
      %8915 = vmatprep.subr.mxu0 0.0
      %8916 = vmatpush1.msra.mxu0 0.0
      %8917 = vmatprep.subr.mxu0 0.0
      %8918 = vmatpush1.msra.mxu0 0.0
      %8919 = vmatprep.subr.mxu0 0.0
      %8920 = vmatpush1.msra.mxu0 0.0
      %8921 = vmatprep.subr.mxu0 0.0
      %8922 = vmatpush1.msra.mxu0 0.0
      %8923 = vmatprep.subr.mxu0 0.0
      %8924 = vmatpush1.msra.mxu0 0.0
      %8925 = vmatprep.subr.mxu0 0.0
      %8926 = vmatpush1.msra.mxu0 0.0
      %8927 = vmatprep.subr.mxu0 0.0
      %8928 = vmatpush1.msra.mxu0 0.0
      %8929 = vmatprep.subr.mxu0 0.0
      %8930 = vmatpush1.msra.mxu0 0.0
      %8931 = vmatprep.subr.mxu0 0.0
      %8932 = vmatpush1.msra.mxu0 0.0
      %8933 = vmatprep.subr.mxu0 0.0
      %8934 = vmatpush1.msra.mxu0 0.0
      %8935 = vmatprep.subr.mxu0 0.0
      %8936 = vmatpush1.msra.mxu0 0.0
      %8937 = vmatprep.subr.mxu0 0.0
      %8938 = vmatpush1.msra.mxu0 0.0
      %8939 = vmatprep.subr.mxu0 0.0
      %8940 = vmatpush1.msra.mxu0 0.0
      %8941 = vmatprep.subr.mxu0 0.0
      %8942 = vmatpush1.msra.mxu0 0.0
      %8943 = vmatprep.subr.mxu0 0.0
      %8944 = vmatpush1.msra.mxu0 0.0
      %8945 = vmatprep.subr.mxu0 0.0
      %8946 = vmatpush1.msra.mxu0 0.0
      %8947 = vmatprep.subr.mxu0 0.0
      %8948 = vmatpush1.msra.mxu0 0.0
      %8949 = vmatprep.subr.mxu0 0.0
      %8950 = vmatpush1.msra.mxu0 0.0
      %8951 = vmatprep.subr.mxu0 0.0
      %8952 = vmatpush1.msra.mxu0 0.0
      %8953 = vmatprep.subr.mxu0 0.0
      %8954 = vmatpush1.msra.mxu0 0.0
      %8955 = vmatprep.mubr.f32.mxu0 0.0
      %8956 = vmatmul.mubr.f32.gmra.mrb[0].mxu0 %v8699
      %v8957 = vpop.f32.mrb[0].mxu0
      %v8958 = vadd.f32 0.0, %v8957
      %v8959 = vpop.f32.mrb[0].mxu0
      %v8960 = vadd.f32 0.0, %v8959
      %8961 = vmatprep.mubr.f32.mxu0 0.0
      %8962 = vmatmul.mubr.f32.gmra.mrb[0].mxu0 %v8702
      %v8963 = vpop.f32.mrb[0].mxu0
      %v8964 = vadd.f32 0.0, %v8963
      %v8965 = vpop.f32.mrb[0].mxu0
      %v8966 = vadd.f32 0.0, %v8965
      %8967 = vmatprep.mubr.f32.mxu0 0.0
      %8968 = vmatmul.mubr.f32.gmra.mrb[0].mxu0 %v8705
      %v8969 = vpop.f32.mrb[0].mxu0
      %v8970 = vadd.f32 0.0, %v8969
      %v8971 = vpop.f32.mrb[0].mxu0
      %v8972 = vadd.f32 0.0, %v8971
      %8973 = vmatprep.mubr.f32.mxu0 0.0
      %8974 = vmatmul.mubr.f32.gmra.mrb[0].mxu0 %v8708
      %v8975 = vpop.f32.mrb[0].mxu0
      %v8976 = vadd.f32 0.0, %v8975
      %v8977 = vpop.f32.mrb[0].mxu0
      %v8978 = vadd.f32 0.0, %v8977
      %8979 = vmatprep.mubr.f32.mxu0 0.0
      %8980 = vmatmul.mubr.f32.gmra.mrb[0].mxu0 %v8711
      %v8981 = vpop.f32.mrb[0].mxu0
      %v8982 = vadd.f32 0.0, %v8981
      %v8983 = vpop.f32.mrb[0].mxu0
      %v8984 = vadd.f32 0.0, %v8983
      %8985 = vmatprep.mubr.f32.mxu0 0.0
      %8986 = vmatmul.mubr.f32.gmra.mrb[0].mxu0 %v8714
      %v8987 = vpop.f32.mrb[0].mxu0
      %v8988 = vadd.f32 0.0, %v8987
      %v8989 = vpop.f32.mrb[0].mxu0
      %v8990 = vadd.f32 0.0, %v8989
      %8991 = vmatprep.mubr.f32.mxu0 0.0
      %8992 = vmatmul.mubr.f32.gmra.mrb[0].mxu0 %v8717
      %v8993 = vpop.f32.mrb[0].mxu0
      %v8994 = vadd.f32 0.0, %v8993
      %v8995 = vpop.f32.mrb[0].mxu0
      %v8996 = vadd.f32 0.0, %v8995
      %8997 = vmatprep.mubr.f32.mxu0 0.0
      %8998 = vmatmul.mubr.f32.gmra.mrb[0].mxu0 %v8720
      %v8999 = vpop.f32.mrb[0].mxu0
      %v9000 = vadd.f32 0.0, %v8999
      %v9001 = vpop.f32.mrb[0].mxu0
      %v9002 = vadd.f32 0.0, %v9001
      %9003 = vdwg.mxu0
      %v9004 = vadd.f32 %v8958, %v8960
      %9005 = vadd.xlane.f32.xlu0 %v9004
      %v9006 = vpop.xlane.xlu0 %9005
      %v9007 = vadd.f32 %v8964, %v8966
      %9008 = vadd.xlane.f32.xlu0 %v9007
      %v9009 = vpop.xlane.xlu0 %9008
      %v9010 = vadd.f32 %v8970, %v8972
      %9011 = vadd.xlane.f32.xlu0 %v9010
      %v9012 = vpop.xlane.xlu0 %9011
      %v9013 = vadd.f32 %v8976, %v8978
      %9014 = vadd.xlane.f32.xlu0 %v9013
      %v9015 = vpop.xlane.xlu0 %9014
      %v9016 = vadd.f32 %v8982, %v8984
      %9017 = vadd.xlane.f32.xlu0 %v9016
      %v9018 = vpop.xlane.xlu0 %9017
      %v9019 = vadd.f32 %v8988, %v8990
      %9020 = vadd.xlane.f32.xlu0 %v9019
      %v9021 = vpop.xlane.xlu0 %9020
      %v9022 = vadd.f32 %v8994, %v8996
      %9023 = vadd.xlane.f32.xlu0 %v9022
      %v9024 = vpop.xlane.xlu0 %9023
      %v9025 = vadd.f32 %v9000, %v9002
      %9026 = vadd.xlane.f32.xlu0 %v9025
      %v9027 = vpop.xlane.xlu0 %9026
      %v9028 = vadd.f32 %v9006, 1e-05
      %v9029 = vadd.f32 %v9009, 1e-05
      %v9030 = vadd.f32 %v9012, 1e-05
      %v9031 = vadd.f32 %v9015, 1e-05
      %v9032 = vadd.f32 %v9018, 1e-05
      %v9033 = vadd.f32 %v9021, 1e-05
      %v9034 = vadd.f32 %v9024, 1e-05
      %v9035 = vadd.f32 %v9027, 1e-05
      %v9036 = vrsqrt.pop %v9028
      %v9037 = vrsqrt.pop %v9029
      %v9038 = vrsqrt.pop %v9030
      %v9039 = vrsqrt.pop %v9031
      %v9040 = vrsqrt.pop %v9032
      %v9041 = vrsqrt.pop %v9033
      %v9042 = vrsqrt.pop %v9034
      %v9043 = vrsqrt.pop %v9035
      %v9044 = vmul.f32 %v8859, %v9036
      %v9045 = vmul.f32 %v8860, %v9036
      %v9046 = vmul.f32 %v8861, %v9037
      %v9047 = vmul.f32 %v8862, %v9037
      %v9048 = vmul.f32 %v8863, %v9038
      %v9049 = vmul.f32 %v8864, %v9038
      %v9050 = vmul.f32 %v8865, %v9039
      %v9051 = vmul.f32 %v8866, %v9039
      %v9052 = vmul.f32 %v8867, %v9040
      %v9053 = vmul.f32 %v8868, %v9040
      %v9054 = vmul.f32 %v8869, %v9041
      %v9055 = vmul.f32 %v8870, %v9041
      %v9056 = vmul.f32 %v8871, %v9042
      %v9057 = vmul.f32 %v8872, %v9042
      %v9058 = vmul.f32 %v8873, %v9043
      %v9059 = vmul.f32 %v8874, %v9043
      %v9060 = vld [vmem:[%s5] sm:$0xff]
      %v9061 = vld [vmem:[%s5 + $0x8] sm:$0xff]
      %v9062 = vld [vmem:[%s5 + $0x10] sm:$0xff]
      %v9063 = vld [vmem:[%s5 + $0x18] sm:$0xff]
      %v9064 = vld [vmem:[%s5 + $0x20] sm:$0xff]
      %v9065 = vld [vmem:[%s5 + $0x28] sm:$0xff]
      %v9066 = vld [vmem:[%s5 + $0x30] sm:$0xff]
      %v9067 = vld [vmem:[%s5 + $0x38] sm:$0xff]
      %9069 = vset.pattern.permute.xlu0 0
      %9070 = vperm.xlu0 %9069, %v9060
      %v9071 = vpop.permute.xlu0 %9070
      %9074 = vset.pattern.permute.xlu0 0
      %9075 = vperm.xlu0 %9074, %v9061
      %v9076 = vpop.permute.xlu0 %9075
      %9079 = vset.pattern.permute.xlu0 0
      %9080 = vperm.xlu0 %9079, %v9062
      %v9081 = vpop.permute.xlu0 %9080
      %9084 = vset.pattern.permute.xlu0 0
      %9085 = vperm.xlu0 %9084, %v9063
      %v9086 = vpop.permute.xlu0 %9085
      %9089 = vset.pattern.permute.xlu0 0
      %9090 = vperm.xlu0 %9089, %v9064
      %v9091 = vpop.permute.xlu0 %9090
      %9094 = vset.pattern.permute.xlu0 0
      %9095 = vperm.xlu0 %9094, %v9065
      %v9096 = vpop.permute.xlu0 %9095
      %9099 = vset.pattern.permute.xlu0 0
      %9100 = vperm.xlu0 %9099, %v9066
      %v9101 = vpop.permute.xlu0 %9100
      %9104 = vset.pattern.permute.xlu0 0
      %9105 = vperm.xlu0 %9104, %v9067
      %v9106 = vpop.permute.xlu0 %9105
      %v9108 = vmul.f32 %v9044, %v9071
      %v9109 = vmul.f32 %v9045, %v9071
      %v9110 = vmul.f32 %v9046, %v9076
      %v9111 = vmul.f32 %v9047, %v9076
      %v9112 = vmul.f32 %v9048, %v9081
      %v9113 = vmul.f32 %v9049, %v9081
      %v9114 = vmul.f32 %v9050, %v9086
      %v9115 = vmul.f32 %v9051, %v9086
      %v9116 = vmul.f32 %v9052, %v9091
      %v9117 = vmul.f32 %v9053, %v9091
      %v9118 = vmul.f32 %v9054, %v9096
      %v9119 = vmul.f32 %v9055, %v9096
      %v9120 = vmul.f32 %v9056, %v9101
      %v9121 = vmul.f32 %v9057, %v9101
      %v9122 = vmul.f32 %v9058, %v9106
      %v9123 = vmul.f32 %v9059, %v9106
      %v9124 = vld [vmem:[%s6] sm:$0xff]
      %v9125 = vld [vmem:[%s6 + $0x8] sm:$0xff]
      %v9126 = vld [vmem:[%s6 + $0x10] sm:$0xff]
      %v9127 = vld [vmem:[%s6 + $0x18] sm:$0xff]
      %v9128 = vld [vmem:[%s6 + $0x20] sm:$0xff]
      %v9129 = vld [vmem:[%s6 + $0x28] sm:$0xff]
      %v9130 = vld [vmem:[%s6 + $0x30] sm:$0xff]
      %v9131 = vld [vmem:[%s6 + $0x38] sm:$0xff]
      %9133 = vset.pattern.permute.xlu0 0
      %9134 = vperm.xlu0 %9133, %v9124
      %v9135 = vpop.permute.xlu0 %9134
      %9138 = vset.pattern.permute.xlu0 0
      %9139 = vperm.xlu0 %9138, %v9125
      %v9140 = vpop.permute.xlu0 %9139
      %9143 = vset.pattern.permute.xlu0 0
      %9144 = vperm.xlu0 %9143, %v9126
      %v9145 = vpop.permute.xlu0 %9144
      %9148 = vset.pattern.permute.xlu0 0
      %9149 = vperm.xlu0 %9148, %v9127
      %v9150 = vpop.permute.xlu0 %9149
      %9153 = vset.pattern.permute.xlu0 0
      %9154 = vperm.xlu0 %9153, %v9128
      %v9155 = vpop.permute.xlu0 %9154
      %9158 = vset.pattern.permute.xlu0 0
      %9159 = vperm.xlu0 %9158, %v9129
      %v9160 = vpop.permute.xlu0 %9159
      %9163 = vset.pattern.permute.xlu0 0
      %9164 = vperm.xlu0 %9163, %v9130
      %v9165 = vpop.permute.xlu0 %9164
      %9168 = vset.pattern.permute.xlu0 0
      %9169 = vperm.xlu0 %9168, %v9131
      %v9170 = vpop.permute.xlu0 %9169
      %v9172 = vadd.f32 %v9108, %v9135
      %v9173 = vadd.f32 %v9109, %v9135
      %v9174 = vadd.f32 %v9110, %v9140
      %v9175 = vadd.f32 %v9111, %v9140
      %v9176 = vadd.f32 %v9112, %v9145
      %v9177 = vadd.f32 %v9113, %v9145
      %v9178 = vadd.f32 %v9114, %v9150
      %v9179 = vadd.f32 %v9115, %v9150
      %v9180 = vadd.f32 %v9116, %v9155
      %v9181 = vadd.f32 %v9117, %v9155
      %v9182 = vadd.f32 %v9118, %v9160
      %v9183 = vadd.f32 %v9119, %v9160
      %v9184 = vadd.f32 %v9120, %v9165
      %v9185 = vadd.f32 %v9121, %v9165
      %v9186 = vadd.f32 %v9122, %v9170
      %v9187 = vadd.f32 %v9123, %v9170
      %vm9188 = vcmp.ge.f32.partialorder %v9172, 0.0
      %vm9189 = vcmp.ge.f32.partialorder %v9173, 0.0
      %vm9190 = vcmp.ge.f32.partialorder %v9174, 0.0
      %vm9191 = vcmp.ge.f32.partialorder %v9175, 0.0
      %vm9192 = vcmp.ge.f32.partialorder %v9176, 0.0
      %vm9193 = vcmp.ge.f32.partialorder %v9177, 0.0
      %vm9194 = vcmp.ge.f32.partialorder %v9178, 0.0
      %vm9195 = vcmp.ge.f32.partialorder %v9179, 0.0
      %vm9196 = vcmp.ge.f32.partialorder %v9180, 0.0
      %vm9197 = vcmp.ge.f32.partialorder %v9181, 0.0
      %vm9198 = vcmp.ge.f32.partialorder %v9182, 0.0
      %vm9199 = vcmp.ge.f32.partialorder %v9183, 0.0
      %vm9200 = vcmp.ge.f32.partialorder %v9184, 0.0
      %vm9201 = vcmp.ge.f32.partialorder %v9185, 0.0
      %vm9202 = vcmp.ge.f32.partialorder %v9186, 0.0
      %vm9203 = vcmp.ge.f32.partialorder %v9187, 0.0
      %v9204 = vmul.f32 %v9172, 0.2
      %v9205 = vmul.f32 %v9173, 0.2
      %v9206 = vmul.f32 %v9174, 0.2
      %v9207 = vmul.f32 %v9175, 0.2
      %v9208 = vmul.f32 %v9176, 0.2
      %v9209 = vmul.f32 %v9177, 0.2
      %v9210 = vmul.f32 %v9178, 0.2
      %v9211 = vmul.f32 %v9179, 0.2
      %v9212 = vmul.f32 %v9180, 0.2
      %v9213 = vmul.f32 %v9181, 0.2
      %v9214 = vmul.f32 %v9182, 0.2
      %v9215 = vmul.f32 %v9183, 0.2
      %v9216 = vmul.f32 %v9184, 0.2
      %v9217 = vmul.f32 %v9185, 0.2
      %v9218 = vmul.f32 %v9186, 0.2
      %v9219 = vmul.f32 %v9187, 0.2
      %v9220 = vsel %vm9188, %v9172, %v9204
      %v9221 = vsel %vm9189, %v9173, %v9205
      %v9222 = vsel %vm9190, %v9174, %v9206
      %v9223 = vsel %vm9191, %v9175, %v9207
      %v9224 = vsel %vm9192, %v9176, %v9208
      %v9225 = vsel %vm9193, %v9177, %v9209
      %v9226 = vsel %vm9194, %v9178, %v9210
      %v9227 = vsel %vm9195, %v9179, %v9211
      %v9228 = vsel %vm9196, %v9180, %v9212
      %v9229 = vsel %vm9197, %v9181, %v9213
      %v9230 = vsel %vm9198, %v9182, %v9214
      %v9231 = vsel %vm9199, %v9183, %v9215
      %v9232 = vsel %vm9200, %v9184, %v9216
      %v9233 = vsel %vm9201, %v9185, %v9217
      %v9234 = vsel %vm9202, %v9186, %v9218
      %v9235 = vsel %vm9203, %v9187, %v9219
      %v9236 = vadd.f32 %v9220, %v9224
      %v9237 = vadd.f32 %v9221, %v9225
      %v9238 = vadd.f32 %v9222, %v9226
      %v9239 = vadd.f32 %v9223, %v9227
      %v9240 = vadd.f32 %v9236, %v9228
      %v9241 = vadd.f32 %v9237, %v9229
      %v9242 = vadd.f32 %v9238, %v9230
      %v9243 = vadd.f32 %v9239, %v9231
      %v9244 = vadd.f32 %v9240, %v9232
      %v9245 = vadd.f32 %v9241, %v9233
      %v9246 = vadd.f32 %v9242, %v9234
      %v9247 = vadd.f32 %v9243, %v9235
      %9248 = vst [vmem:[%s305] sm:$0xff] %v9244
      %9249 = vst [vmem:[%s305 + $0x8] sm:$0xff] %v9245
      %9250 = vst [vmem:[%s305 + $0x10] sm:$0xff] %v9246
      %9251 = vst [vmem:[%s305 + $0x18] sm:$0xff] %v9247
      %p9252 = scmp.lt.s32.totalorder %s19, 1
      %s9253 = scalar_select %p9252, %s19, 1
      %s9254 = smul.addr %s9253, 4
      %s9255 = smul.addr %s9254, 8
      %s9256 = scalar_lea.vmem %s8, %s9255
      // Predicated region
      $region53: #{ginception_st_forward.1} parent=51 // pred_check
        %p9257 = pneg %p210
      $region54: #{ginception_st_forward.1} parent=51 // pred_check_branch
        %9259 = sbr.rel (%p9257) target = $region56
      $region55: #{ginception_st_forward.1} parent=51 // pred_region
        _
      $region56: #{ginception_st_forward.1} parent=51 // pred_fallthru
        _
    $region52: #{ginception_st_forward.1} parent=5 // pred_fallthru
      _
    %p9260 = scmp.le.s32.totalorder 2, %s14
    // Predicated region
    $region57: #{ginception_st_forward.1} parent=5 // pred_check
      %p9261 = pneg %p9260
    $region58: #{ginception_st_forward.1} parent=5 // pred_check_branch
      %9263 = sbr.rel (%p9261) target = $region60
    $region59: #{ginception_st_forward.1} parent=5 // pred_region
      %s9264 = ssub.s32 %s14, 2
      // Predicated region
      $region61: #{ginception_st_forward.1} parent=59 // pred_check
        %p9265 = pneg %p216
      $region62: #{ginception_st_forward.1} parent=59 // pred_check_branch
        %9267 = sbr.rel (%p9265) target = $region64
      $region63: #{ginception_st_forward.1} parent=59 // pred_region
        %p9268 = scmp.lt.s32.totalorder %s20, 1
        %s9269 = scalar_select %p9268, %s20, 1
        %s9270 = smul.addr %s9269, 4
        %s9271 = smul.addr %s9270, 8
        %s9272 = scalar_lea.vmem %s8, %s9271
      $region64: #{ginception_st_forward.1} parent=59 // pred_fallthru
        _
    $region60: #{ginception_st_forward.1} parent=5 // pred_fallthru
      _
  $region6: #{ginception_st_forward.1} parent=0 // loop_footer
    %s18 = sadd.s32 1, %s14
  $region7: #{ginception_st_forward.1} parent=0 // loop_footer_branch
    %13 = sbr.rel target = $region3
  $region8: #{ginception_st_forward.1} parent=0 // loop_exit
    _

</llo_original>
